<compile_context>
chip_gen: v7x
topology: tpu7x:2x2x1
jax: 0.10.0
libtpu: 0.0.40
codegen_flags: <defaults>
</compile_context>

<pallas_src>
import functools

import jax
import jax.numpy as jnp
from jax.experimental import pallas as pl
from jax.experimental.pallas import tpu as pltpu


def _round_up(x, m):
    return (x + m - 1) // m * m


def _relu_conv3x3_kernel(x_ref, w_ref, o_ref, lhs_ref, *, H, W, Wp, C, Cpad):
    """One batch image per grid step.

    x_ref:   (1, H+3, Wp, Cpad) bf16  zero-padded NHWC input (padding done in glue)
    w_ref:   (3, 3*Cpad, C)     bf16  kw-fused block-diagonal weights (resident)
    o_ref:   (1, H, W, C)       f32   conv output for this image
    lhs_ref: ((H+2)*Wp, 3*Cpad) bf16  kw-fused im2col slab (scratch)
    """
    R = (H + 2) * Wp          # rows of the fused LHS that the matmuls read
    S = H * Wp                # flattened output rows (cols W..Wp-1 are garbage, dropped)

    # ReLU on the VPU (bf16); the zero halo stays zero.  Flattening (H+3, Wp) -> rows
    # is layout-free because Wp is a multiple of the bf16 sublane pack (16).
    xflat = jnp.maximum(x_ref[0], 0).reshape((H + 3) * Wp, Cpad)

    # Build the kw-fused im2col slab once per step:
    #   lhs[r, kw*Cpad + c] = xflat[r + kw, c]
    # Lane offsets kw*Cpad are multiples of 128 and stores cover whole rows, so the
    # only non-trivial work is the 1/2-sublane shift of the kw=1,2 source slices (XLU).
    for kw in range(3):
        lhs_ref[:, kw * Cpad:(kw + 1) * Cpad] = xflat[kw:kw + R, :]

    # Three accumulated MXU matmuls (one per kh tap row), K = 3*Cpad.  Row offsets
    # kh*Wp are multiples of 16 -> sublane-aligned LHS reads.  Chained f32 accumulation
    # (fewer result drains / accumulator RMWs; MRB-friendly on v7x).
    acc = jnp.dot(lhs_ref[0:S, :], w_ref[0], preferred_element_type=jnp.float32)
    acc = acc + jnp.dot(lhs_ref[Wp:Wp + S, :], w_ref[1],
                        preferred_element_type=jnp.float32)
    acc = acc + jnp.dot(lhs_ref[2 * Wp:2 * Wp + S, :], w_ref[2],
                        preferred_element_type=jnp.float32)

    # Drop the Wp-W wrap-around garbage columns, store lane-dense f32 output.
    o_ref[0] = acc.reshape(H, Wp, C)[:, :W, :].astype(o_ref.dtype)


def relu_group_conv3x3(x_nchw, weight, groups):
    """ReLU followed by grouped 3x3 conv (stride 1, pad 1, no bias), NCHW in/out.

    x_nchw:  (N, C, H, W)  float32
    weight:  (C, C/groups, 3, 3)  float32
    returns: (N, C, H, W)  float32
    """
    N, C, H, W = x_nchw.shape
    assert C % groups == 0
    Cg = C // groups
    assert weight.shape == (C, Cg, 3, 3)

    Wp = _round_up(W + 2, 16)      # padded row width; multiple of bf16 sublane pack
    Cpad = _round_up(C, 128)       # lane-tile padded channel count

    # ---- glue: ONE fused XLA pass over the input ----
    # NCHW -> NHWC (C lane-dense), f32 -> bf16 (halves the kernel's input DMA), conv
    # zero padding (data at rows 1..H, cols 1..W; +2 spare rows for the flat-shift
    # reads) and channel padding to Cpad (keeps in-kernel stores lane-aligned and the
    # padded lanes finite/zero).
    x_nhwc = jnp.transpose(x_nchw, (0, 2, 3, 1)).astype(jnp.bfloat16)
    x_pad = jnp.pad(x_nhwc, ((0, 0), (1, 2), (1, Wp - W - 1), (0, Cpad - C)))

    # Block-diagonal dense weights, kw-fused along K:
    #   w_fused[kh, kw*Cpad + ci, co] = weight[co, ci - g*Cg, kh, kw]  if ci,co in
    #   group g, 0 otherwise (including the Cpad-C padded rows).
    wg = weight.reshape(groups, Cg, Cg, 3, 3)                  # (g, o, i, kh, kw)
    eye = jnp.eye(groups, dtype=weight.dtype)
    w_dense = jnp.einsum('goixy,gh->xygiho', wg, eye).reshape(3, 3, C, C)
    w_fused = jnp.pad(w_dense, ((0, 0), (0, 0), (0, Cpad - C), (0, 0)))
    w_fused = w_fused.reshape(3, 3 * Cpad, C).astype(jnp.bfloat16)

    kernel = functools.partial(_relu_conv3x3_kernel,
                               H=H, W=W, Wp=Wp, C=C, Cpad=Cpad)

    out_nhwc = pl.pallas_call(
        kernel,
        out_shape=jax.ShapeDtypeStruct((N, H, W, C), x_nchw.dtype),
        grid_spec=pltpu.PrefetchScalarGridSpec(
            num_scalar_prefetch=0,
            grid=(N,),
            in_specs=[
                pl.BlockSpec((1, H + 3, Wp, Cpad), lambda n: (n, 0, 0, 0)),
                # Constant block index -> weights DMA'd once, resident across steps.
                pl.BlockSpec((3, 3 * Cpad, C), lambda n: (0, 0, 0)),
            ],
            out_specs=pl.BlockSpec((1, H, W, C), lambda n: (n, 0, 0, 0)),
            scratch_shapes=[pltpu.VMEM(((H + 2) * Wp, 3 * Cpad), jnp.bfloat16)],
        ),
        compiler_params=pltpu.CompilerParams(
            dimension_semantics=("parallel",)),
    )(x_pad, w_fused)

    # NHWC -> NCHW.  (If the surrounding model carried NHWC these two transposes —
    # HBM traffic comparable to the kernel's own — would disappear.)
    return jnp.transpose(out_nhwc, (0, 3, 1, 2))


if __name__ == "__main__":
    # Scaled-down shapes consistent with the module: groups=11 (as in the original),
    # 24 channels/group (original: 264), 14x14 spatial.  batch=8 so the "parallel"
    # batch grid gives each v7x TensorCore >=4 pipelined steps.
    N, G, Cg, H, W = 8, 11, 24, 14, 14
    C = G * Cg

    key = jax.random.PRNGKey(0)
    kx, kwgt = jax.random.split(key)
    x = jax.random.normal(kx, (N, C, H, W), dtype=jnp.float32)
    w = jax.random.normal(kwgt, (C, Cg, 3, 3), dtype=jnp.float32) * (2.0 / (Cg * 9)) ** 0.5

    fn = jax.jit(functools.partial(relu_group_conv3x3, groups=G))
    out = jax.block_until_ready(fn(x, w))
    assert out.shape == (N, C, H, W)

    # Cross-check vs XLA's grouped conv with the same bf16 MXU inputs / f32 accumulation.
    ref = jax.lax.conv_general_dilated(
        jnp.maximum(x, 0.0).astype(jnp.bfloat16), w.astype(jnp.bfloat16),
        window_strides=(1, 1), padding=((1, 1), (1, 1)),
        dimension_numbers=("NCHW", "OIHW", "NCHW"),
        feature_group_count=G,
        preferred_element_type=jnp.float32)
    assert jnp.allclose(out, ref, atol=2e-2, rtol=2e-2), "mismatch vs reference conv"

    print("KERNEL_OK")
</pallas_src>

<mosaic_0001>
module attributes {stable_mosaic.version = 11 : i64} {
  func.func @_relu_conv3x3_kernel(%arg0: i32, %arg1: memref<1x17x16x384xbf16, #tpu.memory_space<vmem>>, %arg2: memref<3x1152x264xbf16, #tpu.memory_space<vmem>>, %arg3: memref<1x14x14x264xf32, #tpu.memory_space<vmem>>, %arg4: memref<256x1152xbf16, #tpu.memory_space<vmem>>) attributes {dimension_semantics = [#tpu.dimension_semantics<parallel>], iteration_bounds = array<i64: 8>, scalar_prefetch = 0 : i64, scratch_operands = 1 : i64, tpu.core_type = #tpu.core_type<tc>, window_params = [{transform_indices = @transform_0, window_bounds = array<i64: 1, 17, 16, 384>}, {pipeline_mode = #tpu.pipeline_mode<synchronous>, transform_indices = @transform_1, window_bounds = array<i64: 3, 1152, 264>}, {transform_indices = @transform_2, window_bounds = array<i64: 1, 14, 14, 264>}]} {
    %c0 = arith.constant 0 : index
    %c0_0 = arith.constant 0 : index
    %c0_1 = arith.constant 0 : index
    %c0_2 = arith.constant 0 : index
    %0 = vector.load %arg1[%c0, %c0_0, %c0_1, %c0_2] : memref<1x17x16x384xbf16, #tpu.memory_space<vmem>>, vector<1x17x16x384xbf16>
    %1 = vector.shape_cast %0 : vector<1x17x16x384xbf16> to vector<17x16x384xbf16>
    %cst = arith.constant 0.000000e+00 : bf16
    %2 = vector.broadcast %cst : bf16 to vector<17x16x384xbf16>
    %3 = arith.maximumf %1, %2 : vector<17x16x384xbf16>
    %4 = vector.shape_cast %3 : vector<17x16x384xbf16> to vector<272x384xbf16>
    %5 = vector.extract_strided_slice %4 {offsets = [0, 0], sizes = [256, 384], strides = [1, 1]} : vector<272x384xbf16> to vector<256x384xbf16>
    %c0_3 = arith.constant 0 : index
    %c0_4 = arith.constant 0 : index
    %6 = vector.load %arg4[%c0_3, %c0_4] : memref<256x1152xbf16, #tpu.memory_space<vmem>>, vector<256x384xbf16>
    tpu.vector_store %arg4[%c0_3, %c0_4], %5 {strides = array<i32>} : memref<256x1152xbf16, #tpu.memory_space<vmem>>, vector<256x384xbf16>,
    %7 = vector.extract_strided_slice %4 {offsets = [1, 0], sizes = [256, 384], strides = [1, 1]} : vector<272x384xbf16> to vector<256x384xbf16>
    %c0_5 = arith.constant 0 : index
    %c384 = arith.constant 384 : index
    %8 = vector.load %arg4[%c0_5, %c384] : memref<256x1152xbf16, #tpu.memory_space<vmem>>, vector<256x384xbf16>
    tpu.vector_store %arg4[%c0_5, %c384], %7 {strides = array<i32>} : memref<256x1152xbf16, #tpu.memory_space<vmem>>, vector<256x384xbf16>,
    %9 = vector.extract_strided_slice %4 {offsets = [2, 0], sizes = [256, 384], strides = [1, 1]} : vector<272x384xbf16> to vector<256x384xbf16>
    %c0_6 = arith.constant 0 : index
    %c768 = arith.constant 768 : index
    %10 = vector.load %arg4[%c0_6, %c768] : memref<256x1152xbf16, #tpu.memory_space<vmem>>, vector<256x384xbf16>
    tpu.vector_store %arg4[%c0_6, %c768], %9 {strides = array<i32>} : memref<256x1152xbf16, #tpu.memory_space<vmem>>, vector<256x384xbf16>,
    %c0_7 = arith.constant 0 : index
    %c0_8 = arith.constant 0 : index
    %11 = vector.load %arg4[%c0_7, %c0_8] : memref<256x1152xbf16, #tpu.memory_space<vmem>>, vector<224x1152xbf16>
    %c0_9 = arith.constant 0 : index
    %c0_10 = arith.constant 0 : index
    %c0_11 = arith.constant 0 : index
    %12 = vector.load %arg2[%c0_9, %c0_10, %c0_11] : memref<3x1152x264xbf16, #tpu.memory_space<vmem>>, vector<1x1152x264xbf16>
    %13 = vector.shape_cast %12 : vector<1x1152x264xbf16> to vector<1152x264xbf16>
    %cst_12 = arith.constant dense<0.000000e+00> : vector<224x264xf32>
    %14 = tpu.matmul %11, %13, %cst_12 {dimension_numbers = #tpu.dot_dimension_numbers<[1], [0], [0], [1], [0, 0, 1, 1], [], []>} : vector<224x1152xbf16>, vector<1152x264xbf16>, vector<224x264xf32> -> vector<224x264xf32>
    %c16 = arith.constant 16 : index
    %c0_13 = arith.constant 0 : index
    %15 = vector.load %arg4[%c16, %c0_13] : memref<256x1152xbf16, #tpu.memory_space<vmem>>, vector<224x1152xbf16>
    %c1 = arith.constant 1 : index
    %c0_14 = arith.constant 0 : index
    %c0_15 = arith.constant 0 : index
    %16 = vector.load %arg2[%c1, %c0_14, %c0_15] : memref<3x1152x264xbf16, #tpu.memory_space<vmem>>, vector<1x1152x264xbf16>
    %17 = vector.shape_cast %16 : vector<1x1152x264xbf16> to vector<1152x264xbf16>
    %cst_16 = arith.constant dense<0.000000e+00> : vector<224x264xf32>
    %18 = tpu.matmul %15, %17, %cst_16 {dimension_numbers = #tpu.dot_dimension_numbers<[1], [0], [0], [1], [0, 0, 1, 1], [], []>} : vector<224x1152xbf16>, vector<1152x264xbf16>, vector<224x264xf32> -> vector<224x264xf32>
    %19 = arith.addf %14, %18 : vector<224x264xf32>
    %c32 = arith.constant 32 : index
    %c0_17 = arith.constant 0 : index
    %20 = vector.load %arg4[%c32, %c0_17] : memref<256x1152xbf16, #tpu.memory_space<vmem>>, vector<224x1152xbf16>
    %c2 = arith.constant 2 : index
    %c0_18 = arith.constant 0 : index
    %c0_19 = arith.constant 0 : index
    %21 = vector.load %arg2[%c2, %c0_18, %c0_19] : memref<3x1152x264xbf16, #tpu.memory_space<vmem>>, vector<1x1152x264xbf16>
    %22 = vector.shape_cast %21 : vector<1x1152x264xbf16> to vector<1152x264xbf16>
    %cst_20 = arith.constant dense<0.000000e+00> : vector<224x264xf32>
    %23 = tpu.matmul %20, %22, %cst_20 {dimension_numbers = #tpu.dot_dimension_numbers<[1], [0], [0], [1], [0, 0, 1, 1], [], []>} : vector<224x1152xbf16>, vector<1152x264xbf16>, vector<224x264xf32> -> vector<224x264xf32>
    %24 = arith.addf %19, %23 : vector<224x264xf32>
    %25 = vector.shape_cast %24 : vector<224x264xf32> to vector<14x16x264xf32>
    %26 = vector.extract_strided_slice %25 {offsets = [0, 0, 0], sizes = [14, 14, 264], strides = [1, 1, 1]} : vector<14x16x264xf32> to vector<14x14x264xf32>
    %c0_21 = arith.constant 0 : index
    %c0_22 = arith.constant 0 : index
    %c0_23 = arith.constant 0 : index
    %c0_24 = arith.constant 0 : index
    %27 = vector.load %arg3[%c0_21, %c0_22, %c0_23, %c0_24] : memref<1x14x14x264xf32, #tpu.memory_space<vmem>>, vector<1x14x14x264xf32>
    %28 = vector.shape_cast %27 : vector<1x14x14x264xf32> to vector<14x14x264xf32>
    %29 = vector.shape_cast %26 : vector<14x14x264xf32> to vector<1x14x14x264xf32>
    tpu.vector_store %arg3[%c0_21, %c0_22, %c0_23, %c0_24], %29 {strides = array<i32>} : memref<1x14x14x264xf32, #tpu.memory_space<vmem>>, vector<1x14x14x264xf32>,
    return
  }
  func.func @transform_0(%arg0: i32) -> (i32, i32, i32, i32) {
    %c0_i32 = arith.constant 0 : i32
    %c0_i32_0 = arith.constant 0 : i32
    %c0_i32_1 = arith.constant 0 : i32
    %c0_i32_2 = arith.constant 0 : i32
    return %arg0, %c0_i32, %c0_i32_0, %c0_i32_1 : i32, i32, i32, i32
  }
  func.func @transform_1(%arg0: i32) -> (i32, i32, i32) {
    %c0_i32 = arith.constant 0 : i32
    %c0_i32_0 = arith.constant 0 : i32
    %c0_i32_1 = arith.constant 0 : i32
    %c0_i32_2 = arith.constant 0 : i32
    return %c0_i32, %c0_i32_0, %c0_i32_1 : i32, i32, i32
  }
  func.func @transform_2(%arg0: i32) -> (i32, i32, i32, i32) {
    %c0_i32 = arith.constant 0 : i32
    %c0_i32_0 = arith.constant 0 : i32
    %c0_i32_1 = arith.constant 0 : i32
    %c0_i32_2 = arith.constant 0 : i32
    return %arg0, %c0_i32, %c0_i32_0, %c0_i32_1 : i32, i32, i32, i32
  }
}

</mosaic_0001>

<llo_original>
// kernel: relu_group_conv3x3.1
$region0: #{relu_group_conv3x3.1}
  #allocation0 [shape = 'u32[]', space=smem, size = 0x4, offset = 0x4, fixed_abs, tag = 'smem constant byte address 0x4 - core index']
  #allocation1 [shape = 'u32[144,128]{1,0:T(1,128)}', space=vmem, size = 0x12000, scoped, tag = 'internal scratch']
  #allocation2 [shape = 'bf16[256,1152]{1,0:T(16,128)(2,1)}', space=vmem, size = 0x90000, scoped, tag = 'scratch operand']
  %s0 = inlined_call_operand.vmem [shape: bf16[8,17,16,384], index: 0, kind: input, shape index: {}]
  %s1 = inlined_call_operand.vmem [shape: bf16[3,1152,264], index: 1, kind: input, shape index: {}]
  %s2 = inlined_call_operand.vmem [shape: f32[8,14,14,264], index: 2, kind: output, shape index: {}]
  %s3 = sld [smem:[#allocation0]]
  $region41: #{relu_group_conv3x3.1} parent=0
    _
  %s5 = ssub.s32 1, %s3
  %s6 = scalar_select 0, %s5, %s3
  loop: start=0, step=1, limit=10
  $region2: #{relu_group_conv3x3.1} parent=0 // loop_pre_header
    _
  $region3: #{relu_group_conv3x3.1} parent=0 // loop_header
    %s8 = sphi 0, %s12
    %p9 = scmp.ge.s32.totalorder %s8, 10
    %s18 = sphi 0, %s20
    %s21 = sphi 0, %s18
    %s22 = sphi 0, %s21
    %s38 = sphi 0, %s22
    %s42 = sphi 0, %s42
    %s44 = sphi 0, %s42
    %s45 = sphi 0, %s44
    %s59 = sphi 0, %s45
    %s65 = sphi 0, %s67
    %s68 = sphi 0, %s65
    %s69 = sphi 0, %s68
    %s85 = sphi 0, %s69
  $region4: #{relu_group_conv3x3.1} parent=0 // loop_header_branch
    %11 = sbr.rel (%p9) target = $region8
  $region5: #{relu_group_conv3x3.1} parent=0 // loop_body
    %s13 = ssub.s32 %s8, 1
    %s14 = ssub.s32 %s8, 2
    %s15 = sadd.s32 %s8, 1
    %s16 = ssub.s32 %s8, %s15
    %p17 = scmp.eq.s32.totalorder %s16, 0
    %s19 = sadd.s32 %s18, 1
    %s20 = scalar_select %p17, %s18, %s19
    %p23 = pneg %p17
    %p24 = scmp.eq.s32.totalorder %s8, 7
    %p25 = por %p23, %p24
    %p26 = scmp.ne.s32.totalorder %s18, %s21
    %p27 = scmp.eq.s32.totalorder %s8, 0
    %p28 = por %p26, %p27
    %p29 = scmp.ne.s32.totalorder %s18, %s21
    %p30 = scmp.eq.s32.totalorder %s13, 7
    %p31 = por %p29, %p30
    %p32 = scmp.ne.s32.totalorder %s21, %s22
    %p33 = scmp.eq.s32.totalorder %s13, 0
    %p34 = por %p32, %p33
    %p35 = scmp.ne.s32.totalorder %s21, %s22
    %p36 = scmp.eq.s32.totalorder %s14, 7
    %p37 = por %p35, %p36
    %p39 = scmp.ne.s32.totalorder %s22, %s38
    %p40 = scmp.eq.s32.totalorder %s14, 0
    %p41 = por %p39, %p40
    %s43 = sadd.s32 %s42, 1
    %p46 = scmp.eq.s32.totalorder %s8, 7
    %p47 = scmp.ne.s32.totalorder %s42, %s44
    %p48 = scmp.eq.s32.totalorder %s8, 0
    %p49 = por %p47, %p48
    %p50 = scmp.ne.s32.totalorder %s42, %s44
    %p51 = scmp.eq.s32.totalorder %s13, 7
    %p52 = por %p50, %p51
    %p53 = scmp.ne.s32.totalorder %s44, %s45
    %p54 = scmp.eq.s32.totalorder %s13, 0
    %p55 = por %p53, %p54
    %p56 = scmp.ne.s32.totalorder %s44, %s45
    %p57 = scmp.eq.s32.totalorder %s14, 7
    %p58 = por %p56, %p57
    %p60 = scmp.ne.s32.totalorder %s45, %s59
    %p61 = scmp.eq.s32.totalorder %s14, 0
    %p62 = por %p60, %p61
    %s63 = ssub.s32 %s8, %s15
    %p64 = scmp.eq.s32.totalorder %s63, 0
    %s66 = sadd.s32 %s65, 1
    %s67 = scalar_select %p64, %s65, %s66
    %p70 = pneg %p64
    %p71 = scmp.eq.s32.totalorder %s8, 7
    %p72 = por %p70, %p71
    %p73 = scmp.ne.s32.totalorder %s65, %s68
    %p74 = scmp.eq.s32.totalorder %s8, 0
    %p75 = por %p73, %p74
    %p76 = scmp.ne.s32.totalorder %s65, %s68
    %p77 = scmp.eq.s32.totalorder %s13, 7
    %p78 = por %p76, %p77
    %p79 = scmp.ne.s32.totalorder %s68, %s69
    %p80 = scmp.eq.s32.totalorder %s13, 0
    %p81 = por %p79, %p80
    %p82 = scmp.ne.s32.totalorder %s68, %s69
    %p83 = scmp.eq.s32.totalorder %s14, 7
    %p84 = por %p82, %p83
    %p86 = scmp.ne.s32.totalorder %s69, %s85
    %p87 = scmp.eq.s32.totalorder %s14, 0
    %p88 = por %p86, %p87
    %p89 = scmp.le.s32.totalorder 1, %s8
    %p90 = scmp.lt.s32.totalorder %s8, 9
    %p91 = pnand %p89, %p90
    %p92 = pneg %p91
    // Predicated region
    $region9: #{relu_group_conv3x3.1} parent=5 // pred_check
      _
    $region10: #{relu_group_conv3x3.1} parent=5 // pred_check_branch
      %94 = sbr.rel (%p91) target = $region12
    $region11: #{relu_group_conv3x3.1} parent=5 // pred_region
      %s95 = ssub.s32 %s8, 1
      // Predicated region
      $region13: #{relu_group_conv3x3.1} parent=11 // pred_check
        %p96 = pneg %p55
      $region14: #{relu_group_conv3x3.1} parent=11 // pred_check_branch
        %98 = sbr.rel (%p96) target = $region16
      $region15: #{relu_group_conv3x3.1} parent=11 // pred_region
        _
      $region16: #{relu_group_conv3x3.1} parent=11 // pred_fallthru
        _
    $region12: #{relu_group_conv3x3.1} parent=5 // pred_fallthru
      _
    %p99 = scmp.lt.s32.totalorder %s8, 8
    // Predicated region
    $region17: #{relu_group_conv3x3.1} parent=5 // pred_check
      %p100 = pneg %p99
    $region18: #{relu_group_conv3x3.1} parent=5 // pred_check_branch
      %102 = sbr.rel (%p100) target = $region20
    $region19: #{relu_group_conv3x3.1} parent=5 // pred_region
      // Predicated region
      $region21: #{relu_group_conv3x3.1} parent=19 // pred_check
        %p103 = pneg %p28
      $region22: #{relu_group_conv3x3.1} parent=19 // pred_check_branch
        %105 = sbr.rel (%p103) target = $region24
      $region23: #{relu_group_conv3x3.1} parent=19 // pred_region
        %p106 = scmp.lt.s32.totalorder %s8, 7
        %s107 = scalar_select %p106, %s8, 7
        %s108 = smul.addr %s107, 102
        %s109 = smul.addr %s108, 4
        %s110 = scalar_lea.vmem %s0, %s109
      $region24: #{relu_group_conv3x3.1} parent=19 // pred_fallthru
        _
    $region20: #{relu_group_conv3x3.1} parent=5 // pred_fallthru
      _
    %p111 = scmp.le.s32.totalorder 1, %s8
    %p112 = scmp.lt.s32.totalorder %s8, 9
    %p113 = pnand %p111, %p112
    %p114 = pneg %p113
    // Predicated region
    $region25: #{relu_group_conv3x3.1} parent=5 // pred_check
      _
    $region26: #{relu_group_conv3x3.1} parent=5 // pred_check_branch
      %116 = sbr.rel (%p113) target = $region28
    $region27: #{relu_group_conv3x3.1} parent=5 // pred_region
      %s117 = ssub.s32 %s8, 1
      %p118 = scmp.lt.s32.totalorder %s13, 7
      %s119 = scalar_select %p118, %s13, 7
      %s120 = smul.addr %s119, 102
      %s121 = smul.addr %s120, 4
      %s122 = scalar_lea.vmem %s0, %s121
      %p123 = pneg %p34
      %p124 = pneg %p31
      %p125 = pneg %p55
      %p126 = pneg %p52
      %p127 = pneg %p81
      %p128 = pneg %p78
      %p129 = scmp.lt.s32.totalorder %s13, 7
      %s130 = scalar_select %p129, %s13, 7
      %s131 = smul.addr %s130, 84
      %s132 = smul.addr %s131, 8
      %s133 = scalar_lea.vmem %s2, %s132
      %p134 = scmp.lt.s32.totalorder %s13, 7
      %s135 = scalar_select %p134, %s13, 7
      %s136 = smul.addr %s135, 102
      %s137 = smul.addr %s136, 4
      %s138 = scalar_lea.vmem %s0, %s137
      %p139 = scmp.lt.s32.totalorder %s13, 7
      %s140 = scalar_select %p139, %s13, 7
      %s141 = smul.addr %s140, 84
      %s142 = smul.addr %s141, 8
      %s143 = scalar_lea.vmem %s2, %s142
      %v145 = vld [vmem:[%s138] sm:$0xff]
      %v146 = vld [vmem:[%s138 + $0x8] sm:$0xf]
      %v147 = vld [vmem:[%s138 + $0xc] sm:$0xff]
      %v148 = vld [vmem:[%s138 + $0x14] sm:$0xf]
      %v149 = vld [vmem:[%s138 + $0x18] sm:$0xff]
      %v150 = vld [vmem:[%s138 + $0x20] sm:$0xf]
      %v151 = vld [vmem:[%s138 + $0x24] sm:$0xff]
      %v152 = vld [vmem:[%s138 + $0x2c] sm:$0xf]
      %v153 = vld [vmem:[%s138 + $0x30] sm:$0xff]
      %v154 = vld [vmem:[%s138 + $0x38] sm:$0xf]
      %v155 = vld [vmem:[%s138 + $0x3c] sm:$0xff]
      %v156 = vld [vmem:[%s138 + $0x44] sm:$0xf]
      %v157 = vld [vmem:[%s138 + $0x48] sm:$0xff]
      %v158 = vld [vmem:[%s138 + $0x50] sm:$0xf]
      %v159 = vld [vmem:[%s138 + $0x54] sm:$0xff]
      %v160 = vld [vmem:[%s138 + $0x5c] sm:$0xf]
      %v161 = vld [vmem:[%s138 + $0x60] sm:$0xff]
      %v162 = vld [vmem:[%s138 + $0x68] sm:$0xf]
      %v163 = vld [vmem:[%s138 + $0x6c] sm:$0xff]
      %v164 = vld [vmem:[%s138 + $0x74] sm:$0xf]
      %v165 = vld [vmem:[%s138 + $0x78] sm:$0xff]
      %v166 = vld [vmem:[%s138 + $0x80] sm:$0xf]
      %v167 = vld [vmem:[%s138 + $0x84] sm:$0xff]
      %v168 = vld [vmem:[%s138 + $0x8c] sm:$0xf]
      %v169 = vld [vmem:[%s138 + $0x90] sm:$0xff]
      %v170 = vld [vmem:[%s138 + $0x98] sm:$0xf]
      %v171 = vld [vmem:[%s138 + $0x9c] sm:$0xff]
      %v172 = vld [vmem:[%s138 + $0xa4] sm:$0xf]
      %v173 = vld [vmem:[%s138 + $0xa8] sm:$0xff]
      %v174 = vld [vmem:[%s138 + $0xb0] sm:$0xf]
      %v175 = vld [vmem:[%s138 + $0xb4] sm:$0xff]
      %v176 = vld [vmem:[%s138 + $0xbc] sm:$0xf]
      %v177 = vld [vmem:[%s138 + $0xc0] sm:$0xff]
      %v178 = vld [vmem:[%s138 + $0xc8] sm:$0xf]
      %v179 = vld [vmem:[%s138 + $0xcc] sm:$0xff]
      %v180 = vld [vmem:[%s138 + $0xd4] sm:$0xf]
      %v181 = vld [vmem:[%s138 + $0xd8] sm:$0xff]
      %v182 = vld [vmem:[%s138 + $0xe0] sm:$0xf]
      %v183 = vld [vmem:[%s138 + $0xe4] sm:$0xff]
      %v184 = vld [vmem:[%s138 + $0xec] sm:$0xf]
      %v185 = vld [vmem:[%s138 + $0xf0] sm:$0xff]
      %v186 = vld [vmem:[%s138 + $0xf8] sm:$0xf]
      %v187 = vld [vmem:[%s138 + $0xfc] sm:$0xff]
      %v188 = vld [vmem:[%s138 + $0x104] sm:$0xf]
      %v189 = vld [vmem:[%s138 + $0x108] sm:$0xff]
      %v190 = vld [vmem:[%s138 + $0x110] sm:$0xf]
      %v191 = vld [vmem:[%s138 + $0x114] sm:$0xff]
      %v192 = vld [vmem:[%s138 + $0x11c] sm:$0xf]
      %v193 = vld [vmem:[%s138 + $0x120] sm:$0xff]
      %v194 = vld [vmem:[%s138 + $0x128] sm:$0xf]
      %v195 = vld [vmem:[%s138 + $0x12c] sm:$0xff]
      %v196 = vld [vmem:[%s138 + $0x134] sm:$0xf]
      %v197 = vld [vmem:[%s138 + $0x138] sm:$0xff]
      %v198 = vld [vmem:[%s138 + $0x140] sm:$0xf]
      %v199 = vld [vmem:[%s138 + $0x144] sm:$0xff]
      %v200 = vld [vmem:[%s138 + $0x14c] sm:$0xf]
      %v201 = vld [vmem:[%s138 + $0x150] sm:$0xff]
      %v202 = vld [vmem:[%s138 + $0x158] sm:$0xf]
      %v203 = vld [vmem:[%s138 + $0x15c] sm:$0xff]
      %v204 = vld [vmem:[%s138 + $0x164] sm:$0xf]
      %v205 = vld [vmem:[%s138 + $0x168] sm:$0xff]
      %v206 = vld [vmem:[%s138 + $0x170] sm:$0xf]
      %v207 = vld [vmem:[%s138 + $0x174] sm:$0xff]
      %v208 = vld [vmem:[%s138 + $0x17c] sm:$0xf]
      %v209 = vld [vmem:[%s138 + $0x180] sm:$0xff]
      %v210 = vld [vmem:[%s138 + $0x188] sm:$0xf]
      %v211 = vmax.bf16 %v145, 0
      %v212 = vmax.bf16 %v146, 0
      %v213 = vmax.bf16 %v147, 0
      %v214 = vmax.bf16 %v148, 0
      %v215 = vmax.bf16 %v149, 0
      %v216 = vmax.bf16 %v150, 0
      %v217 = vmax.bf16 %v151, 0
      %v218 = vmax.bf16 %v152, 0
      %v219 = vmax.bf16 %v153, 0
      %v220 = vmax.bf16 %v154, 0
      %v221 = vmax.bf16 %v155, 0
      %v222 = vmax.bf16 %v156, 0
      %v223 = vmax.bf16 %v157, 0
      %v224 = vmax.bf16 %v158, 0
      %v225 = vmax.bf16 %v159, 0
      %v226 = vmax.bf16 %v160, 0
      %v227 = vmax.bf16 %v161, 0
      %v228 = vmax.bf16 %v162, 0
      %v229 = vmax.bf16 %v163, 0
      %v230 = vmax.bf16 %v164, 0
      %v231 = vmax.bf16 %v165, 0
      %v232 = vmax.bf16 %v166, 0
      %v233 = vmax.bf16 %v167, 0
      %v234 = vmax.bf16 %v168, 0
      %v235 = vmax.bf16 %v169, 0
      %v236 = vmax.bf16 %v170, 0
      %v237 = vmax.bf16 %v171, 0
      %v238 = vmax.bf16 %v172, 0
      %v239 = vmax.bf16 %v173, 0
      %v240 = vmax.bf16 %v174, 0
      %v241 = vmax.bf16 %v175, 0
      %v242 = vmax.bf16 %v176, 0
      %v243 = vmax.bf16 %v177, 0
      %v244 = vmax.bf16 %v178, 0
      %v245 = vmax.bf16 %v179, 0
      %v246 = vmax.bf16 %v180, 0
      %v247 = vmax.bf16 %v181, 0
      %v248 = vmax.bf16 %v182, 0
      %v249 = vmax.bf16 %v183, 0
      %v250 = vmax.bf16 %v184, 0
      %v251 = vmax.bf16 %v185, 0
      %v252 = vmax.bf16 %v186, 0
      %v253 = vmax.bf16 %v187, 0
      %v254 = vmax.bf16 %v188, 0
      %v255 = vmax.bf16 %v189, 0
      %v256 = vmax.bf16 %v190, 0
      %v257 = vmax.bf16 %v191, 0
      %v258 = vmax.bf16 %v192, 0
      %v259 = vmax.bf16 %v193, 0
      %v260 = vmax.bf16 %v194, 0
      %v261 = vmax.bf16 %v195, 0
      %v262 = vmax.bf16 %v196, 0
      %v263 = vmax.bf16 %v197, 0
      %v264 = vmax.bf16 %v198, 0
      %v265 = vmax.bf16 %v199, 0
      %v266 = vmax.bf16 %v200, 0
      %v267 = vmax.bf16 %v201, 0
      %v268 = vmax.bf16 %v202, 0
      %v269 = vmax.bf16 %v203, 0
      %v270 = vmax.bf16 %v204, 0
      %v271 = vmax.bf16 %v205, 0
      %v272 = vmax.bf16 %v206, 0
      %v273 = vmax.bf16 %v207, 0
      %v274 = vmax.bf16 %v208, 0
      %v275 = vmax.bf16 %v209, 0
      %v276 = vmax.bf16 %v210, 0
      %v341 = vunpack.c.l.b16 %v211
      %v342 = vunpack.c.h.b16 %v211
      %v343 = vunpack.c.l.b16 %v212
      %v344 = vunpack.c.l.b16 %v213
      %v345 = vunpack.c.h.b16 %v213
      %v346 = vunpack.c.l.b16 %v214
      %v347 = vunpack.c.l.b16 %v215
      %v348 = vunpack.c.h.b16 %v215
      %v349 = vunpack.c.l.b16 %v216
      %v350 = vunpack.c.l.b16 %v217
      %v351 = vunpack.c.h.b16 %v217
      %v352 = vunpack.c.l.b16 %v218
      %v353 = vunpack.c.l.b16 %v219
      %v354 = vunpack.c.h.b16 %v219
      %v355 = vunpack.c.l.b16 %v220
      %v356 = vunpack.c.l.b16 %v221
      %v357 = vunpack.c.h.b16 %v221
      %v358 = vunpack.c.l.b16 %v222
      %v359 = vunpack.c.l.b16 %v223
      %v360 = vunpack.c.h.b16 %v223
      %v361 = vunpack.c.l.b16 %v224
      %v362 = vunpack.c.l.b16 %v225
      %v363 = vunpack.c.h.b16 %v225
      %v364 = vunpack.c.l.b16 %v226
      %v365 = vunpack.c.l.b16 %v227
      %v366 = vunpack.c.h.b16 %v227
      %v367 = vunpack.c.l.b16 %v228
      %v368 = vunpack.c.l.b16 %v229
      %v369 = vunpack.c.h.b16 %v229
      %v370 = vunpack.c.l.b16 %v230
      %v371 = vunpack.c.l.b16 %v231
      %v372 = vunpack.c.h.b16 %v231
      %v373 = vunpack.c.l.b16 %v232
      %v374 = vunpack.c.l.b16 %v233
      %v375 = vunpack.c.h.b16 %v233
      %v376 = vunpack.c.l.b16 %v234
      %v377 = vunpack.c.l.b16 %v235
      %v378 = vunpack.c.h.b16 %v235
      %v379 = vunpack.c.l.b16 %v236
      %v380 = vunpack.c.l.b16 %v237
      %v381 = vunpack.c.h.b16 %v237
      %v382 = vunpack.c.l.b16 %v238
      %v383 = vunpack.c.l.b16 %v239
      %v384 = vunpack.c.h.b16 %v239
      %v385 = vunpack.c.l.b16 %v240
      %v386 = vunpack.c.l.b16 %v241
      %v387 = vunpack.c.h.b16 %v241
      %v388 = vunpack.c.l.b16 %v242
      %v389 = vunpack.c.l.b16 %v243
      %v390 = vunpack.c.h.b16 %v243
      %v391 = vunpack.c.l.b16 %v244
      %v392 = vunpack.c.l.b16 %v245
      %v393 = vunpack.c.h.b16 %v245
      %v394 = vunpack.c.l.b16 %v246
      %v395 = vunpack.c.l.b16 %v247
      %v396 = vunpack.c.h.b16 %v247
      %v397 = vunpack.c.l.b16 %v248
      %v398 = vunpack.c.l.b16 %v249
      %v399 = vunpack.c.h.b16 %v249
      %v400 = vunpack.c.l.b16 %v250
      %v401 = vunpack.c.l.b16 %v251
      %v402 = vunpack.c.h.b16 %v251
      %v403 = vunpack.c.l.b16 %v252
      %v404 = vunpack.c.l.b16 %v253
      %v405 = vunpack.c.h.b16 %v253
      %v406 = vunpack.c.l.b16 %v254
      %v407 = vunpack.c.l.b16 %v255
      %v408 = vunpack.c.h.b16 %v255
      %v409 = vunpack.c.l.b16 %v256
      %v410 = vunpack.c.l.b16 %v257
      %v411 = vunpack.c.h.b16 %v257
      %v412 = vunpack.c.l.b16 %v258
      %v413 = vunpack.c.l.b16 %v259
      %v414 = vunpack.c.h.b16 %v259
      %v415 = vunpack.c.l.b16 %v260
      %v416 = vunpack.c.l.b16 %v261
      %v417 = vunpack.c.h.b16 %v261
      %v418 = vunpack.c.l.b16 %v262
      %v419 = vunpack.c.l.b16 %v263
      %v420 = vunpack.c.h.b16 %v263
      %v421 = vunpack.c.l.b16 %v264
      %v422 = vunpack.c.l.b16 %v265
      %v423 = vunpack.c.h.b16 %v265
      %v424 = vunpack.c.l.b16 %v266
      %v425 = vunpack.c.l.b16 %v267
      %v426 = vunpack.c.h.b16 %v267
      %v427 = vunpack.c.l.b16 %v268
      %v428 = vunpack.c.l.b16 %v269
      %v429 = vunpack.c.h.b16 %v269
      %v430 = vunpack.c.l.b16 %v270
      %v431 = vunpack.c.l.b16 %v271
      %v432 = vunpack.c.h.b16 %v271
      %v433 = vunpack.c.l.b16 %v272
      %v434 = vunpack.c.l.b16 %v273
      %v435 = vunpack.c.h.b16 %v273
      %v436 = vunpack.c.l.b16 %v274
      %v437 = vpack.c.b16 %v344, %v341
      %v438 = vpack.c.b16 %v345, %v342
      %v439 = vpack.c.b16 %v346, %v343
      %v440 = vpack.c.b16 %v350, %v347
      %v441 = vpack.c.b16 %v351, %v348
      %v442 = vpack.c.b16 %v352, %v349
      %v443 = vpack.c.b16 %v356, %v353
      %v444 = vpack.c.b16 %v357, %v354
      %v445 = vpack.c.b16 %v358, %v355
      %v446 = vpack.c.b16 %v362, %v359
      %v447 = vpack.c.b16 %v363, %v360
      %v448 = vpack.c.b16 %v364, %v361
      %v449 = vpack.c.b16 %v368, %v365
      %v450 = vpack.c.b16 %v369, %v366
      %v451 = vpack.c.b16 %v370, %v367
      %v452 = vpack.c.b16 %v374, %v371
      %v453 = vpack.c.b16 %v375, %v372
      %v454 = vpack.c.b16 %v376, %v373
      %v455 = vpack.c.b16 %v380, %v377
      %v456 = vpack.c.b16 %v381, %v378
      %v457 = vpack.c.b16 %v382, %v379
      %v458 = vpack.c.b16 %v386, %v383
      %v459 = vpack.c.b16 %v387, %v384
      %v460 = vpack.c.b16 %v388, %v385
      %v461 = vpack.c.b16 %v392, %v389
      %v462 = vpack.c.b16 %v393, %v390
      %v463 = vpack.c.b16 %v394, %v391
      %v464 = vpack.c.b16 %v398, %v395
      %v465 = vpack.c.b16 %v399, %v396
      %v466 = vpack.c.b16 %v400, %v397
      %v467 = vpack.c.b16 %v404, %v401
      %v468 = vpack.c.b16 %v405, %v402
      %v469 = vpack.c.b16 %v406, %v403
      %v470 = vpack.c.b16 %v410, %v407
      %v471 = vpack.c.b16 %v411, %v408
      %v472 = vpack.c.b16 %v412, %v409
      %v473 = vpack.c.b16 %v416, %v413
      %v474 = vpack.c.b16 %v417, %v414
      %v475 = vpack.c.b16 %v418, %v415
      %v476 = vpack.c.b16 %v422, %v419
      %v477 = vpack.c.b16 %v423, %v420
      %v478 = vpack.c.b16 %v424, %v421
      %v479 = vpack.c.b16 %v428, %v425
      %v480 = vpack.c.b16 %v429, %v426
      %v481 = vpack.c.b16 %v430, %v427
      %v482 = vpack.c.b16 %v434, %v431
      %v483 = vpack.c.b16 %v435, %v432
      %v484 = vpack.c.b16 %v436, %v433
      %533 = vst [vmem:[#allocation2] sm:$0xff] %v437
      %534 = vst [vmem:[#allocation2 + $0x8] sm:$0xff] %v438
      %535 = vst [vmem:[#allocation2 + $0x10] sm:$0xff] %v439
      %536 = vst [vmem:[#allocation2 + $0x48] sm:$0xff] %v440
      %537 = vst [vmem:[#allocation2 + $0x50] sm:$0xff] %v441
      %538 = vst [vmem:[#allocation2 + $0x58] sm:$0xff] %v442
      %539 = vst [vmem:[#allocation2 + $0x90] sm:$0xff] %v443
      %540 = vst [vmem:[#allocation2 + $0x98] sm:$0xff] %v444
      %541 = vst [vmem:[#allocation2 + $0xa0] sm:$0xff] %v445
      %542 = vst [vmem:[#allocation2 + $0xd8] sm:$0xff] %v446
      %543 = vst [vmem:[#allocation2 + $0xe0] sm:$0xff] %v447
      %544 = vst [vmem:[#allocation2 + $0xe8] sm:$0xff] %v448
      %545 = vst [vmem:[#allocation2 + $0x120] sm:$0xff] %v449
      %546 = vst [vmem:[#allocation2 + $0x128] sm:$0xff] %v450
      %547 = vst [vmem:[#allocation2 + $0x130] sm:$0xff] %v451
      %548 = vst [vmem:[#allocation2 + $0x168] sm:$0xff] %v452
      %549 = vst [vmem:[#allocation2 + $0x170] sm:$0xff] %v453
      %550 = vst [vmem:[#allocation2 + $0x178] sm:$0xff] %v454
      %551 = vst [vmem:[#allocation2 + $0x1b0] sm:$0xff] %v455
      %552 = vst [vmem:[#allocation2 + $0x1b8] sm:$0xff] %v456
      %553 = vst [vmem:[#allocation2 + $0x1c0] sm:$0xff] %v457
      %554 = vst [vmem:[#allocation2 + $0x1f8] sm:$0xff] %v458
      %555 = vst [vmem:[#allocation2 + $0x200] sm:$0xff] %v459
      %556 = vst [vmem:[#allocation2 + $0x208] sm:$0xff] %v460
      %557 = vst [vmem:[#allocation2 + $0x240] sm:$0xff] %v461
      %558 = vst [vmem:[#allocation2 + $0x248] sm:$0xff] %v462
      %559 = vst [vmem:[#allocation2 + $0x250] sm:$0xff] %v463
      %560 = vst [vmem:[#allocation2 + $0x288] sm:$0xff] %v464
      %561 = vst [vmem:[#allocation2 + $0x290] sm:$0xff] %v465
      %562 = vst [vmem:[#allocation2 + $0x298] sm:$0xff] %v466
      %563 = vst [vmem:[#allocation2 + $0x2d0] sm:$0xff] %v467
      %564 = vst [vmem:[#allocation2 + $0x2d8] sm:$0xff] %v468
      %565 = vst [vmem:[#allocation2 + $0x2e0] sm:$0xff] %v469
      %566 = vst [vmem:[#allocation2 + $0x318] sm:$0xff] %v470
      %567 = vst [vmem:[#allocation2 + $0x320] sm:$0xff] %v471
      %568 = vst [vmem:[#allocation2 + $0x328] sm:$0xff] %v472
      %569 = vst [vmem:[#allocation2 + $0x360] sm:$0xff] %v473
      %570 = vst [vmem:[#allocation2 + $0x368] sm:$0xff] %v474
      %571 = vst [vmem:[#allocation2 + $0x370] sm:$0xff] %v475
      %572 = vst [vmem:[#allocation2 + $0x3a8] sm:$0xff] %v476
      %573 = vst [vmem:[#allocation2 + $0x3b0] sm:$0xff] %v477
      %574 = vst [vmem:[#allocation2 + $0x3b8] sm:$0xff] %v478
      %575 = vst [vmem:[#allocation2 + $0x3f0] sm:$0xff] %v479
      %576 = vst [vmem:[#allocation2 + $0x3f8] sm:$0xff] %v480
      %577 = vst [vmem:[#allocation2 + $0x400] sm:$0xff] %v481
      %578 = vst [vmem:[#allocation2 + $0x438] sm:$0xff] %v482
      %579 = vst [vmem:[#allocation2 + $0x440] sm:$0xff] %v483
      %580 = vst [vmem:[#allocation2 + $0x448] sm:$0xff] %v484
      %v583 = vunpack.c.l.b16 %v275
      %v584 = vunpack.c.h.b16 %v275
      %v585 = vunpack.c.l.b16 %v276
      %v586 = vpack.c.b16 %v583, %v583
      %v587 = vpack.c.b16 %v584, %v584
      %v588 = vpack.c.b16 %v585, %v585
      %vm589 = vsmask.f32 7424
      %v591 = vshrl.u32 %v437, 16
      %v593 = vshll.u32 %v437, 16
      %v595 = vrot.slane %v593, 1
      %v596 = vor.u32 %v591, %v595
      %v598 = vshll.u32 %v440, 16
      %v600 = vrot.slane %v598, 1
      %v601 = vsel %vm589, %v596, %v600
      %v603 = vshrl.u32 %v438, 16
      %v605 = vshll.u32 %v438, 16
      %v607 = vrot.slane %v605, 1
      %v608 = vor.u32 %v603, %v607
      %v610 = vshll.u32 %v441, 16
      %v612 = vrot.slane %v610, 1
      %v613 = vsel %vm589, %v608, %v612
      %v615 = vshrl.u32 %v439, 16
      %v617 = vshll.u32 %v439, 16
      %v619 = vrot.slane %v617, 1
      %v620 = vor.u32 %v615, %v619
      %v622 = vshll.u32 %v442, 16
      %v624 = vrot.slane %v622, 1
      %v625 = vsel %vm589, %v620, %v624
      %v626 = vshrl.u32 %v440, 16
      %v628 = vor.u32 %v626, %v600
      %v630 = vshll.u32 %v443, 16
      %v632 = vrot.slane %v630, 1
      %v633 = vsel %vm589, %v628, %v632
      %v634 = vshrl.u32 %v441, 16
      %v636 = vor.u32 %v634, %v612
      %v638 = vshll.u32 %v444, 16
      %v640 = vrot.slane %v638, 1
      %v641 = vsel %vm589, %v636, %v640
      %v642 = vshrl.u32 %v442, 16
      %v644 = vor.u32 %v642, %v624
      %v646 = vshll.u32 %v445, 16
      %v648 = vrot.slane %v646, 1
      %v649 = vsel %vm589, %v644, %v648
      %v650 = vshrl.u32 %v443, 16
      %v652 = vor.u32 %v650, %v632
      %v654 = vshll.u32 %v446, 16
      %v656 = vrot.slane %v654, 1
      %v657 = vsel %vm589, %v652, %v656
      %v658 = vshrl.u32 %v444, 16
      %v660 = vor.u32 %v658, %v640
      %v662 = vshll.u32 %v447, 16
      %v664 = vrot.slane %v662, 1
      %v665 = vsel %vm589, %v660, %v664
      %v666 = vshrl.u32 %v445, 16
      %v668 = vor.u32 %v666, %v648
      %v670 = vshll.u32 %v448, 16
      %v672 = vrot.slane %v670, 1
      %v673 = vsel %vm589, %v668, %v672
      %v674 = vshrl.u32 %v446, 16
      %v676 = vor.u32 %v674, %v656
      %v678 = vshll.u32 %v449, 16
      %v680 = vrot.slane %v678, 1
      %v681 = vsel %vm589, %v676, %v680
      %v682 = vshrl.u32 %v447, 16
      %v684 = vor.u32 %v682, %v664
      %v686 = vshll.u32 %v450, 16
      %v688 = vrot.slane %v686, 1
      %v689 = vsel %vm589, %v684, %v688
      %v690 = vshrl.u32 %v448, 16
      %v692 = vor.u32 %v690, %v672
      %v694 = vshll.u32 %v451, 16
      %v696 = vrot.slane %v694, 1
      %v697 = vsel %vm589, %v692, %v696
      %v698 = vshrl.u32 %v449, 16
      %v700 = vor.u32 %v698, %v680
      %v702 = vshll.u32 %v452, 16
      %v704 = vrot.slane %v702, 1
      %v705 = vsel %vm589, %v700, %v704
      %v706 = vshrl.u32 %v450, 16
      %v708 = vor.u32 %v706, %v688
      %v710 = vshll.u32 %v453, 16
      %v712 = vrot.slane %v710, 1
      %v713 = vsel %vm589, %v708, %v712
      %v714 = vshrl.u32 %v451, 16
      %v716 = vor.u32 %v714, %v696
      %v718 = vshll.u32 %v454, 16
      %v720 = vrot.slane %v718, 1
      %v721 = vsel %vm589, %v716, %v720
      %v722 = vshrl.u32 %v452, 16
      %v724 = vor.u32 %v722, %v704
      %v726 = vshll.u32 %v455, 16
      %v728 = vrot.slane %v726, 1
      %v729 = vsel %vm589, %v724, %v728
      %v730 = vshrl.u32 %v453, 16
      %v732 = vor.u32 %v730, %v712
      %v734 = vshll.u32 %v456, 16
      %v736 = vrot.slane %v734, 1
      %v737 = vsel %vm589, %v732, %v736
      %v738 = vshrl.u32 %v454, 16
      %v740 = vor.u32 %v738, %v720
      %v742 = vshll.u32 %v457, 16
      %v744 = vrot.slane %v742, 1
      %v745 = vsel %vm589, %v740, %v744
      %v746 = vshrl.u32 %v455, 16
      %v748 = vor.u32 %v746, %v728
      %v750 = vshll.u32 %v458, 16
      %v752 = vrot.slane %v750, 1
      %v753 = vsel %vm589, %v748, %v752
      %v754 = vshrl.u32 %v456, 16
      %v756 = vor.u32 %v754, %v736
      %v758 = vshll.u32 %v459, 16
      %v760 = vrot.slane %v758, 1
      %v761 = vsel %vm589, %v756, %v760
      %v762 = vshrl.u32 %v457, 16
      %v764 = vor.u32 %v762, %v744
      %v766 = vshll.u32 %v460, 16
      %v768 = vrot.slane %v766, 1
      %v769 = vsel %vm589, %v764, %v768
      %v770 = vshrl.u32 %v458, 16
      %v772 = vor.u32 %v770, %v752
      %v774 = vshll.u32 %v461, 16
      %v776 = vrot.slane %v774, 1
      %v777 = vsel %vm589, %v772, %v776
      %v778 = vshrl.u32 %v459, 16
      %v780 = vor.u32 %v778, %v760
      %v782 = vshll.u32 %v462, 16
      %v784 = vrot.slane %v782, 1
      %v785 = vsel %vm589, %v780, %v784
      %v786 = vshrl.u32 %v460, 16
      %v788 = vor.u32 %v786, %v768
      %v790 = vshll.u32 %v463, 16
      %v792 = vrot.slane %v790, 1
      %v793 = vsel %vm589, %v788, %v792
      %v794 = vshrl.u32 %v461, 16
      %v796 = vor.u32 %v794, %v776
      %v798 = vshll.u32 %v464, 16
      %v800 = vrot.slane %v798, 1
      %v801 = vsel %vm589, %v796, %v800
      %v802 = vshrl.u32 %v462, 16
      %v804 = vor.u32 %v802, %v784
      %v806 = vshll.u32 %v465, 16
      %v808 = vrot.slane %v806, 1
      %v809 = vsel %vm589, %v804, %v808
      %v810 = vshrl.u32 %v463, 16
      %v812 = vor.u32 %v810, %v792
      %v814 = vshll.u32 %v466, 16
      %v816 = vrot.slane %v814, 1
      %v817 = vsel %vm589, %v812, %v816
      %v818 = vshrl.u32 %v464, 16
      %v820 = vor.u32 %v818, %v800
      %v822 = vshll.u32 %v467, 16
      %v824 = vrot.slane %v822, 1
      %v825 = vsel %vm589, %v820, %v824
      %v826 = vshrl.u32 %v465, 16
      %v828 = vor.u32 %v826, %v808
      %v830 = vshll.u32 %v468, 16
      %v832 = vrot.slane %v830, 1
      %v833 = vsel %vm589, %v828, %v832
      %v834 = vshrl.u32 %v466, 16
      %v836 = vor.u32 %v834, %v816
      %v838 = vshll.u32 %v469, 16
      %v840 = vrot.slane %v838, 1
      %v841 = vsel %vm589, %v836, %v840
      %v842 = vshrl.u32 %v467, 16
      %v844 = vor.u32 %v842, %v824
      %v846 = vshll.u32 %v470, 16
      %v848 = vrot.slane %v846, 1
      %v849 = vsel %vm589, %v844, %v848
      %v850 = vshrl.u32 %v468, 16
      %v852 = vor.u32 %v850, %v832
      %v854 = vshll.u32 %v471, 16
      %v856 = vrot.slane %v854, 1
      %v857 = vsel %vm589, %v852, %v856
      %v858 = vshrl.u32 %v469, 16
      %v860 = vor.u32 %v858, %v840
      %v862 = vshll.u32 %v472, 16
      %v864 = vrot.slane %v862, 1
      %v865 = vsel %vm589, %v860, %v864
      %v866 = vshrl.u32 %v470, 16
      %v868 = vor.u32 %v866, %v848
      %v870 = vshll.u32 %v473, 16
      %v872 = vrot.slane %v870, 1
      %v873 = vsel %vm589, %v868, %v872
      %v874 = vshrl.u32 %v471, 16
      %v876 = vor.u32 %v874, %v856
      %v878 = vshll.u32 %v474, 16
      %v880 = vrot.slane %v878, 1
      %v881 = vsel %vm589, %v876, %v880
      %v882 = vshrl.u32 %v472, 16
      %v884 = vor.u32 %v882, %v864
      %v886 = vshll.u32 %v475, 16
      %v888 = vrot.slane %v886, 1
      %v889 = vsel %vm589, %v884, %v888
      %v890 = vshrl.u32 %v473, 16
      %v892 = vor.u32 %v890, %v872
      %v894 = vshll.u32 %v476, 16
      %v896 = vrot.slane %v894, 1
      %v897 = vsel %vm589, %v892, %v896
      %v898 = vshrl.u32 %v474, 16
      %v900 = vor.u32 %v898, %v880
      %v902 = vshll.u32 %v477, 16
      %v904 = vrot.slane %v902, 1
      %v905 = vsel %vm589, %v900, %v904
      %v906 = vshrl.u32 %v475, 16
      %v908 = vor.u32 %v906, %v888
      %v910 = vshll.u32 %v478, 16
      %v912 = vrot.slane %v910, 1
      %v913 = vsel %vm589, %v908, %v912
      %v914 = vshrl.u32 %v476, 16
      %v916 = vor.u32 %v914, %v896
      %v918 = vshll.u32 %v479, 16
      %v920 = vrot.slane %v918, 1
      %v921 = vsel %vm589, %v916, %v920
      %v922 = vshrl.u32 %v477, 16
      %v924 = vor.u32 %v922, %v904
      %v926 = vshll.u32 %v480, 16
      %v928 = vrot.slane %v926, 1
      %v929 = vsel %vm589, %v924, %v928
      %v930 = vshrl.u32 %v478, 16
      %v932 = vor.u32 %v930, %v912
      %v934 = vshll.u32 %v481, 16
      %v936 = vrot.slane %v934, 1
      %v937 = vsel %vm589, %v932, %v936
      %v938 = vshrl.u32 %v479, 16
      %v940 = vor.u32 %v938, %v920
      %v942 = vshll.u32 %v482, 16
      %v944 = vrot.slane %v942, 1
      %v945 = vsel %vm589, %v940, %v944
      %v946 = vshrl.u32 %v480, 16
      %v948 = vor.u32 %v946, %v928
      %v950 = vshll.u32 %v483, 16
      %v952 = vrot.slane %v950, 1
      %v953 = vsel %vm589, %v948, %v952
      %v954 = vshrl.u32 %v481, 16
      %v956 = vor.u32 %v954, %v936
      %v958 = vshll.u32 %v484, 16
      %v960 = vrot.slane %v958, 1
      %v961 = vsel %vm589, %v956, %v960
      %v962 = vshrl.u32 %v482, 16
      %v964 = vor.u32 %v962, %v944
      %v966 = vshll.u32 %v586, 16
      %v968 = vrot.slane %v966, 1
      %v969 = vsel %vm589, %v964, %v968
      %v970 = vshrl.u32 %v483, 16
      %v972 = vor.u32 %v970, %v952
      %v974 = vshll.u32 %v587, 16
      %v976 = vrot.slane %v974, 1
      %v977 = vsel %vm589, %v972, %v976
      %v978 = vshrl.u32 %v484, 16
      %v980 = vor.u32 %v978, %v960
      %v982 = vshll.u32 %v588, 16
      %v984 = vrot.slane %v982, 1
      %v985 = vsel %vm589, %v980, %v984
      %1034 = vst [vmem:[#allocation2 + $0x18] sm:$0xff] %v601
      %1035 = vst [vmem:[#allocation2 + $0x20] sm:$0xff] %v613
      %1036 = vst [vmem:[#allocation2 + $0x28] sm:$0xff] %v625
      %1037 = vst [vmem:[#allocation2 + $0x60] sm:$0xff] %v633
      %1038 = vst [vmem:[#allocation2 + $0x68] sm:$0xff] %v641
      %1039 = vst [vmem:[#allocation2 + $0x70] sm:$0xff] %v649
      %1040 = vst [vmem:[#allocation2 + $0xa8] sm:$0xff] %v657
      %1041 = vst [vmem:[#allocation2 + $0xb0] sm:$0xff] %v665
      %1042 = vst [vmem:[#allocation2 + $0xb8] sm:$0xff] %v673
      %1043 = vst [vmem:[#allocation2 + $0xf0] sm:$0xff] %v681
      %1044 = vst [vmem:[#allocation2 + $0xf8] sm:$0xff] %v689
      %1045 = vst [vmem:[#allocation2 + $0x100] sm:$0xff] %v697
      %1046 = vst [vmem:[#allocation2 + $0x138] sm:$0xff] %v705
      %1047 = vst [vmem:[#allocation2 + $0x140] sm:$0xff] %v713
      %1048 = vst [vmem:[#allocation2 + $0x148] sm:$0xff] %v721
      %1049 = vst [vmem:[#allocation2 + $0x180] sm:$0xff] %v729
      %1050 = vst [vmem:[#allocation2 + $0x188] sm:$0xff] %v737
      %1051 = vst [vmem:[#allocation2 + $0x190] sm:$0xff] %v745
      %1052 = vst [vmem:[#allocation2 + $0x1c8] sm:$0xff] %v753
      %1053 = vst [vmem:[#allocation2 + $0x1d0] sm:$0xff] %v761
      %1054 = vst [vmem:[#allocation2 + $0x1d8] sm:$0xff] %v769
      %1055 = vst [vmem:[#allocation2 + $0x210] sm:$0xff] %v777
      %1056 = vst [vmem:[#allocation2 + $0x218] sm:$0xff] %v785
      %1057 = vst [vmem:[#allocation2 + $0x220] sm:$0xff] %v793
      %1058 = vst [vmem:[#allocation2 + $0x258] sm:$0xff] %v801
      %1059 = vst [vmem:[#allocation2 + $0x260] sm:$0xff] %v809
      %1060 = vst [vmem:[#allocation2 + $0x268] sm:$0xff] %v817
      %1061 = vst [vmem:[#allocation2 + $0x2a0] sm:$0xff] %v825
      %1062 = vst [vmem:[#allocation2 + $0x2a8] sm:$0xff] %v833
      %1063 = vst [vmem:[#allocation2 + $0x2b0] sm:$0xff] %v841
      %1064 = vst [vmem:[#allocation2 + $0x2e8] sm:$0xff] %v849
      %1065 = vst [vmem:[#allocation2 + $0x2f0] sm:$0xff] %v857
      %1066 = vst [vmem:[#allocation2 + $0x2f8] sm:$0xff] %v865
      %1067 = vst [vmem:[#allocation2 + $0x330] sm:$0xff] %v873
      %1068 = vst [vmem:[#allocation2 + $0x338] sm:$0xff] %v881
      %1069 = vst [vmem:[#allocation2 + $0x340] sm:$0xff] %v889
      %1070 = vst [vmem:[#allocation2 + $0x378] sm:$0xff] %v897
      %1071 = vst [vmem:[#allocation2 + $0x380] sm:$0xff] %v905
      %1072 = vst [vmem:[#allocation2 + $0x388] sm:$0xff] %v913
      %1073 = vst [vmem:[#allocation2 + $0x3c0] sm:$0xff] %v921
      %1074 = vst [vmem:[#allocation2 + $0x3c8] sm:$0xff] %v929
      %1075 = vst [vmem:[#allocation2 + $0x3d0] sm:$0xff] %v937
      %1076 = vst [vmem:[#allocation2 + $0x408] sm:$0xff] %v945
      %1077 = vst [vmem:[#allocation2 + $0x410] sm:$0xff] %v953
      %1078 = vst [vmem:[#allocation2 + $0x418] sm:$0xff] %v961
      %1079 = vst [vmem:[#allocation2 + $0x450] sm:$0xff] %v969
      %1080 = vst [vmem:[#allocation2 + $0x458] sm:$0xff] %v977
      %1081 = vst [vmem:[#allocation2 + $0x460] sm:$0xff] %v985
      %vm1082 = vcmask 1046528
      %v1083 = vrot.slane %v437, 1
      %v1084 = vrot.slane %v440, 1
      %v1085 = vsel %vm1082, %v1083, %v1084
      %v1086 = vrot.slane %v438, 1
      %v1087 = vrot.slane %v441, 1
      %v1088 = vsel %vm1082, %v1086, %v1087
      %v1089 = vrot.slane %v439, 1
      %v1090 = vrot.slane %v442, 1
      %v1091 = vsel %vm1082, %v1089, %v1090
      %v1092 = vrot.slane %v443, 1
      %v1093 = vsel %vm1082, %v1084, %v1092
      %v1094 = vrot.slane %v444, 1
      %v1095 = vsel %vm1082, %v1087, %v1094
      %v1096 = vrot.slane %v445, 1
      %v1097 = vsel %vm1082, %v1090, %v1096
      %v1098 = vrot.slane %v446, 1
      %v1099 = vsel %vm1082, %v1092, %v1098
      %v1100 = vrot.slane %v447, 1
      %v1101 = vsel %vm1082, %v1094, %v1100
      %v1102 = vrot.slane %v448, 1
      %v1103 = vsel %vm1082, %v1096, %v1102
      %v1104 = vrot.slane %v449, 1
      %v1105 = vsel %vm1082, %v1098, %v1104
      %v1106 = vrot.slane %v450, 1
      %v1107 = vsel %vm1082, %v1100, %v1106
      %v1108 = vrot.slane %v451, 1
      %v1109 = vsel %vm1082, %v1102, %v1108
      %v1110 = vrot.slane %v452, 1
      %v1111 = vsel %vm1082, %v1104, %v1110
      %v1112 = vrot.slane %v453, 1
      %v1113 = vsel %vm1082, %v1106, %v1112
      %v1114 = vrot.slane %v454, 1
      %v1115 = vsel %vm1082, %v1108, %v1114
      %v1116 = vrot.slane %v455, 1
      %v1117 = vsel %vm1082, %v1110, %v1116
      %v1118 = vrot.slane %v456, 1
      %v1119 = vsel %vm1082, %v1112, %v1118
      %v1120 = vrot.slane %v457, 1
      %v1121 = vsel %vm1082, %v1114, %v1120
      %v1122 = vrot.slane %v458, 1
      %v1123 = vsel %vm1082, %v1116, %v1122
      %v1124 = vrot.slane %v459, 1
      %v1125 = vsel %vm1082, %v1118, %v1124
      %v1126 = vrot.slane %v460, 1
      %v1127 = vsel %vm1082, %v1120, %v1126
      %v1128 = vrot.slane %v461, 1
      %v1129 = vsel %vm1082, %v1122, %v1128
      %v1130 = vrot.slane %v462, 1
      %v1131 = vsel %vm1082, %v1124, %v1130
      %v1132 = vrot.slane %v463, 1
      %v1133 = vsel %vm1082, %v1126, %v1132
      %v1134 = vrot.slane %v464, 1
      %v1135 = vsel %vm1082, %v1128, %v1134
      %v1136 = vrot.slane %v465, 1
      %v1137 = vsel %vm1082, %v1130, %v1136
      %v1138 = vrot.slane %v466, 1
      %v1139 = vsel %vm1082, %v1132, %v1138
      %v1140 = vrot.slane %v467, 1
      %v1141 = vsel %vm1082, %v1134, %v1140
      %v1142 = vrot.slane %v468, 1
      %v1143 = vsel %vm1082, %v1136, %v1142
      %v1144 = vrot.slane %v469, 1
      %v1145 = vsel %vm1082, %v1138, %v1144
      %v1146 = vrot.slane %v470, 1
      %v1147 = vsel %vm1082, %v1140, %v1146
      %v1148 = vrot.slane %v471, 1
      %v1149 = vsel %vm1082, %v1142, %v1148
      %v1150 = vrot.slane %v472, 1
      %v1151 = vsel %vm1082, %v1144, %v1150
      %v1152 = vrot.slane %v473, 1
      %v1153 = vsel %vm1082, %v1146, %v1152
      %v1154 = vrot.slane %v474, 1
      %v1155 = vsel %vm1082, %v1148, %v1154
      %v1156 = vrot.slane %v475, 1
      %v1157 = vsel %vm1082, %v1150, %v1156
      %v1158 = vrot.slane %v476, 1
      %v1159 = vsel %vm1082, %v1152, %v1158
      %v1160 = vrot.slane %v477, 1
      %v1161 = vsel %vm1082, %v1154, %v1160
      %v1162 = vrot.slane %v478, 1
      %v1163 = vsel %vm1082, %v1156, %v1162
      %v1164 = vrot.slane %v479, 1
      %v1165 = vsel %vm1082, %v1158, %v1164
      %v1166 = vrot.slane %v480, 1
      %v1167 = vsel %vm1082, %v1160, %v1166
      %v1168 = vrot.slane %v481, 1
      %v1169 = vsel %vm1082, %v1162, %v1168
      %v1170 = vrot.slane %v482, 1
      %v1171 = vsel %vm1082, %v1164, %v1170
      %v1172 = vrot.slane %v483, 1
      %v1173 = vsel %vm1082, %v1166, %v1172
      %v1174 = vrot.slane %v484, 1
      %v1175 = vsel %vm1082, %v1168, %v1174
      %v1176 = vrot.slane %v586, 1
      %v1177 = vsel %vm1082, %v1170, %v1176
      %v1178 = vrot.slane %v587, 1
      %v1179 = vsel %vm1082, %v1172, %v1178
      %v1180 = vrot.slane %v588, 1
      %v1181 = vsel %vm1082, %v1174, %v1180
      %1230 = vst [vmem:[#allocation2 + $0x30] sm:$0xff] %v1085
      %1231 = vst [vmem:[#allocation2 + $0x38] sm:$0xff] %v1088
      %1232 = vst [vmem:[#allocation2 + $0x40] sm:$0xff] %v1091
      %1233 = vst [vmem:[#allocation2 + $0x78] sm:$0xff] %v1093
      %1234 = vst [vmem:[#allocation2 + $0x80] sm:$0xff] %v1095
      %1235 = vst [vmem:[#allocation2 + $0x88] sm:$0xff] %v1097
      %1236 = vst [vmem:[#allocation2 + $0xc0] sm:$0xff] %v1099
      %1237 = vst [vmem:[#allocation2 + $0xc8] sm:$0xff] %v1101
      %1238 = vst [vmem:[#allocation2 + $0xd0] sm:$0xff] %v1103
      %1239 = vst [vmem:[#allocation2 + $0x108] sm:$0xff] %v1105
      %1240 = vst [vmem:[#allocation2 + $0x110] sm:$0xff] %v1107
      %1241 = vst [vmem:[#allocation2 + $0x118] sm:$0xff] %v1109
      %1242 = vst [vmem:[#allocation2 + $0x150] sm:$0xff] %v1111
      %1243 = vst [vmem:[#allocation2 + $0x158] sm:$0xff] %v1113
      %1244 = vst [vmem:[#allocation2 + $0x160] sm:$0xff] %v1115
      %1245 = vst [vmem:[#allocation2 + $0x198] sm:$0xff] %v1117
      %1246 = vst [vmem:[#allocation2 + $0x1a0] sm:$0xff] %v1119
      %1247 = vst [vmem:[#allocation2 + $0x1a8] sm:$0xff] %v1121
      %1248 = vst [vmem:[#allocation2 + $0x1e0] sm:$0xff] %v1123
      %1249 = vst [vmem:[#allocation2 + $0x1e8] sm:$0xff] %v1125
      %1250 = vst [vmem:[#allocation2 + $0x1f0] sm:$0xff] %v1127
      %1251 = vst [vmem:[#allocation2 + $0x228] sm:$0xff] %v1129
      %1252 = vst [vmem:[#allocation2 + $0x230] sm:$0xff] %v1131
      %1253 = vst [vmem:[#allocation2 + $0x238] sm:$0xff] %v1133
      %1254 = vst [vmem:[#allocation2 + $0x270] sm:$0xff] %v1135
      %1255 = vst [vmem:[#allocation2 + $0x278] sm:$0xff] %v1137
      %1256 = vst [vmem:[#allocation2 + $0x280] sm:$0xff] %v1139
      %1257 = vst [vmem:[#allocation2 + $0x2b8] sm:$0xff] %v1141
      %1258 = vst [vmem:[#allocation2 + $0x2c0] sm:$0xff] %v1143
      %1259 = vst [vmem:[#allocation2 + $0x2c8] sm:$0xff] %v1145
      %1260 = vst [vmem:[#allocation2 + $0x300] sm:$0xff] %v1147
      %1261 = vst [vmem:[#allocation2 + $0x308] sm:$0xff] %v1149
      %1262 = vst [vmem:[#allocation2 + $0x310] sm:$0xff] %v1151
      %1263 = vst [vmem:[#allocation2 + $0x348] sm:$0xff] %v1153
      %1264 = vst [vmem:[#allocation2 + $0x350] sm:$0xff] %v1155
      %1265 = vst [vmem:[#allocation2 + $0x358] sm:$0xff] %v1157
      %1266 = vst [vmem:[#allocation2 + $0x390] sm:$0xff] %v1159
      %1267 = vst [vmem:[#allocation2 + $0x398] sm:$0xff] %v1161
      %1268 = vst [vmem:[#allocation2 + $0x3a0] sm:$0xff] %v1163
      %1269 = vst [vmem:[#allocation2 + $0x3d8] sm:$0xff] %v1165
      %1270 = vst [vmem:[#allocation2 + $0x3e0] sm:$0xff] %v1167
      %1271 = vst [vmem:[#allocation2 + $0x3e8] sm:$0xff] %v1169
      %1272 = vst [vmem:[#allocation2 + $0x420] sm:$0xff] %v1171
      %1273 = vst [vmem:[#allocation2 + $0x428] sm:$0xff] %v1173
      %1274 = vst [vmem:[#allocation2 + $0x430] sm:$0xff] %v1175
      %1275 = vst [vmem:[#allocation2 + $0x468] sm:$0xff] %v1177
      %1276 = vst [vmem:[#allocation2 + $0x470] sm:$0xff] %v1179
      %1277 = vst [vmem:[#allocation2 + $0x478] sm:$0xff] %v1181
      %v1278 = vld [vmem:[#allocation2] sm:$0xff]
      %v1279 = vld [vmem:[#allocation2 + $0x8] sm:$0xff]
      %v1280 = vld [vmem:[#allocation2 + $0x10] sm:$0xff]
      %v1281 = vld [vmem:[#allocation2 + $0x18] sm:$0xff]
      %v1282 = vld [vmem:[#allocation2 + $0x20] sm:$0xff]
      %v1283 = vld [vmem:[#allocation2 + $0x28] sm:$0xff]
      %v1284 = vld [vmem:[#allocation2 + $0x30] sm:$0xff]
      %v1285 = vld [vmem:[#allocation2 + $0x38] sm:$0xff]
      %v1286 = vld [vmem:[#allocation2 + $0x40] sm:$0xff]
      %v1287 = vld [vmem:[#allocation2 + $0x48] sm:$0xff]
      %v1288 = vld [vmem:[#allocation2 + $0x50] sm:$0xff]
      %v1289 = vld [vmem:[#allocation2 + $0x58] sm:$0xff]
      %v1290 = vld [vmem:[#allocation2 + $0x60] sm:$0xff]
      %v1291 = vld [vmem:[#allocation2 + $0x68] sm:$0xff]
      %v1292 = vld [vmem:[#allocation2 + $0x70] sm:$0xff]
      %v1293 = vld [vmem:[#allocation2 + $0x78] sm:$0xff]
      %v1294 = vld [vmem:[#allocation2 + $0x80] sm:$0xff]
      %v1295 = vld [vmem:[#allocation2 + $0x88] sm:$0xff]
      %v1296 = vld [vmem:[#allocation2 + $0x90] sm:$0xff]
      %v1297 = vld [vmem:[#allocation2 + $0x98] sm:$0xff]
      %v1298 = vld [vmem:[#allocation2 + $0xa0] sm:$0xff]
      %v1299 = vld [vmem:[#allocation2 + $0xa8] sm:$0xff]
      %v1300 = vld [vmem:[#allocation2 + $0xb0] sm:$0xff]
      %v1301 = vld [vmem:[#allocation2 + $0xb8] sm:$0xff]
      %v1302 = vld [vmem:[#allocation2 + $0xc0] sm:$0xff]
      %v1303 = vld [vmem:[#allocation2 + $0xc8] sm:$0xff]
      %v1304 = vld [vmem:[#allocation2 + $0xd0] sm:$0xff]
      %v1305 = vld [vmem:[#allocation2 + $0xd8] sm:$0xff]
      %v1306 = vld [vmem:[#allocation2 + $0xe0] sm:$0xff]
      %v1307 = vld [vmem:[#allocation2 + $0xe8] sm:$0xff]
      %v1308 = vld [vmem:[#allocation2 + $0xf0] sm:$0xff]
      %v1309 = vld [vmem:[#allocation2 + $0xf8] sm:$0xff]
      %v1310 = vld [vmem:[#allocation2 + $0x100] sm:$0xff]
      %v1311 = vld [vmem:[#allocation2 + $0x108] sm:$0xff]
      %v1312 = vld [vmem:[#allocation2 + $0x110] sm:$0xff]
      %v1313 = vld [vmem:[#allocation2 + $0x118] sm:$0xff]
      %v1314 = vld [vmem:[#allocation2 + $0x120] sm:$0xff]
      %v1315 = vld [vmem:[#allocation2 + $0x128] sm:$0xff]
      %v1316 = vld [vmem:[#allocation2 + $0x130] sm:$0xff]
      %v1317 = vld [vmem:[#allocation2 + $0x138] sm:$0xff]
      %v1318 = vld [vmem:[#allocation2 + $0x140] sm:$0xff]
      %v1319 = vld [vmem:[#allocation2 + $0x148] sm:$0xff]
      %v1320 = vld [vmem:[#allocation2 + $0x150] sm:$0xff]
      %v1321 = vld [vmem:[#allocation2 + $0x158] sm:$0xff]
      %v1322 = vld [vmem:[#allocation2 + $0x160] sm:$0xff]
      %v1323 = vld [vmem:[#allocation2 + $0x168] sm:$0xff]
      %v1324 = vld [vmem:[#allocation2 + $0x170] sm:$0xff]
      %v1325 = vld [vmem:[#allocation2 + $0x178] sm:$0xff]
      %v1326 = vld [vmem:[#allocation2 + $0x180] sm:$0xff]
      %v1327 = vld [vmem:[#allocation2 + $0x188] sm:$0xff]
      %v1328 = vld [vmem:[#allocation2 + $0x190] sm:$0xff]
      %v1329 = vld [vmem:[#allocation2 + $0x198] sm:$0xff]
      %v1330 = vld [vmem:[#allocation2 + $0x1a0] sm:$0xff]
      %v1331 = vld [vmem:[#allocation2 + $0x1a8] sm:$0xff]
      %v1332 = vld [vmem:[#allocation2 + $0x1b0] sm:$0xff]
      %v1333 = vld [vmem:[#allocation2 + $0x1b8] sm:$0xff]
      %v1334 = vld [vmem:[#allocation2 + $0x1c0] sm:$0xff]
      %v1335 = vld [vmem:[#allocation2 + $0x1c8] sm:$0xff]
      %v1336 = vld [vmem:[#allocation2 + $0x1d0] sm:$0xff]
      %v1337 = vld [vmem:[#allocation2 + $0x1d8] sm:$0xff]
      %v1338 = vld [vmem:[#allocation2 + $0x1e0] sm:$0xff]
      %v1339 = vld [vmem:[#allocation2 + $0x1e8] sm:$0xff]
      %v1340 = vld [vmem:[#allocation2 + $0x1f0] sm:$0xff]
      %v1341 = vld [vmem:[#allocation2 + $0x1f8] sm:$0xff]
      %v1342 = vld [vmem:[#allocation2 + $0x200] sm:$0xff]
      %v1343 = vld [vmem:[#allocation2 + $0x208] sm:$0xff]
      %v1344 = vld [vmem:[#allocation2 + $0x210] sm:$0xff]
      %v1345 = vld [vmem:[#allocation2 + $0x218] sm:$0xff]
      %v1346 = vld [vmem:[#allocation2 + $0x220] sm:$0xff]
      %v1347 = vld [vmem:[#allocation2 + $0x228] sm:$0xff]
      %v1348 = vld [vmem:[#allocation2 + $0x230] sm:$0xff]
      %v1349 = vld [vmem:[#allocation2 + $0x238] sm:$0xff]
      %v1350 = vld [vmem:[#allocation2 + $0x240] sm:$0xff]
      %v1351 = vld [vmem:[#allocation2 + $0x248] sm:$0xff]
      %v1352 = vld [vmem:[#allocation2 + $0x250] sm:$0xff]
      %v1353 = vld [vmem:[#allocation2 + $0x258] sm:$0xff]
      %v1354 = vld [vmem:[#allocation2 + $0x260] sm:$0xff]
      %v1355 = vld [vmem:[#allocation2 + $0x268] sm:$0xff]
      %v1356 = vld [vmem:[#allocation2 + $0x270] sm:$0xff]
      %v1357 = vld [vmem:[#allocation2 + $0x278] sm:$0xff]
      %v1358 = vld [vmem:[#allocation2 + $0x280] sm:$0xff]
      %v1359 = vld [vmem:[#allocation2 + $0x288] sm:$0xff]
      %v1360 = vld [vmem:[#allocation2 + $0x290] sm:$0xff]
      %v1361 = vld [vmem:[#allocation2 + $0x298] sm:$0xff]
      %v1362 = vld [vmem:[#allocation2 + $0x2a0] sm:$0xff]
      %v1363 = vld [vmem:[#allocation2 + $0x2a8] sm:$0xff]
      %v1364 = vld [vmem:[#allocation2 + $0x2b0] sm:$0xff]
      %v1365 = vld [vmem:[#allocation2 + $0x2b8] sm:$0xff]
      %v1366 = vld [vmem:[#allocation2 + $0x2c0] sm:$0xff]
      %v1367 = vld [vmem:[#allocation2 + $0x2c8] sm:$0xff]
      %v1368 = vld [vmem:[#allocation2 + $0x2d0] sm:$0xff]
      %v1369 = vld [vmem:[#allocation2 + $0x2d8] sm:$0xff]
      %v1370 = vld [vmem:[#allocation2 + $0x2e0] sm:$0xff]
      %v1371 = vld [vmem:[#allocation2 + $0x2e8] sm:$0xff]
      %v1372 = vld [vmem:[#allocation2 + $0x2f0] sm:$0xff]
      %v1373 = vld [vmem:[#allocation2 + $0x2f8] sm:$0xff]
      %v1374 = vld [vmem:[#allocation2 + $0x300] sm:$0xff]
      %v1375 = vld [vmem:[#allocation2 + $0x308] sm:$0xff]
      %v1376 = vld [vmem:[#allocation2 + $0x310] sm:$0xff]
      %v1377 = vld [vmem:[#allocation2 + $0x318] sm:$0xff]
      %v1378 = vld [vmem:[#allocation2 + $0x320] sm:$0xff]
      %v1379 = vld [vmem:[#allocation2 + $0x328] sm:$0xff]
      %v1380 = vld [vmem:[#allocation2 + $0x330] sm:$0xff]
      %v1381 = vld [vmem:[#allocation2 + $0x338] sm:$0xff]
      %v1382 = vld [vmem:[#allocation2 + $0x340] sm:$0xff]
      %v1383 = vld [vmem:[#allocation2 + $0x348] sm:$0xff]
      %v1384 = vld [vmem:[#allocation2 + $0x350] sm:$0xff]
      %v1385 = vld [vmem:[#allocation2 + $0x358] sm:$0xff]
      %v1386 = vld [vmem:[#allocation2 + $0x360] sm:$0xff]
      %v1387 = vld [vmem:[#allocation2 + $0x368] sm:$0xff]
      %v1388 = vld [vmem:[#allocation2 + $0x370] sm:$0xff]
      %v1389 = vld [vmem:[#allocation2 + $0x378] sm:$0xff]
      %v1390 = vld [vmem:[#allocation2 + $0x380] sm:$0xff]
      %v1391 = vld [vmem:[#allocation2 + $0x388] sm:$0xff]
      %v1392 = vld [vmem:[#allocation2 + $0x390] sm:$0xff]
      %v1393 = vld [vmem:[#allocation2 + $0x398] sm:$0xff]
      %v1394 = vld [vmem:[#allocation2 + $0x3a0] sm:$0xff]
      %v1395 = vld [vmem:[#allocation2 + $0x3a8] sm:$0xff]
      %v1396 = vld [vmem:[#allocation2 + $0x3b0] sm:$0xff]
      %v1397 = vld [vmem:[#allocation2 + $0x3b8] sm:$0xff]
      %v1398 = vld [vmem:[#allocation2 + $0x3c0] sm:$0xff]
      %v1399 = vld [vmem:[#allocation2 + $0x3c8] sm:$0xff]
      %v1400 = vld [vmem:[#allocation2 + $0x3d0] sm:$0xff]
      %v1401 = vld [vmem:[#allocation2 + $0x3d8] sm:$0xff]
      %v1402 = vld [vmem:[#allocation2 + $0x3e0] sm:$0xff]
      %v1403 = vld [vmem:[#allocation2 + $0x3e8] sm:$0xff]
      %v1404 = vld [vmem:[%s1] sm:$0xff]
      %v1405 = vld [vmem:[%s1 + $0x8] sm:$0xf]
      %v1406 = vld [vmem:[%s1 + $0xc] sm:$0xff]
      %v1407 = vld [vmem:[%s1 + $0x14] sm:$0xf]
      %v1408 = vld [vmem:[%s1 + $0x18] sm:$0xff]
      %v1409 = vld [vmem:[%s1 + $0x20] sm:$0xf]
      %v1410 = vld [vmem:[%s1 + $0x24] sm:$0xff]
      %v1411 = vld [vmem:[%s1 + $0x2c] sm:$0xf]
      %v1412 = vld [vmem:[%s1 + $0x30] sm:$0xff]
      %v1413 = vld [vmem:[%s1 + $0x38] sm:$0xf]
      %v1414 = vld [vmem:[%s1 + $0x3c] sm:$0xff]
      %v1415 = vld [vmem:[%s1 + $0x44] sm:$0xf]
      %v1416 = vld [vmem:[%s1 + $0x48] sm:$0xff]
      %v1417 = vld [vmem:[%s1 + $0x50] sm:$0xf]
      %v1418 = vld [vmem:[%s1 + $0x54] sm:$0xff]
      %v1419 = vld [vmem:[%s1 + $0x5c] sm:$0xf]
      %v1420 = vld [vmem:[%s1 + $0x60] sm:$0xff]
      %v1421 = vld [vmem:[%s1 + $0x68] sm:$0xf]
      %v1422 = vld [vmem:[%s1 + $0x6c] sm:$0xff]
      %v1423 = vld [vmem:[%s1 + $0x74] sm:$0xf]
      %v1424 = vld [vmem:[%s1 + $0x78] sm:$0xff]
      %v1425 = vld [vmem:[%s1 + $0x80] sm:$0xf]
      %v1426 = vld [vmem:[%s1 + $0x84] sm:$0xff]
      %v1427 = vld [vmem:[%s1 + $0x8c] sm:$0xf]
      %v1428 = vld [vmem:[%s1 + $0x90] sm:$0xff]
      %v1429 = vld [vmem:[%s1 + $0x98] sm:$0xf]
      %v1430 = vld [vmem:[%s1 + $0x9c] sm:$0xff]
      %v1431 = vld [vmem:[%s1 + $0xa4] sm:$0xf]
      %v1432 = vld [vmem:[%s1 + $0xa8] sm:$0xff]
      %v1433 = vld [vmem:[%s1 + $0xb0] sm:$0xf]
      %v1434 = vld [vmem:[%s1 + $0xb4] sm:$0xff]
      %v1435 = vld [vmem:[%s1 + $0xbc] sm:$0xf]
      %v1436 = vld [vmem:[%s1 + $0xc0] sm:$0xff]
      %v1437 = vld [vmem:[%s1 + $0xc8] sm:$0xf]
      %v1438 = vld [vmem:[%s1 + $0xcc] sm:$0xff]
      %v1439 = vld [vmem:[%s1 + $0xd4] sm:$0xf]
      %v1440 = vld [vmem:[%s1 + $0xd8] sm:$0xff]
      %v1441 = vld [vmem:[%s1 + $0xe0] sm:$0xf]
      %v1442 = vld [vmem:[%s1 + $0xe4] sm:$0xff]
      %v1443 = vld [vmem:[%s1 + $0xec] sm:$0xf]
      %v1444 = vld [vmem:[%s1 + $0xf0] sm:$0xff]
      %v1445 = vld [vmem:[%s1 + $0xf8] sm:$0xf]
      %v1446 = vld [vmem:[%s1 + $0xfc] sm:$0xff]
      %v1447 = vld [vmem:[%s1 + $0x104] sm:$0xf]
      %v1448 = vld [vmem:[%s1 + $0x108] sm:$0xff]
      %v1449 = vld [vmem:[%s1 + $0x110] sm:$0xf]
      %v1450 = vld [vmem:[%s1 + $0x114] sm:$0xff]
      %v1451 = vld [vmem:[%s1 + $0x11c] sm:$0xf]
      %v1452 = vld [vmem:[%s1 + $0x120] sm:$0xff]
      %v1453 = vld [vmem:[%s1 + $0x128] sm:$0xf]
      %v1454 = vld [vmem:[%s1 + $0x12c] sm:$0xff]
      %v1455 = vld [vmem:[%s1 + $0x134] sm:$0xf]
      %v1456 = vld [vmem:[%s1 + $0x138] sm:$0xff]
      %v1457 = vld [vmem:[%s1 + $0x140] sm:$0xf]
      %v1458 = vld [vmem:[%s1 + $0x144] sm:$0xff]
      %v1459 = vld [vmem:[%s1 + $0x14c] sm:$0xf]
      %v1460 = vld [vmem:[%s1 + $0x150] sm:$0xff]
      %v1461 = vld [vmem:[%s1 + $0x158] sm:$0xf]
      %v1462 = vld [vmem:[%s1 + $0x15c] sm:$0xff]
      %v1463 = vld [vmem:[%s1 + $0x164] sm:$0xf]
      %v1464 = vld [vmem:[%s1 + $0x168] sm:$0xff]
      %v1465 = vld [vmem:[%s1 + $0x170] sm:$0xf]
      %v1466 = vld [vmem:[%s1 + $0x174] sm:$0xff]
      %v1467 = vld [vmem:[%s1 + $0x17c] sm:$0xf]
      %v1468 = vld [vmem:[%s1 + $0x180] sm:$0xff]
      %v1469 = vld [vmem:[%s1 + $0x188] sm:$0xf]
      %v1470 = vld [vmem:[%s1 + $0x18c] sm:$0xff]
      %v1471 = vld [vmem:[%s1 + $0x194] sm:$0xf]
      %v1472 = vld [vmem:[%s1 + $0x198] sm:$0xff]
      %v1473 = vld [vmem:[%s1 + $0x1a0] sm:$0xf]
      %v1474 = vld [vmem:[%s1 + $0x1a4] sm:$0xff]
      %v1475 = vld [vmem:[%s1 + $0x1ac] sm:$0xf]
      %v1476 = vld [vmem:[%s1 + $0x1b0] sm:$0xff]
      %v1477 = vld [vmem:[%s1 + $0x1b8] sm:$0xf]
      %v1478 = vld [vmem:[%s1 + $0x1bc] sm:$0xff]
      %v1479 = vld [vmem:[%s1 + $0x1c4] sm:$0xf]
      %v1480 = vld [vmem:[%s1 + $0x1c8] sm:$0xff]
      %v1481 = vld [vmem:[%s1 + $0x1d0] sm:$0xf]
      %v1482 = vld [vmem:[%s1 + $0x1d4] sm:$0xff]
      %v1483 = vld [vmem:[%s1 + $0x1dc] sm:$0xf]
      %v1484 = vld [vmem:[%s1 + $0x1e0] sm:$0xff]
      %v1485 = vld [vmem:[%s1 + $0x1e8] sm:$0xf]
      %v1486 = vld [vmem:[%s1 + $0x1ec] sm:$0xff]
      %v1487 = vld [vmem:[%s1 + $0x1f4] sm:$0xf]
      %v1488 = vld [vmem:[%s1 + $0x1f8] sm:$0xff]
      %v1489 = vld [vmem:[%s1 + $0x200] sm:$0xf]
      %v1490 = vld [vmem:[%s1 + $0x204] sm:$0xff]
      %v1491 = vld [vmem:[%s1 + $0x20c] sm:$0xf]
      %v1492 = vld [vmem:[%s1 + $0x210] sm:$0xff]
      %v1493 = vld [vmem:[%s1 + $0x218] sm:$0xf]
      %v1494 = vld [vmem:[%s1 + $0x21c] sm:$0xff]
      %v1495 = vld [vmem:[%s1 + $0x224] sm:$0xf]
      %v1496 = vld [vmem:[%s1 + $0x228] sm:$0xff]
      %v1497 = vld [vmem:[%s1 + $0x230] sm:$0xf]
      %v1498 = vld [vmem:[%s1 + $0x234] sm:$0xff]
      %v1499 = vld [vmem:[%s1 + $0x23c] sm:$0xf]
      %v1500 = vld [vmem:[%s1 + $0x240] sm:$0xff]
      %v1501 = vld [vmem:[%s1 + $0x248] sm:$0xf]
      %v1502 = vld [vmem:[%s1 + $0x24c] sm:$0xff]
      %v1503 = vld [vmem:[%s1 + $0x254] sm:$0xf]
      %v1504 = vld [vmem:[%s1 + $0x258] sm:$0xff]
      %v1505 = vld [vmem:[%s1 + $0x260] sm:$0xf]
      %v1506 = vld [vmem:[%s1 + $0x264] sm:$0xff]
      %v1507 = vld [vmem:[%s1 + $0x26c] sm:$0xf]
      %v1508 = vld [vmem:[%s1 + $0x270] sm:$0xff]
      %v1509 = vld [vmem:[%s1 + $0x278] sm:$0xf]
      %v1510 = vld [vmem:[%s1 + $0x27c] sm:$0xff]
      %v1511 = vld [vmem:[%s1 + $0x284] sm:$0xf]
      %v1512 = vld [vmem:[%s1 + $0x288] sm:$0xff]
      %v1513 = vld [vmem:[%s1 + $0x290] sm:$0xf]
      %v1514 = vld [vmem:[%s1 + $0x294] sm:$0xff]
      %v1515 = vld [vmem:[%s1 + $0x29c] sm:$0xf]
      %v1516 = vld [vmem:[%s1 + $0x2a0] sm:$0xff]
      %v1517 = vld [vmem:[%s1 + $0x2a8] sm:$0xf]
      %v1518 = vld [vmem:[%s1 + $0x2ac] sm:$0xff]
      %v1519 = vld [vmem:[%s1 + $0x2b4] sm:$0xf]
      %v1520 = vld [vmem:[%s1 + $0x2b8] sm:$0xff]
      %v1521 = vld [vmem:[%s1 + $0x2c0] sm:$0xf]
      %v1522 = vld [vmem:[%s1 + $0x2c4] sm:$0xff]
      %v1523 = vld [vmem:[%s1 + $0x2cc] sm:$0xf]
      %v1524 = vld [vmem:[%s1 + $0x2d0] sm:$0xff]
      %v1525 = vld [vmem:[%s1 + $0x2d8] sm:$0xf]
      %v1526 = vld [vmem:[%s1 + $0x2dc] sm:$0xff]
      %v1527 = vld [vmem:[%s1 + $0x2e4] sm:$0xf]
      %v1528 = vld [vmem:[%s1 + $0x2e8] sm:$0xff]
      %v1529 = vld [vmem:[%s1 + $0x2f0] sm:$0xf]
      %v1530 = vld [vmem:[%s1 + $0x2f4] sm:$0xff]
      %v1531 = vld [vmem:[%s1 + $0x2fc] sm:$0xf]
      %v1532 = vld [vmem:[%s1 + $0x300] sm:$0xff]
      %v1533 = vld [vmem:[%s1 + $0x308] sm:$0xf]
      %v1534 = vld [vmem:[%s1 + $0x30c] sm:$0xff]
      %v1535 = vld [vmem:[%s1 + $0x314] sm:$0xf]
      %v1536 = vld [vmem:[%s1 + $0x318] sm:$0xff]
      %v1537 = vld [vmem:[%s1 + $0x320] sm:$0xf]
      %v1538 = vld [vmem:[%s1 + $0x324] sm:$0xff]
      %v1539 = vld [vmem:[%s1 + $0x32c] sm:$0xf]
      %v1540 = vld [vmem:[%s1 + $0x330] sm:$0xff]
      %v1541 = vld [vmem:[%s1 + $0x338] sm:$0xf]
      %v1542 = vld [vmem:[%s1 + $0x33c] sm:$0xff]
      %v1543 = vld [vmem:[%s1 + $0x344] sm:$0xf]
      %v1544 = vld [vmem:[%s1 + $0x348] sm:$0xff]
      %v1545 = vld [vmem:[%s1 + $0x350] sm:$0xf]
      %v1546 = vld [vmem:[%s1 + $0x354] sm:$0xff]
      %v1547 = vld [vmem:[%s1 + $0x35c] sm:$0xf]
      %v1548 = vld [vmem:[%s1 + $0x360] sm:$0xff]
      %v1549 = vld [vmem:[%s1 + $0x368] sm:$0xf]
      %v1550 = vld [vmem:[%s1 + $0x36c] sm:$0xff]
      %v1551 = vld [vmem:[%s1 + $0x374] sm:$0xf]
      %v1552 = vld [vmem:[%s1 + $0x378] sm:$0xff]
      %v1553 = vld [vmem:[%s1 + $0x380] sm:$0xf]
      %v1554 = vld [vmem:[%s1 + $0x384] sm:$0xff]
      %v1555 = vld [vmem:[%s1 + $0x38c] sm:$0xf]
      %v1556 = vld [vmem:[%s1 + $0x390] sm:$0xff]
      %v1557 = vld [vmem:[%s1 + $0x398] sm:$0xf]
      %v1558 = vld [vmem:[%s1 + $0x39c] sm:$0xff]
      %v1559 = vld [vmem:[%s1 + $0x3a4] sm:$0xf]
      %v1560 = vld [vmem:[%s1 + $0x3a8] sm:$0xff]
      %v1561 = vld [vmem:[%s1 + $0x3b0] sm:$0xf]
      %v1562 = vld [vmem:[%s1 + $0x3b4] sm:$0xff]
      %v1563 = vld [vmem:[%s1 + $0x3bc] sm:$0xf]
      %v1564 = vld [vmem:[%s1 + $0x3c0] sm:$0xff]
      %v1565 = vld [vmem:[%s1 + $0x3c8] sm:$0xf]
      %v1566 = vld [vmem:[%s1 + $0x3cc] sm:$0xff]
      %v1567 = vld [vmem:[%s1 + $0x3d4] sm:$0xf]
      %v1568 = vld [vmem:[%s1 + $0x3d8] sm:$0xff]
      %v1569 = vld [vmem:[%s1 + $0x3e0] sm:$0xf]
      %v1570 = vld [vmem:[%s1 + $0x3e4] sm:$0xff]
      %v1571 = vld [vmem:[%s1 + $0x3ec] sm:$0xf]
      %v1572 = vld [vmem:[%s1 + $0x3f0] sm:$0xff]
      %v1573 = vld [vmem:[%s1 + $0x3f8] sm:$0xf]
      %v1574 = vld [vmem:[%s1 + $0x3fc] sm:$0xff]
      %v1575 = vld [vmem:[%s1 + $0x404] sm:$0xf]
      %v1576 = vld [vmem:[%s1 + $0x408] sm:$0xff]
      %v1577 = vld [vmem:[%s1 + $0x410] sm:$0xf]
      %v1578 = vld [vmem:[%s1 + $0x414] sm:$0xff]
      %v1579 = vld [vmem:[%s1 + $0x41c] sm:$0xf]
      %v1580 = vld [vmem:[%s1 + $0x420] sm:$0xff]
      %v1581 = vld [vmem:[%s1 + $0x428] sm:$0xf]
      %v1582 = vld [vmem:[%s1 + $0x42c] sm:$0xff]
      %v1583 = vld [vmem:[%s1 + $0x434] sm:$0xf]
      %v1584 = vld [vmem:[%s1 + $0x438] sm:$0xff]
      %v1585 = vld [vmem:[%s1 + $0x440] sm:$0xf]
      %v1586 = vld [vmem:[%s1 + $0x444] sm:$0xff]
      %v1587 = vld [vmem:[%s1 + $0x44c] sm:$0xf]
      %v1588 = vld [vmem:[%s1 + $0x450] sm:$0xff]
      %v1589 = vld [vmem:[%s1 + $0x458] sm:$0xf]
      %v1590 = vld [vmem:[%s1 + $0x45c] sm:$0xff]
      %v1591 = vld [vmem:[%s1 + $0x464] sm:$0xf]
      %v1592 = vld [vmem:[%s1 + $0x468] sm:$0xff]
      %v1593 = vld [vmem:[%s1 + $0x470] sm:$0xf]
      %v1594 = vld [vmem:[%s1 + $0x474] sm:$0xff]
      %v1595 = vld [vmem:[%s1 + $0x47c] sm:$0xf]
      %v1596 = vld [vmem:[%s1 + $0x480] sm:$0xff]
      %v1597 = vld [vmem:[%s1 + $0x488] sm:$0xf]
      %v1598 = vld [vmem:[%s1 + $0x48c] sm:$0xff]
      %v1599 = vld [vmem:[%s1 + $0x494] sm:$0xf]
      %v1600 = vld [vmem:[%s1 + $0x498] sm:$0xff]
      %v1601 = vld [vmem:[%s1 + $0x4a0] sm:$0xf]
      %v1602 = vld [vmem:[%s1 + $0x4a4] sm:$0xff]
      %v1603 = vld [vmem:[%s1 + $0x4ac] sm:$0xf]
      %v1604 = vld [vmem:[%s1 + $0x4b0] sm:$0xff]
      %v1605 = vld [vmem:[%s1 + $0x4b8] sm:$0xf]
      %v1606 = vld [vmem:[%s1 + $0x4bc] sm:$0xff]
      %v1607 = vld [vmem:[%s1 + $0x4c4] sm:$0xf]
      %v1608 = vld [vmem:[%s1 + $0x4c8] sm:$0xff]
      %v1609 = vld [vmem:[%s1 + $0x4d0] sm:$0xf]
      %v1610 = vld [vmem:[%s1 + $0x4d4] sm:$0xff]
      %v1611 = vld [vmem:[%s1 + $0x4dc] sm:$0xf]
      %v1612 = vld [vmem:[%s1 + $0x4e0] sm:$0xff]
      %v1613 = vld [vmem:[%s1 + $0x4e8] sm:$0xf]
      %v1614 = vld [vmem:[%s1 + $0x4ec] sm:$0xff]
      %v1615 = vld [vmem:[%s1 + $0x4f4] sm:$0xf]
      %v1616 = vld [vmem:[%s1 + $0x4f8] sm:$0xff]
      %v1617 = vld [vmem:[%s1 + $0x500] sm:$0xf]
      %v1618 = vld [vmem:[%s1 + $0x504] sm:$0xff]
      %v1619 = vld [vmem:[%s1 + $0x50c] sm:$0xf]
      %v1620 = vld [vmem:[%s1 + $0x510] sm:$0xff]
      %v1621 = vld [vmem:[%s1 + $0x518] sm:$0xf]
      %v1622 = vld [vmem:[%s1 + $0x51c] sm:$0xff]
      %v1623 = vld [vmem:[%s1 + $0x524] sm:$0xf]
      %v1624 = vld [vmem:[%s1 + $0x528] sm:$0xff]
      %v1625 = vld [vmem:[%s1 + $0x530] sm:$0xf]
      %v1626 = vld [vmem:[%s1 + $0x534] sm:$0xff]
      %v1627 = vld [vmem:[%s1 + $0x53c] sm:$0xf]
      %v1628 = vld [vmem:[%s1 + $0x540] sm:$0xff]
      %v1629 = vld [vmem:[%s1 + $0x548] sm:$0xf]
      %v1630 = vld [vmem:[%s1 + $0x54c] sm:$0xff]
      %v1631 = vld [vmem:[%s1 + $0x554] sm:$0xf]
      %v1632 = vld [vmem:[%s1 + $0x558] sm:$0xff]
      %v1633 = vld [vmem:[%s1 + $0x560] sm:$0xf]
      %v1634 = vld [vmem:[%s1 + $0x564] sm:$0xff]
      %v1635 = vld [vmem:[%s1 + $0x56c] sm:$0xf]
      %v1636 = vld [vmem:[%s1 + $0x570] sm:$0xff]
      %v1637 = vld [vmem:[%s1 + $0x578] sm:$0xf]
      %v1638 = vld [vmem:[%s1 + $0x57c] sm:$0xff]
      %v1639 = vld [vmem:[%s1 + $0x584] sm:$0xf]
      %v1640 = vld [vmem:[%s1 + $0x588] sm:$0xff]
      %v1641 = vld [vmem:[%s1 + $0x590] sm:$0xf]
      %v1642 = vld [vmem:[%s1 + $0x594] sm:$0xff]
      %v1643 = vld [vmem:[%s1 + $0x59c] sm:$0xf]
      %v1644 = vld [vmem:[%s1 + $0x5a0] sm:$0xff]
      %v1645 = vld [vmem:[%s1 + $0x5a8] sm:$0xf]
      %v1646 = vld [vmem:[%s1 + $0x5ac] sm:$0xff]
      %v1647 = vld [vmem:[%s1 + $0x5b4] sm:$0xf]
      %v1648 = vld [vmem:[%s1 + $0x5b8] sm:$0xff]
      %v1649 = vld [vmem:[%s1 + $0x5c0] sm:$0xf]
      %v1650 = vld [vmem:[%s1 + $0x5c4] sm:$0xff]
      %v1651 = vld [vmem:[%s1 + $0x5cc] sm:$0xf]
      %v1652 = vld [vmem:[%s1 + $0x5d0] sm:$0xff]
      %v1653 = vld [vmem:[%s1 + $0x5d8] sm:$0xf]
      %v1654 = vld [vmem:[%s1 + $0x5dc] sm:$0xff]
      %v1655 = vld [vmem:[%s1 + $0x5e4] sm:$0xf]
      %v1656 = vld [vmem:[%s1 + $0x5e8] sm:$0xff]
      %v1657 = vld [vmem:[%s1 + $0x5f0] sm:$0xf]
      %v1658 = vld [vmem:[%s1 + $0x5f4] sm:$0xff]
      %v1659 = vld [vmem:[%s1 + $0x5fc] sm:$0xf]
      %v1660 = vld [vmem:[%s1 + $0x600] sm:$0xff]
      %v1661 = vld [vmem:[%s1 + $0x608] sm:$0xf]
      %v1662 = vld [vmem:[%s1 + $0x60c] sm:$0xff]
      %v1663 = vld [vmem:[%s1 + $0x614] sm:$0xf]
      %v1664 = vld [vmem:[%s1 + $0x618] sm:$0xff]
      %v1665 = vld [vmem:[%s1 + $0x620] sm:$0xf]
      %v1666 = vld [vmem:[%s1 + $0x624] sm:$0xff]
      %v1667 = vld [vmem:[%s1 + $0x62c] sm:$0xf]
      %v1668 = vld [vmem:[%s1 + $0x630] sm:$0xff]
      %v1669 = vld [vmem:[%s1 + $0x638] sm:$0xf]
      %v1670 = vld [vmem:[%s1 + $0x63c] sm:$0xff]
      %v1671 = vld [vmem:[%s1 + $0x644] sm:$0xf]
      %v1672 = vld [vmem:[%s1 + $0x648] sm:$0xff]
      %v1673 = vld [vmem:[%s1 + $0x650] sm:$0xf]
      %v1674 = vld [vmem:[%s1 + $0x654] sm:$0xff]
      %v1675 = vld [vmem:[%s1 + $0x65c] sm:$0xf]
      %v1676 = vld [vmem:[%s1 + $0x660] sm:$0xff]
      %v1677 = vld [vmem:[%s1 + $0x668] sm:$0xf]
      %v1678 = vld [vmem:[%s1 + $0x66c] sm:$0xff]
      %v1679 = vld [vmem:[%s1 + $0x674] sm:$0xf]
      %v1680 = vld [vmem:[%s1 + $0x678] sm:$0xff]
      %v1681 = vld [vmem:[%s1 + $0x680] sm:$0xf]
      %v1682 = vld [vmem:[%s1 + $0x684] sm:$0xff]
      %v1683 = vld [vmem:[%s1 + $0x68c] sm:$0xf]
      %v1684 = vld [vmem:[%s1 + $0x690] sm:$0xff]
      %v1685 = vld [vmem:[%s1 + $0x698] sm:$0xf]
      %v1686 = vld [vmem:[%s1 + $0x69c] sm:$0xff]
      %v1687 = vld [vmem:[%s1 + $0x6a4] sm:$0xf]
      %v1688 = vld [vmem:[%s1 + $0x6a8] sm:$0xff]
      %v1689 = vld [vmem:[%s1 + $0x6b0] sm:$0xf]
      %v1690 = vld [vmem:[%s1 + $0x6b4] sm:$0xff]
      %v1691 = vld [vmem:[%s1 + $0x6bc] sm:$0xf]
      %v1692 = vld [vmem:[#allocation2 + $0x3f0] sm:$0xff]
      %v1693 = vld [vmem:[#allocation2 + $0x3f8] sm:$0xff]
      %v1694 = vld [vmem:[#allocation2 + $0x400] sm:$0xff]
      %v1695 = vld [vmem:[#allocation2 + $0x408] sm:$0xff]
      %v1696 = vld [vmem:[#allocation2 + $0x410] sm:$0xff]
      %v1697 = vld [vmem:[#allocation2 + $0x418] sm:$0xff]
      %v1698 = vld [vmem:[#allocation2 + $0x420] sm:$0xff]
      %v1699 = vld [vmem:[#allocation2 + $0x428] sm:$0xff]
      %v1700 = vld [vmem:[#allocation2 + $0x430] sm:$0xff]
      %s1701 = scalar_lea.vmem %s1, 1728
      %v1702 = vld [vmem:[%s1701] sm:$0xff]
      %v1703 = vld [vmem:[%s1701 + $0x8] sm:$0xf]
      %v1704 = vld [vmem:[%s1701 + $0xc] sm:$0xff]
      %v1705 = vld [vmem:[%s1701 + $0x14] sm:$0xf]
      %v1706 = vld [vmem:[%s1701 + $0x18] sm:$0xff]
      %v1707 = vld [vmem:[%s1701 + $0x20] sm:$0xf]
      %v1708 = vld [vmem:[%s1701 + $0x24] sm:$0xff]
      %v1709 = vld [vmem:[%s1701 + $0x2c] sm:$0xf]
      %v1710 = vld [vmem:[%s1701 + $0x30] sm:$0xff]
      %v1711 = vld [vmem:[%s1701 + $0x38] sm:$0xf]
      %v1712 = vld [vmem:[%s1701 + $0x3c] sm:$0xff]
      %v1713 = vld [vmem:[%s1701 + $0x44] sm:$0xf]
      %v1714 = vld [vmem:[%s1701 + $0x48] sm:$0xff]
      %v1715 = vld [vmem:[%s1701 + $0x50] sm:$0xf]
      %v1716 = vld [vmem:[%s1701 + $0x54] sm:$0xff]
      %v1717 = vld [vmem:[%s1701 + $0x5c] sm:$0xf]
      %v1718 = vld [vmem:[%s1701 + $0x60] sm:$0xff]
      %v1719 = vld [vmem:[%s1701 + $0x68] sm:$0xf]
      %v1720 = vld [vmem:[%s1701 + $0x6c] sm:$0xff]
      %v1721 = vld [vmem:[%s1701 + $0x74] sm:$0xf]
      %v1722 = vld [vmem:[%s1701 + $0x78] sm:$0xff]
      %v1723 = vld [vmem:[%s1701 + $0x80] sm:$0xf]
      %v1724 = vld [vmem:[%s1701 + $0x84] sm:$0xff]
      %v1725 = vld [vmem:[%s1701 + $0x8c] sm:$0xf]
      %v1726 = vld [vmem:[%s1701 + $0x90] sm:$0xff]
      %v1727 = vld [vmem:[%s1701 + $0x98] sm:$0xf]
      %v1728 = vld [vmem:[%s1701 + $0x9c] sm:$0xff]
      %v1729 = vld [vmem:[%s1701 + $0xa4] sm:$0xf]
      %v1730 = vld [vmem:[%s1701 + $0xa8] sm:$0xff]
      %v1731 = vld [vmem:[%s1701 + $0xb0] sm:$0xf]
      %v1732 = vld [vmem:[%s1701 + $0xb4] sm:$0xff]
      %v1733 = vld [vmem:[%s1701 + $0xbc] sm:$0xf]
      %v1734 = vld [vmem:[%s1701 + $0xc0] sm:$0xff]
      %v1735 = vld [vmem:[%s1701 + $0xc8] sm:$0xf]
      %v1736 = vld [vmem:[%s1701 + $0xcc] sm:$0xff]
      %v1737 = vld [vmem:[%s1701 + $0xd4] sm:$0xf]
      %v1738 = vld [vmem:[%s1701 + $0xd8] sm:$0xff]
      %v1739 = vld [vmem:[%s1701 + $0xe0] sm:$0xf]
      %v1740 = vld [vmem:[%s1701 + $0xe4] sm:$0xff]
      %v1741 = vld [vmem:[%s1701 + $0xec] sm:$0xf]
      %v1742 = vld [vmem:[%s1701 + $0xf0] sm:$0xff]
      %v1743 = vld [vmem:[%s1701 + $0xf8] sm:$0xf]
      %v1744 = vld [vmem:[%s1701 + $0xfc] sm:$0xff]
      %v1745 = vld [vmem:[%s1701 + $0x104] sm:$0xf]
      %v1746 = vld [vmem:[%s1701 + $0x108] sm:$0xff]
      %v1747 = vld [vmem:[%s1701 + $0x110] sm:$0xf]
      %v1748 = vld [vmem:[%s1701 + $0x114] sm:$0xff]
      %v1749 = vld [vmem:[%s1701 + $0x11c] sm:$0xf]
      %v1750 = vld [vmem:[%s1701 + $0x120] sm:$0xff]
      %v1751 = vld [vmem:[%s1701 + $0x128] sm:$0xf]
      %v1752 = vld [vmem:[%s1701 + $0x12c] sm:$0xff]
      %v1753 = vld [vmem:[%s1701 + $0x134] sm:$0xf]
      %v1754 = vld [vmem:[%s1701 + $0x138] sm:$0xff]
      %v1755 = vld [vmem:[%s1701 + $0x140] sm:$0xf]
      %v1756 = vld [vmem:[%s1701 + $0x144] sm:$0xff]
      %v1757 = vld [vmem:[%s1701 + $0x14c] sm:$0xf]
      %v1758 = vld [vmem:[%s1701 + $0x150] sm:$0xff]
      %v1759 = vld [vmem:[%s1701 + $0x158] sm:$0xf]
      %v1760 = vld [vmem:[%s1701 + $0x15c] sm:$0xff]
      %v1761 = vld [vmem:[%s1701 + $0x164] sm:$0xf]
      %v1762 = vld [vmem:[%s1701 + $0x168] sm:$0xff]
      %v1763 = vld [vmem:[%s1701 + $0x170] sm:$0xf]
      %v1764 = vld [vmem:[%s1701 + $0x174] sm:$0xff]
      %v1765 = vld [vmem:[%s1701 + $0x17c] sm:$0xf]
      %v1766 = vld [vmem:[%s1701 + $0x180] sm:$0xff]
      %v1767 = vld [vmem:[%s1701 + $0x188] sm:$0xf]
      %v1768 = vld [vmem:[%s1701 + $0x18c] sm:$0xff]
      %v1769 = vld [vmem:[%s1701 + $0x194] sm:$0xf]
      %v1770 = vld [vmem:[%s1701 + $0x198] sm:$0xff]
      %v1771 = vld [vmem:[%s1701 + $0x1a0] sm:$0xf]
      %v1772 = vld [vmem:[%s1701 + $0x1a4] sm:$0xff]
      %v1773 = vld [vmem:[%s1701 + $0x1ac] sm:$0xf]
      %v1774 = vld [vmem:[%s1701 + $0x1b0] sm:$0xff]
      %v1775 = vld [vmem:[%s1701 + $0x1b8] sm:$0xf]
      %v1776 = vld [vmem:[%s1701 + $0x1bc] sm:$0xff]
      %v1777 = vld [vmem:[%s1701 + $0x1c4] sm:$0xf]
      %v1778 = vld [vmem:[%s1701 + $0x1c8] sm:$0xff]
      %v1779 = vld [vmem:[%s1701 + $0x1d0] sm:$0xf]
      %v1780 = vld [vmem:[%s1701 + $0x1d4] sm:$0xff]
      %v1781 = vld [vmem:[%s1701 + $0x1dc] sm:$0xf]
      %v1782 = vld [vmem:[%s1701 + $0x1e0] sm:$0xff]
      %v1783 = vld [vmem:[%s1701 + $0x1e8] sm:$0xf]
      %v1784 = vld [vmem:[%s1701 + $0x1ec] sm:$0xff]
      %v1785 = vld [vmem:[%s1701 + $0x1f4] sm:$0xf]
      %v1786 = vld [vmem:[%s1701 + $0x1f8] sm:$0xff]
      %v1787 = vld [vmem:[%s1701 + $0x200] sm:$0xf]
      %v1788 = vld [vmem:[%s1701 + $0x204] sm:$0xff]
      %v1789 = vld [vmem:[%s1701 + $0x20c] sm:$0xf]
      %v1790 = vld [vmem:[%s1701 + $0x210] sm:$0xff]
      %v1791 = vld [vmem:[%s1701 + $0x218] sm:$0xf]
      %v1792 = vld [vmem:[%s1701 + $0x21c] sm:$0xff]
      %v1793 = vld [vmem:[%s1701 + $0x224] sm:$0xf]
      %v1794 = vld [vmem:[%s1701 + $0x228] sm:$0xff]
      %v1795 = vld [vmem:[%s1701 + $0x230] sm:$0xf]
      %v1796 = vld [vmem:[%s1701 + $0x234] sm:$0xff]
      %v1797 = vld [vmem:[%s1701 + $0x23c] sm:$0xf]
      %v1798 = vld [vmem:[%s1701 + $0x240] sm:$0xff]
      %v1799 = vld [vmem:[%s1701 + $0x248] sm:$0xf]
      %v1800 = vld [vmem:[%s1701 + $0x24c] sm:$0xff]
      %v1801 = vld [vmem:[%s1701 + $0x254] sm:$0xf]
      %v1802 = vld [vmem:[%s1701 + $0x258] sm:$0xff]
      %v1803 = vld [vmem:[%s1701 + $0x260] sm:$0xf]
      %v1804 = vld [vmem:[%s1701 + $0x264] sm:$0xff]
      %v1805 = vld [vmem:[%s1701 + $0x26c] sm:$0xf]
      %v1806 = vld [vmem:[%s1701 + $0x270] sm:$0xff]
      %v1807 = vld [vmem:[%s1701 + $0x278] sm:$0xf]
      %v1808 = vld [vmem:[%s1701 + $0x27c] sm:$0xff]
      %v1809 = vld [vmem:[%s1701 + $0x284] sm:$0xf]
      %v1810 = vld [vmem:[%s1701 + $0x288] sm:$0xff]
      %v1811 = vld [vmem:[%s1701 + $0x290] sm:$0xf]
      %v1812 = vld [vmem:[%s1701 + $0x294] sm:$0xff]
      %v1813 = vld [vmem:[%s1701 + $0x29c] sm:$0xf]
      %v1814 = vld [vmem:[%s1701 + $0x2a0] sm:$0xff]
      %v1815 = vld [vmem:[%s1701 + $0x2a8] sm:$0xf]
      %v1816 = vld [vmem:[%s1701 + $0x2ac] sm:$0xff]
      %v1817 = vld [vmem:[%s1701 + $0x2b4] sm:$0xf]
      %v1818 = vld [vmem:[%s1701 + $0x2b8] sm:$0xff]
      %v1819 = vld [vmem:[%s1701 + $0x2c0] sm:$0xf]
      %v1820 = vld [vmem:[%s1701 + $0x2c4] sm:$0xff]
      %v1821 = vld [vmem:[%s1701 + $0x2cc] sm:$0xf]
      %v1822 = vld [vmem:[%s1701 + $0x2d0] sm:$0xff]
      %v1823 = vld [vmem:[%s1701 + $0x2d8] sm:$0xf]
      %v1824 = vld [vmem:[%s1701 + $0x2dc] sm:$0xff]
      %v1825 = vld [vmem:[%s1701 + $0x2e4] sm:$0xf]
      %v1826 = vld [vmem:[%s1701 + $0x2e8] sm:$0xff]
      %v1827 = vld [vmem:[%s1701 + $0x2f0] sm:$0xf]
      %v1828 = vld [vmem:[%s1701 + $0x2f4] sm:$0xff]
      %v1829 = vld [vmem:[%s1701 + $0x2fc] sm:$0xf]
      %v1830 = vld [vmem:[%s1701 + $0x300] sm:$0xff]
      %v1831 = vld [vmem:[%s1701 + $0x308] sm:$0xf]
      %v1832 = vld [vmem:[%s1701 + $0x30c] sm:$0xff]
      %v1833 = vld [vmem:[%s1701 + $0x314] sm:$0xf]
      %v1834 = vld [vmem:[%s1701 + $0x318] sm:$0xff]
      %v1835 = vld [vmem:[%s1701 + $0x320] sm:$0xf]
      %v1836 = vld [vmem:[%s1701 + $0x324] sm:$0xff]
      %v1837 = vld [vmem:[%s1701 + $0x32c] sm:$0xf]
      %v1838 = vld [vmem:[%s1701 + $0x330] sm:$0xff]
      %v1839 = vld [vmem:[%s1701 + $0x338] sm:$0xf]
      %v1840 = vld [vmem:[%s1701 + $0x33c] sm:$0xff]
      %v1841 = vld [vmem:[%s1701 + $0x344] sm:$0xf]
      %v1842 = vld [vmem:[%s1701 + $0x348] sm:$0xff]
      %v1843 = vld [vmem:[%s1701 + $0x350] sm:$0xf]
      %v1844 = vld [vmem:[%s1701 + $0x354] sm:$0xff]
      %v1845 = vld [vmem:[%s1701 + $0x35c] sm:$0xf]
      %v1846 = vld [vmem:[%s1701 + $0x360] sm:$0xff]
      %v1847 = vld [vmem:[%s1701 + $0x368] sm:$0xf]
      %v1848 = vld [vmem:[%s1701 + $0x36c] sm:$0xff]
      %v1849 = vld [vmem:[%s1701 + $0x374] sm:$0xf]
      %v1850 = vld [vmem:[%s1701 + $0x378] sm:$0xff]
      %v1851 = vld [vmem:[%s1701 + $0x380] sm:$0xf]
      %v1852 = vld [vmem:[%s1701 + $0x384] sm:$0xff]
      %v1853 = vld [vmem:[%s1701 + $0x38c] sm:$0xf]
      %v1854 = vld [vmem:[%s1701 + $0x390] sm:$0xff]
      %v1855 = vld [vmem:[%s1701 + $0x398] sm:$0xf]
      %v1856 = vld [vmem:[%s1701 + $0x39c] sm:$0xff]
      %v1857 = vld [vmem:[%s1701 + $0x3a4] sm:$0xf]
      %v1858 = vld [vmem:[%s1701 + $0x3a8] sm:$0xff]
      %v1859 = vld [vmem:[%s1701 + $0x3b0] sm:$0xf]
      %v1860 = vld [vmem:[%s1701 + $0x3b4] sm:$0xff]
      %v1861 = vld [vmem:[%s1701 + $0x3bc] sm:$0xf]
      %v1862 = vld [vmem:[%s1701 + $0x3c0] sm:$0xff]
      %v1863 = vld [vmem:[%s1701 + $0x3c8] sm:$0xf]
      %v1864 = vld [vmem:[%s1701 + $0x3cc] sm:$0xff]
      %v1865 = vld [vmem:[%s1701 + $0x3d4] sm:$0xf]
      %v1866 = vld [vmem:[%s1701 + $0x3d8] sm:$0xff]
      %v1867 = vld [vmem:[%s1701 + $0x3e0] sm:$0xf]
      %v1868 = vld [vmem:[%s1701 + $0x3e4] sm:$0xff]
      %v1869 = vld [vmem:[%s1701 + $0x3ec] sm:$0xf]
      %v1870 = vld [vmem:[%s1701 + $0x3f0] sm:$0xff]
      %v1871 = vld [vmem:[%s1701 + $0x3f8] sm:$0xf]
      %v1872 = vld [vmem:[%s1701 + $0x3fc] sm:$0xff]
      %v1873 = vld [vmem:[%s1701 + $0x404] sm:$0xf]
      %v1874 = vld [vmem:[%s1701 + $0x408] sm:$0xff]
      %v1875 = vld [vmem:[%s1701 + $0x410] sm:$0xf]
      %v1876 = vld [vmem:[%s1701 + $0x414] sm:$0xff]
      %v1877 = vld [vmem:[%s1701 + $0x41c] sm:$0xf]
      %v1878 = vld [vmem:[%s1701 + $0x420] sm:$0xff]
      %v1879 = vld [vmem:[%s1701 + $0x428] sm:$0xf]
      %v1880 = vld [vmem:[%s1701 + $0x42c] sm:$0xff]
      %v1881 = vld [vmem:[%s1701 + $0x434] sm:$0xf]
      %v1882 = vld [vmem:[%s1701 + $0x438] sm:$0xff]
      %v1883 = vld [vmem:[%s1701 + $0x440] sm:$0xf]
      %v1884 = vld [vmem:[%s1701 + $0x444] sm:$0xff]
      %v1885 = vld [vmem:[%s1701 + $0x44c] sm:$0xf]
      %v1886 = vld [vmem:[%s1701 + $0x450] sm:$0xff]
      %v1887 = vld [vmem:[%s1701 + $0x458] sm:$0xf]
      %v1888 = vld [vmem:[%s1701 + $0x45c] sm:$0xff]
      %v1889 = vld [vmem:[%s1701 + $0x464] sm:$0xf]
      %v1890 = vld [vmem:[%s1701 + $0x468] sm:$0xff]
      %v1891 = vld [vmem:[%s1701 + $0x470] sm:$0xf]
      %v1892 = vld [vmem:[%s1701 + $0x474] sm:$0xff]
      %v1893 = vld [vmem:[%s1701 + $0x47c] sm:$0xf]
      %v1894 = vld [vmem:[%s1701 + $0x480] sm:$0xff]
      %v1895 = vld [vmem:[%s1701 + $0x488] sm:$0xf]
      %v1896 = vld [vmem:[%s1701 + $0x48c] sm:$0xff]
      %v1897 = vld [vmem:[%s1701 + $0x494] sm:$0xf]
      %v1898 = vld [vmem:[%s1701 + $0x498] sm:$0xff]
      %v1899 = vld [vmem:[%s1701 + $0x4a0] sm:$0xf]
      %v1900 = vld [vmem:[%s1701 + $0x4a4] sm:$0xff]
      %v1901 = vld [vmem:[%s1701 + $0x4ac] sm:$0xf]
      %v1902 = vld [vmem:[%s1701 + $0x4b0] sm:$0xff]
      %v1903 = vld [vmem:[%s1701 + $0x4b8] sm:$0xf]
      %v1904 = vld [vmem:[%s1701 + $0x4bc] sm:$0xff]
      %v1905 = vld [vmem:[%s1701 + $0x4c4] sm:$0xf]
      %v1906 = vld [vmem:[%s1701 + $0x4c8] sm:$0xff]
      %v1907 = vld [vmem:[%s1701 + $0x4d0] sm:$0xf]
      %v1908 = vld [vmem:[%s1701 + $0x4d4] sm:$0xff]
      %v1909 = vld [vmem:[%s1701 + $0x4dc] sm:$0xf]
      %v1910 = vld [vmem:[%s1701 + $0x4e0] sm:$0xff]
      %v1911 = vld [vmem:[%s1701 + $0x4e8] sm:$0xf]
      %v1912 = vld [vmem:[%s1701 + $0x4ec] sm:$0xff]
      %v1913 = vld [vmem:[%s1701 + $0x4f4] sm:$0xf]
      %v1914 = vld [vmem:[%s1701 + $0x4f8] sm:$0xff]
      %v1915 = vld [vmem:[%s1701 + $0x500] sm:$0xf]
      %v1916 = vld [vmem:[%s1701 + $0x504] sm:$0xff]
      %v1917 = vld [vmem:[%s1701 + $0x50c] sm:$0xf]
      %v1918 = vld [vmem:[%s1701 + $0x510] sm:$0xff]
      %v1919 = vld [vmem:[%s1701 + $0x518] sm:$0xf]
      %v1920 = vld [vmem:[%s1701 + $0x51c] sm:$0xff]
      %v1921 = vld [vmem:[%s1701 + $0x524] sm:$0xf]
      %v1922 = vld [vmem:[%s1701 + $0x528] sm:$0xff]
      %v1923 = vld [vmem:[%s1701 + $0x530] sm:$0xf]
      %v1924 = vld [vmem:[%s1701 + $0x534] sm:$0xff]
      %v1925 = vld [vmem:[%s1701 + $0x53c] sm:$0xf]
      %v1926 = vld [vmem:[%s1701 + $0x540] sm:$0xff]
      %v1927 = vld [vmem:[%s1701 + $0x548] sm:$0xf]
      %v1928 = vld [vmem:[%s1701 + $0x54c] sm:$0xff]
      %v1929 = vld [vmem:[%s1701 + $0x554] sm:$0xf]
      %v1930 = vld [vmem:[%s1701 + $0x558] sm:$0xff]
      %v1931 = vld [vmem:[%s1701 + $0x560] sm:$0xf]
      %v1932 = vld [vmem:[%s1701 + $0x564] sm:$0xff]
      %v1933 = vld [vmem:[%s1701 + $0x56c] sm:$0xf]
      %v1934 = vld [vmem:[%s1701 + $0x570] sm:$0xff]
      %v1935 = vld [vmem:[%s1701 + $0x578] sm:$0xf]
      %v1936 = vld [vmem:[%s1701 + $0x57c] sm:$0xff]
      %v1937 = vld [vmem:[%s1701 + $0x584] sm:$0xf]
      %v1938 = vld [vmem:[%s1701 + $0x588] sm:$0xff]
      %v1939 = vld [vmem:[%s1701 + $0x590] sm:$0xf]
      %v1940 = vld [vmem:[%s1701 + $0x594] sm:$0xff]
      %v1941 = vld [vmem:[%s1701 + $0x59c] sm:$0xf]
      %v1942 = vld [vmem:[%s1701 + $0x5a0] sm:$0xff]
      %v1943 = vld [vmem:[%s1701 + $0x5a8] sm:$0xf]
      %v1944 = vld [vmem:[%s1701 + $0x5ac] sm:$0xff]
      %v1945 = vld [vmem:[%s1701 + $0x5b4] sm:$0xf]
      %v1946 = vld [vmem:[%s1701 + $0x5b8] sm:$0xff]
      %v1947 = vld [vmem:[%s1701 + $0x5c0] sm:$0xf]
      %v1948 = vld [vmem:[%s1701 + $0x5c4] sm:$0xff]
      %v1949 = vld [vmem:[%s1701 + $0x5cc] sm:$0xf]
      %v1950 = vld [vmem:[%s1701 + $0x5d0] sm:$0xff]
      %v1951 = vld [vmem:[%s1701 + $0x5d8] sm:$0xf]
      %v1952 = vld [vmem:[%s1701 + $0x5dc] sm:$0xff]
      %v1953 = vld [vmem:[%s1701 + $0x5e4] sm:$0xf]
      %v1954 = vld [vmem:[%s1701 + $0x5e8] sm:$0xff]
      %v1955 = vld [vmem:[%s1701 + $0x5f0] sm:$0xf]
      %v1956 = vld [vmem:[%s1701 + $0x5f4] sm:$0xff]
      %v1957 = vld [vmem:[%s1701 + $0x5fc] sm:$0xf]
      %v1958 = vld [vmem:[%s1701 + $0x600] sm:$0xff]
      %v1959 = vld [vmem:[%s1701 + $0x608] sm:$0xf]
      %v1960 = vld [vmem:[%s1701 + $0x60c] sm:$0xff]
      %v1961 = vld [vmem:[%s1701 + $0x614] sm:$0xf]
      %v1962 = vld [vmem:[%s1701 + $0x618] sm:$0xff]
      %v1963 = vld [vmem:[%s1701 + $0x620] sm:$0xf]
      %v1964 = vld [vmem:[%s1701 + $0x624] sm:$0xff]
      %v1965 = vld [vmem:[%s1701 + $0x62c] sm:$0xf]
      %v1966 = vld [vmem:[%s1701 + $0x630] sm:$0xff]
      %v1967 = vld [vmem:[%s1701 + $0x638] sm:$0xf]
      %v1968 = vld [vmem:[%s1701 + $0x63c] sm:$0xff]
      %v1969 = vld [vmem:[%s1701 + $0x644] sm:$0xf]
      %v1970 = vld [vmem:[%s1701 + $0x648] sm:$0xff]
      %v1971 = vld [vmem:[%s1701 + $0x650] sm:$0xf]
      %v1972 = vld [vmem:[%s1701 + $0x654] sm:$0xff]
      %v1973 = vld [vmem:[%s1701 + $0x65c] sm:$0xf]
      %v1974 = vld [vmem:[%s1701 + $0x660] sm:$0xff]
      %v1975 = vld [vmem:[%s1701 + $0x668] sm:$0xf]
      %v1976 = vld [vmem:[%s1701 + $0x66c] sm:$0xff]
      %v1977 = vld [vmem:[%s1701 + $0x674] sm:$0xf]
      %v1978 = vld [vmem:[%s1701 + $0x678] sm:$0xff]
      %v1979 = vld [vmem:[%s1701 + $0x680] sm:$0xf]
      %v1980 = vld [vmem:[%s1701 + $0x684] sm:$0xff]
      %v1981 = vld [vmem:[%s1701 + $0x68c] sm:$0xf]
      %v1982 = vld [vmem:[%s1701 + $0x690] sm:$0xff]
      %v1983 = vld [vmem:[%s1701 + $0x698] sm:$0xf]
      %v1984 = vld [vmem:[%s1701 + $0x69c] sm:$0xff]
      %v1985 = vld [vmem:[%s1701 + $0x6a4] sm:$0xf]
      %v1986 = vld [vmem:[%s1701 + $0x6a8] sm:$0xff]
      %v1987 = vld [vmem:[%s1701 + $0x6b0] sm:$0xf]
      %v1988 = vld [vmem:[%s1701 + $0x6b4] sm:$0xff]
      %v1989 = vld [vmem:[%s1701 + $0x6bc] sm:$0xf]
      %v2278 = vunpack.c.l.b16 %v1702
      %v2279 = vunpack.c.h.b16 %v1702
      %v2280 = vunpack.c.l.b16 %v1703
      %v2281 = vunpack.c.l.b16 %v1704
      %v2282 = vunpack.c.h.b16 %v1704
      %v2283 = vunpack.c.l.b16 %v1705
      %v2284 = vunpack.c.l.b16 %v1706
      %v2285 = vunpack.c.h.b16 %v1706
      %v2286 = vunpack.c.l.b16 %v1707
      %v2287 = vunpack.c.l.b16 %v1708
      %v2288 = vunpack.c.h.b16 %v1708
      %v2289 = vunpack.c.l.b16 %v1709
      %v2290 = vunpack.c.l.b16 %v1710
      %v2291 = vunpack.c.h.b16 %v1710
      %v2292 = vunpack.c.l.b16 %v1711
      %v2293 = vunpack.c.l.b16 %v1712
      %v2294 = vunpack.c.h.b16 %v1712
      %v2295 = vunpack.c.l.b16 %v1713
      %v2296 = vunpack.c.l.b16 %v1714
      %v2297 = vunpack.c.h.b16 %v1714
      %v2298 = vunpack.c.l.b16 %v1715
      %v2299 = vunpack.c.l.b16 %v1716
      %v2300 = vunpack.c.h.b16 %v1716
      %v2301 = vunpack.c.l.b16 %v1717
      %v2302 = vunpack.c.l.b16 %v1718
      %v2303 = vunpack.c.h.b16 %v1718
      %v2304 = vunpack.c.l.b16 %v1719
      %v2305 = vunpack.c.l.b16 %v1720
      %v2306 = vunpack.c.h.b16 %v1720
      %v2307 = vunpack.c.l.b16 %v1721
      %v2308 = vunpack.c.l.b16 %v1722
      %v2309 = vunpack.c.h.b16 %v1722
      %v2310 = vunpack.c.l.b16 %v1723
      %v2311 = vunpack.c.l.b16 %v1724
      %v2312 = vunpack.c.h.b16 %v1724
      %v2313 = vunpack.c.l.b16 %v1725
      %v2314 = vunpack.c.l.b16 %v1726
      %v2315 = vunpack.c.h.b16 %v1726
      %v2316 = vunpack.c.l.b16 %v1727
      %v2317 = vunpack.c.l.b16 %v1728
      %v2318 = vunpack.c.h.b16 %v1728
      %v2319 = vunpack.c.l.b16 %v1729
      %v2320 = vunpack.c.l.b16 %v1730
      %v2321 = vunpack.c.h.b16 %v1730
      %v2322 = vunpack.c.l.b16 %v1731
      %v2323 = vunpack.c.l.b16 %v1732
      %v2324 = vunpack.c.h.b16 %v1732
      %v2325 = vunpack.c.l.b16 %v1733
      %v2326 = vunpack.c.l.b16 %v1734
      %v2327 = vunpack.c.h.b16 %v1734
      %v2328 = vunpack.c.l.b16 %v1735
      %v2329 = vunpack.c.l.b16 %v1736
      %v2330 = vunpack.c.h.b16 %v1736
      %v2331 = vunpack.c.l.b16 %v1737
      %v2332 = vunpack.c.l.b16 %v1738
      %v2333 = vunpack.c.h.b16 %v1738
      %v2334 = vunpack.c.l.b16 %v1739
      %v2335 = vunpack.c.l.b16 %v1740
      %v2336 = vunpack.c.h.b16 %v1740
      %v2337 = vunpack.c.l.b16 %v1741
      %v2338 = vunpack.c.l.b16 %v1742
      %v2339 = vunpack.c.h.b16 %v1742
      %v2340 = vunpack.c.l.b16 %v1743
      %v2341 = vunpack.c.l.b16 %v1744
      %v2342 = vunpack.c.h.b16 %v1744
      %v2343 = vunpack.c.l.b16 %v1745
      %v2344 = vunpack.c.l.b16 %v1746
      %v2345 = vunpack.c.h.b16 %v1746
      %v2346 = vunpack.c.l.b16 %v1747
      %v2347 = vunpack.c.l.b16 %v1748
      %v2348 = vunpack.c.h.b16 %v1748
      %v2349 = vunpack.c.l.b16 %v1749
      %v2350 = vunpack.c.l.b16 %v1750
      %v2351 = vunpack.c.h.b16 %v1750
      %v2352 = vunpack.c.l.b16 %v1751
      %v2353 = vunpack.c.l.b16 %v1752
      %v2354 = vunpack.c.h.b16 %v1752
      %v2355 = vunpack.c.l.b16 %v1753
      %v2356 = vunpack.c.l.b16 %v1754
      %v2357 = vunpack.c.h.b16 %v1754
      %v2358 = vunpack.c.l.b16 %v1755
      %v2359 = vunpack.c.l.b16 %v1756
      %v2360 = vunpack.c.h.b16 %v1756
      %v2361 = vunpack.c.l.b16 %v1757
      %v2362 = vunpack.c.l.b16 %v1758
      %v2363 = vunpack.c.h.b16 %v1758
      %v2364 = vunpack.c.l.b16 %v1759
      %v2365 = vunpack.c.l.b16 %v1760
      %v2366 = vunpack.c.h.b16 %v1760
      %v2367 = vunpack.c.l.b16 %v1761
      %v2368 = vunpack.c.l.b16 %v1762
      %v2369 = vunpack.c.h.b16 %v1762
      %v2370 = vunpack.c.l.b16 %v1763
      %v2371 = vunpack.c.l.b16 %v1764
      %v2372 = vunpack.c.h.b16 %v1764
      %v2373 = vunpack.c.l.b16 %v1765
      %v2374 = vunpack.c.l.b16 %v1766
      %v2375 = vunpack.c.h.b16 %v1766
      %v2376 = vunpack.c.l.b16 %v1767
      %v2377 = vunpack.c.l.b16 %v1768
      %v2378 = vunpack.c.h.b16 %v1768
      %v2379 = vunpack.c.l.b16 %v1769
      %v2380 = vunpack.c.l.b16 %v1770
      %v2381 = vunpack.c.h.b16 %v1770
      %v2382 = vunpack.c.l.b16 %v1771
      %v2383 = vunpack.c.l.b16 %v1772
      %v2384 = vunpack.c.h.b16 %v1772
      %v2385 = vunpack.c.l.b16 %v1773
      %v2386 = vunpack.c.l.b16 %v1774
      %v2387 = vunpack.c.h.b16 %v1774
      %v2388 = vunpack.c.l.b16 %v1775
      %v2389 = vunpack.c.l.b16 %v1776
      %v2390 = vunpack.c.h.b16 %v1776
      %v2391 = vunpack.c.l.b16 %v1777
      %v2392 = vunpack.c.l.b16 %v1778
      %v2393 = vunpack.c.h.b16 %v1778
      %v2394 = vunpack.c.l.b16 %v1779
      %v2395 = vunpack.c.l.b16 %v1780
      %v2396 = vunpack.c.h.b16 %v1780
      %v2397 = vunpack.c.l.b16 %v1781
      %v2398 = vunpack.c.l.b16 %v1782
      %v2399 = vunpack.c.h.b16 %v1782
      %v2400 = vunpack.c.l.b16 %v1783
      %v2401 = vunpack.c.l.b16 %v1784
      %v2402 = vunpack.c.h.b16 %v1784
      %v2403 = vunpack.c.l.b16 %v1785
      %v2404 = vunpack.c.l.b16 %v1786
      %v2405 = vunpack.c.h.b16 %v1786
      %v2406 = vunpack.c.l.b16 %v1787
      %v2407 = vunpack.c.l.b16 %v1788
      %v2408 = vunpack.c.h.b16 %v1788
      %v2409 = vunpack.c.l.b16 %v1789
      %v2410 = vunpack.c.l.b16 %v1790
      %v2411 = vunpack.c.h.b16 %v1790
      %v2412 = vunpack.c.l.b16 %v1791
      %v2413 = vunpack.c.l.b16 %v1792
      %v2414 = vunpack.c.h.b16 %v1792
      %v2415 = vunpack.c.l.b16 %v1793
      %v2416 = vunpack.c.l.b16 %v1794
      %v2417 = vunpack.c.h.b16 %v1794
      %v2418 = vunpack.c.l.b16 %v1795
      %v2419 = vunpack.c.l.b16 %v1796
      %v2420 = vunpack.c.h.b16 %v1796
      %v2421 = vunpack.c.l.b16 %v1797
      %v2422 = vunpack.c.l.b16 %v1798
      %v2423 = vunpack.c.h.b16 %v1798
      %v2424 = vunpack.c.l.b16 %v1799
      %v2425 = vunpack.c.l.b16 %v1800
      %v2426 = vunpack.c.h.b16 %v1800
      %v2427 = vunpack.c.l.b16 %v1801
      %v2428 = vunpack.c.l.b16 %v1802
      %v2429 = vunpack.c.h.b16 %v1802
      %v2430 = vunpack.c.l.b16 %v1803
      %v2431 = vunpack.c.l.b16 %v1804
      %v2432 = vunpack.c.h.b16 %v1804
      %v2433 = vunpack.c.l.b16 %v1805
      %v2434 = vunpack.c.l.b16 %v1806
      %v2435 = vunpack.c.h.b16 %v1806
      %v2436 = vunpack.c.l.b16 %v1807
      %v2437 = vunpack.c.l.b16 %v1808
      %v2438 = vunpack.c.h.b16 %v1808
      %v2439 = vunpack.c.l.b16 %v1809
      %v2440 = vunpack.c.l.b16 %v1810
      %v2441 = vunpack.c.h.b16 %v1810
      %v2442 = vunpack.c.l.b16 %v1811
      %v2443 = vunpack.c.l.b16 %v1812
      %v2444 = vunpack.c.h.b16 %v1812
      %v2445 = vunpack.c.l.b16 %v1813
      %v2446 = vunpack.c.l.b16 %v1814
      %v2447 = vunpack.c.h.b16 %v1814
      %v2448 = vunpack.c.l.b16 %v1815
      %v2449 = vunpack.c.l.b16 %v1816
      %v2450 = vunpack.c.h.b16 %v1816
      %v2451 = vunpack.c.l.b16 %v1817
      %v2452 = vunpack.c.l.b16 %v1818
      %v2453 = vunpack.c.h.b16 %v1818
      %v2454 = vunpack.c.l.b16 %v1819
      %v2455 = vunpack.c.l.b16 %v1820
      %v2456 = vunpack.c.h.b16 %v1820
      %v2457 = vunpack.c.l.b16 %v1821
      %v2458 = vunpack.c.l.b16 %v1822
      %v2459 = vunpack.c.h.b16 %v1822
      %v2460 = vunpack.c.l.b16 %v1823
      %v2461 = vunpack.c.l.b16 %v1824
      %v2462 = vunpack.c.h.b16 %v1824
      %v2463 = vunpack.c.l.b16 %v1825
      %v2464 = vunpack.c.l.b16 %v1826
      %v2465 = vunpack.c.h.b16 %v1826
      %v2466 = vunpack.c.l.b16 %v1827
      %v2467 = vunpack.c.l.b16 %v1828
      %v2468 = vunpack.c.h.b16 %v1828
      %v2469 = vunpack.c.l.b16 %v1829
      %v2470 = vunpack.c.l.b16 %v1830
      %v2471 = vunpack.c.h.b16 %v1830
      %v2472 = vunpack.c.l.b16 %v1831
      %v2473 = vunpack.c.l.b16 %v1832
      %v2474 = vunpack.c.h.b16 %v1832
      %v2475 = vunpack.c.l.b16 %v1833
      %v2476 = vunpack.c.l.b16 %v1834
      %v2477 = vunpack.c.h.b16 %v1834
      %v2478 = vunpack.c.l.b16 %v1835
      %v2479 = vunpack.c.l.b16 %v1836
      %v2480 = vunpack.c.h.b16 %v1836
      %v2481 = vunpack.c.l.b16 %v1837
      %v2482 = vunpack.c.l.b16 %v1838
      %v2483 = vunpack.c.h.b16 %v1838
      %v2484 = vunpack.c.l.b16 %v1839
      %v2485 = vunpack.c.l.b16 %v1840
      %v2486 = vunpack.c.h.b16 %v1840
      %v2487 = vunpack.c.l.b16 %v1841
      %v2488 = vunpack.c.l.b16 %v1842
      %v2489 = vunpack.c.h.b16 %v1842
      %v2490 = vunpack.c.l.b16 %v1843
      %v2491 = vunpack.c.l.b16 %v1844
      %v2492 = vunpack.c.h.b16 %v1844
      %v2493 = vunpack.c.l.b16 %v1845
      %v2494 = vunpack.c.l.b16 %v1846
      %v2495 = vunpack.c.h.b16 %v1846
      %v2496 = vunpack.c.l.b16 %v1847
      %v2497 = vunpack.c.l.b16 %v1848
      %v2498 = vunpack.c.h.b16 %v1848
      %v2499 = vunpack.c.l.b16 %v1849
      %v2500 = vunpack.c.l.b16 %v1850
      %v2501 = vunpack.c.h.b16 %v1850
      %v2502 = vunpack.c.l.b16 %v1851
      %v2503 = vunpack.c.l.b16 %v1852
      %v2504 = vunpack.c.h.b16 %v1852
      %v2505 = vunpack.c.l.b16 %v1853
      %v2506 = vunpack.c.l.b16 %v1854
      %v2507 = vunpack.c.h.b16 %v1854
      %v2508 = vunpack.c.l.b16 %v1855
      %v2509 = vunpack.c.l.b16 %v1856
      %v2510 = vunpack.c.h.b16 %v1856
      %v2511 = vunpack.c.l.b16 %v1857
      %v2512 = vunpack.c.l.b16 %v1858
      %v2513 = vunpack.c.h.b16 %v1858
      %v2514 = vunpack.c.l.b16 %v1859
      %v2515 = vunpack.c.l.b16 %v1860
      %v2516 = vunpack.c.h.b16 %v1860
      %v2517 = vunpack.c.l.b16 %v1861
      %v2518 = vunpack.c.l.b16 %v1862
      %v2519 = vunpack.c.h.b16 %v1862
      %v2520 = vunpack.c.l.b16 %v1863
      %v2521 = vunpack.c.l.b16 %v1864
      %v2522 = vunpack.c.h.b16 %v1864
      %v2523 = vunpack.c.l.b16 %v1865
      %v2524 = vunpack.c.l.b16 %v1866
      %v2525 = vunpack.c.h.b16 %v1866
      %v2526 = vunpack.c.l.b16 %v1867
      %v2527 = vunpack.c.l.b16 %v1868
      %v2528 = vunpack.c.h.b16 %v1868
      %v2529 = vunpack.c.l.b16 %v1869
      %v2530 = vunpack.c.l.b16 %v1870
      %v2531 = vunpack.c.h.b16 %v1870
      %v2532 = vunpack.c.l.b16 %v1871
      %v2533 = vunpack.c.l.b16 %v1872
      %v2534 = vunpack.c.h.b16 %v1872
      %v2535 = vunpack.c.l.b16 %v1873
      %v2536 = vunpack.c.l.b16 %v1874
      %v2537 = vunpack.c.h.b16 %v1874
      %v2538 = vunpack.c.l.b16 %v1875
      %v2539 = vunpack.c.l.b16 %v1876
      %v2540 = vunpack.c.h.b16 %v1876
      %v2541 = vunpack.c.l.b16 %v1877
      %v2542 = vunpack.c.l.b16 %v1878
      %v2543 = vunpack.c.h.b16 %v1878
      %v2544 = vunpack.c.l.b16 %v1879
      %v2545 = vunpack.c.l.b16 %v1880
      %v2546 = vunpack.c.h.b16 %v1880
      %v2547 = vunpack.c.l.b16 %v1881
      %v2548 = vunpack.c.l.b16 %v1882
      %v2549 = vunpack.c.h.b16 %v1882
      %v2550 = vunpack.c.l.b16 %v1883
      %v2551 = vunpack.c.l.b16 %v1884
      %v2552 = vunpack.c.h.b16 %v1884
      %v2553 = vunpack.c.l.b16 %v1885
      %v2554 = vunpack.c.l.b16 %v1886
      %v2555 = vunpack.c.h.b16 %v1886
      %v2556 = vunpack.c.l.b16 %v1887
      %v2557 = vunpack.c.l.b16 %v1888
      %v2558 = vunpack.c.h.b16 %v1888
      %v2559 = vunpack.c.l.b16 %v1889
      %v2560 = vunpack.c.l.b16 %v1890
      %v2561 = vunpack.c.h.b16 %v1890
      %v2562 = vunpack.c.l.b16 %v1891
      %v2563 = vunpack.c.l.b16 %v1892
      %v2564 = vunpack.c.h.b16 %v1892
      %v2565 = vunpack.c.l.b16 %v1893
      %v2566 = vunpack.c.l.b16 %v1894
      %v2567 = vunpack.c.h.b16 %v1894
      %v2568 = vunpack.c.l.b16 %v1895
      %v2569 = vunpack.c.l.b16 %v1896
      %v2570 = vunpack.c.h.b16 %v1896
      %v2571 = vunpack.c.l.b16 %v1897
      %v2572 = vunpack.c.l.b16 %v1898
      %v2573 = vunpack.c.h.b16 %v1898
      %v2574 = vunpack.c.l.b16 %v1899
      %v2575 = vunpack.c.l.b16 %v1900
      %v2576 = vunpack.c.h.b16 %v1900
      %v2577 = vunpack.c.l.b16 %v1901
      %v2578 = vunpack.c.l.b16 %v1902
      %v2579 = vunpack.c.h.b16 %v1902
      %v2580 = vunpack.c.l.b16 %v1903
      %v2581 = vunpack.c.l.b16 %v1904
      %v2582 = vunpack.c.h.b16 %v1904
      %v2583 = vunpack.c.l.b16 %v1905
      %v2584 = vunpack.c.l.b16 %v1906
      %v2585 = vunpack.c.h.b16 %v1906
      %v2586 = vunpack.c.l.b16 %v1907
      %v2587 = vunpack.c.l.b16 %v1908
      %v2588 = vunpack.c.h.b16 %v1908
      %v2589 = vunpack.c.l.b16 %v1909
      %v2590 = vunpack.c.l.b16 %v1910
      %v2591 = vunpack.c.h.b16 %v1910
      %v2592 = vunpack.c.l.b16 %v1911
      %v2593 = vunpack.c.l.b16 %v1912
      %v2594 = vunpack.c.h.b16 %v1912
      %v2595 = vunpack.c.l.b16 %v1913
      %v2596 = vunpack.c.l.b16 %v1914
      %v2597 = vunpack.c.h.b16 %v1914
      %v2598 = vunpack.c.l.b16 %v1915
      %v2599 = vunpack.c.l.b16 %v1916
      %v2600 = vunpack.c.h.b16 %v1916
      %v2601 = vunpack.c.l.b16 %v1917
      %v2602 = vunpack.c.l.b16 %v1918
      %v2603 = vunpack.c.h.b16 %v1918
      %v2604 = vunpack.c.l.b16 %v1919
      %v2605 = vunpack.c.l.b16 %v1920
      %v2606 = vunpack.c.h.b16 %v1920
      %v2607 = vunpack.c.l.b16 %v1921
      %v2608 = vunpack.c.l.b16 %v1922
      %v2609 = vunpack.c.h.b16 %v1922
      %v2610 = vunpack.c.l.b16 %v1923
      %v2611 = vunpack.c.l.b16 %v1924
      %v2612 = vunpack.c.h.b16 %v1924
      %v2613 = vunpack.c.l.b16 %v1925
      %v2614 = vunpack.c.l.b16 %v1926
      %v2615 = vunpack.c.h.b16 %v1926
      %v2616 = vunpack.c.l.b16 %v1927
      %v2617 = vunpack.c.l.b16 %v1928
      %v2618 = vunpack.c.h.b16 %v1928
      %v2619 = vunpack.c.l.b16 %v1929
      %v2620 = vunpack.c.l.b16 %v1930
      %v2621 = vunpack.c.h.b16 %v1930
      %v2622 = vunpack.c.l.b16 %v1931
      %v2623 = vunpack.c.l.b16 %v1932
      %v2624 = vunpack.c.h.b16 %v1932
      %v2625 = vunpack.c.l.b16 %v1933
      %v2626 = vunpack.c.l.b16 %v1934
      %v2627 = vunpack.c.h.b16 %v1934
      %v2628 = vunpack.c.l.b16 %v1935
      %v2629 = vunpack.c.l.b16 %v1936
      %v2630 = vunpack.c.h.b16 %v1936
      %v2631 = vunpack.c.l.b16 %v1937
      %v2632 = vunpack.c.l.b16 %v1938
      %v2633 = vunpack.c.h.b16 %v1938
      %v2634 = vunpack.c.l.b16 %v1939
      %v2635 = vunpack.c.l.b16 %v1940
      %v2636 = vunpack.c.h.b16 %v1940
      %v2637 = vunpack.c.l.b16 %v1941
      %v2638 = vunpack.c.l.b16 %v1942
      %v2639 = vunpack.c.h.b16 %v1942
      %v2640 = vunpack.c.l.b16 %v1943
      %v2641 = vunpack.c.l.b16 %v1944
      %v2642 = vunpack.c.h.b16 %v1944
      %v2643 = vunpack.c.l.b16 %v1945
      %v2644 = vunpack.c.l.b16 %v1946
      %v2645 = vunpack.c.h.b16 %v1946
      %v2646 = vunpack.c.l.b16 %v1947
      %v2647 = vunpack.c.l.b16 %v1948
      %v2648 = vunpack.c.h.b16 %v1948
      %v2649 = vunpack.c.l.b16 %v1949
      %v2650 = vunpack.c.l.b16 %v1950
      %v2651 = vunpack.c.h.b16 %v1950
      %v2652 = vunpack.c.l.b16 %v1951
      %v2653 = vunpack.c.l.b16 %v1952
      %v2654 = vunpack.c.h.b16 %v1952
      %v2655 = vunpack.c.l.b16 %v1953
      %v2656 = vunpack.c.l.b16 %v1954
      %v2657 = vunpack.c.h.b16 %v1954
      %v2658 = vunpack.c.l.b16 %v1955
      %v2659 = vunpack.c.l.b16 %v1956
      %v2660 = vunpack.c.h.b16 %v1956
      %v2661 = vunpack.c.l.b16 %v1957
      %v2662 = vunpack.c.l.b16 %v1958
      %v2663 = vunpack.c.h.b16 %v1958
      %v2664 = vunpack.c.l.b16 %v1959
      %v2665 = vunpack.c.l.b16 %v1960
      %v2666 = vunpack.c.h.b16 %v1960
      %v2667 = vunpack.c.l.b16 %v1961
      %v2668 = vunpack.c.l.b16 %v1962
      %v2669 = vunpack.c.h.b16 %v1962
      %v2670 = vunpack.c.l.b16 %v1963
      %v2671 = vunpack.c.l.b16 %v1964
      %v2672 = vunpack.c.h.b16 %v1964
      %v2673 = vunpack.c.l.b16 %v1965
      %v2674 = vunpack.c.l.b16 %v1966
      %v2675 = vunpack.c.h.b16 %v1966
      %v2676 = vunpack.c.l.b16 %v1967
      %v2677 = vunpack.c.l.b16 %v1968
      %v2678 = vunpack.c.h.b16 %v1968
      %v2679 = vunpack.c.l.b16 %v1969
      %v2680 = vunpack.c.l.b16 %v1970
      %v2681 = vunpack.c.h.b16 %v1970
      %v2682 = vunpack.c.l.b16 %v1971
      %v2683 = vunpack.c.l.b16 %v1972
      %v2684 = vunpack.c.h.b16 %v1972
      %v2685 = vunpack.c.l.b16 %v1973
      %v2686 = vunpack.c.l.b16 %v1974
      %v2687 = vunpack.c.h.b16 %v1974
      %v2688 = vunpack.c.l.b16 %v1975
      %v2689 = vunpack.c.l.b16 %v1976
      %v2690 = vunpack.c.h.b16 %v1976
      %v2691 = vunpack.c.l.b16 %v1977
      %v2692 = vunpack.c.l.b16 %v1978
      %v2693 = vunpack.c.h.b16 %v1978
      %v2694 = vunpack.c.l.b16 %v1979
      %v2695 = vunpack.c.l.b16 %v1980
      %v2696 = vunpack.c.h.b16 %v1980
      %v2697 = vunpack.c.l.b16 %v1981
      %v2698 = vunpack.c.l.b16 %v1982
      %v2699 = vunpack.c.h.b16 %v1982
      %v2700 = vunpack.c.l.b16 %v1983
      %v2701 = vunpack.c.l.b16 %v1984
      %v2702 = vunpack.c.h.b16 %v1984
      %v2703 = vunpack.c.l.b16 %v1985
      %v2704 = vunpack.c.l.b16 %v1986
      %v2705 = vunpack.c.h.b16 %v1986
      %v2706 = vunpack.c.l.b16 %v1987
      %v2707 = vunpack.c.l.b16 %v1988
      %v2708 = vunpack.c.h.b16 %v1988
      %v2709 = vunpack.c.l.b16 %v1989
      %v2710 = vpack.c.b16 %v2281, %v2278
      %v2711 = vpack.c.b16 %v2282, %v2279
      %v2712 = vpack.c.b16 %v2283, %v2280
      %v2713 = vpack.c.b16 %v2287, %v2284
      %v2714 = vpack.c.b16 %v2288, %v2285
      %v2715 = vpack.c.b16 %v2289, %v2286
      %v2716 = vpack.c.b16 %v2293, %v2290
      %v2717 = vpack.c.b16 %v2294, %v2291
      %v2718 = vpack.c.b16 %v2295, %v2292
      %v2719 = vpack.c.b16 %v2299, %v2296
      %v2720 = vpack.c.b16 %v2300, %v2297
      %v2721 = vpack.c.b16 %v2301, %v2298
      %v2722 = vpack.c.b16 %v2305, %v2302
      %v2723 = vpack.c.b16 %v2306, %v2303
      %v2724 = vpack.c.b16 %v2307, %v2304
      %v2725 = vpack.c.b16 %v2311, %v2308
      %v2726 = vpack.c.b16 %v2312, %v2309
      %v2727 = vpack.c.b16 %v2313, %v2310
      %v2728 = vpack.c.b16 %v2317, %v2314
      %v2729 = vpack.c.b16 %v2318, %v2315
      %v2730 = vpack.c.b16 %v2319, %v2316
      %v2731 = vpack.c.b16 %v2323, %v2320
      %v2732 = vpack.c.b16 %v2324, %v2321
      %v2733 = vpack.c.b16 %v2325, %v2322
      %v2734 = vpack.c.b16 %v2329, %v2326
      %v2735 = vpack.c.b16 %v2330, %v2327
      %v2736 = vpack.c.b16 %v2331, %v2328
      %v2737 = vpack.c.b16 %v2335, %v2332
      %v2738 = vpack.c.b16 %v2336, %v2333
      %v2739 = vpack.c.b16 %v2337, %v2334
      %v2740 = vpack.c.b16 %v2341, %v2338
      %v2741 = vpack.c.b16 %v2342, %v2339
      %v2742 = vpack.c.b16 %v2343, %v2340
      %v2743 = vpack.c.b16 %v2347, %v2344
      %v2744 = vpack.c.b16 %v2348, %v2345
      %v2745 = vpack.c.b16 %v2349, %v2346
      %v2746 = vpack.c.b16 %v2353, %v2350
      %v2747 = vpack.c.b16 %v2354, %v2351
      %v2748 = vpack.c.b16 %v2355, %v2352
      %v2749 = vpack.c.b16 %v2359, %v2356
      %v2750 = vpack.c.b16 %v2360, %v2357
      %v2751 = vpack.c.b16 %v2361, %v2358
      %v2752 = vpack.c.b16 %v2365, %v2362
      %v2753 = vpack.c.b16 %v2366, %v2363
      %v2754 = vpack.c.b16 %v2367, %v2364
      %v2755 = vpack.c.b16 %v2371, %v2368
      %v2756 = vpack.c.b16 %v2372, %v2369
      %v2757 = vpack.c.b16 %v2373, %v2370
      %v2758 = vpack.c.b16 %v2377, %v2374
      %v2759 = vpack.c.b16 %v2378, %v2375
      %v2760 = vpack.c.b16 %v2379, %v2376
      %v2761 = vpack.c.b16 %v2383, %v2380
      %v2762 = vpack.c.b16 %v2384, %v2381
      %v2763 = vpack.c.b16 %v2385, %v2382
      %v2764 = vpack.c.b16 %v2389, %v2386
      %v2765 = vpack.c.b16 %v2390, %v2387
      %v2766 = vpack.c.b16 %v2391, %v2388
      %v2767 = vpack.c.b16 %v2395, %v2392
      %v2768 = vpack.c.b16 %v2396, %v2393
      %v2769 = vpack.c.b16 %v2397, %v2394
      %v2770 = vpack.c.b16 %v2401, %v2398
      %v2771 = vpack.c.b16 %v2402, %v2399
      %v2772 = vpack.c.b16 %v2403, %v2400
      %v2773 = vpack.c.b16 %v2407, %v2404
      %v2774 = vpack.c.b16 %v2408, %v2405
      %v2775 = vpack.c.b16 %v2409, %v2406
      %v2776 = vpack.c.b16 %v2413, %v2410
      %v2777 = vpack.c.b16 %v2414, %v2411
      %v2778 = vpack.c.b16 %v2415, %v2412
      %v2779 = vpack.c.b16 %v2419, %v2416
      %v2780 = vpack.c.b16 %v2420, %v2417
      %v2781 = vpack.c.b16 %v2421, %v2418
      %v2782 = vpack.c.b16 %v2425, %v2422
      %v2783 = vpack.c.b16 %v2426, %v2423
      %v2784 = vpack.c.b16 %v2427, %v2424
      %v2785 = vpack.c.b16 %v2431, %v2428
      %v2786 = vpack.c.b16 %v2432, %v2429
      %v2787 = vpack.c.b16 %v2433, %v2430
      %v2788 = vpack.c.b16 %v2437, %v2434
      %v2789 = vpack.c.b16 %v2438, %v2435
      %v2790 = vpack.c.b16 %v2439, %v2436
      %v2791 = vpack.c.b16 %v2443, %v2440
      %v2792 = vpack.c.b16 %v2444, %v2441
      %v2793 = vpack.c.b16 %v2445, %v2442
      %v2794 = vpack.c.b16 %v2449, %v2446
      %v2795 = vpack.c.b16 %v2450, %v2447
      %v2796 = vpack.c.b16 %v2451, %v2448
      %v2797 = vpack.c.b16 %v2455, %v2452
      %v2798 = vpack.c.b16 %v2456, %v2453
      %v2799 = vpack.c.b16 %v2457, %v2454
      %v2800 = vpack.c.b16 %v2461, %v2458
      %v2801 = vpack.c.b16 %v2462, %v2459
      %v2802 = vpack.c.b16 %v2463, %v2460
      %v2803 = vpack.c.b16 %v2467, %v2464
      %v2804 = vpack.c.b16 %v2468, %v2465
      %v2805 = vpack.c.b16 %v2469, %v2466
      %v2806 = vpack.c.b16 %v2473, %v2470
      %v2807 = vpack.c.b16 %v2474, %v2471
      %v2808 = vpack.c.b16 %v2475, %v2472
      %v2809 = vpack.c.b16 %v2479, %v2476
      %v2810 = vpack.c.b16 %v2480, %v2477
      %v2811 = vpack.c.b16 %v2481, %v2478
      %v2812 = vpack.c.b16 %v2485, %v2482
      %v2813 = vpack.c.b16 %v2486, %v2483
      %v2814 = vpack.c.b16 %v2487, %v2484
      %v2815 = vpack.c.b16 %v2491, %v2488
      %v2816 = vpack.c.b16 %v2492, %v2489
      %v2817 = vpack.c.b16 %v2493, %v2490
      %v2818 = vpack.c.b16 %v2497, %v2494
      %v2819 = vpack.c.b16 %v2498, %v2495
      %v2820 = vpack.c.b16 %v2499, %v2496
      %v2821 = vpack.c.b16 %v2503, %v2500
      %v2822 = vpack.c.b16 %v2504, %v2501
      %v2823 = vpack.c.b16 %v2505, %v2502
      %v2824 = vpack.c.b16 %v2509, %v2506
      %v2825 = vpack.c.b16 %v2510, %v2507
      %v2826 = vpack.c.b16 %v2511, %v2508
      %v2827 = vpack.c.b16 %v2515, %v2512
      %v2828 = vpack.c.b16 %v2516, %v2513
      %v2829 = vpack.c.b16 %v2517, %v2514
      %v2830 = vpack.c.b16 %v2521, %v2518
      %v2831 = vpack.c.b16 %v2522, %v2519
      %v2832 = vpack.c.b16 %v2523, %v2520
      %v2833 = vpack.c.b16 %v2527, %v2524
      %v2834 = vpack.c.b16 %v2528, %v2525
      %v2835 = vpack.c.b16 %v2529, %v2526
      %v2836 = vpack.c.b16 %v2533, %v2530
      %v2837 = vpack.c.b16 %v2534, %v2531
      %v2838 = vpack.c.b16 %v2535, %v2532
      %v2839 = vpack.c.b16 %v2539, %v2536
      %v2840 = vpack.c.b16 %v2540, %v2537
      %v2841 = vpack.c.b16 %v2541, %v2538
      %v2842 = vpack.c.b16 %v2545, %v2542
      %v2843 = vpack.c.b16 %v2546, %v2543
      %v2844 = vpack.c.b16 %v2547, %v2544
      %v2845 = vpack.c.b16 %v2551, %v2548
      %v2846 = vpack.c.b16 %v2552, %v2549
      %v2847 = vpack.c.b16 %v2553, %v2550
      %v2848 = vpack.c.b16 %v2557, %v2554
      %v2849 = vpack.c.b16 %v2558, %v2555
      %v2850 = vpack.c.b16 %v2559, %v2556
      %v2851 = vpack.c.b16 %v2563, %v2560
      %v2852 = vpack.c.b16 %v2564, %v2561
      %v2853 = vpack.c.b16 %v2565, %v2562
      %v2854 = vpack.c.b16 %v2569, %v2566
      %v2855 = vpack.c.b16 %v2570, %v2567
      %v2856 = vpack.c.b16 %v2571, %v2568
      %v2857 = vpack.c.b16 %v2575, %v2572
      %v2858 = vpack.c.b16 %v2576, %v2573
      %v2859 = vpack.c.b16 %v2577, %v2574
      %v2860 = vpack.c.b16 %v2581, %v2578
      %v2861 = vpack.c.b16 %v2582, %v2579
      %v2862 = vpack.c.b16 %v2583, %v2580
      %v2863 = vpack.c.b16 %v2587, %v2584
      %v2864 = vpack.c.b16 %v2588, %v2585
      %v2865 = vpack.c.b16 %v2589, %v2586
      %v2866 = vpack.c.b16 %v2593, %v2590
      %v2867 = vpack.c.b16 %v2594, %v2591
      %v2868 = vpack.c.b16 %v2595, %v2592
      %v2869 = vpack.c.b16 %v2599, %v2596
      %v2870 = vpack.c.b16 %v2600, %v2597
      %v2871 = vpack.c.b16 %v2601, %v2598
      %v2872 = vpack.c.b16 %v2605, %v2602
      %v2873 = vpack.c.b16 %v2606, %v2603
      %v2874 = vpack.c.b16 %v2607, %v2604
      %v2875 = vpack.c.b16 %v2611, %v2608
      %v2876 = vpack.c.b16 %v2612, %v2609
      %v2877 = vpack.c.b16 %v2613, %v2610
      %v2878 = vpack.c.b16 %v2617, %v2614
      %v2879 = vpack.c.b16 %v2618, %v2615
      %v2880 = vpack.c.b16 %v2619, %v2616
      %v2881 = vpack.c.b16 %v2623, %v2620
      %v2882 = vpack.c.b16 %v2624, %v2621
      %v2883 = vpack.c.b16 %v2625, %v2622
      %v2884 = vpack.c.b16 %v2629, %v2626
      %v2885 = vpack.c.b16 %v2630, %v2627
      %v2886 = vpack.c.b16 %v2631, %v2628
      %v2887 = vpack.c.b16 %v2635, %v2632
      %v2888 = vpack.c.b16 %v2636, %v2633
      %v2889 = vpack.c.b16 %v2637, %v2634
      %v2890 = vpack.c.b16 %v2641, %v2638
      %v2891 = vpack.c.b16 %v2642, %v2639
      %v2892 = vpack.c.b16 %v2643, %v2640
      %v2893 = vpack.c.b16 %v2647, %v2644
      %v2894 = vpack.c.b16 %v2648, %v2645
      %v2895 = vpack.c.b16 %v2649, %v2646
      %v2896 = vpack.c.b16 %v2653, %v2650
      %v2897 = vpack.c.b16 %v2654, %v2651
      %v2898 = vpack.c.b16 %v2655, %v2652
      %v2899 = vpack.c.b16 %v2659, %v2656
      %v2900 = vpack.c.b16 %v2660, %v2657
      %v2901 = vpack.c.b16 %v2661, %v2658
      %v2902 = vpack.c.b16 %v2665, %v2662
      %v2903 = vpack.c.b16 %v2666, %v2663
      %v2904 = vpack.c.b16 %v2667, %v2664
      %v2905 = vpack.c.b16 %v2671, %v2668
      %v2906 = vpack.c.b16 %v2672, %v2669
      %v2907 = vpack.c.b16 %v2673, %v2670
      %v2908 = vpack.c.b16 %v2677, %v2674
      %v2909 = vpack.c.b16 %v2678, %v2675
      %v2910 = vpack.c.b16 %v2679, %v2676
      %v2911 = vpack.c.b16 %v2683, %v2680
      %v2912 = vpack.c.b16 %v2684, %v2681
      %v2913 = vpack.c.b16 %v2685, %v2682
      %v2914 = vpack.c.b16 %v2689, %v2686
      %v2915 = vpack.c.b16 %v2690, %v2687
      %v2916 = vpack.c.b16 %v2691, %v2688
      %v2917 = vpack.c.b16 %v2695, %v2692
      %v2918 = vpack.c.b16 %v2696, %v2693
      %v2919 = vpack.c.b16 %v2697, %v2694
      %v2920 = vpack.c.b16 %v2701, %v2698
      %v2921 = vpack.c.b16 %v2702, %v2699
      %v2922 = vpack.c.b16 %v2703, %v2700
      %v2923 = vpack.c.b16 %v2707, %v2704
      %v2924 = vpack.c.b16 %v2708, %v2705
      %v2925 = vpack.c.b16 %v2709, %v2706
      %3142 = vmatprep.subr.bf16.mxu0 %v2711
      %3143 = vmatpush1.bf16.msra.mxu0 %v2710
      %3144 = vmatprep.subr.bf16.mxu0 %v2714
      %3145 = vmatpush1.bf16.msra.mxu0 %v2713
      %3146 = vmatprep.subr.bf16.mxu0 %v2717
      %3147 = vmatpush1.bf16.msra.mxu0 %v2716
      %3148 = vmatprep.subr.bf16.mxu0 %v2720
      %3149 = vmatpush1.bf16.msra.mxu0 %v2719
      %3150 = vmatprep.subr.bf16.mxu0 %v2723
      %3151 = vmatpush1.bf16.msra.mxu0 %v2722
      %3152 = vmatprep.subr.bf16.mxu0 %v2726
      %3153 = vmatpush1.bf16.msra.mxu0 %v2725
      %3154 = vmatprep.subr.bf16.mxu0 %v2729
      %3155 = vmatpush1.bf16.msra.mxu0 %v2728
      %3156 = vmatprep.subr.bf16.mxu0 %v2732
      %3157 = vmatpush1.bf16.msra.mxu0 %v2731
      %3158 = vmatprep.subr.bf16.mxu0 %v2735
      %3159 = vmatpush1.bf16.msra.mxu0 %v2734
      %3160 = vmatprep.subr.bf16.mxu0 %v2738
      %3161 = vmatpush1.bf16.msra.mxu0 %v2737
      %3162 = vmatprep.subr.bf16.mxu0 %v2741
      %3163 = vmatpush1.bf16.msra.mxu0 %v2740
      %3164 = vmatprep.subr.bf16.mxu0 %v2744
      %3165 = vmatpush1.bf16.msra.mxu0 %v2743
      %3166 = vmatprep.subr.bf16.mxu0 %v2747
      %3167 = vmatpush1.bf16.msra.mxu0 %v2746
      %3168 = vmatprep.subr.bf16.mxu0 %v2750
      %3169 = vmatpush1.bf16.msra.mxu0 %v2749
      %3170 = vmatprep.subr.bf16.mxu0 %v2753
      %3171 = vmatpush1.bf16.msra.mxu0 %v2752
      %3172 = vmatprep.subr.bf16.mxu0 %v2756
      %3173 = vmatpush1.bf16.msra.mxu0 %v2755
      %3174 = vmatprep.mubr.bf16.mxu0 %v1288
      %3175 = vmatmul.mubr.bf16.gmra.mrb[0].mxu0 %v1287
      %v3176 = vpop.f32.mrb[0].mxu0
      %v3177 = vadd.f32 0.0, %v3176
      %v3178 = vpop.f32.mrb[0].mxu0
      %v3179 = vadd.f32 0.0, %v3178
      %v3180 = vpop.f32.mrb[0].mxu0
      %v3181 = vadd.f32 0.0, %v3180
      %v3182 = vpop.f32.mrb[0].mxu0
      %v3183 = vadd.f32 0.0, %v3182
      %3184 = vmatprep.mubr.bf16.mxu0 %v1297
      %3185 = vmatmul.mubr.bf16.gmra.mrb[0].mxu0 %v1296
      %v3186 = vpop.f32.mrb[0].mxu0
      %v3187 = vadd.f32 0.0, %v3186
      %v3188 = vpop.f32.mrb[0].mxu0
      %v3189 = vadd.f32 0.0, %v3188
      %v3190 = vpop.f32.mrb[0].mxu0
      %v3191 = vadd.f32 0.0, %v3190
      %v3192 = vpop.f32.mrb[0].mxu0
      %v3193 = vadd.f32 0.0, %v3192
      %3194 = vmatprep.mubr.bf16.mxu0 %v1306
      %3195 = vmatmul.mubr.bf16.gmra.mrb[0].mxu0 %v1305
      %v3196 = vpop.f32.mrb[0].mxu0
      %v3197 = vadd.f32 0.0, %v3196
      %v3198 = vpop.f32.mrb[0].mxu0
      %v3199 = vadd.f32 0.0, %v3198
      %v3200 = vpop.f32.mrb[0].mxu0
      %v3201 = vadd.f32 0.0, %v3200
      %v3202 = vpop.f32.mrb[0].mxu0
      %v3203 = vadd.f32 0.0, %v3202
      %3204 = vmatprep.mubr.bf16.mxu0 %v1315
      %3205 = vmatmul.mubr.bf16.gmra.mrb[0].mxu0 %v1314
      %v3206 = vpop.f32.mrb[0].mxu0
      %v3207 = vadd.f32 0.0, %v3206
      %v3208 = vpop.f32.mrb[0].mxu0
      %v3209 = vadd.f32 0.0, %v3208
      %v3210 = vpop.f32.mrb[0].mxu0
      %v3211 = vadd.f32 0.0, %v3210
      %v3212 = vpop.f32.mrb[0].mxu0
      %v3213 = vadd.f32 0.0, %v3212
      %3214 = vmatprep.mubr.bf16.mxu0 %v1324
      %3215 = vmatmul.mubr.bf16.gmra.mrb[0].mxu0 %v1323
      %v3216 = vpop.f32.mrb[0].mxu0
      %v3217 = vadd.f32 0.0, %v3216
      %v3218 = vpop.f32.mrb[0].mxu0
      %v3219 = vadd.f32 0.0, %v3218
      %v3220 = vpop.f32.mrb[0].mxu0
      %v3221 = vadd.f32 0.0, %v3220
      %v3222 = vpop.f32.mrb[0].mxu0
      %v3223 = vadd.f32 0.0, %v3222
      %3224 = vmatprep.mubr.bf16.mxu0 %v1333
      %3225 = vmatmul.mubr.bf16.gmra.mrb[0].mxu0 %v1332
      %v3226 = vpop.f32.mrb[0].mxu0
      %v3227 = vadd.f32 0.0, %v3226
      %v3228 = vpop.f32.mrb[0].mxu0
      %v3229 = vadd.f32 0.0, %v3228
      %v3230 = vpop.f32.mrb[0].mxu0
      %v3231 = vadd.f32 0.0, %v3230
      %v3232 = vpop.f32.mrb[0].mxu0
      %v3233 = vadd.f32 0.0, %v3232
      %3234 = vmatprep.mubr.bf16.mxu0 %v1342
      %3235 = vmatmul.mubr.bf16.gmra.mrb[0].mxu0 %v1341
      %v3236 = vpop.f32.mrb[0].mxu0
      %v3237 = vadd.f32 0.0, %v3236
      %v3238 = vpop.f32.mrb[0].mxu0
      %v3239 = vadd.f32 0.0, %v3238
      %v3240 = vpop.f32.mrb[0].mxu0
      %v3241 = vadd.f32 0.0, %v3240
      %v3242 = vpop.f32.mrb[0].mxu0
      %v3243 = vadd.f32 0.0, %v3242
      %3244 = vmatprep.mubr.bf16.mxu0 %v1351
      %3245 = vmatmul.mubr.bf16.gmra.mrb[0].mxu0 %v1350
      %v3246 = vpop.f32.mrb[0].mxu0
      %v3247 = vadd.f32 0.0, %v3246
      %v3248 = vpop.f32.mrb[0].mxu0
      %v3249 = vadd.f32 0.0, %v3248
      %v3250 = vpop.f32.mrb[0].mxu0
      %v3251 = vadd.f32 0.0, %v3250
      %v3252 = vpop.f32.mrb[0].mxu0
      %v3253 = vadd.f32 0.0, %v3252
      %3254 = vmatprep.mubr.bf16.mxu0 %v1360
      %3255 = vmatmul.mubr.bf16.gmra.mrb[0].mxu0 %v1359
      %v3256 = vpop.f32.mrb[0].mxu0
      %v3257 = vadd.f32 0.0, %v3256
      %v3258 = vpop.f32.mrb[0].mxu0
      %v3259 = vadd.f32 0.0, %v3258
      %v3260 = vpop.f32.mrb[0].mxu0
      %v3261 = vadd.f32 0.0, %v3260
      %v3262 = vpop.f32.mrb[0].mxu0
      %v3263 = vadd.f32 0.0, %v3262
      %3264 = vmatprep.mubr.bf16.mxu0 %v1369
      %3265 = vmatmul.mubr.bf16.gmra.mrb[0].mxu0 %v1368
      %v3266 = vpop.f32.mrb[0].mxu0
      %v3267 = vadd.f32 0.0, %v3266
      %v3268 = vpop.f32.mrb[0].mxu0
      %v3269 = vadd.f32 0.0, %v3268
      %v3270 = vpop.f32.mrb[0].mxu0
      %v3271 = vadd.f32 0.0, %v3270
      %v3272 = vpop.f32.mrb[0].mxu0
      %v3273 = vadd.f32 0.0, %v3272
      %3274 = vmatprep.mubr.bf16.mxu0 %v1378
      %3275 = vmatmul.mubr.bf16.gmra.mrb[0].mxu0 %v1377
      %v3276 = vpop.f32.mrb[0].mxu0
      %v3277 = vadd.f32 0.0, %v3276
      %v3278 = vpop.f32.mrb[0].mxu0
      %v3279 = vadd.f32 0.0, %v3278
      %v3280 = vpop.f32.mrb[0].mxu0
      %v3281 = vadd.f32 0.0, %v3280
      %v3282 = vpop.f32.mrb[0].mxu0
      %v3283 = vadd.f32 0.0, %v3282
      %3284 = vmatprep.mubr.bf16.mxu0 %v1387
      %3285 = vmatmul.mubr.bf16.gmra.mrb[0].mxu0 %v1386
      %v3286 = vpop.f32.mrb[0].mxu0
      %v3287 = vadd.f32 0.0, %v3286
      %v3288 = vpop.f32.mrb[0].mxu0
      %v3289 = vadd.f32 0.0, %v3288
      %v3290 = vpop.f32.mrb[0].mxu0
      %v3291 = vadd.f32 0.0, %v3290
      %v3292 = vpop.f32.mrb[0].mxu0
      %v3293 = vadd.f32 0.0, %v3292
      %3294 = vmatprep.mubr.bf16.mxu0 %v1396
      %3295 = vmatmul.mubr.bf16.gmra.mrb[0].mxu0 %v1395
      %v3296 = vpop.f32.mrb[0].mxu0
      %v3297 = vadd.f32 0.0, %v3296
      %v3298 = vpop.f32.mrb[0].mxu0
      %v3299 = vadd.f32 0.0, %v3298
      %v3300 = vpop.f32.mrb[0].mxu0
      %v3301 = vadd.f32 0.0, %v3300
      %v3302 = vpop.f32.mrb[0].mxu0
      %v3303 = vadd.f32 0.0, %v3302
      %3304 = vmatprep.mubr.bf16.mxu0 %v1693
      %3305 = vmatmul.mubr.bf16.gmra.mrb[0].mxu0 %v1692
      %v3306 = vpop.f32.mrb[0].mxu0
      %v3307 = vadd.f32 0.0, %v3306
      %v3308 = vpop.f32.mrb[0].mxu0
      %v3309 = vadd.f32 0.0, %v3308
      %v3310 = vpop.f32.mrb[0].mxu0
      %v3311 = vadd.f32 0.0, %v3310
      %v3312 = vpop.f32.mrb[0].mxu0
      %v3313 = vadd.f32 0.0, %v3312
      %3314 = vdwg.mxu0
      %3315 = vmatprep.subr.bf16.mxu0 %v2759
      %3316 = vmatpush1.bf16.msra.mxu0 %v2758
      %3317 = vmatprep.subr.bf16.mxu0 %v2762
      %3318 = vmatpush1.bf16.msra.mxu0 %v2761
      %3319 = vmatprep.subr.bf16.mxu0 %v2765
      %3320 = vmatpush1.bf16.msra.mxu0 %v2764
      %3321 = vmatprep.subr.bf16.mxu0 %v2768
      %3322 = vmatpush1.bf16.msra.mxu0 %v2767
      %3323 = vmatprep.subr.bf16.mxu0 %v2771
      %3324 = vmatpush1.bf16.msra.mxu0 %v2770
      %3325 = vmatprep.subr.bf16.mxu0 %v2774
      %3326 = vmatpush1.bf16.msra.mxu0 %v2773
      %3327 = vmatprep.subr.bf16.mxu0 %v2777
      %3328 = vmatpush1.bf16.msra.mxu0 %v2776
      %3329 = vmatprep.subr.bf16.mxu0 %v2780
      %3330 = vmatpush1.bf16.msra.mxu0 %v2779
      %3331 = vmatprep.subr.bf16.mxu0 %v2783
      %3332 = vmatpush1.bf16.msra.mxu0 %v2782
      %3333 = vmatprep.subr.bf16.mxu0 %v2786
      %3334 = vmatpush1.bf16.msra.mxu0 %v2785
      %3335 = vmatprep.subr.bf16.mxu0 %v2789
      %3336 = vmatpush1.bf16.msra.mxu0 %v2788
      %3337 = vmatprep.subr.bf16.mxu0 %v2792
      %3338 = vmatpush1.bf16.msra.mxu0 %v2791
      %3339 = vmatprep.subr.bf16.mxu0 %v2795
      %3340 = vmatpush1.bf16.msra.mxu0 %v2794
      %3341 = vmatprep.subr.bf16.mxu0 %v2798
      %3342 = vmatpush1.bf16.msra.mxu0 %v2797
      %3343 = vmatprep.subr.bf16.mxu0 %v2801
      %3344 = vmatpush1.bf16.msra.mxu0 %v2800
      %3345 = vmatprep.subr.bf16.mxu0 %v2804
      %3346 = vmatpush1.bf16.msra.mxu0 %v2803
      %3347 = vmatprep.mubr.bf16.mxu0 %v1290
      %3348 = vmatmul.mubr.bf16.gmra.mrb[0].mxu0 %v1289
      %v3349 = vpop.f32.mrb[0].mxu0
      %v3350 = vadd.f32 %v3177, %v3349
      %v3351 = vpop.f32.mrb[0].mxu0
      %v3352 = vadd.f32 %v3179, %v3351
      %v3353 = vpop.f32.mrb[0].mxu0
      %v3354 = vadd.f32 %v3181, %v3353
      %v3355 = vpop.f32.mrb[0].mxu0
      %v3356 = vadd.f32 %v3183, %v3355
      %3357 = vmatprep.mubr.bf16.mxu0 %v1299
      %3358 = vmatmul.mubr.bf16.gmra.mrb[0].mxu0 %v1298
      %v3359 = vpop.f32.mrb[0].mxu0
      %v3360 = vadd.f32 %v3187, %v3359
      %v3361 = vpop.f32.mrb[0].mxu0
      %v3362 = vadd.f32 %v3189, %v3361
      %v3363 = vpop.f32.mrb[0].mxu0
      %v3364 = vadd.f32 %v3191, %v3363
      %v3365 = vpop.f32.mrb[0].mxu0
      %v3366 = vadd.f32 %v3193, %v3365
      %3367 = vmatprep.mubr.bf16.mxu0 %v1308
      %3368 = vmatmul.mubr.bf16.gmra.mrb[0].mxu0 %v1307
      %v3369 = vpop.f32.mrb[0].mxu0
      %v3370 = vadd.f32 %v3197, %v3369
      %v3371 = vpop.f32.mrb[0].mxu0
      %v3372 = vadd.f32 %v3199, %v3371
      %v3373 = vpop.f32.mrb[0].mxu0
      %v3374 = vadd.f32 %v3201, %v3373
      %v3375 = vpop.f32.mrb[0].mxu0
      %v3376 = vadd.f32 %v3203, %v3375
      %3377 = vmatprep.mubr.bf16.mxu0 %v1317
      %3378 = vmatmul.mubr.bf16.gmra.mrb[0].mxu0 %v1316
      %v3379 = vpop.f32.mrb[0].mxu0
      %v3380 = vadd.f32 %v3207, %v3379
      %v3381 = vpop.f32.mrb[0].mxu0
      %v3382 = vadd.f32 %v3209, %v3381
      %v3383 = vpop.f32.mrb[0].mxu0
      %v3384 = vadd.f32 %v3211, %v3383
      %v3385 = vpop.f32.mrb[0].mxu0
      %v3386 = vadd.f32 %v3213, %v3385
      %3387 = vmatprep.mubr.bf16.mxu0 %v1326
      %3388 = vmatmul.mubr.bf16.gmra.mrb[0].mxu0 %v1325
      %v3389 = vpop.f32.mrb[0].mxu0
      %v3390 = vadd.f32 %v3217, %v3389
      %v3391 = vpop.f32.mrb[0].mxu0
      %v3392 = vadd.f32 %v3219, %v3391
      %v3393 = vpop.f32.mrb[0].mxu0
      %v3394 = vadd.f32 %v3221, %v3393
      %v3395 = vpop.f32.mrb[0].mxu0
      %v3396 = vadd.f32 %v3223, %v3395
      %3397 = vmatprep.mubr.bf16.mxu0 %v1335
      %3398 = vmatmul.mubr.bf16.gmra.mrb[0].mxu0 %v1334
      %v3399 = vpop.f32.mrb[0].mxu0
      %v3400 = vadd.f32 %v3227, %v3399
      %v3401 = vpop.f32.mrb[0].mxu0
      %v3402 = vadd.f32 %v3229, %v3401
      %v3403 = vpop.f32.mrb[0].mxu0
      %v3404 = vadd.f32 %v3231, %v3403
      %v3405 = vpop.f32.mrb[0].mxu0
      %v3406 = vadd.f32 %v3233, %v3405
      %3407 = vmatprep.mubr.bf16.mxu0 %v1344
      %3408 = vmatmul.mubr.bf16.gmra.mrb[0].mxu0 %v1343
      %v3409 = vpop.f32.mrb[0].mxu0
      %v3410 = vadd.f32 %v3237, %v3409
      %v3411 = vpop.f32.mrb[0].mxu0
      %v3412 = vadd.f32 %v3239, %v3411
      %v3413 = vpop.f32.mrb[0].mxu0
      %v3414 = vadd.f32 %v3241, %v3413
      %v3415 = vpop.f32.mrb[0].mxu0
      %v3416 = vadd.f32 %v3243, %v3415
      %3417 = vmatprep.mubr.bf16.mxu0 %v1353
      %3418 = vmatmul.mubr.bf16.gmra.mrb[0].mxu0 %v1352
      %v3419 = vpop.f32.mrb[0].mxu0
      %v3420 = vadd.f32 %v3247, %v3419
      %v3421 = vpop.f32.mrb[0].mxu0
      %v3422 = vadd.f32 %v3249, %v3421
      %v3423 = vpop.f32.mrb[0].mxu0
      %v3424 = vadd.f32 %v3251, %v3423
      %v3425 = vpop.f32.mrb[0].mxu0
      %v3426 = vadd.f32 %v3253, %v3425
      %3427 = vmatprep.mubr.bf16.mxu0 %v1362
      %3428 = vmatmul.mubr.bf16.gmra.mrb[0].mxu0 %v1361
      %v3429 = vpop.f32.mrb[0].mxu0
      %v3430 = vadd.f32 %v3257, %v3429
      %v3431 = vpop.f32.mrb[0].mxu0
      %v3432 = vadd.f32 %v3259, %v3431
      %v3433 = vpop.f32.mrb[0].mxu0
      %v3434 = vadd.f32 %v3261, %v3433
      %v3435 = vpop.f32.mrb[0].mxu0
      %v3436 = vadd.f32 %v3263, %v3435
      %3437 = vmatprep.mubr.bf16.mxu0 %v1371
      %3438 = vmatmul.mubr.bf16.gmra.mrb[0].mxu0 %v1370
      %v3439 = vpop.f32.mrb[0].mxu0
      %v3440 = vadd.f32 %v3267, %v3439
      %v3441 = vpop.f32.mrb[0].mxu0
      %v3442 = vadd.f32 %v3269, %v3441
      %v3443 = vpop.f32.mrb[0].mxu0
      %v3444 = vadd.f32 %v3271, %v3443
      %v3445 = vpop.f32.mrb[0].mxu0
      %v3446 = vadd.f32 %v3273, %v3445
      %3447 = vmatprep.mubr.bf16.mxu0 %v1380
      %3448 = vmatmul.mubr.bf16.gmra.mrb[0].mxu0 %v1379
      %v3449 = vpop.f32.mrb[0].mxu0
      %v3450 = vadd.f32 %v3277, %v3449
      %v3451 = vpop.f32.mrb[0].mxu0
      %v3452 = vadd.f32 %v3279, %v3451
      %v3453 = vpop.f32.mrb[0].mxu0
      %v3454 = vadd.f32 %v3281, %v3453
      %v3455 = vpop.f32.mrb[0].mxu0
      %v3456 = vadd.f32 %v3283, %v3455
      %3457 = vmatprep.mubr.bf16.mxu0 %v1389
      %3458 = vmatmul.mubr.bf16.gmra.mrb[0].mxu0 %v1388
      %v3459 = vpop.f32.mrb[0].mxu0
      %v3460 = vadd.f32 %v3287, %v3459
      %v3461 = vpop.f32.mrb[0].mxu0
      %v3462 = vadd.f32 %v3289, %v3461
      %v3463 = vpop.f32.mrb[0].mxu0
      %v3464 = vadd.f32 %v3291, %v3463
      %v3465 = vpop.f32.mrb[0].mxu0
      %v3466 = vadd.f32 %v3293, %v3465
      %3467 = vmatprep.mubr.bf16.mxu0 %v1398
      %3468 = vmatmul.mubr.bf16.gmra.mrb[0].mxu0 %v1397
      %v3469 = vpop.f32.mrb[0].mxu0
      %v3470 = vadd.f32 %v3297, %v3469
      %v3471 = vpop.f32.mrb[0].mxu0
      %v3472 = vadd.f32 %v3299, %v3471
      %v3473 = vpop.f32.mrb[0].mxu0
      %v3474 = vadd.f32 %v3301, %v3473
      %v3475 = vpop.f32.mrb[0].mxu0
      %v3476 = vadd.f32 %v3303, %v3475
      %3477 = vmatprep.mubr.bf16.mxu0 %v1695
      %3478 = vmatmul.mubr.bf16.gmra.mrb[0].mxu0 %v1694
      %v3479 = vpop.f32.mrb[0].mxu0
      %v3480 = vadd.f32 %v3307, %v3479
      %v3481 = vpop.f32.mrb[0].mxu0
      %v3482 = vadd.f32 %v3309, %v3481
      %v3483 = vpop.f32.mrb[0].mxu0
      %v3484 = vadd.f32 %v3311, %v3483
      %v3485 = vpop.f32.mrb[0].mxu0
      %v3486 = vadd.f32 %v3313, %v3485
      %3487 = vdwg.mxu0
      %3488 = vmatprep.subr.bf16.mxu0 %v2807
      %3489 = vmatpush1.bf16.msra.mxu0 %v2806
      %3490 = vmatprep.subr.bf16.mxu0 %v2810
      %3491 = vmatpush1.bf16.msra.mxu0 %v2809
      %3492 = vmatprep.subr.bf16.mxu0 %v2813
      %3493 = vmatpush1.bf16.msra.mxu0 %v2812
      %3494 = vmatprep.subr.bf16.mxu0 %v2816
      %3495 = vmatpush1.bf16.msra.mxu0 %v2815
      %3496 = vmatprep.subr.bf16.mxu0 %v2819
      %3497 = vmatpush1.bf16.msra.mxu0 %v2818
      %3498 = vmatprep.subr.bf16.mxu0 %v2822
      %3499 = vmatpush1.bf16.msra.mxu0 %v2821
      %3500 = vmatprep.subr.bf16.mxu0 %v2825
      %3501 = vmatpush1.bf16.msra.mxu0 %v2824
      %3502 = vmatprep.subr.bf16.mxu0 %v2828
      %3503 = vmatpush1.bf16.msra.mxu0 %v2827
      %3504 = vmatprep.subr.bf16.mxu0 %v2831
      %3505 = vmatpush1.bf16.msra.mxu0 %v2830
      %3506 = vmatprep.subr.bf16.mxu0 %v2834
      %3507 = vmatpush1.bf16.msra.mxu0 %v2833
      %3508 = vmatprep.subr.bf16.mxu0 %v2837
      %3509 = vmatpush1.bf16.msra.mxu0 %v2836
      %3510 = vmatprep.subr.bf16.mxu0 %v2840
      %3511 = vmatpush1.bf16.msra.mxu0 %v2839
      %3512 = vmatprep.subr.bf16.mxu0 %v2843
      %3513 = vmatpush1.bf16.msra.mxu0 %v2842
      %3514 = vmatprep.subr.bf16.mxu0 %v2846
      %3515 = vmatpush1.bf16.msra.mxu0 %v2845
      %3516 = vmatprep.subr.bf16.mxu0 %v2849
      %3517 = vmatpush1.bf16.msra.mxu0 %v2848
      %3518 = vmatprep.subr.bf16.mxu0 %v2852
      %3519 = vmatpush1.bf16.msra.mxu0 %v2851
      %3520 = vmatprep.mubr.bf16.mxu0 %v1292
      %3521 = vmatmul.mubr.bf16.gmra.mrb[0].mxu0 %v1291
      %v3522 = vpop.f32.mrb[0].mxu0
      %v3523 = vadd.f32 %v3350, %v3522
      %v3524 = vpop.f32.mrb[0].mxu0
      %v3525 = vadd.f32 %v3352, %v3524
      %v3526 = vpop.f32.mrb[0].mxu0
      %v3527 = vadd.f32 %v3354, %v3526
      %v3528 = vpop.f32.mrb[0].mxu0
      %v3529 = vadd.f32 %v3356, %v3528
      %3530 = vmatprep.mubr.bf16.mxu0 %v1301
      %3531 = vmatmul.mubr.bf16.gmra.mrb[0].mxu0 %v1300
      %v3532 = vpop.f32.mrb[0].mxu0
      %v3533 = vadd.f32 %v3360, %v3532
      %v3534 = vpop.f32.mrb[0].mxu0
      %v3535 = vadd.f32 %v3362, %v3534
      %v3536 = vpop.f32.mrb[0].mxu0
      %v3537 = vadd.f32 %v3364, %v3536
      %v3538 = vpop.f32.mrb[0].mxu0
      %v3539 = vadd.f32 %v3366, %v3538
      %3540 = vmatprep.mubr.bf16.mxu0 %v1310
      %3541 = vmatmul.mubr.bf16.gmra.mrb[0].mxu0 %v1309
      %v3542 = vpop.f32.mrb[0].mxu0
      %v3543 = vadd.f32 %v3370, %v3542
      %v3544 = vpop.f32.mrb[0].mxu0
      %v3545 = vadd.f32 %v3372, %v3544
      %v3546 = vpop.f32.mrb[0].mxu0
      %v3547 = vadd.f32 %v3374, %v3546
      %v3548 = vpop.f32.mrb[0].mxu0
      %v3549 = vadd.f32 %v3376, %v3548
      %3550 = vmatprep.mubr.bf16.mxu0 %v1319
      %3551 = vmatmul.mubr.bf16.gmra.mrb[0].mxu0 %v1318
      %v3552 = vpop.f32.mrb[0].mxu0
      %v3553 = vadd.f32 %v3380, %v3552
      %v3554 = vpop.f32.mrb[0].mxu0
      %v3555 = vadd.f32 %v3382, %v3554
      %v3556 = vpop.f32.mrb[0].mxu0
      %v3557 = vadd.f32 %v3384, %v3556
      %v3558 = vpop.f32.mrb[0].mxu0
      %v3559 = vadd.f32 %v3386, %v3558
      %3560 = vmatprep.mubr.bf16.mxu0 %v1328
      %3561 = vmatmul.mubr.bf16.gmra.mrb[0].mxu0 %v1327
      %v3562 = vpop.f32.mrb[0].mxu0
      %v3563 = vadd.f32 %v3390, %v3562
      %v3564 = vpop.f32.mrb[0].mxu0
      %v3565 = vadd.f32 %v3392, %v3564
      %v3566 = vpop.f32.mrb[0].mxu0
      %v3567 = vadd.f32 %v3394, %v3566
      %v3568 = vpop.f32.mrb[0].mxu0
      %v3569 = vadd.f32 %v3396, %v3568
      %3570 = vmatprep.mubr.bf16.mxu0 %v1337
      %3571 = vmatmul.mubr.bf16.gmra.mrb[0].mxu0 %v1336
      %v3572 = vpop.f32.mrb[0].mxu0
      %v3573 = vadd.f32 %v3400, %v3572
      %v3574 = vpop.f32.mrb[0].mxu0
      %v3575 = vadd.f32 %v3402, %v3574
      %v3576 = vpop.f32.mrb[0].mxu0
      %v3577 = vadd.f32 %v3404, %v3576
      %v3578 = vpop.f32.mrb[0].mxu0
      %v3579 = vadd.f32 %v3406, %v3578
      %3580 = vmatprep.mubr.bf16.mxu0 %v1346
      %3581 = vmatmul.mubr.bf16.gmra.mrb[0].mxu0 %v1345
      %v3582 = vpop.f32.mrb[0].mxu0
      %v3583 = vadd.f32 %v3410, %v3582
      %v3584 = vpop.f32.mrb[0].mxu0
      %v3585 = vadd.f32 %v3412, %v3584
      %v3586 = vpop.f32.mrb[0].mxu0
      %v3587 = vadd.f32 %v3414, %v3586
      %v3588 = vpop.f32.mrb[0].mxu0
      %v3589 = vadd.f32 %v3416, %v3588
      %3590 = vmatprep.mubr.bf16.mxu0 %v1355
      %3591 = vmatmul.mubr.bf16.gmra.mrb[0].mxu0 %v1354
      %v3592 = vpop.f32.mrb[0].mxu0
      %v3593 = vadd.f32 %v3420, %v3592
      %v3594 = vpop.f32.mrb[0].mxu0
      %v3595 = vadd.f32 %v3422, %v3594
      %v3596 = vpop.f32.mrb[0].mxu0
      %v3597 = vadd.f32 %v3424, %v3596
      %v3598 = vpop.f32.mrb[0].mxu0
      %v3599 = vadd.f32 %v3426, %v3598
      %3600 = vmatprep.mubr.bf16.mxu0 %v1364
      %3601 = vmatmul.mubr.bf16.gmra.mrb[0].mxu0 %v1363
      %v3602 = vpop.f32.mrb[0].mxu0
      %v3603 = vadd.f32 %v3430, %v3602
      %v3604 = vpop.f32.mrb[0].mxu0
      %v3605 = vadd.f32 %v3432, %v3604
      %v3606 = vpop.f32.mrb[0].mxu0
      %v3607 = vadd.f32 %v3434, %v3606
      %v3608 = vpop.f32.mrb[0].mxu0
      %v3609 = vadd.f32 %v3436, %v3608
      %3610 = vmatprep.mubr.bf16.mxu0 %v1373
      %3611 = vmatmul.mubr.bf16.gmra.mrb[0].mxu0 %v1372
      %v3612 = vpop.f32.mrb[0].mxu0
      %v3613 = vadd.f32 %v3440, %v3612
      %v3614 = vpop.f32.mrb[0].mxu0
      %v3615 = vadd.f32 %v3442, %v3614
      %v3616 = vpop.f32.mrb[0].mxu0
      %v3617 = vadd.f32 %v3444, %v3616
      %v3618 = vpop.f32.mrb[0].mxu0
      %v3619 = vadd.f32 %v3446, %v3618
      %3620 = vmatprep.mubr.bf16.mxu0 %v1382
      %3621 = vmatmul.mubr.bf16.gmra.mrb[0].mxu0 %v1381
      %v3622 = vpop.f32.mrb[0].mxu0
      %v3623 = vadd.f32 %v3450, %v3622
      %v3624 = vpop.f32.mrb[0].mxu0
      %v3625 = vadd.f32 %v3452, %v3624
      %v3626 = vpop.f32.mrb[0].mxu0
      %v3627 = vadd.f32 %v3454, %v3626
      %v3628 = vpop.f32.mrb[0].mxu0
      %v3629 = vadd.f32 %v3456, %v3628
      %3630 = vmatprep.mubr.bf16.mxu0 %v1391
      %3631 = vmatmul.mubr.bf16.gmra.mrb[0].mxu0 %v1390
      %v3632 = vpop.f32.mrb[0].mxu0
      %v3633 = vadd.f32 %v3460, %v3632
      %v3634 = vpop.f32.mrb[0].mxu0
      %v3635 = vadd.f32 %v3462, %v3634
      %v3636 = vpop.f32.mrb[0].mxu0
      %v3637 = vadd.f32 %v3464, %v3636
      %v3638 = vpop.f32.mrb[0].mxu0
      %v3639 = vadd.f32 %v3466, %v3638
      %3640 = vmatprep.mubr.bf16.mxu0 %v1400
      %3641 = vmatmul.mubr.bf16.gmra.mrb[0].mxu0 %v1399
      %v3642 = vpop.f32.mrb[0].mxu0
      %v3643 = vadd.f32 %v3470, %v3642
      %v3644 = vpop.f32.mrb[0].mxu0
      %v3645 = vadd.f32 %v3472, %v3644
      %v3646 = vpop.f32.mrb[0].mxu0
      %v3647 = vadd.f32 %v3474, %v3646
      %v3648 = vpop.f32.mrb[0].mxu0
      %v3649 = vadd.f32 %v3476, %v3648
      %3650 = vmatprep.mubr.bf16.mxu0 %v1697
      %3651 = vmatmul.mubr.bf16.gmra.mrb[0].mxu0 %v1696
      %v3652 = vpop.f32.mrb[0].mxu0
      %v3653 = vadd.f32 %v3480, %v3652
      %v3654 = vpop.f32.mrb[0].mxu0
      %v3655 = vadd.f32 %v3482, %v3654
      %v3656 = vpop.f32.mrb[0].mxu0
      %v3657 = vadd.f32 %v3484, %v3656
      %v3658 = vpop.f32.mrb[0].mxu0
      %v3659 = vadd.f32 %v3486, %v3658
      %3660 = vdwg.mxu0
      %3661 = vmatprep.subr.bf16.mxu0 %v2855
      %3662 = vmatpush1.bf16.msra.mxu0 %v2854
      %3663 = vmatprep.subr.bf16.mxu0 %v2858
      %3664 = vmatpush1.bf16.msra.mxu0 %v2857
      %3665 = vmatprep.subr.bf16.mxu0 %v2861
      %3666 = vmatpush1.bf16.msra.mxu0 %v2860
      %3667 = vmatprep.subr.bf16.mxu0 %v2864
      %3668 = vmatpush1.bf16.msra.mxu0 %v2863
      %3669 = vmatprep.subr.bf16.mxu0 %v2867
      %3670 = vmatpush1.bf16.msra.mxu0 %v2866
      %3671 = vmatprep.subr.bf16.mxu0 %v2870
      %3672 = vmatpush1.bf16.msra.mxu0 %v2869
      %3673 = vmatprep.subr.bf16.mxu0 %v2873
      %3674 = vmatpush1.bf16.msra.mxu0 %v2872
      %3675 = vmatprep.subr.bf16.mxu0 %v2876
      %3676 = vmatpush1.bf16.msra.mxu0 %v2875
      %3677 = vmatprep.subr.bf16.mxu0 %v2879
      %3678 = vmatpush1.bf16.msra.mxu0 %v2878
      %3679 = vmatprep.subr.bf16.mxu0 %v2882
      %3680 = vmatpush1.bf16.msra.mxu0 %v2881
      %3681 = vmatprep.subr.bf16.mxu0 %v2885
      %3682 = vmatpush1.bf16.msra.mxu0 %v2884
      %3683 = vmatprep.subr.bf16.mxu0 %v2888
      %3684 = vmatpush1.bf16.msra.mxu0 %v2887
      %3685 = vmatprep.subr.bf16.mxu0 %v2891
      %3686 = vmatpush1.bf16.msra.mxu0 %v2890
      %3687 = vmatprep.subr.bf16.mxu0 %v2894
      %3688 = vmatpush1.bf16.msra.mxu0 %v2893
      %3689 = vmatprep.subr.bf16.mxu0 %v2897
      %3690 = vmatpush1.bf16.msra.mxu0 %v2896
      %3691 = vmatprep.subr.bf16.mxu0 %v2900
      %3692 = vmatpush1.bf16.msra.mxu0 %v2899
      %3693 = vmatprep.mubr.bf16.mxu0 %v1294
      %3694 = vmatmul.mubr.bf16.gmra.mrb[0].mxu0 %v1293
      %v3695 = vpop.f32.mrb[0].mxu0
      %v3696 = vadd.f32 %v3523, %v3695
      %v3697 = vpop.f32.mrb[0].mxu0
      %v3698 = vadd.f32 %v3525, %v3697
      %v3699 = vpop.f32.mrb[0].mxu0
      %v3700 = vadd.f32 %v3527, %v3699
      %v3701 = vpop.f32.mrb[0].mxu0
      %v3702 = vadd.f32 %v3529, %v3701
      %3703 = vmatprep.mubr.bf16.mxu0 %v1303
      %3704 = vmatmul.mubr.bf16.gmra.mrb[0].mxu0 %v1302
      %v3705 = vpop.f32.mrb[0].mxu0
      %v3706 = vadd.f32 %v3533, %v3705
      %v3707 = vpop.f32.mrb[0].mxu0
      %v3708 = vadd.f32 %v3535, %v3707
      %v3709 = vpop.f32.mrb[0].mxu0
      %v3710 = vadd.f32 %v3537, %v3709
      %v3711 = vpop.f32.mrb[0].mxu0
      %v3712 = vadd.f32 %v3539, %v3711
      %3713 = vmatprep.mubr.bf16.mxu0 %v1312
      %3714 = vmatmul.mubr.bf16.gmra.mrb[0].mxu0 %v1311
      %v3715 = vpop.f32.mrb[0].mxu0
      %v3716 = vadd.f32 %v3543, %v3715
      %v3717 = vpop.f32.mrb[0].mxu0
      %v3718 = vadd.f32 %v3545, %v3717
      %v3719 = vpop.f32.mrb[0].mxu0
      %v3720 = vadd.f32 %v3547, %v3719
      %v3721 = vpop.f32.mrb[0].mxu0
      %v3722 = vadd.f32 %v3549, %v3721
      %3723 = vmatprep.mubr.bf16.mxu0 %v1321
      %3724 = vmatmul.mubr.bf16.gmra.mrb[0].mxu0 %v1320
      %v3725 = vpop.f32.mrb[0].mxu0
      %v3726 = vadd.f32 %v3553, %v3725
      %v3727 = vpop.f32.mrb[0].mxu0
      %v3728 = vadd.f32 %v3555, %v3727
      %v3729 = vpop.f32.mrb[0].mxu0
      %v3730 = vadd.f32 %v3557, %v3729
      %v3731 = vpop.f32.mrb[0].mxu0
      %v3732 = vadd.f32 %v3559, %v3731
      %3733 = vmatprep.mubr.bf16.mxu0 %v1330
      %3734 = vmatmul.mubr.bf16.gmra.mrb[0].mxu0 %v1329
      %v3735 = vpop.f32.mrb[0].mxu0
      %v3736 = vadd.f32 %v3563, %v3735
      %v3737 = vpop.f32.mrb[0].mxu0
      %v3738 = vadd.f32 %v3565, %v3737
      %v3739 = vpop.f32.mrb[0].mxu0
      %v3740 = vadd.f32 %v3567, %v3739
      %v3741 = vpop.f32.mrb[0].mxu0
      %v3742 = vadd.f32 %v3569, %v3741
      %3743 = vmatprep.mubr.bf16.mxu0 %v1339
      %3744 = vmatmul.mubr.bf16.gmra.mrb[0].mxu0 %v1338
      %v3745 = vpop.f32.mrb[0].mxu0
      %v3746 = vadd.f32 %v3573, %v3745
      %v3747 = vpop.f32.mrb[0].mxu0
      %v3748 = vadd.f32 %v3575, %v3747
      %v3749 = vpop.f32.mrb[0].mxu0
      %v3750 = vadd.f32 %v3577, %v3749
      %v3751 = vpop.f32.mrb[0].mxu0
      %v3752 = vadd.f32 %v3579, %v3751
      %3753 = vmatprep.mubr.bf16.mxu0 %v1348
      %3754 = vmatmul.mubr.bf16.gmra.mrb[0].mxu0 %v1347
      %v3755 = vpop.f32.mrb[0].mxu0
      %v3756 = vadd.f32 %v3583, %v3755
      %v3757 = vpop.f32.mrb[0].mxu0
      %v3758 = vadd.f32 %v3585, %v3757
      %v3759 = vpop.f32.mrb[0].mxu0
      %v3760 = vadd.f32 %v3587, %v3759
      %v3761 = vpop.f32.mrb[0].mxu0
      %v3762 = vadd.f32 %v3589, %v3761
      %3763 = vmatprep.mubr.bf16.mxu0 %v1357
      %3764 = vmatmul.mubr.bf16.gmra.mrb[0].mxu0 %v1356
      %v3765 = vpop.f32.mrb[0].mxu0
      %v3766 = vadd.f32 %v3593, %v3765
      %v3767 = vpop.f32.mrb[0].mxu0
      %v3768 = vadd.f32 %v3595, %v3767
      %v3769 = vpop.f32.mrb[0].mxu0
      %v3770 = vadd.f32 %v3597, %v3769
      %v3771 = vpop.f32.mrb[0].mxu0
      %v3772 = vadd.f32 %v3599, %v3771
      %3773 = vmatprep.mubr.bf16.mxu0 %v1366
      %3774 = vmatmul.mubr.bf16.gmra.mrb[0].mxu0 %v1365
      %v3775 = vpop.f32.mrb[0].mxu0
      %v3776 = vadd.f32 %v3603, %v3775
      %v3777 = vpop.f32.mrb[0].mxu0
      %v3778 = vadd.f32 %v3605, %v3777
      %v3779 = vpop.f32.mrb[0].mxu0
      %v3780 = vadd.f32 %v3607, %v3779
      %v3781 = vpop.f32.mrb[0].mxu0
      %v3782 = vadd.f32 %v3609, %v3781
      %3783 = vmatprep.mubr.bf16.mxu0 %v1375
      %3784 = vmatmul.mubr.bf16.gmra.mrb[0].mxu0 %v1374
      %v3785 = vpop.f32.mrb[0].mxu0
      %v3786 = vadd.f32 %v3613, %v3785
      %v3787 = vpop.f32.mrb[0].mxu0
      %v3788 = vadd.f32 %v3615, %v3787
      %v3789 = vpop.f32.mrb[0].mxu0
      %v3790 = vadd.f32 %v3617, %v3789
      %v3791 = vpop.f32.mrb[0].mxu0
      %v3792 = vadd.f32 %v3619, %v3791
      %3793 = vmatprep.mubr.bf16.mxu0 %v1384
      %3794 = vmatmul.mubr.bf16.gmra.mrb[0].mxu0 %v1383
      %v3795 = vpop.f32.mrb[0].mxu0
      %v3796 = vadd.f32 %v3623, %v3795
      %v3797 = vpop.f32.mrb[0].mxu0
      %v3798 = vadd.f32 %v3625, %v3797
      %v3799 = vpop.f32.mrb[0].mxu0
      %v3800 = vadd.f32 %v3627, %v3799
      %v3801 = vpop.f32.mrb[0].mxu0
      %v3802 = vadd.f32 %v3629, %v3801
      %3803 = vmatprep.mubr.bf16.mxu0 %v1393
      %3804 = vmatmul.mubr.bf16.gmra.mrb[0].mxu0 %v1392
      %v3805 = vpop.f32.mrb[0].mxu0
      %v3806 = vadd.f32 %v3633, %v3805
      %v3807 = vpop.f32.mrb[0].mxu0
      %v3808 = vadd.f32 %v3635, %v3807
      %v3809 = vpop.f32.mrb[0].mxu0
      %v3810 = vadd.f32 %v3637, %v3809
      %v3811 = vpop.f32.mrb[0].mxu0
      %v3812 = vadd.f32 %v3639, %v3811
      %3813 = vmatprep.mubr.bf16.mxu0 %v1402
      %3814 = vmatmul.mubr.bf16.gmra.mrb[0].mxu0 %v1401
      %v3815 = vpop.f32.mrb[0].mxu0
      %v3816 = vadd.f32 %v3643, %v3815
      %v3817 = vpop.f32.mrb[0].mxu0
      %v3818 = vadd.f32 %v3645, %v3817
      %v3819 = vpop.f32.mrb[0].mxu0
      %v3820 = vadd.f32 %v3647, %v3819
      %v3821 = vpop.f32.mrb[0].mxu0
      %v3822 = vadd.f32 %v3649, %v3821
      %3823 = vmatprep.mubr.bf16.mxu0 %v1699
      %3824 = vmatmul.mubr.bf16.gmra.mrb[0].mxu0 %v1698
      %v3825 = vpop.f32.mrb[0].mxu0
      %v3826 = vadd.f32 %v3653, %v3825
      %v3827 = vpop.f32.mrb[0].mxu0
      %v3828 = vadd.f32 %v3655, %v3827
      %v3829 = vpop.f32.mrb[0].mxu0
      %v3830 = vadd.f32 %v3657, %v3829
      %v3831 = vpop.f32.mrb[0].mxu0
      %v3832 = vadd.f32 %v3659, %v3831
      %3833 = vdwg.mxu0
      %3834 = vmatprep.subr.bf16.mxu0 %v2903
      %3835 = vmatpush1.bf16.msra.mxu0 %v2902
      %3836 = vmatprep.subr.bf16.mxu0 %v2906
      %3837 = vmatpush1.bf16.msra.mxu0 %v2905
      %3838 = vmatprep.subr.bf16.mxu0 %v2909
      %3839 = vmatpush1.bf16.msra.mxu0 %v2908
      %3840 = vmatprep.subr.bf16.mxu0 %v2912
      %3841 = vmatpush1.bf16.msra.mxu0 %v2911
      %3842 = vmatprep.subr.bf16.mxu0 %v2915
      %3843 = vmatpush1.bf16.msra.mxu0 %v2914
      %3844 = vmatprep.subr.bf16.mxu0 %v2918
      %3845 = vmatpush1.bf16.msra.mxu0 %v2917
      %3846 = vmatprep.subr.bf16.mxu0 %v2921
      %3847 = vmatpush1.bf16.msra.mxu0 %v2920
      %3848 = vmatprep.subr.bf16.mxu0 %v2924
      %3849 = vmatpush1.bf16.msra.mxu0 %v2923
      %3850 = vmatprep.subr.bf16.mxu0 0
      %3851 = vmatpush1.bf16.msra.mxu0 0
      %3852 = vmatprep.subr.bf16.mxu0 0
      %3853 = vmatpush1.bf16.msra.mxu0 0
      %3854 = vmatprep.subr.bf16.mxu0 0
      %3855 = vmatpush1.bf16.msra.mxu0 0
      %3856 = vmatprep.subr.bf16.mxu0 0
      %3857 = vmatpush1.bf16.msra.mxu0 0
      %3858 = vmatprep.subr.bf16.mxu0 0
      %3859 = vmatpush1.bf16.msra.mxu0 0
      %3860 = vmatprep.subr.bf16.mxu0 0
      %3861 = vmatpush1.bf16.msra.mxu0 0
      %3862 = vmatprep.subr.bf16.mxu0 0
      %3863 = vmatpush1.bf16.msra.mxu0 0
      %3864 = vmatprep.subr.bf16.mxu0 0
      %3865 = vmatpush1.bf16.msra.mxu0 0
      %3866 = vmatprep.mubr.bf16.mxu0 0
      %3867 = vmatmul.mubr.bf16.gmra.mrb[0].mxu0 %v1295
      %v3868 = vpop.f32.mrb[0].mxu0
      %v3869 = vadd.f32 %v3696, %v3868
      %v3870 = vpop.f32.mrb[0].mxu0
      %v3871 = vadd.f32 %v3698, %v3870
      %v3872 = vpop.f32.mrb[0].mxu0
      %v3873 = vadd.f32 %v3700, %v3872
      %v3874 = vpop.f32.mrb[0].mxu0
      %v3875 = vadd.f32 %v3702, %v3874
      %3876 = vmatprep.mubr.bf16.mxu0 0
      %3877 = vmatmul.mubr.bf16.gmra.mrb[0].mxu0 %v1304
      %v3878 = vpop.f32.mrb[0].mxu0
      %v3879 = vadd.f32 %v3706, %v3878
      %v3880 = vpop.f32.mrb[0].mxu0
      %v3881 = vadd.f32 %v3708, %v3880
      %v3882 = vpop.f32.mrb[0].mxu0
      %v3883 = vadd.f32 %v3710, %v3882
      %v3884 = vpop.f32.mrb[0].mxu0
      %v3885 = vadd.f32 %v3712, %v3884
      %3886 = vmatprep.mubr.bf16.mxu0 0
      %3887 = vmatmul.mubr.bf16.gmra.mrb[0].mxu0 %v1313
      %v3888 = vpop.f32.mrb[0].mxu0
      %v3889 = vadd.f32 %v3716, %v3888
      %v3890 = vpop.f32.mrb[0].mxu0
      %v3891 = vadd.f32 %v3718, %v3890
      %v3892 = vpop.f32.mrb[0].mxu0
      %v3893 = vadd.f32 %v3720, %v3892
      %v3894 = vpop.f32.mrb[0].mxu0
      %v3895 = vadd.f32 %v3722, %v3894
      %3896 = vmatprep.mubr.bf16.mxu0 0
      %3897 = vmatmul.mubr.bf16.gmra.mrb[0].mxu0 %v1322
      %v3898 = vpop.f32.mrb[0].mxu0
      %v3899 = vadd.f32 %v3726, %v3898
      %v3900 = vpop.f32.mrb[0].mxu0
      %v3901 = vadd.f32 %v3728, %v3900
      %v3902 = vpop.f32.mrb[0].mxu0
      %v3903 = vadd.f32 %v3730, %v3902
      %v3904 = vpop.f32.mrb[0].mxu0
      %v3905 = vadd.f32 %v3732, %v3904
      %3906 = vmatprep.mubr.bf16.mxu0 0
      %3907 = vmatmul.mubr.bf16.gmra.mrb[0].mxu0 %v1331
      %v3908 = vpop.f32.mrb[0].mxu0
      %v3909 = vadd.f32 %v3736, %v3908
      %v3910 = vpop.f32.mrb[0].mxu0
      %v3911 = vadd.f32 %v3738, %v3910
      %v3912 = vpop.f32.mrb[0].mxu0
      %v3913 = vadd.f32 %v3740, %v3912
      %v3914 = vpop.f32.mrb[0].mxu0
      %v3915 = vadd.f32 %v3742, %v3914
      %3916 = vmatprep.mubr.bf16.mxu0 0
      %3917 = vmatmul.mubr.bf16.gmra.mrb[0].mxu0 %v1340
      %v3918 = vpop.f32.mrb[0].mxu0
      %v3919 = vadd.f32 %v3746, %v3918
      %v3920 = vpop.f32.mrb[0].mxu0
      %v3921 = vadd.f32 %v3748, %v3920
      %v3922 = vpop.f32.mrb[0].mxu0
      %v3923 = vadd.f32 %v3750, %v3922
      %v3924 = vpop.f32.mrb[0].mxu0
      %v3925 = vadd.f32 %v3752, %v3924
      %3926 = vmatprep.mubr.bf16.mxu0 0
      %3927 = vmatmul.mubr.bf16.gmra.mrb[0].mxu0 %v1349
      %v3928 = vpop.f32.mrb[0].mxu0
      %v3929 = vadd.f32 %v3756, %v3928
      %v3930 = vpop.f32.mrb[0].mxu0
      %v3931 = vadd.f32 %v3758, %v3930
      %v3932 = vpop.f32.mrb[0].mxu0
      %v3933 = vadd.f32 %v3760, %v3932
      %v3934 = vpop.f32.mrb[0].mxu0
      %v3935 = vadd.f32 %v3762, %v3934
      %3936 = vmatprep.mubr.bf16.mxu0 0
      %3937 = vmatmul.mubr.bf16.gmra.mrb[0].mxu0 %v1358
      %v3938 = vpop.f32.mrb[0].mxu0
      %v3939 = vadd.f32 %v3766, %v3938
      %v3940 = vpop.f32.mrb[0].mxu0
      %v3941 = vadd.f32 %v3768, %v3940
      %v3942 = vpop.f32.mrb[0].mxu0
      %v3943 = vadd.f32 %v3770, %v3942
      %v3944 = vpop.f32.mrb[0].mxu0
      %v3945 = vadd.f32 %v3772, %v3944
      %3946 = vmatprep.mubr.bf16.mxu0 0
      %3947 = vmatmul.mubr.bf16.gmra.mrb[0].mxu0 %v1367
      %v3948 = vpop.f32.mrb[0].mxu0
      %v3949 = vadd.f32 %v3776, %v3948
      %v3950 = vpop.f32.mrb[0].mxu0
      %v3951 = vadd.f32 %v3778, %v3950
      %v3952 = vpop.f32.mrb[0].mxu0
      %v3953 = vadd.f32 %v3780, %v3952
      %v3954 = vpop.f32.mrb[0].mxu0
      %v3955 = vadd.f32 %v3782, %v3954
      %3956 = vmatprep.mubr.bf16.mxu0 0
      %3957 = vmatmul.mubr.bf16.gmra.mrb[0].mxu0 %v1376
      %v3958 = vpop.f32.mrb[0].mxu0
      %v3959 = vadd.f32 %v3786, %v3958
      %v3960 = vpop.f32.mrb[0].mxu0
      %v3961 = vadd.f32 %v3788, %v3960
      %v3962 = vpop.f32.mrb[0].mxu0
      %v3963 = vadd.f32 %v3790, %v3962
      %v3964 = vpop.f32.mrb[0].mxu0
      %v3965 = vadd.f32 %v3792, %v3964
      %3966 = vmatprep.mubr.bf16.mxu0 0
      %3967 = vmatmul.mubr.bf16.gmra.mrb[0].mxu0 %v1385
      %v3968 = vpop.f32.mrb[0].mxu0
      %v3969 = vadd.f32 %v3796, %v3968
      %v3970 = vpop.f32.mrb[0].mxu0
      %v3971 = vadd.f32 %v3798, %v3970
      %v3972 = vpop.f32.mrb[0].mxu0
      %v3973 = vadd.f32 %v3800, %v3972
      %v3974 = vpop.f32.mrb[0].mxu0
      %v3975 = vadd.f32 %v3802, %v3974
      %3976 = vmatprep.mubr.bf16.mxu0 0
      %3977 = vmatmul.mubr.bf16.gmra.mrb[0].mxu0 %v1394
      %v3978 = vpop.f32.mrb[0].mxu0
      %v3979 = vadd.f32 %v3806, %v3978
      %v3980 = vpop.f32.mrb[0].mxu0
      %v3981 = vadd.f32 %v3808, %v3980
      %v3982 = vpop.f32.mrb[0].mxu0
      %v3983 = vadd.f32 %v3810, %v3982
      %v3984 = vpop.f32.mrb[0].mxu0
      %v3985 = vadd.f32 %v3812, %v3984
      %3986 = vmatprep.mubr.bf16.mxu0 0
      %3987 = vmatmul.mubr.bf16.gmra.mrb[0].mxu0 %v1403
      %v3988 = vpop.f32.mrb[0].mxu0
      %v3989 = vadd.f32 %v3816, %v3988
      %v3990 = vpop.f32.mrb[0].mxu0
      %v3991 = vadd.f32 %v3818, %v3990
      %v3992 = vpop.f32.mrb[0].mxu0
      %v3993 = vadd.f32 %v3820, %v3992
      %v3994 = vpop.f32.mrb[0].mxu0
      %v3995 = vadd.f32 %v3822, %v3994
      %3996 = vmatprep.mubr.bf16.mxu0 0
      %3997 = vmatmul.mubr.bf16.gmra.mrb[0].mxu0 %v1700
      %v3998 = vpop.f32.mrb[0].mxu0
      %v3999 = vadd.f32 %v3826, %v3998
      %v4000 = vpop.f32.mrb[0].mxu0
      %v4001 = vadd.f32 %v3828, %v4000
      %v4002 = vpop.f32.mrb[0].mxu0
      %v4003 = vadd.f32 %v3830, %v4002
      %v4004 = vpop.f32.mrb[0].mxu0
      %v4005 = vadd.f32 %v3832, %v4004
      %4006 = vdwg.mxu0
      %4007 = vmatprep.subr.bf16.mxu0 0
      %4008 = vmatpush1.bf16.msra.mxu0 %v2712
      %4009 = vmatprep.subr.bf16.mxu0 0
      %4010 = vmatpush1.bf16.msra.mxu0 %v2715
      %4011 = vmatprep.subr.bf16.mxu0 0
      %4012 = vmatpush1.bf16.msra.mxu0 %v2718
      %4013 = vmatprep.subr.bf16.mxu0 0
      %4014 = vmatpush1.bf16.msra.mxu0 %v2721
      %4015 = vmatprep.subr.bf16.mxu0 0
      %4016 = vmatpush1.bf16.msra.mxu0 %v2724
      %4017 = vmatprep.subr.bf16.mxu0 0
      %4018 = vmatpush1.bf16.msra.mxu0 %v2727
      %4019 = vmatprep.subr.bf16.mxu0 0
      %4020 = vmatpush1.bf16.msra.mxu0 %v2730
      %4021 = vmatprep.subr.bf16.mxu0 0
      %4022 = vmatpush1.bf16.msra.mxu0 %v2733
      %4023 = vmatprep.subr.bf16.mxu0 0
      %4024 = vmatpush1.bf16.msra.mxu0 %v2736
      %4025 = vmatprep.subr.bf16.mxu0 0
      %4026 = vmatpush1.bf16.msra.mxu0 %v2739
      %4027 = vmatprep.subr.bf16.mxu0 0
      %4028 = vmatpush1.bf16.msra.mxu0 %v2742
      %4029 = vmatprep.subr.bf16.mxu0 0
      %4030 = vmatpush1.bf16.msra.mxu0 %v2745
      %4031 = vmatprep.subr.bf16.mxu0 0
      %4032 = vmatpush1.bf16.msra.mxu0 %v2748
      %4033 = vmatprep.subr.bf16.mxu0 0
      %4034 = vmatpush1.bf16.msra.mxu0 %v2751
      %4035 = vmatprep.subr.bf16.mxu0 0
      %4036 = vmatpush1.bf16.msra.mxu0 %v2754
      %4037 = vmatprep.subr.bf16.mxu0 0
      %4038 = vmatpush1.bf16.msra.mxu0 %v2757
      %4039 = vmatprep.mubr.bf16.mxu0 %v1288
      %4040 = vmatmul.mubr.bf16.gmra.mrb[0].mxu0 %v1287
      %v4041 = vpop.f32.mrb[0].mxu0
      %v4042 = vadd.f32 0.0, %v4041
      %v4043 = vpop.f32.mrb[0].mxu0
      %v4044 = vpop.f32.mrb[0].mxu0
      %v4045 = vadd.f32 0.0, %v4044
      %v4046 = vpop.f32.mrb[0].mxu0
      %4047 = vmatprep.mubr.bf16.mxu0 %v1297
      %4048 = vmatmul.mubr.bf16.gmra.mrb[0].mxu0 %v1296
      %v4049 = vpop.f32.mrb[0].mxu0
      %v4050 = vadd.f32 0.0, %v4049
      %v4051 = vpop.f32.mrb[0].mxu0
      %v4052 = vpop.f32.mrb[0].mxu0
      %v4053 = vadd.f32 0.0, %v4052
      %v4054 = vpop.f32.mrb[0].mxu0
      %4055 = vmatprep.mubr.bf16.mxu0 %v1306
      %4056 = vmatmul.mubr.bf16.gmra.mrb[0].mxu0 %v1305
      %v4057 = vpop.f32.mrb[0].mxu0
      %v4058 = vadd.f32 0.0, %v4057
      %v4059 = vpop.f32.mrb[0].mxu0
      %v4060 = vpop.f32.mrb[0].mxu0
      %v4061 = vadd.f32 0.0, %v4060
      %v4062 = vpop.f32.mrb[0].mxu0
      %4063 = vmatprep.mubr.bf16.mxu0 %v1315
      %4064 = vmatmul.mubr.bf16.gmra.mrb[0].mxu0 %v1314
      %v4065 = vpop.f32.mrb[0].mxu0
      %v4066 = vadd.f32 0.0, %v4065
      %v4067 = vpop.f32.mrb[0].mxu0
      %v4068 = vpop.f32.mrb[0].mxu0
      %v4069 = vadd.f32 0.0, %v4068
      %v4070 = vpop.f32.mrb[0].mxu0
      %4071 = vmatprep.mubr.bf16.mxu0 %v1324
      %4072 = vmatmul.mubr.bf16.gmra.mrb[0].mxu0 %v1323
      %v4073 = vpop.f32.mrb[0].mxu0
      %v4074 = vadd.f32 0.0, %v4073
      %v4075 = vpop.f32.mrb[0].mxu0
      %v4076 = vpop.f32.mrb[0].mxu0
      %v4077 = vadd.f32 0.0, %v4076
      %v4078 = vpop.f32.mrb[0].mxu0
      %4079 = vmatprep.mubr.bf16.mxu0 %v1333
      %4080 = vmatmul.mubr.bf16.gmra.mrb[0].mxu0 %v1332
      %v4081 = vpop.f32.mrb[0].mxu0
      %v4082 = vadd.f32 0.0, %v4081
      %v4083 = vpop.f32.mrb[0].mxu0
      %v4084 = vpop.f32.mrb[0].mxu0
      %v4085 = vadd.f32 0.0, %v4084
      %v4086 = vpop.f32.mrb[0].mxu0
      %4087 = vmatprep.mubr.bf16.mxu0 %v1342
      %4088 = vmatmul.mubr.bf16.gmra.mrb[0].mxu0 %v1341
      %v4089 = vpop.f32.mrb[0].mxu0
      %v4090 = vadd.f32 0.0, %v4089
      %v4091 = vpop.f32.mrb[0].mxu0
      %v4092 = vpop.f32.mrb[0].mxu0
      %v4093 = vadd.f32 0.0, %v4092
      %v4094 = vpop.f32.mrb[0].mxu0
      %4095 = vmatprep.mubr.bf16.mxu0 %v1351
      %4096 = vmatmul.mubr.bf16.gmra.mrb[0].mxu0 %v1350
      %v4097 = vpop.f32.mrb[0].mxu0
      %v4098 = vadd.f32 0.0, %v4097
      %v4099 = vpop.f32.mrb[0].mxu0
      %v4100 = vpop.f32.mrb[0].mxu0
      %v4101 = vadd.f32 0.0, %v4100
      %v4102 = vpop.f32.mrb[0].mxu0
      %4103 = vmatprep.mubr.bf16.mxu0 %v1360
      %4104 = vmatmul.mubr.bf16.gmra.mrb[0].mxu0 %v1359
      %v4105 = vpop.f32.mrb[0].mxu0
      %v4106 = vadd.f32 0.0, %v4105
      %v4107 = vpop.f32.mrb[0].mxu0
      %v4108 = vpop.f32.mrb[0].mxu0
      %v4109 = vadd.f32 0.0, %v4108
      %v4110 = vpop.f32.mrb[0].mxu0
      %4111 = vmatprep.mubr.bf16.mxu0 %v1369
      %4112 = vmatmul.mubr.bf16.gmra.mrb[0].mxu0 %v1368
      %v4113 = vpop.f32.mrb[0].mxu0
      %v4114 = vadd.f32 0.0, %v4113
      %v4115 = vpop.f32.mrb[0].mxu0
      %v4116 = vpop.f32.mrb[0].mxu0
      %v4117 = vadd.f32 0.0, %v4116
      %v4118 = vpop.f32.mrb[0].mxu0
      %4119 = vmatprep.mubr.bf16.mxu0 %v1378
      %4120 = vmatmul.mubr.bf16.gmra.mrb[0].mxu0 %v1377
      %v4121 = vpop.f32.mrb[0].mxu0
      %v4122 = vadd.f32 0.0, %v4121
      %v4123 = vpop.f32.mrb[0].mxu0
      %v4124 = vpop.f32.mrb[0].mxu0
      %v4125 = vadd.f32 0.0, %v4124
      %v4126 = vpop.f32.mrb[0].mxu0
      %4127 = vmatprep.mubr.bf16.mxu0 %v1387
      %4128 = vmatmul.mubr.bf16.gmra.mrb[0].mxu0 %v1386
      %v4129 = vpop.f32.mrb[0].mxu0
      %v4130 = vadd.f32 0.0, %v4129
      %v4131 = vpop.f32.mrb[0].mxu0
      %v4132 = vpop.f32.mrb[0].mxu0
      %v4133 = vadd.f32 0.0, %v4132
      %v4134 = vpop.f32.mrb[0].mxu0
      %4135 = vmatprep.mubr.bf16.mxu0 %v1396
      %4136 = vmatmul.mubr.bf16.gmra.mrb[0].mxu0 %v1395
      %v4137 = vpop.f32.mrb[0].mxu0
      %v4138 = vadd.f32 0.0, %v4137
      %v4139 = vpop.f32.mrb[0].mxu0
      %v4140 = vpop.f32.mrb[0].mxu0
      %v4141 = vadd.f32 0.0, %v4140
      %v4142 = vpop.f32.mrb[0].mxu0
      %4143 = vmatprep.mubr.bf16.mxu0 %v1693
      %4144 = vmatmul.mubr.bf16.gmra.mrb[0].mxu0 %v1692
      %v4145 = vpop.f32.mrb[0].mxu0
      %v4146 = vadd.f32 0.0, %v4145
      %v4147 = vpop.f32.mrb[0].mxu0
      %v4148 = vpop.f32.mrb[0].mxu0
      %v4149 = vadd.f32 0.0, %v4148
      %v4150 = vpop.f32.mrb[0].mxu0
      %4151 = vdwg.mxu0
      %4152 = vmatprep.subr.bf16.mxu0 0
      %4153 = vmatpush1.bf16.msra.mxu0 %v2760
      %4154 = vmatprep.subr.bf16.mxu0 0
      %4155 = vmatpush1.bf16.msra.mxu0 %v2763
      %4156 = vmatprep.subr.bf16.mxu0 0
      %4157 = vmatpush1.bf16.msra.mxu0 %v2766
      %4158 = vmatprep.subr.bf16.mxu0 0
      %4159 = vmatpush1.bf16.msra.mxu0 %v2769
      %4160 = vmatprep.subr.bf16.mxu0 0
      %4161 = vmatpush1.bf16.msra.mxu0 %v2772
      %4162 = vmatprep.subr.bf16.mxu0 0
      %4163 = vmatpush1.bf16.msra.mxu0 %v2775
      %4164 = vmatprep.subr.bf16.mxu0 0
      %4165 = vmatpush1.bf16.msra.mxu0 %v2778
      %4166 = vmatprep.subr.bf16.mxu0 0
      %4167 = vmatpush1.bf16.msra.mxu0 %v2781
      %4168 = vmatprep.subr.bf16.mxu0 0
      %4169 = vmatpush1.bf16.msra.mxu0 %v2784
      %4170 = vmatprep.subr.bf16.mxu0 0
      %4171 = vmatpush1.bf16.msra.mxu0 %v2787
      %4172 = vmatprep.subr.bf16.mxu0 0
      %4173 = vmatpush1.bf16.msra.mxu0 %v2790
      %4174 = vmatprep.subr.bf16.mxu0 0
      %4175 = vmatpush1.bf16.msra.mxu0 %v2793
      %4176 = vmatprep.subr.bf16.mxu0 0
      %4177 = vmatpush1.bf16.msra.mxu0 %v2796
      %4178 = vmatprep.subr.bf16.mxu0 0
      %4179 = vmatpush1.bf16.msra.mxu0 %v2799
      %4180 = vmatprep.subr.bf16.mxu0 0
      %4181 = vmatpush1.bf16.msra.mxu0 %v2802
      %4182 = vmatprep.subr.bf16.mxu0 0
      %4183 = vmatpush1.bf16.msra.mxu0 %v2805
      %4184 = vmatprep.mubr.bf16.mxu0 %v1290
      %4185 = vmatmul.mubr.bf16.gmra.mrb[0].mxu0 %v1289
      %v4186 = vpop.f32.mrb[0].mxu0
      %v4187 = vadd.f32 %v4042, %v4186
      %v4188 = vpop.f32.mrb[0].mxu0
      %v4189 = vpop.f32.mrb[0].mxu0
      %v4190 = vadd.f32 %v4045, %v4189
      %v4191 = vpop.f32.mrb[0].mxu0
      %4192 = vmatprep.mubr.bf16.mxu0 %v1299
      %4193 = vmatmul.mubr.bf16.gmra.mrb[0].mxu0 %v1298
      %v4194 = vpop.f32.mrb[0].mxu0
      %v4195 = vadd.f32 %v4050, %v4194
      %v4196 = vpop.f32.mrb[0].mxu0
      %v4197 = vpop.f32.mrb[0].mxu0
      %v4198 = vadd.f32 %v4053, %v4197
      %v4199 = vpop.f32.mrb[0].mxu0
      %4200 = vmatprep.mubr.bf16.mxu0 %v1308
      %4201 = vmatmul.mubr.bf16.gmra.mrb[0].mxu0 %v1307
      %v4202 = vpop.f32.mrb[0].mxu0
      %v4203 = vadd.f32 %v4058, %v4202
      %v4204 = vpop.f32.mrb[0].mxu0
      %v4205 = vpop.f32.mrb[0].mxu0
      %v4206 = vadd.f32 %v4061, %v4205
      %v4207 = vpop.f32.mrb[0].mxu0
      %4208 = vmatprep.mubr.bf16.mxu0 %v1317
      %4209 = vmatmul.mubr.bf16.gmra.mrb[0].mxu0 %v1316
      %v4210 = vpop.f32.mrb[0].mxu0
      %v4211 = vadd.f32 %v4066, %v4210
      %v4212 = vpop.f32.mrb[0].mxu0
      %v4213 = vpop.f32.mrb[0].mxu0
      %v4214 = vadd.f32 %v4069, %v4213
      %v4215 = vpop.f32.mrb[0].mxu0
      %4216 = vmatprep.mubr.bf16.mxu0 %v1326
      %4217 = vmatmul.mubr.bf16.gmra.mrb[0].mxu0 %v1325
      %v4218 = vpop.f32.mrb[0].mxu0
      %v4219 = vadd.f32 %v4074, %v4218
      %v4220 = vpop.f32.mrb[0].mxu0
      %v4221 = vpop.f32.mrb[0].mxu0
      %v4222 = vadd.f32 %v4077, %v4221
      %v4223 = vpop.f32.mrb[0].mxu0
      %4224 = vmatprep.mubr.bf16.mxu0 %v1335
      %4225 = vmatmul.mubr.bf16.gmra.mrb[0].mxu0 %v1334
      %v4226 = vpop.f32.mrb[0].mxu0
      %v4227 = vadd.f32 %v4082, %v4226
      %v4228 = vpop.f32.mrb[0].mxu0
      %v4229 = vpop.f32.mrb[0].mxu0
      %v4230 = vadd.f32 %v4085, %v4229
      %v4231 = vpop.f32.mrb[0].mxu0
      %4232 = vmatprep.mubr.bf16.mxu0 %v1344
      %4233 = vmatmul.mubr.bf16.gmra.mrb[0].mxu0 %v1343
      %v4234 = vpop.f32.mrb[0].mxu0
      %v4235 = vadd.f32 %v4090, %v4234
      %v4236 = vpop.f32.mrb[0].mxu0
      %v4237 = vpop.f32.mrb[0].mxu0
      %v4238 = vadd.f32 %v4093, %v4237
      %v4239 = vpop.f32.mrb[0].mxu0
      %4240 = vmatprep.mubr.bf16.mxu0 %v1353
      %4241 = vmatmul.mubr.bf16.gmra.mrb[0].mxu0 %v1352
      %v4242 = vpop.f32.mrb[0].mxu0
      %v4243 = vadd.f32 %v4098, %v4242
      %v4244 = vpop.f32.mrb[0].mxu0
      %v4245 = vpop.f32.mrb[0].mxu0
      %v4246 = vadd.f32 %v4101, %v4245
      %v4247 = vpop.f32.mrb[0].mxu0
      %4248 = vmatprep.mubr.bf16.mxu0 %v1362
      %4249 = vmatmul.mubr.bf16.gmra.mrb[0].mxu0 %v1361
      %v4250 = vpop.f32.mrb[0].mxu0
      %v4251 = vadd.f32 %v4106, %v4250
      %v4252 = vpop.f32.mrb[0].mxu0
      %v4253 = vpop.f32.mrb[0].mxu0
      %v4254 = vadd.f32 %v4109, %v4253
      %v4255 = vpop.f32.mrb[0].mxu0
      %4256 = vmatprep.mubr.bf16.mxu0 %v1371
      %4257 = vmatmul.mubr.bf16.gmra.mrb[0].mxu0 %v1370
      %v4258 = vpop.f32.mrb[0].mxu0
      %v4259 = vadd.f32 %v4114, %v4258
      %v4260 = vpop.f32.mrb[0].mxu0
      %v4261 = vpop.f32.mrb[0].mxu0
      %v4262 = vadd.f32 %v4117, %v4261
      %v4263 = vpop.f32.mrb[0].mxu0
      %4264 = vmatprep.mubr.bf16.mxu0 %v1380
      %4265 = vmatmul.mubr.bf16.gmra.mrb[0].mxu0 %v1379
      %v4266 = vpop.f32.mrb[0].mxu0
      %v4267 = vadd.f32 %v4122, %v4266
      %v4268 = vpop.f32.mrb[0].mxu0
      %v4269 = vpop.f32.mrb[0].mxu0
      %v4270 = vadd.f32 %v4125, %v4269
      %v4271 = vpop.f32.mrb[0].mxu0
      %4272 = vmatprep.mubr.bf16.mxu0 %v1389
      %4273 = vmatmul.mubr.bf16.gmra.mrb[0].mxu0 %v1388
      %v4274 = vpop.f32.mrb[0].mxu0
      %v4275 = vadd.f32 %v4130, %v4274
      %v4276 = vpop.f32.mrb[0].mxu0
      %v4277 = vpop.f32.mrb[0].mxu0
      %v4278 = vadd.f32 %v4133, %v4277
      %v4279 = vpop.f32.mrb[0].mxu0
      %4280 = vmatprep.mubr.bf16.mxu0 %v1398
      %4281 = vmatmul.mubr.bf16.gmra.mrb[0].mxu0 %v1397
      %v4282 = vpop.f32.mrb[0].mxu0
      %v4283 = vadd.f32 %v4138, %v4282
      %v4284 = vpop.f32.mrb[0].mxu0
      %v4285 = vpop.f32.mrb[0].mxu0
      %v4286 = vadd.f32 %v4141, %v4285
      %v4287 = vpop.f32.mrb[0].mxu0
      %4288 = vmatprep.mubr.bf16.mxu0 %v1695
      %4289 = vmatmul.mubr.bf16.gmra.mrb[0].mxu0 %v1694
      %v4290 = vpop.f32.mrb[0].mxu0
      %v4291 = vadd.f32 %v4146, %v4290
      %v4292 = vpop.f32.mrb[0].mxu0
      %v4293 = vpop.f32.mrb[0].mxu0
      %v4294 = vadd.f32 %v4149, %v4293
      %v4295 = vpop.f32.mrb[0].mxu0
      %4296 = vdwg.mxu0
      %4297 = vmatprep.subr.bf16.mxu0 0
      %4298 = vmatpush1.bf16.msra.mxu0 %v2808
      %4299 = vmatprep.subr.bf16.mxu0 0
      %4300 = vmatpush1.bf16.msra.mxu0 %v2811
      %4301 = vmatprep.subr.bf16.mxu0 0
      %4302 = vmatpush1.bf16.msra.mxu0 %v2814
      %4303 = vmatprep.subr.bf16.mxu0 0
      %4304 = vmatpush1.bf16.msra.mxu0 %v2817
      %4305 = vmatprep.subr.bf16.mxu0 0
      %4306 = vmatpush1.bf16.msra.mxu0 %v2820
      %4307 = vmatprep.subr.bf16.mxu0 0
      %4308 = vmatpush1.bf16.msra.mxu0 %v2823
      %4309 = vmatprep.subr.bf16.mxu0 0
      %4310 = vmatpush1.bf16.msra.mxu0 %v2826
      %4311 = vmatprep.subr.bf16.mxu0 0
      %4312 = vmatpush1.bf16.msra.mxu0 %v2829
      %4313 = vmatprep.subr.bf16.mxu0 0
      %4314 = vmatpush1.bf16.msra.mxu0 %v2832
      %4315 = vmatprep.subr.bf16.mxu0 0
      %4316 = vmatpush1.bf16.msra.mxu0 %v2835
      %4317 = vmatprep.subr.bf16.mxu0 0
      %4318 = vmatpush1.bf16.msra.mxu0 %v2838
      %4319 = vmatprep.subr.bf16.mxu0 0
      %4320 = vmatpush1.bf16.msra.mxu0 %v2841
      %4321 = vmatprep.subr.bf16.mxu0 0
      %4322 = vmatpush1.bf16.msra.mxu0 %v2844
      %4323 = vmatprep.subr.bf16.mxu0 0
      %4324 = vmatpush1.bf16.msra.mxu0 %v2847
      %4325 = vmatprep.subr.bf16.mxu0 0
      %4326 = vmatpush1.bf16.msra.mxu0 %v2850
      %4327 = vmatprep.subr.bf16.mxu0 0
      %4328 = vmatpush1.bf16.msra.mxu0 %v2853
      %4329 = vmatprep.mubr.bf16.mxu0 %v1292
      %4330 = vmatmul.mubr.bf16.gmra.mrb[0].mxu0 %v1291
      %v4331 = vpop.f32.mrb[0].mxu0
      %v4332 = vadd.f32 %v4187, %v4331
      %v4333 = vpop.f32.mrb[0].mxu0
      %v4334 = vpop.f32.mrb[0].mxu0
      %v4335 = vadd.f32 %v4190, %v4334
      %v4336 = vpop.f32.mrb[0].mxu0
      %4337 = vmatprep.mubr.bf16.mxu0 %v1301
      %4338 = vmatmul.mubr.bf16.gmra.mrb[0].mxu0 %v1300
      %v4339 = vpop.f32.mrb[0].mxu0
      %v4340 = vadd.f32 %v4195, %v4339
      %v4341 = vpop.f32.mrb[0].mxu0
      %v4342 = vpop.f32.mrb[0].mxu0
      %v4343 = vadd.f32 %v4198, %v4342
      %v4344 = vpop.f32.mrb[0].mxu0
      %4345 = vmatprep.mubr.bf16.mxu0 %v1310
      %4346 = vmatmul.mubr.bf16.gmra.mrb[0].mxu0 %v1309
      %v4347 = vpop.f32.mrb[0].mxu0
      %v4348 = vadd.f32 %v4203, %v4347
      %v4349 = vpop.f32.mrb[0].mxu0
      %v4350 = vpop.f32.mrb[0].mxu0
      %v4351 = vadd.f32 %v4206, %v4350
      %v4352 = vpop.f32.mrb[0].mxu0
      %4353 = vmatprep.mubr.bf16.mxu0 %v1319
      %4354 = vmatmul.mubr.bf16.gmra.mrb[0].mxu0 %v1318
      %v4355 = vpop.f32.mrb[0].mxu0
      %v4356 = vadd.f32 %v4211, %v4355
      %v4357 = vpop.f32.mrb[0].mxu0
      %v4358 = vpop.f32.mrb[0].mxu0
      %v4359 = vadd.f32 %v4214, %v4358
      %v4360 = vpop.f32.mrb[0].mxu0
      %4361 = vmatprep.mubr.bf16.mxu0 %v1328
      %4362 = vmatmul.mubr.bf16.gmra.mrb[0].mxu0 %v1327
      %v4363 = vpop.f32.mrb[0].mxu0
      %v4364 = vadd.f32 %v4219, %v4363
      %v4365 = vpop.f32.mrb[0].mxu0
      %v4366 = vpop.f32.mrb[0].mxu0
      %v4367 = vadd.f32 %v4222, %v4366
      %v4368 = vpop.f32.mrb[0].mxu0
      %4369 = vmatprep.mubr.bf16.mxu0 %v1337
      %4370 = vmatmul.mubr.bf16.gmra.mrb[0].mxu0 %v1336
      %v4371 = vpop.f32.mrb[0].mxu0
      %v4372 = vadd.f32 %v4227, %v4371
      %v4373 = vpop.f32.mrb[0].mxu0
      %v4374 = vpop.f32.mrb[0].mxu0
      %v4375 = vadd.f32 %v4230, %v4374
      %v4376 = vpop.f32.mrb[0].mxu0
      %4377 = vmatprep.mubr.bf16.mxu0 %v1346
      %4378 = vmatmul.mubr.bf16.gmra.mrb[0].mxu0 %v1345
      %v4379 = vpop.f32.mrb[0].mxu0
      %v4380 = vadd.f32 %v4235, %v4379
      %v4381 = vpop.f32.mrb[0].mxu0
      %v4382 = vpop.f32.mrb[0].mxu0
      %v4383 = vadd.f32 %v4238, %v4382
      %v4384 = vpop.f32.mrb[0].mxu0
      %4385 = vmatprep.mubr.bf16.mxu0 %v1355
      %4386 = vmatmul.mubr.bf16.gmra.mrb[0].mxu0 %v1354
      %v4387 = vpop.f32.mrb[0].mxu0
      %v4388 = vadd.f32 %v4243, %v4387
      %v4389 = vpop.f32.mrb[0].mxu0
      %v4390 = vpop.f32.mrb[0].mxu0
      %v4391 = vadd.f32 %v4246, %v4390
      %v4392 = vpop.f32.mrb[0].mxu0
      %4393 = vmatprep.mubr.bf16.mxu0 %v1364
      %4394 = vmatmul.mubr.bf16.gmra.mrb[0].mxu0 %v1363
      %v4395 = vpop.f32.mrb[0].mxu0
      %v4396 = vadd.f32 %v4251, %v4395
      %v4397 = vpop.f32.mrb[0].mxu0
      %v4398 = vpop.f32.mrb[0].mxu0
      %v4399 = vadd.f32 %v4254, %v4398
      %v4400 = vpop.f32.mrb[0].mxu0
      %4401 = vmatprep.mubr.bf16.mxu0 %v1373
      %4402 = vmatmul.mubr.bf16.gmra.mrb[0].mxu0 %v1372
      %v4403 = vpop.f32.mrb[0].mxu0
      %v4404 = vadd.f32 %v4259, %v4403
      %v4405 = vpop.f32.mrb[0].mxu0
      %v4406 = vpop.f32.mrb[0].mxu0
      %v4407 = vadd.f32 %v4262, %v4406
      %v4408 = vpop.f32.mrb[0].mxu0
      %4409 = vmatprep.mubr.bf16.mxu0 %v1382
      %4410 = vmatmul.mubr.bf16.gmra.mrb[0].mxu0 %v1381
      %v4411 = vpop.f32.mrb[0].mxu0
      %v4412 = vadd.f32 %v4267, %v4411
      %v4413 = vpop.f32.mrb[0].mxu0
      %v4414 = vpop.f32.mrb[0].mxu0
      %v4415 = vadd.f32 %v4270, %v4414
      %v4416 = vpop.f32.mrb[0].mxu0
      %4417 = vmatprep.mubr.bf16.mxu0 %v1391
      %4418 = vmatmul.mubr.bf16.gmra.mrb[0].mxu0 %v1390
      %v4419 = vpop.f32.mrb[0].mxu0
      %v4420 = vadd.f32 %v4275, %v4419
      %v4421 = vpop.f32.mrb[0].mxu0
      %v4422 = vpop.f32.mrb[0].mxu0
      %v4423 = vadd.f32 %v4278, %v4422
      %v4424 = vpop.f32.mrb[0].mxu0
      %4425 = vmatprep.mubr.bf16.mxu0 %v1400
      %4426 = vmatmul.mubr.bf16.gmra.mrb[0].mxu0 %v1399
      %v4427 = vpop.f32.mrb[0].mxu0
      %v4428 = vadd.f32 %v4283, %v4427
      %v4429 = vpop.f32.mrb[0].mxu0
      %v4430 = vpop.f32.mrb[0].mxu0
      %v4431 = vadd.f32 %v4286, %v4430
      %v4432 = vpop.f32.mrb[0].mxu0
      %4433 = vmatprep.mubr.bf16.mxu0 %v1697
      %4434 = vmatmul.mubr.bf16.gmra.mrb[0].mxu0 %v1696
      %v4435 = vpop.f32.mrb[0].mxu0
      %v4436 = vadd.f32 %v4291, %v4435
      %v4437 = vpop.f32.mrb[0].mxu0
      %v4438 = vpop.f32.mrb[0].mxu0
      %v4439 = vadd.f32 %v4294, %v4438
      %v4440 = vpop.f32.mrb[0].mxu0
      %4441 = vdwg.mxu0
      %4442 = vmatprep.subr.bf16.mxu0 0
      %4443 = vmatpush1.bf16.msra.mxu0 %v2856
      %4444 = vmatprep.subr.bf16.mxu0 0
      %4445 = vmatpush1.bf16.msra.mxu0 %v2859
      %4446 = vmatprep.subr.bf16.mxu0 0
      %4447 = vmatpush1.bf16.msra.mxu0 %v2862
      %4448 = vmatprep.subr.bf16.mxu0 0
      %4449 = vmatpush1.bf16.msra.mxu0 %v2865
      %4450 = vmatprep.subr.bf16.mxu0 0
      %4451 = vmatpush1.bf16.msra.mxu0 %v2868
      %4452 = vmatprep.subr.bf16.mxu0 0
      %4453 = vmatpush1.bf16.msra.mxu0 %v2871
      %4454 = vmatprep.subr.bf16.mxu0 0
      %4455 = vmatpush1.bf16.msra.mxu0 %v2874
      %4456 = vmatprep.subr.bf16.mxu0 0
      %4457 = vmatpush1.bf16.msra.mxu0 %v2877
      %4458 = vmatprep.subr.bf16.mxu0 0
      %4459 = vmatpush1.bf16.msra.mxu0 %v2880
      %4460 = vmatprep.subr.bf16.mxu0 0
      %4461 = vmatpush1.bf16.msra.mxu0 %v2883
      %4462 = vmatprep.subr.bf16.mxu0 0
      %4463 = vmatpush1.bf16.msra.mxu0 %v2886
      %4464 = vmatprep.subr.bf16.mxu0 0
      %4465 = vmatpush1.bf16.msra.mxu0 %v2889
      %4466 = vmatprep.subr.bf16.mxu0 0
      %4467 = vmatpush1.bf16.msra.mxu0 %v2892
      %4468 = vmatprep.subr.bf16.mxu0 0
      %4469 = vmatpush1.bf16.msra.mxu0 %v2895
      %4470 = vmatprep.subr.bf16.mxu0 0
      %4471 = vmatpush1.bf16.msra.mxu0 %v2898
      %4472 = vmatprep.subr.bf16.mxu0 0
      %4473 = vmatpush1.bf16.msra.mxu0 %v2901
      %4474 = vmatprep.mubr.bf16.mxu0 %v1294
      %4475 = vmatmul.mubr.bf16.gmra.mrb[0].mxu0 %v1293
      %v4476 = vpop.f32.mrb[0].mxu0
      %v4477 = vadd.f32 %v4332, %v4476
      %v4478 = vpop.f32.mrb[0].mxu0
      %v4479 = vpop.f32.mrb[0].mxu0
      %v4480 = vadd.f32 %v4335, %v4479
      %v4481 = vpop.f32.mrb[0].mxu0
      %4482 = vmatprep.mubr.bf16.mxu0 %v1303
      %4483 = vmatmul.mubr.bf16.gmra.mrb[0].mxu0 %v1302
      %v4484 = vpop.f32.mrb[0].mxu0
      %v4485 = vadd.f32 %v4340, %v4484
      %v4486 = vpop.f32.mrb[0].mxu0
      %v4487 = vpop.f32.mrb[0].mxu0
      %v4488 = vadd.f32 %v4343, %v4487
      %v4489 = vpop.f32.mrb[0].mxu0
      %4490 = vmatprep.mubr.bf16.mxu0 %v1312
      %4491 = vmatmul.mubr.bf16.gmra.mrb[0].mxu0 %v1311
      %v4492 = vpop.f32.mrb[0].mxu0
      %v4493 = vadd.f32 %v4348, %v4492
      %v4494 = vpop.f32.mrb[0].mxu0
      %v4495 = vpop.f32.mrb[0].mxu0
      %v4496 = vadd.f32 %v4351, %v4495
      %v4497 = vpop.f32.mrb[0].mxu0
      %4498 = vmatprep.mubr.bf16.mxu0 %v1321
      %4499 = vmatmul.mubr.bf16.gmra.mrb[0].mxu0 %v1320
      %v4500 = vpop.f32.mrb[0].mxu0
      %v4501 = vadd.f32 %v4356, %v4500
      %v4502 = vpop.f32.mrb[0].mxu0
      %v4503 = vpop.f32.mrb[0].mxu0
      %v4504 = vadd.f32 %v4359, %v4503
      %v4505 = vpop.f32.mrb[0].mxu0
      %4506 = vmatprep.mubr.bf16.mxu0 %v1330
      %4507 = vmatmul.mubr.bf16.gmra.mrb[0].mxu0 %v1329
      %v4508 = vpop.f32.mrb[0].mxu0
      %v4509 = vadd.f32 %v4364, %v4508
      %v4510 = vpop.f32.mrb[0].mxu0
      %v4511 = vpop.f32.mrb[0].mxu0
      %v4512 = vadd.f32 %v4367, %v4511
      %v4513 = vpop.f32.mrb[0].mxu0
      %4514 = vmatprep.mubr.bf16.mxu0 %v1339
      %4515 = vmatmul.mubr.bf16.gmra.mrb[0].mxu0 %v1338
      %v4516 = vpop.f32.mrb[0].mxu0
      %v4517 = vadd.f32 %v4372, %v4516
      %v4518 = vpop.f32.mrb[0].mxu0
      %v4519 = vpop.f32.mrb[0].mxu0
      %v4520 = vadd.f32 %v4375, %v4519
      %v4521 = vpop.f32.mrb[0].mxu0
      %4522 = vmatprep.mubr.bf16.mxu0 %v1348
      %4523 = vmatmul.mubr.bf16.gmra.mrb[0].mxu0 %v1347
      %v4524 = vpop.f32.mrb[0].mxu0
      %v4525 = vadd.f32 %v4380, %v4524
      %v4526 = vpop.f32.mrb[0].mxu0
      %v4527 = vpop.f32.mrb[0].mxu0
      %v4528 = vadd.f32 %v4383, %v4527
      %v4529 = vpop.f32.mrb[0].mxu0
      %4530 = vmatprep.mubr.bf16.mxu0 %v1357
      %4531 = vmatmul.mubr.bf16.gmra.mrb[0].mxu0 %v1356
      %v4532 = vpop.f32.mrb[0].mxu0
      %v4533 = vadd.f32 %v4388, %v4532
      %v4534 = vpop.f32.mrb[0].mxu0
      %v4535 = vpop.f32.mrb[0].mxu0
      %v4536 = vadd.f32 %v4391, %v4535
      %v4537 = vpop.f32.mrb[0].mxu0
      %4538 = vmatprep.mubr.bf16.mxu0 %v1366
      %4539 = vmatmul.mubr.bf16.gmra.mrb[0].mxu0 %v1365
      %v4540 = vpop.f32.mrb[0].mxu0
      %v4541 = vadd.f32 %v4396, %v4540
      %v4542 = vpop.f32.mrb[0].mxu0
      %v4543 = vpop.f32.mrb[0].mxu0
      %v4544 = vadd.f32 %v4399, %v4543
      %v4545 = vpop.f32.mrb[0].mxu0
      %4546 = vmatprep.mubr.bf16.mxu0 %v1375
      %4547 = vmatmul.mubr.bf16.gmra.mrb[0].mxu0 %v1374
      %v4548 = vpop.f32.mrb[0].mxu0
      %v4549 = vadd.f32 %v4404, %v4548
      %v4550 = vpop.f32.mrb[0].mxu0
      %v4551 = vpop.f32.mrb[0].mxu0
      %v4552 = vadd.f32 %v4407, %v4551
      %v4553 = vpop.f32.mrb[0].mxu0
      %4554 = vmatprep.mubr.bf16.mxu0 %v1384
      %4555 = vmatmul.mubr.bf16.gmra.mrb[0].mxu0 %v1383
      %v4556 = vpop.f32.mrb[0].mxu0
      %v4557 = vadd.f32 %v4412, %v4556
      %v4558 = vpop.f32.mrb[0].mxu0
      %v4559 = vpop.f32.mrb[0].mxu0
      %v4560 = vadd.f32 %v4415, %v4559
      %v4561 = vpop.f32.mrb[0].mxu0
      %4562 = vmatprep.mubr.bf16.mxu0 %v1393
      %4563 = vmatmul.mubr.bf16.gmra.mrb[0].mxu0 %v1392
      %v4564 = vpop.f32.mrb[0].mxu0
      %v4565 = vadd.f32 %v4420, %v4564
      %v4566 = vpop.f32.mrb[0].mxu0
      %v4567 = vpop.f32.mrb[0].mxu0
      %v4568 = vadd.f32 %v4423, %v4567
      %v4569 = vpop.f32.mrb[0].mxu0
      %4570 = vmatprep.mubr.bf16.mxu0 %v1402
      %4571 = vmatmul.mubr.bf16.gmra.mrb[0].mxu0 %v1401
      %v4572 = vpop.f32.mrb[0].mxu0
      %v4573 = vadd.f32 %v4428, %v4572
      %v4574 = vpop.f32.mrb[0].mxu0
      %v4575 = vpop.f32.mrb[0].mxu0
      %v4576 = vadd.f32 %v4431, %v4575
      %v4577 = vpop.f32.mrb[0].mxu0
      %4578 = vmatprep.mubr.bf16.mxu0 %v1699
      %4579 = vmatmul.mubr.bf16.gmra.mrb[0].mxu0 %v1698
      %v4580 = vpop.f32.mrb[0].mxu0
      %v4581 = vadd.f32 %v4436, %v4580
      %v4582 = vpop.f32.mrb[0].mxu0
      %v4583 = vpop.f32.mrb[0].mxu0
      %v4584 = vadd.f32 %v4439, %v4583
      %v4585 = vpop.f32.mrb[0].mxu0
      %4586 = vdwg.mxu0
      %4587 = vmatprep.subr.bf16.mxu0 0
      %4588 = vmatpush1.bf16.msra.mxu0 %v2904
      %4589 = vmatprep.subr.bf16.mxu0 0
      %4590 = vmatpush1.bf16.msra.mxu0 %v2907
      %4591 = vmatprep.subr.bf16.mxu0 0
      %4592 = vmatpush1.bf16.msra.mxu0 %v2910
      %4593 = vmatprep.subr.bf16.mxu0 0
      %4594 = vmatpush1.bf16.msra.mxu0 %v2913
      %4595 = vmatprep.subr.bf16.mxu0 0
      %4596 = vmatpush1.bf16.msra.mxu0 %v2916
      %4597 = vmatprep.subr.bf16.mxu0 0
      %4598 = vmatpush1.bf16.msra.mxu0 %v2919
      %4599 = vmatprep.subr.bf16.mxu0 0
      %4600 = vmatpush1.bf16.msra.mxu0 %v2922
      %4601 = vmatprep.subr.bf16.mxu0 0
      %4602 = vmatpush1.bf16.msra.mxu0 %v2925
      %4603 = vmatprep.subr.bf16.mxu0 0
      %4604 = vmatpush1.bf16.msra.mxu0 0
      %4605 = vmatprep.subr.bf16.mxu0 0
      %4606 = vmatpush1.bf16.msra.mxu0 0
      %4607 = vmatprep.subr.bf16.mxu0 0
      %4608 = vmatpush1.bf16.msra.mxu0 0
      %4609 = vmatprep.subr.bf16.mxu0 0
      %4610 = vmatpush1.bf16.msra.mxu0 0
      %4611 = vmatprep.subr.bf16.mxu0 0
      %4612 = vmatpush1.bf16.msra.mxu0 0
      %4613 = vmatprep.subr.bf16.mxu0 0
      %4614 = vmatpush1.bf16.msra.mxu0 0
      %4615 = vmatprep.subr.bf16.mxu0 0
      %4616 = vmatpush1.bf16.msra.mxu0 0
      %4617 = vmatprep.subr.bf16.mxu0 0
      %4618 = vmatpush1.bf16.msra.mxu0 0
      %4619 = vmatprep.mubr.bf16.mxu0 0
      %4620 = vmatmul.mubr.bf16.gmra.mrb[0].mxu0 %v1295
      %v4621 = vpop.f32.mrb[0].mxu0
      %v4622 = vadd.f32 %v4477, %v4621
      %v4623 = vpop.f32.mrb[0].mxu0
      %v4624 = vpop.f32.mrb[0].mxu0
      %v4625 = vadd.f32 %v4480, %v4624
      %v4626 = vpop.f32.mrb[0].mxu0
      %4627 = vmatprep.mubr.bf16.mxu0 0
      %4628 = vmatmul.mubr.bf16.gmra.mrb[0].mxu0 %v1304
      %v4629 = vpop.f32.mrb[0].mxu0
      %v4630 = vadd.f32 %v4485, %v4629
      %v4631 = vpop.f32.mrb[0].mxu0
      %v4632 = vpop.f32.mrb[0].mxu0
      %v4633 = vadd.f32 %v4488, %v4632
      %v4634 = vpop.f32.mrb[0].mxu0
      %4635 = vmatprep.mubr.bf16.mxu0 0
      %4636 = vmatmul.mubr.bf16.gmra.mrb[0].mxu0 %v1313
      %v4637 = vpop.f32.mrb[0].mxu0
      %v4638 = vadd.f32 %v4493, %v4637
      %v4639 = vpop.f32.mrb[0].mxu0
      %v4640 = vpop.f32.mrb[0].mxu0
      %v4641 = vadd.f32 %v4496, %v4640
      %v4642 = vpop.f32.mrb[0].mxu0
      %4643 = vmatprep.mubr.bf16.mxu0 0
      %4644 = vmatmul.mubr.bf16.gmra.mrb[0].mxu0 %v1322
      %v4645 = vpop.f32.mrb[0].mxu0
      %v4646 = vadd.f32 %v4501, %v4645
      %v4647 = vpop.f32.mrb[0].mxu0
      %v4648 = vpop.f32.mrb[0].mxu0
      %v4649 = vadd.f32 %v4504, %v4648
      %v4650 = vpop.f32.mrb[0].mxu0
      %4651 = vmatprep.mubr.bf16.mxu0 0
      %4652 = vmatmul.mubr.bf16.gmra.mrb[0].mxu0 %v1331
      %v4653 = vpop.f32.mrb[0].mxu0
      %v4654 = vadd.f32 %v4509, %v4653
      %v4655 = vpop.f32.mrb[0].mxu0
      %v4656 = vpop.f32.mrb[0].mxu0
      %v4657 = vadd.f32 %v4512, %v4656
      %v4658 = vpop.f32.mrb[0].mxu0
      %4659 = vmatprep.mubr.bf16.mxu0 0
      %4660 = vmatmul.mubr.bf16.gmra.mrb[0].mxu0 %v1340
      %v4661 = vpop.f32.mrb[0].mxu0
      %v4662 = vadd.f32 %v4517, %v4661
      %v4663 = vpop.f32.mrb[0].mxu0
      %v4664 = vpop.f32.mrb[0].mxu0
      %v4665 = vadd.f32 %v4520, %v4664
      %v4666 = vpop.f32.mrb[0].mxu0
      %4667 = vmatprep.mubr.bf16.mxu0 0
      %4668 = vmatmul.mubr.bf16.gmra.mrb[0].mxu0 %v1349
      %v4669 = vpop.f32.mrb[0].mxu0
      %v4670 = vadd.f32 %v4525, %v4669
      %v4671 = vpop.f32.mrb[0].mxu0
      %v4672 = vpop.f32.mrb[0].mxu0
      %v4673 = vadd.f32 %v4528, %v4672
      %v4674 = vpop.f32.mrb[0].mxu0
      %4675 = vmatprep.mubr.bf16.mxu0 0
      %4676 = vmatmul.mubr.bf16.gmra.mrb[0].mxu0 %v1358
      %v4677 = vpop.f32.mrb[0].mxu0
      %v4678 = vadd.f32 %v4533, %v4677
      %v4679 = vpop.f32.mrb[0].mxu0
      %v4680 = vpop.f32.mrb[0].mxu0
      %v4681 = vadd.f32 %v4536, %v4680
      %v4682 = vpop.f32.mrb[0].mxu0
      %4683 = vmatprep.mubr.bf16.mxu0 0
      %4684 = vmatmul.mubr.bf16.gmra.mrb[0].mxu0 %v1367
      %v4685 = vpop.f32.mrb[0].mxu0
      %v4686 = vadd.f32 %v4541, %v4685
      %v4687 = vpop.f32.mrb[0].mxu0
      %v4688 = vpop.f32.mrb[0].mxu0
      %v4689 = vadd.f32 %v4544, %v4688
      %v4690 = vpop.f32.mrb[0].mxu0
      %4691 = vmatprep.mubr.bf16.mxu0 0
      %4692 = vmatmul.mubr.bf16.gmra.mrb[0].mxu0 %v1376
      %v4693 = vpop.f32.mrb[0].mxu0
      %v4694 = vadd.f32 %v4549, %v4693
      %v4695 = vpop.f32.mrb[0].mxu0
      %v4696 = vpop.f32.mrb[0].mxu0
      %v4697 = vadd.f32 %v4552, %v4696
      %v4698 = vpop.f32.mrb[0].mxu0
      %4699 = vmatprep.mubr.bf16.mxu0 0
      %4700 = vmatmul.mubr.bf16.gmra.mrb[0].mxu0 %v1385
      %v4701 = vpop.f32.mrb[0].mxu0
      %v4702 = vadd.f32 %v4557, %v4701
      %v4703 = vpop.f32.mrb[0].mxu0
      %v4704 = vpop.f32.mrb[0].mxu0
      %v4705 = vadd.f32 %v4560, %v4704
      %v4706 = vpop.f32.mrb[0].mxu0
      %4707 = vmatprep.mubr.bf16.mxu0 0
      %4708 = vmatmul.mubr.bf16.gmra.mrb[0].mxu0 %v1394
      %v4709 = vpop.f32.mrb[0].mxu0
      %v4710 = vadd.f32 %v4565, %v4709
      %v4711 = vpop.f32.mrb[0].mxu0
      %v4712 = vpop.f32.mrb[0].mxu0
      %v4713 = vadd.f32 %v4568, %v4712
      %v4714 = vpop.f32.mrb[0].mxu0
      %4715 = vmatprep.mubr.bf16.mxu0 0
      %4716 = vmatmul.mubr.bf16.gmra.mrb[0].mxu0 %v1403
      %v4717 = vpop.f32.mrb[0].mxu0
      %v4718 = vadd.f32 %v4573, %v4717
      %v4719 = vpop.f32.mrb[0].mxu0
      %v4720 = vpop.f32.mrb[0].mxu0
      %v4721 = vadd.f32 %v4576, %v4720
      %v4722 = vpop.f32.mrb[0].mxu0
      %4723 = vmatprep.mubr.bf16.mxu0 0
      %4724 = vmatmul.mubr.bf16.gmra.mrb[0].mxu0 %v1700
      %v4725 = vpop.f32.mrb[0].mxu0
      %v4726 = vadd.f32 %v4581, %v4725
      %v4727 = vpop.f32.mrb[0].mxu0
      %v4728 = vpop.f32.mrb[0].mxu0
      %v4729 = vadd.f32 %v4584, %v4728
      %v4730 = vpop.f32.mrb[0].mxu0
      %4731 = vdwg.mxu0
      %v5020 = vunpack.c.l.b16 %v1404
      %v5021 = vunpack.c.h.b16 %v1404
      %v5022 = vunpack.c.l.b16 %v1405
      %v5023 = vunpack.c.l.b16 %v1406
      %v5024 = vunpack.c.h.b16 %v1406
      %v5025 = vunpack.c.l.b16 %v1407
      %v5026 = vunpack.c.l.b16 %v1408
      %v5027 = vunpack.c.h.b16 %v1408
      %v5028 = vunpack.c.l.b16 %v1409
      %v5029 = vunpack.c.l.b16 %v1410
      %v5030 = vunpack.c.h.b16 %v1410
      %v5031 = vunpack.c.l.b16 %v1411
      %v5032 = vunpack.c.l.b16 %v1412
      %v5033 = vunpack.c.h.b16 %v1412
      %v5034 = vunpack.c.l.b16 %v1413
      %v5035 = vunpack.c.l.b16 %v1414
      %v5036 = vunpack.c.h.b16 %v1414
      %v5037 = vunpack.c.l.b16 %v1415
      %v5038 = vunpack.c.l.b16 %v1416
      %v5039 = vunpack.c.h.b16 %v1416
      %v5040 = vunpack.c.l.b16 %v1417
      %v5041 = vunpack.c.l.b16 %v1418
      %v5042 = vunpack.c.h.b16 %v1418
      %v5043 = vunpack.c.l.b16 %v1419
      %v5044 = vunpack.c.l.b16 %v1420
      %v5045 = vunpack.c.h.b16 %v1420
      %v5046 = vunpack.c.l.b16 %v1421
      %v5047 = vunpack.c.l.b16 %v1422
      %v5048 = vunpack.c.h.b16 %v1422
      %v5049 = vunpack.c.l.b16 %v1423
      %v5050 = vunpack.c.l.b16 %v1424
      %v5051 = vunpack.c.h.b16 %v1424
      %v5052 = vunpack.c.l.b16 %v1425
      %v5053 = vunpack.c.l.b16 %v1426
      %v5054 = vunpack.c.h.b16 %v1426
      %v5055 = vunpack.c.l.b16 %v1427
      %v5056 = vunpack.c.l.b16 %v1428
      %v5057 = vunpack.c.h.b16 %v1428
      %v5058 = vunpack.c.l.b16 %v1429
      %v5059 = vunpack.c.l.b16 %v1430
      %v5060 = vunpack.c.h.b16 %v1430
      %v5061 = vunpack.c.l.b16 %v1431
      %v5062 = vunpack.c.l.b16 %v1432
      %v5063 = vunpack.c.h.b16 %v1432
      %v5064 = vunpack.c.l.b16 %v1433
      %v5065 = vunpack.c.l.b16 %v1434
      %v5066 = vunpack.c.h.b16 %v1434
      %v5067 = vunpack.c.l.b16 %v1435
      %v5068 = vunpack.c.l.b16 %v1436
      %v5069 = vunpack.c.h.b16 %v1436
      %v5070 = vunpack.c.l.b16 %v1437
      %v5071 = vunpack.c.l.b16 %v1438
      %v5072 = vunpack.c.h.b16 %v1438
      %v5073 = vunpack.c.l.b16 %v1439
      %v5074 = vunpack.c.l.b16 %v1440
      %v5075 = vunpack.c.h.b16 %v1440
      %v5076 = vunpack.c.l.b16 %v1441
      %v5077 = vunpack.c.l.b16 %v1442
      %v5078 = vunpack.c.h.b16 %v1442
      %v5079 = vunpack.c.l.b16 %v1443
      %v5080 = vunpack.c.l.b16 %v1444
      %v5081 = vunpack.c.h.b16 %v1444
      %v5082 = vunpack.c.l.b16 %v1445
      %v5083 = vunpack.c.l.b16 %v1446
      %v5084 = vunpack.c.h.b16 %v1446
      %v5085 = vunpack.c.l.b16 %v1447
      %v5086 = vunpack.c.l.b16 %v1448
      %v5087 = vunpack.c.h.b16 %v1448
      %v5088 = vunpack.c.l.b16 %v1449
      %v5089 = vunpack.c.l.b16 %v1450
      %v5090 = vunpack.c.h.b16 %v1450
      %v5091 = vunpack.c.l.b16 %v1451
      %v5092 = vunpack.c.l.b16 %v1452
      %v5093 = vunpack.c.h.b16 %v1452
      %v5094 = vunpack.c.l.b16 %v1453
      %v5095 = vunpack.c.l.b16 %v1454
      %v5096 = vunpack.c.h.b16 %v1454
      %v5097 = vunpack.c.l.b16 %v1455
      %v5098 = vunpack.c.l.b16 %v1456
      %v5099 = vunpack.c.h.b16 %v1456
      %v5100 = vunpack.c.l.b16 %v1457
      %v5101 = vunpack.c.l.b16 %v1458
      %v5102 = vunpack.c.h.b16 %v1458
      %v5103 = vunpack.c.l.b16 %v1459
      %v5104 = vunpack.c.l.b16 %v1460
      %v5105 = vunpack.c.h.b16 %v1460
      %v5106 = vunpack.c.l.b16 %v1461
      %v5107 = vunpack.c.l.b16 %v1462
      %v5108 = vunpack.c.h.b16 %v1462
      %v5109 = vunpack.c.l.b16 %v1463
      %v5110 = vunpack.c.l.b16 %v1464
      %v5111 = vunpack.c.h.b16 %v1464
      %v5112 = vunpack.c.l.b16 %v1465
      %v5113 = vunpack.c.l.b16 %v1466
      %v5114 = vunpack.c.h.b16 %v1466
      %v5115 = vunpack.c.l.b16 %v1467
      %v5116 = vunpack.c.l.b16 %v1468
      %v5117 = vunpack.c.h.b16 %v1468
      %v5118 = vunpack.c.l.b16 %v1469
      %v5119 = vunpack.c.l.b16 %v1470
      %v5120 = vunpack.c.h.b16 %v1470
      %v5121 = vunpack.c.l.b16 %v1471
      %v5122 = vunpack.c.l.b16 %v1472
      %v5123 = vunpack.c.h.b16 %v1472
      %v5124 = vunpack.c.l.b16 %v1473
      %v5125 = vunpack.c.l.b16 %v1474
      %v5126 = vunpack.c.h.b16 %v1474
      %v5127 = vunpack.c.l.b16 %v1475
      %v5128 = vunpack.c.l.b16 %v1476
      %v5129 = vunpack.c.h.b16 %v1476
      %v5130 = vunpack.c.l.b16 %v1477
      %v5131 = vunpack.c.l.b16 %v1478
      %v5132 = vunpack.c.h.b16 %v1478
      %v5133 = vunpack.c.l.b16 %v1479
      %v5134 = vunpack.c.l.b16 %v1480
      %v5135 = vunpack.c.h.b16 %v1480
      %v5136 = vunpack.c.l.b16 %v1481
      %v5137 = vunpack.c.l.b16 %v1482
      %v5138 = vunpack.c.h.b16 %v1482
      %v5139 = vunpack.c.l.b16 %v1483
      %v5140 = vunpack.c.l.b16 %v1484
      %v5141 = vunpack.c.h.b16 %v1484
      %v5142 = vunpack.c.l.b16 %v1485
      %v5143 = vunpack.c.l.b16 %v1486
      %v5144 = vunpack.c.h.b16 %v1486
      %v5145 = vunpack.c.l.b16 %v1487
      %v5146 = vunpack.c.l.b16 %v1488
      %v5147 = vunpack.c.h.b16 %v1488
      %v5148 = vunpack.c.l.b16 %v1489
      %v5149 = vunpack.c.l.b16 %v1490
      %v5150 = vunpack.c.h.b16 %v1490
      %v5151 = vunpack.c.l.b16 %v1491
      %v5152 = vunpack.c.l.b16 %v1492
      %v5153 = vunpack.c.h.b16 %v1492
      %v5154 = vunpack.c.l.b16 %v1493
      %v5155 = vunpack.c.l.b16 %v1494
      %v5156 = vunpack.c.h.b16 %v1494
      %v5157 = vunpack.c.l.b16 %v1495
      %v5158 = vunpack.c.l.b16 %v1496
      %v5159 = vunpack.c.h.b16 %v1496
      %v5160 = vunpack.c.l.b16 %v1497
      %v5161 = vunpack.c.l.b16 %v1498
      %v5162 = vunpack.c.h.b16 %v1498
      %v5163 = vunpack.c.l.b16 %v1499
      %v5164 = vunpack.c.l.b16 %v1500
      %v5165 = vunpack.c.h.b16 %v1500
      %v5166 = vunpack.c.l.b16 %v1501
      %v5167 = vunpack.c.l.b16 %v1502
      %v5168 = vunpack.c.h.b16 %v1502
      %v5169 = vunpack.c.l.b16 %v1503
      %v5170 = vunpack.c.l.b16 %v1504
      %v5171 = vunpack.c.h.b16 %v1504
      %v5172 = vunpack.c.l.b16 %v1505
      %v5173 = vunpack.c.l.b16 %v1506
      %v5174 = vunpack.c.h.b16 %v1506
      %v5175 = vunpack.c.l.b16 %v1507
      %v5176 = vunpack.c.l.b16 %v1508
      %v5177 = vunpack.c.h.b16 %v1508
      %v5178 = vunpack.c.l.b16 %v1509
      %v5179 = vunpack.c.l.b16 %v1510
      %v5180 = vunpack.c.h.b16 %v1510
      %v5181 = vunpack.c.l.b16 %v1511
      %v5182 = vunpack.c.l.b16 %v1512
      %v5183 = vunpack.c.h.b16 %v1512
      %v5184 = vunpack.c.l.b16 %v1513
      %v5185 = vunpack.c.l.b16 %v1514
      %v5186 = vunpack.c.h.b16 %v1514
      %v5187 = vunpack.c.l.b16 %v1515
      %v5188 = vunpack.c.l.b16 %v1516
      %v5189 = vunpack.c.h.b16 %v1516
      %v5190 = vunpack.c.l.b16 %v1517
      %v5191 = vunpack.c.l.b16 %v1518
      %v5192 = vunpack.c.h.b16 %v1518
      %v5193 = vunpack.c.l.b16 %v1519
      %v5194 = vunpack.c.l.b16 %v1520
      %v5195 = vunpack.c.h.b16 %v1520
      %v5196 = vunpack.c.l.b16 %v1521
      %v5197 = vunpack.c.l.b16 %v1522
      %v5198 = vunpack.c.h.b16 %v1522
      %v5199 = vunpack.c.l.b16 %v1523
      %v5200 = vunpack.c.l.b16 %v1524
      %v5201 = vunpack.c.h.b16 %v1524
      %v5202 = vunpack.c.l.b16 %v1525
      %v5203 = vunpack.c.l.b16 %v1526
      %v5204 = vunpack.c.h.b16 %v1526
      %v5205 = vunpack.c.l.b16 %v1527
      %v5206 = vunpack.c.l.b16 %v1528
      %v5207 = vunpack.c.h.b16 %v1528
      %v5208 = vunpack.c.l.b16 %v1529
      %v5209 = vunpack.c.l.b16 %v1530
      %v5210 = vunpack.c.h.b16 %v1530
      %v5211 = vunpack.c.l.b16 %v1531
      %v5212 = vunpack.c.l.b16 %v1532
      %v5213 = vunpack.c.h.b16 %v1532
      %v5214 = vunpack.c.l.b16 %v1533
      %v5215 = vunpack.c.l.b16 %v1534
      %v5216 = vunpack.c.h.b16 %v1534
      %v5217 = vunpack.c.l.b16 %v1535
      %v5218 = vunpack.c.l.b16 %v1536
      %v5219 = vunpack.c.h.b16 %v1536
      %v5220 = vunpack.c.l.b16 %v1537
      %v5221 = vunpack.c.l.b16 %v1538
      %v5222 = vunpack.c.h.b16 %v1538
      %v5223 = vunpack.c.l.b16 %v1539
      %v5224 = vunpack.c.l.b16 %v1540
      %v5225 = vunpack.c.h.b16 %v1540
      %v5226 = vunpack.c.l.b16 %v1541
      %v5227 = vunpack.c.l.b16 %v1542
      %v5228 = vunpack.c.h.b16 %v1542
      %v5229 = vunpack.c.l.b16 %v1543
      %v5230 = vunpack.c.l.b16 %v1544
      %v5231 = vunpack.c.h.b16 %v1544
      %v5232 = vunpack.c.l.b16 %v1545
      %v5233 = vunpack.c.l.b16 %v1546
      %v5234 = vunpack.c.h.b16 %v1546
      %v5235 = vunpack.c.l.b16 %v1547
      %v5236 = vunpack.c.l.b16 %v1548
      %v5237 = vunpack.c.h.b16 %v1548
      %v5238 = vunpack.c.l.b16 %v1549
      %v5239 = vunpack.c.l.b16 %v1550
      %v5240 = vunpack.c.h.b16 %v1550
      %v5241 = vunpack.c.l.b16 %v1551
      %v5242 = vunpack.c.l.b16 %v1552
      %v5243 = vunpack.c.h.b16 %v1552
      %v5244 = vunpack.c.l.b16 %v1553
      %v5245 = vunpack.c.l.b16 %v1554
      %v5246 = vunpack.c.h.b16 %v1554
      %v5247 = vunpack.c.l.b16 %v1555
      %v5248 = vunpack.c.l.b16 %v1556
      %v5249 = vunpack.c.h.b16 %v1556
      %v5250 = vunpack.c.l.b16 %v1557
      %v5251 = vunpack.c.l.b16 %v1558
      %v5252 = vunpack.c.h.b16 %v1558
      %v5253 = vunpack.c.l.b16 %v1559
      %v5254 = vunpack.c.l.b16 %v1560
      %v5255 = vunpack.c.h.b16 %v1560
      %v5256 = vunpack.c.l.b16 %v1561
      %v5257 = vunpack.c.l.b16 %v1562
      %v5258 = vunpack.c.h.b16 %v1562
      %v5259 = vunpack.c.l.b16 %v1563
      %v5260 = vunpack.c.l.b16 %v1564
      %v5261 = vunpack.c.h.b16 %v1564
      %v5262 = vunpack.c.l.b16 %v1565
      %v5263 = vunpack.c.l.b16 %v1566
      %v5264 = vunpack.c.h.b16 %v1566
      %v5265 = vunpack.c.l.b16 %v1567
      %v5266 = vunpack.c.l.b16 %v1568
      %v5267 = vunpack.c.h.b16 %v1568
      %v5268 = vunpack.c.l.b16 %v1569
      %v5269 = vunpack.c.l.b16 %v1570
      %v5270 = vunpack.c.h.b16 %v1570
      %v5271 = vunpack.c.l.b16 %v1571
      %v5272 = vunpack.c.l.b16 %v1572
      %v5273 = vunpack.c.h.b16 %v1572
      %v5274 = vunpack.c.l.b16 %v1573
      %v5275 = vunpack.c.l.b16 %v1574
      %v5276 = vunpack.c.h.b16 %v1574
      %v5277 = vunpack.c.l.b16 %v1575
      %v5278 = vunpack.c.l.b16 %v1576
      %v5279 = vunpack.c.h.b16 %v1576
      %v5280 = vunpack.c.l.b16 %v1577
      %v5281 = vunpack.c.l.b16 %v1578
      %v5282 = vunpack.c.h.b16 %v1578
      %v5283 = vunpack.c.l.b16 %v1579
      %v5284 = vunpack.c.l.b16 %v1580
      %v5285 = vunpack.c.h.b16 %v1580
      %v5286 = vunpack.c.l.b16 %v1581
      %v5287 = vunpack.c.l.b16 %v1582
      %v5288 = vunpack.c.h.b16 %v1582
      %v5289 = vunpack.c.l.b16 %v1583
      %v5290 = vunpack.c.l.b16 %v1584
      %v5291 = vunpack.c.h.b16 %v1584
      %v5292 = vunpack.c.l.b16 %v1585
      %v5293 = vunpack.c.l.b16 %v1586
      %v5294 = vunpack.c.h.b16 %v1586
      %v5295 = vunpack.c.l.b16 %v1587
      %v5296 = vunpack.c.l.b16 %v1588
      %v5297 = vunpack.c.h.b16 %v1588
      %v5298 = vunpack.c.l.b16 %v1589
      %v5299 = vunpack.c.l.b16 %v1590
      %v5300 = vunpack.c.h.b16 %v1590
      %v5301 = vunpack.c.l.b16 %v1591
      %v5302 = vunpack.c.l.b16 %v1592
      %v5303 = vunpack.c.h.b16 %v1592
      %v5304 = vunpack.c.l.b16 %v1593
      %v5305 = vunpack.c.l.b16 %v1594
      %v5306 = vunpack.c.h.b16 %v1594
      %v5307 = vunpack.c.l.b16 %v1595
      %v5308 = vunpack.c.l.b16 %v1596
      %v5309 = vunpack.c.h.b16 %v1596
      %v5310 = vunpack.c.l.b16 %v1597
      %v5311 = vunpack.c.l.b16 %v1598
      %v5312 = vunpack.c.h.b16 %v1598
      %v5313 = vunpack.c.l.b16 %v1599
      %v5314 = vunpack.c.l.b16 %v1600
      %v5315 = vunpack.c.h.b16 %v1600
      %v5316 = vunpack.c.l.b16 %v1601
      %v5317 = vunpack.c.l.b16 %v1602
      %v5318 = vunpack.c.h.b16 %v1602
      %v5319 = vunpack.c.l.b16 %v1603
      %v5320 = vunpack.c.l.b16 %v1604
      %v5321 = vunpack.c.h.b16 %v1604
      %v5322 = vunpack.c.l.b16 %v1605
      %v5323 = vunpack.c.l.b16 %v1606
      %v5324 = vunpack.c.h.b16 %v1606
      %v5325 = vunpack.c.l.b16 %v1607
      %v5326 = vunpack.c.l.b16 %v1608
      %v5327 = vunpack.c.h.b16 %v1608
      %v5328 = vunpack.c.l.b16 %v1609
      %v5329 = vunpack.c.l.b16 %v1610
      %v5330 = vunpack.c.h.b16 %v1610
      %v5331 = vunpack.c.l.b16 %v1611
      %v5332 = vunpack.c.l.b16 %v1612
      %v5333 = vunpack.c.h.b16 %v1612
      %v5334 = vunpack.c.l.b16 %v1613
      %v5335 = vunpack.c.l.b16 %v1614
      %v5336 = vunpack.c.h.b16 %v1614
      %v5337 = vunpack.c.l.b16 %v1615
      %v5338 = vunpack.c.l.b16 %v1616
      %v5339 = vunpack.c.h.b16 %v1616
      %v5340 = vunpack.c.l.b16 %v1617
      %v5341 = vunpack.c.l.b16 %v1618
      %v5342 = vunpack.c.h.b16 %v1618
      %v5343 = vunpack.c.l.b16 %v1619
      %v5344 = vunpack.c.l.b16 %v1620
      %v5345 = vunpack.c.h.b16 %v1620
      %v5346 = vunpack.c.l.b16 %v1621
      %v5347 = vunpack.c.l.b16 %v1622
      %v5348 = vunpack.c.h.b16 %v1622
      %v5349 = vunpack.c.l.b16 %v1623
      %v5350 = vunpack.c.l.b16 %v1624
      %v5351 = vunpack.c.h.b16 %v1624
      %v5352 = vunpack.c.l.b16 %v1625
      %v5353 = vunpack.c.l.b16 %v1626
      %v5354 = vunpack.c.h.b16 %v1626
      %v5355 = vunpack.c.l.b16 %v1627
      %v5356 = vunpack.c.l.b16 %v1628
      %v5357 = vunpack.c.h.b16 %v1628
      %v5358 = vunpack.c.l.b16 %v1629
      %v5359 = vunpack.c.l.b16 %v1630
      %v5360 = vunpack.c.h.b16 %v1630
      %v5361 = vunpack.c.l.b16 %v1631
      %v5362 = vunpack.c.l.b16 %v1632
      %v5363 = vunpack.c.h.b16 %v1632
      %v5364 = vunpack.c.l.b16 %v1633
      %v5365 = vunpack.c.l.b16 %v1634
      %v5366 = vunpack.c.h.b16 %v1634
      %v5367 = vunpack.c.l.b16 %v1635
      %v5368 = vunpack.c.l.b16 %v1636
      %v5369 = vunpack.c.h.b16 %v1636
      %v5370 = vunpack.c.l.b16 %v1637
      %v5371 = vunpack.c.l.b16 %v1638
      %v5372 = vunpack.c.h.b16 %v1638
      %v5373 = vunpack.c.l.b16 %v1639
      %v5374 = vunpack.c.l.b16 %v1640
      %v5375 = vunpack.c.h.b16 %v1640
      %v5376 = vunpack.c.l.b16 %v1641
      %v5377 = vunpack.c.l.b16 %v1642
      %v5378 = vunpack.c.h.b16 %v1642
      %v5379 = vunpack.c.l.b16 %v1643
      %v5380 = vunpack.c.l.b16 %v1644
      %v5381 = vunpack.c.h.b16 %v1644
      %v5382 = vunpack.c.l.b16 %v1645
      %v5383 = vunpack.c.l.b16 %v1646
      %v5384 = vunpack.c.h.b16 %v1646
      %v5385 = vunpack.c.l.b16 %v1647
      %v5386 = vunpack.c.l.b16 %v1648
      %v5387 = vunpack.c.h.b16 %v1648
      %v5388 = vunpack.c.l.b16 %v1649
      %v5389 = vunpack.c.l.b16 %v1650
      %v5390 = vunpack.c.h.b16 %v1650
      %v5391 = vunpack.c.l.b16 %v1651
      %v5392 = vunpack.c.l.b16 %v1652
      %v5393 = vunpack.c.h.b16 %v1652
      %v5394 = vunpack.c.l.b16 %v1653
      %v5395 = vunpack.c.l.b16 %v1654
      %v5396 = vunpack.c.h.b16 %v1654
      %v5397 = vunpack.c.l.b16 %v1655
      %v5398 = vunpack.c.l.b16 %v1656
      %v5399 = vunpack.c.h.b16 %v1656
      %v5400 = vunpack.c.l.b16 %v1657
      %v5401 = vunpack.c.l.b16 %v1658
      %v5402 = vunpack.c.h.b16 %v1658
      %v5403 = vunpack.c.l.b16 %v1659
      %v5404 = vunpack.c.l.b16 %v1660
      %v5405 = vunpack.c.h.b16 %v1660
      %v5406 = vunpack.c.l.b16 %v1661
      %v5407 = vunpack.c.l.b16 %v1662
      %v5408 = vunpack.c.h.b16 %v1662
      %v5409 = vunpack.c.l.b16 %v1663
      %v5410 = vunpack.c.l.b16 %v1664
      %v5411 = vunpack.c.h.b16 %v1664
      %v5412 = vunpack.c.l.b16 %v1665
      %v5413 = vunpack.c.l.b16 %v1666
      %v5414 = vunpack.c.h.b16 %v1666
      %v5415 = vunpack.c.l.b16 %v1667
      %v5416 = vunpack.c.l.b16 %v1668
      %v5417 = vunpack.c.h.b16 %v1668
      %v5418 = vunpack.c.l.b16 %v1669
      %v5419 = vunpack.c.l.b16 %v1670
      %v5420 = vunpack.c.h.b16 %v1670
      %v5421 = vunpack.c.l.b16 %v1671
      %v5422 = vunpack.c.l.b16 %v1672
      %v5423 = vunpack.c.h.b16 %v1672
      %v5424 = vunpack.c.l.b16 %v1673
      %v5425 = vunpack.c.l.b16 %v1674
      %v5426 = vunpack.c.h.b16 %v1674
      %v5427 = vunpack.c.l.b16 %v1675
      %v5428 = vunpack.c.l.b16 %v1676
      %v5429 = vunpack.c.h.b16 %v1676
      %v5430 = vunpack.c.l.b16 %v1677
      %v5431 = vunpack.c.l.b16 %v1678
      %v5432 = vunpack.c.h.b16 %v1678
      %v5433 = vunpack.c.l.b16 %v1679
      %v5434 = vunpack.c.l.b16 %v1680
      %v5435 = vunpack.c.h.b16 %v1680
      %v5436 = vunpack.c.l.b16 %v1681
      %v5437 = vunpack.c.l.b16 %v1682
      %v5438 = vunpack.c.h.b16 %v1682
      %v5439 = vunpack.c.l.b16 %v1683
      %v5440 = vunpack.c.l.b16 %v1684
      %v5441 = vunpack.c.h.b16 %v1684
      %v5442 = vunpack.c.l.b16 %v1685
      %v5443 = vunpack.c.l.b16 %v1686
      %v5444 = vunpack.c.h.b16 %v1686
      %v5445 = vunpack.c.l.b16 %v1687
      %v5446 = vunpack.c.l.b16 %v1688
      %v5447 = vunpack.c.h.b16 %v1688
      %v5448 = vunpack.c.l.b16 %v1689
      %v5449 = vunpack.c.l.b16 %v1690
      %v5450 = vunpack.c.h.b16 %v1690
      %v5451 = vunpack.c.l.b16 %v1691
      %v5452 = vpack.c.b16 %v5023, %v5020
      %v5453 = vpack.c.b16 %v5024, %v5021
      %v5454 = vpack.c.b16 %v5025, %v5022
      %v5455 = vpack.c.b16 %v5029, %v5026
      %v5456 = vpack.c.b16 %v5030, %v5027
      %v5457 = vpack.c.b16 %v5031, %v5028
      %v5458 = vpack.c.b16 %v5035, %v5032
      %v5459 = vpack.c.b16 %v5036, %v5033
      %v5460 = vpack.c.b16 %v5037, %v5034
      %v5461 = vpack.c.b16 %v5041, %v5038
      %v5462 = vpack.c.b16 %v5042, %v5039
      %v5463 = vpack.c.b16 %v5043, %v5040
      %v5464 = vpack.c.b16 %v5047, %v5044
      %v5465 = vpack.c.b16 %v5048, %v5045
      %v5466 = vpack.c.b16 %v5049, %v5046
      %v5467 = vpack.c.b16 %v5053, %v5050
      %v5468 = vpack.c.b16 %v5054, %v5051
      %v5469 = vpack.c.b16 %v5055, %v5052
      %v5470 = vpack.c.b16 %v5059, %v5056
      %v5471 = vpack.c.b16 %v5060, %v5057
      %v5472 = vpack.c.b16 %v5061, %v5058
      %v5473 = vpack.c.b16 %v5065, %v5062
      %v5474 = vpack.c.b16 %v5066, %v5063
      %v5475 = vpack.c.b16 %v5067, %v5064
      %v5476 = vpack.c.b16 %v5071, %v5068
      %v5477 = vpack.c.b16 %v5072, %v5069
      %v5478 = vpack.c.b16 %v5073, %v5070
      %v5479 = vpack.c.b16 %v5077, %v5074
      %v5480 = vpack.c.b16 %v5078, %v5075
      %v5481 = vpack.c.b16 %v5079, %v5076
      %v5482 = vpack.c.b16 %v5083, %v5080
      %v5483 = vpack.c.b16 %v5084, %v5081
      %v5484 = vpack.c.b16 %v5085, %v5082
      %v5485 = vpack.c.b16 %v5089, %v5086
      %v5486 = vpack.c.b16 %v5090, %v5087
      %v5487 = vpack.c.b16 %v5091, %v5088
      %v5488 = vpack.c.b16 %v5095, %v5092
      %v5489 = vpack.c.b16 %v5096, %v5093
      %v5490 = vpack.c.b16 %v5097, %v5094
      %v5491 = vpack.c.b16 %v5101, %v5098
      %v5492 = vpack.c.b16 %v5102, %v5099
      %v5493 = vpack.c.b16 %v5103, %v5100
      %v5494 = vpack.c.b16 %v5107, %v5104
      %v5495 = vpack.c.b16 %v5108, %v5105
      %v5496 = vpack.c.b16 %v5109, %v5106
      %v5497 = vpack.c.b16 %v5113, %v5110
      %v5498 = vpack.c.b16 %v5114, %v5111
      %v5499 = vpack.c.b16 %v5115, %v5112
      %v5500 = vpack.c.b16 %v5119, %v5116
      %v5501 = vpack.c.b16 %v5120, %v5117
      %v5502 = vpack.c.b16 %v5121, %v5118
      %v5503 = vpack.c.b16 %v5125, %v5122
      %v5504 = vpack.c.b16 %v5126, %v5123
      %v5505 = vpack.c.b16 %v5127, %v5124
      %v5506 = vpack.c.b16 %v5131, %v5128
      %v5507 = vpack.c.b16 %v5132, %v5129
      %v5508 = vpack.c.b16 %v5133, %v5130
      %v5509 = vpack.c.b16 %v5137, %v5134
      %v5510 = vpack.c.b16 %v5138, %v5135
      %v5511 = vpack.c.b16 %v5139, %v5136
      %v5512 = vpack.c.b16 %v5143, %v5140
      %v5513 = vpack.c.b16 %v5144, %v5141
      %v5514 = vpack.c.b16 %v5145, %v5142
      %v5515 = vpack.c.b16 %v5149, %v5146
      %v5516 = vpack.c.b16 %v5150, %v5147
      %v5517 = vpack.c.b16 %v5151, %v5148
      %v5518 = vpack.c.b16 %v5155, %v5152
      %v5519 = vpack.c.b16 %v5156, %v5153
      %v5520 = vpack.c.b16 %v5157, %v5154
      %v5521 = vpack.c.b16 %v5161, %v5158
      %v5522 = vpack.c.b16 %v5162, %v5159
      %v5523 = vpack.c.b16 %v5163, %v5160
      %v5524 = vpack.c.b16 %v5167, %v5164
      %v5525 = vpack.c.b16 %v5168, %v5165
      %v5526 = vpack.c.b16 %v5169, %v5166
      %v5527 = vpack.c.b16 %v5173, %v5170
      %v5528 = vpack.c.b16 %v5174, %v5171
      %v5529 = vpack.c.b16 %v5175, %v5172
      %v5530 = vpack.c.b16 %v5179, %v5176
      %v5531 = vpack.c.b16 %v5180, %v5177
      %v5532 = vpack.c.b16 %v5181, %v5178
      %v5533 = vpack.c.b16 %v5185, %v5182
      %v5534 = vpack.c.b16 %v5186, %v5183
      %v5535 = vpack.c.b16 %v5187, %v5184
      %v5536 = vpack.c.b16 %v5191, %v5188
      %v5537 = vpack.c.b16 %v5192, %v5189
      %v5538 = vpack.c.b16 %v5193, %v5190
      %v5539 = vpack.c.b16 %v5197, %v5194
      %v5540 = vpack.c.b16 %v5198, %v5195
      %v5541 = vpack.c.b16 %v5199, %v5196
      %v5542 = vpack.c.b16 %v5203, %v5200
      %v5543 = vpack.c.b16 %v5204, %v5201
      %v5544 = vpack.c.b16 %v5205, %v5202
      %v5545 = vpack.c.b16 %v5209, %v5206
      %v5546 = vpack.c.b16 %v5210, %v5207
      %v5547 = vpack.c.b16 %v5211, %v5208
      %v5548 = vpack.c.b16 %v5215, %v5212
      %v5549 = vpack.c.b16 %v5216, %v5213
      %v5550 = vpack.c.b16 %v5217, %v5214
      %v5551 = vpack.c.b16 %v5221, %v5218
      %v5552 = vpack.c.b16 %v5222, %v5219
      %v5553 = vpack.c.b16 %v5223, %v5220
      %v5554 = vpack.c.b16 %v5227, %v5224
      %v5555 = vpack.c.b16 %v5228, %v5225
      %v5556 = vpack.c.b16 %v5229, %v5226
      %v5557 = vpack.c.b16 %v5233, %v5230
      %v5558 = vpack.c.b16 %v5234, %v5231
      %v5559 = vpack.c.b16 %v5235, %v5232
      %v5560 = vpack.c.b16 %v5239, %v5236
      %v5561 = vpack.c.b16 %v5240, %v5237
      %v5562 = vpack.c.b16 %v5241, %v5238
      %v5563 = vpack.c.b16 %v5245, %v5242
      %v5564 = vpack.c.b16 %v5246, %v5243
      %v5565 = vpack.c.b16 %v5247, %v5244
      %v5566 = vpack.c.b16 %v5251, %v5248
      %v5567 = vpack.c.b16 %v5252, %v5249
      %v5568 = vpack.c.b16 %v5253, %v5250
      %v5569 = vpack.c.b16 %v5257, %v5254
      %v5570 = vpack.c.b16 %v5258, %v5255
      %v5571 = vpack.c.b16 %v5259, %v5256
      %v5572 = vpack.c.b16 %v5263, %v5260
      %v5573 = vpack.c.b16 %v5264, %v5261
      %v5574 = vpack.c.b16 %v5265, %v5262
      %v5575 = vpack.c.b16 %v5269, %v5266
      %v5576 = vpack.c.b16 %v5270, %v5267
      %v5577 = vpack.c.b16 %v5271, %v5268
      %v5578 = vpack.c.b16 %v5275, %v5272
      %v5579 = vpack.c.b16 %v5276, %v5273
      %v5580 = vpack.c.b16 %v5277, %v5274
      %v5581 = vpack.c.b16 %v5281, %v5278
      %v5582 = vpack.c.b16 %v5282, %v5279
      %v5583 = vpack.c.b16 %v5283, %v5280
      %v5584 = vpack.c.b16 %v5287, %v5284
      %v5585 = vpack.c.b16 %v5288, %v5285
      %v5586 = vpack.c.b16 %v5289, %v5286
      %v5587 = vpack.c.b16 %v5293, %v5290
      %v5588 = vpack.c.b16 %v5294, %v5291
      %v5589 = vpack.c.b16 %v5295, %v5292
      %v5590 = vpack.c.b16 %v5299, %v5296
      %v5591 = vpack.c.b16 %v5300, %v5297
      %v5592 = vpack.c.b16 %v5301, %v5298
      %v5593 = vpack.c.b16 %v5305, %v5302
      %v5594 = vpack.c.b16 %v5306, %v5303
      %v5595 = vpack.c.b16 %v5307, %v5304
      %v5596 = vpack.c.b16 %v5311, %v5308
      %v5597 = vpack.c.b16 %v5312, %v5309
      %v5598 = vpack.c.b16 %v5313, %v5310
      %v5599 = vpack.c.b16 %v5317, %v5314
      %v5600 = vpack.c.b16 %v5318, %v5315
      %v5601 = vpack.c.b16 %v5319, %v5316
      %v5602 = vpack.c.b16 %v5323, %v5320
      %v5603 = vpack.c.b16 %v5324, %v5321
      %v5604 = vpack.c.b16 %v5325, %v5322
      %v5605 = vpack.c.b16 %v5329, %v5326
      %v5606 = vpack.c.b16 %v5330, %v5327
      %v5607 = vpack.c.b16 %v5331, %v5328
      %v5608 = vpack.c.b16 %v5335, %v5332
      %v5609 = vpack.c.b16 %v5336, %v5333
      %v5610 = vpack.c.b16 %v5337, %v5334
      %v5611 = vpack.c.b16 %v5341, %v5338
      %v5612 = vpack.c.b16 %v5342, %v5339
      %v5613 = vpack.c.b16 %v5343, %v5340
      %v5614 = vpack.c.b16 %v5347, %v5344
      %v5615 = vpack.c.b16 %v5348, %v5345
      %v5616 = vpack.c.b16 %v5349, %v5346
      %v5617 = vpack.c.b16 %v5353, %v5350
      %v5618 = vpack.c.b16 %v5354, %v5351
      %v5619 = vpack.c.b16 %v5355, %v5352
      %v5620 = vpack.c.b16 %v5359, %v5356
      %v5621 = vpack.c.b16 %v5360, %v5357
      %v5622 = vpack.c.b16 %v5361, %v5358
      %v5623 = vpack.c.b16 %v5365, %v5362
      %v5624 = vpack.c.b16 %v5366, %v5363
      %v5625 = vpack.c.b16 %v5367, %v5364
      %v5626 = vpack.c.b16 %v5371, %v5368
      %v5627 = vpack.c.b16 %v5372, %v5369
      %v5628 = vpack.c.b16 %v5373, %v5370
      %v5629 = vpack.c.b16 %v5377, %v5374
      %v5630 = vpack.c.b16 %v5378, %v5375
      %v5631 = vpack.c.b16 %v5379, %v5376
      %v5632 = vpack.c.b16 %v5383, %v5380
      %v5633 = vpack.c.b16 %v5384, %v5381
      %v5634 = vpack.c.b16 %v5385, %v5382
      %v5635 = vpack.c.b16 %v5389, %v5386
      %v5636 = vpack.c.b16 %v5390, %v5387
      %v5637 = vpack.c.b16 %v5391, %v5388
      %v5638 = vpack.c.b16 %v5395, %v5392
      %v5639 = vpack.c.b16 %v5396, %v5393
      %v5640 = vpack.c.b16 %v5397, %v5394
      %v5641 = vpack.c.b16 %v5401, %v5398
      %v5642 = vpack.c.b16 %v5402, %v5399
      %v5643 = vpack.c.b16 %v5403, %v5400
      %v5644 = vpack.c.b16 %v5407, %v5404
      %v5645 = vpack.c.b16 %v5408, %v5405
      %v5646 = vpack.c.b16 %v5409, %v5406
      %v5647 = vpack.c.b16 %v5413, %v5410
      %v5648 = vpack.c.b16 %v5414, %v5411
      %v5649 = vpack.c.b16 %v5415, %v5412
      %v5650 = vpack.c.b16 %v5419, %v5416
      %v5651 = vpack.c.b16 %v5420, %v5417
      %v5652 = vpack.c.b16 %v5421, %v5418
      %v5653 = vpack.c.b16 %v5425, %v5422
      %v5654 = vpack.c.b16 %v5426, %v5423
      %v5655 = vpack.c.b16 %v5427, %v5424
      %v5656 = vpack.c.b16 %v5431, %v5428
      %v5657 = vpack.c.b16 %v5432, %v5429
      %v5658 = vpack.c.b16 %v5433, %v5430
      %v5659 = vpack.c.b16 %v5437, %v5434
      %v5660 = vpack.c.b16 %v5438, %v5435
      %v5661 = vpack.c.b16 %v5439, %v5436
      %v5662 = vpack.c.b16 %v5443, %v5440
      %v5663 = vpack.c.b16 %v5444, %v5441
      %v5664 = vpack.c.b16 %v5445, %v5442
      %v5665 = vpack.c.b16 %v5449, %v5446
      %v5666 = vpack.c.b16 %v5450, %v5447
      %v5667 = vpack.c.b16 %v5451, %v5448
      %5884 = vmatprep.subr.bf16.mxu0 %v5453
      %5885 = vmatpush1.bf16.msra.mxu0 %v5452
      %5886 = vmatprep.subr.bf16.mxu0 %v5456
      %5887 = vmatpush1.bf16.msra.mxu0 %v5455
      %5888 = vmatprep.subr.bf16.mxu0 %v5459
      %5889 = vmatpush1.bf16.msra.mxu0 %v5458
      %5890 = vmatprep.subr.bf16.mxu0 %v5462
      %5891 = vmatpush1.bf16.msra.mxu0 %v5461
      %5892 = vmatprep.subr.bf16.mxu0 %v5465
      %5893 = vmatpush1.bf16.msra.mxu0 %v5464
      %5894 = vmatprep.subr.bf16.mxu0 %v5468
      %5895 = vmatpush1.bf16.msra.mxu0 %v5467
      %5896 = vmatprep.subr.bf16.mxu0 %v5471
      %5897 = vmatpush1.bf16.msra.mxu0 %v5470
      %5898 = vmatprep.subr.bf16.mxu0 %v5474
      %5899 = vmatpush1.bf16.msra.mxu0 %v5473
      %5900 = vmatprep.subr.bf16.mxu0 %v5477
      %5901 = vmatpush1.bf16.msra.mxu0 %v5476
      %5902 = vmatprep.subr.bf16.mxu0 %v5480
      %5903 = vmatpush1.bf16.msra.mxu0 %v5479
      %5904 = vmatprep.subr.bf16.mxu0 %v5483
      %5905 = vmatpush1.bf16.msra.mxu0 %v5482
      %5906 = vmatprep.subr.bf16.mxu0 %v5486
      %5907 = vmatpush1.bf16.msra.mxu0 %v5485
      %5908 = vmatprep.subr.bf16.mxu0 %v5489
      %5909 = vmatpush1.bf16.msra.mxu0 %v5488
      %5910 = vmatprep.subr.bf16.mxu0 %v5492
      %5911 = vmatpush1.bf16.msra.mxu0 %v5491
      %5912 = vmatprep.subr.bf16.mxu0 %v5495
      %5913 = vmatpush1.bf16.msra.mxu0 %v5494
      %5914 = vmatprep.subr.bf16.mxu0 %v5498
      %5915 = vmatpush1.bf16.msra.mxu0 %v5497
      %5916 = vmatprep.mubr.bf16.mxu0 %v1279
      %5917 = vmatmul.mubr.bf16.gmra.mrb[0].mxu0 %v1278
      %v5918 = vpop.f32.mrb[0].mxu0
      %v5919 = vadd.f32 %v3869, %v5918
      %v5920 = vpop.f32.mrb[0].mxu0
      %v5921 = vadd.f32 %v3871, %v5920
      %v5922 = vpop.f32.mrb[0].mxu0
      %v5923 = vadd.f32 %v3873, %v5922
      %v5924 = vpop.f32.mrb[0].mxu0
      %v5925 = vadd.f32 %v3875, %v5924
      %5926 = vmatprep.mubr.bf16.mxu0 %v1288
      %5927 = vmatmul.mubr.bf16.gmra.mrb[0].mxu0 %v1287
      %v5928 = vpop.f32.mrb[0].mxu0
      %v5929 = vadd.f32 %v3879, %v5928
      %v5930 = vpop.f32.mrb[0].mxu0
      %v5931 = vadd.f32 %v3881, %v5930
      %v5932 = vpop.f32.mrb[0].mxu0
      %v5933 = vadd.f32 %v3883, %v5932
      %v5934 = vpop.f32.mrb[0].mxu0
      %v5935 = vadd.f32 %v3885, %v5934
      %5936 = vmatprep.mubr.bf16.mxu0 %v1297
      %5937 = vmatmul.mubr.bf16.gmra.mrb[0].mxu0 %v1296
      %v5938 = vpop.f32.mrb[0].mxu0
      %v5939 = vadd.f32 %v3889, %v5938
      %v5940 = vpop.f32.mrb[0].mxu0
      %v5941 = vadd.f32 %v3891, %v5940
      %v5942 = vpop.f32.mrb[0].mxu0
      %v5943 = vadd.f32 %v3893, %v5942
      %v5944 = vpop.f32.mrb[0].mxu0
      %v5945 = vadd.f32 %v3895, %v5944
      %5946 = vmatprep.mubr.bf16.mxu0 %v1306
      %5947 = vmatmul.mubr.bf16.gmra.mrb[0].mxu0 %v1305
      %v5948 = vpop.f32.mrb[0].mxu0
      %v5949 = vadd.f32 %v3899, %v5948
      %v5950 = vpop.f32.mrb[0].mxu0
      %v5951 = vadd.f32 %v3901, %v5950
      %v5952 = vpop.f32.mrb[0].mxu0
      %v5953 = vadd.f32 %v3903, %v5952
      %v5954 = vpop.f32.mrb[0].mxu0
      %v5955 = vadd.f32 %v3905, %v5954
      %5956 = vmatprep.mubr.bf16.mxu0 %v1315
      %5957 = vmatmul.mubr.bf16.gmra.mrb[0].mxu0 %v1314
      %v5958 = vpop.f32.mrb[0].mxu0
      %v5959 = vadd.f32 %v3909, %v5958
      %v5960 = vpop.f32.mrb[0].mxu0
      %v5961 = vadd.f32 %v3911, %v5960
      %v5962 = vpop.f32.mrb[0].mxu0
      %v5963 = vadd.f32 %v3913, %v5962
      %v5964 = vpop.f32.mrb[0].mxu0
      %v5965 = vadd.f32 %v3915, %v5964
      %5966 = vmatprep.mubr.bf16.mxu0 %v1324
      %5967 = vmatmul.mubr.bf16.gmra.mrb[0].mxu0 %v1323
      %v5968 = vpop.f32.mrb[0].mxu0
      %v5969 = vadd.f32 %v3919, %v5968
      %v5970 = vpop.f32.mrb[0].mxu0
      %v5971 = vadd.f32 %v3921, %v5970
      %v5972 = vpop.f32.mrb[0].mxu0
      %v5973 = vadd.f32 %v3923, %v5972
      %v5974 = vpop.f32.mrb[0].mxu0
      %v5975 = vadd.f32 %v3925, %v5974
      %5976 = vmatprep.mubr.bf16.mxu0 %v1333
      %5977 = vmatmul.mubr.bf16.gmra.mrb[0].mxu0 %v1332
      %v5978 = vpop.f32.mrb[0].mxu0
      %v5979 = vadd.f32 %v3929, %v5978
      %v5980 = vpop.f32.mrb[0].mxu0
      %v5981 = vadd.f32 %v3931, %v5980
      %v5982 = vpop.f32.mrb[0].mxu0
      %v5983 = vadd.f32 %v3933, %v5982
      %v5984 = vpop.f32.mrb[0].mxu0
      %v5985 = vadd.f32 %v3935, %v5984
      %5986 = vmatprep.mubr.bf16.mxu0 %v1342
      %5987 = vmatmul.mubr.bf16.gmra.mrb[0].mxu0 %v1341
      %v5988 = vpop.f32.mrb[0].mxu0
      %v5989 = vadd.f32 %v3939, %v5988
      %v5990 = vpop.f32.mrb[0].mxu0
      %v5991 = vadd.f32 %v3941, %v5990
      %v5992 = vpop.f32.mrb[0].mxu0
      %v5993 = vadd.f32 %v3943, %v5992
      %v5994 = vpop.f32.mrb[0].mxu0
      %v5995 = vadd.f32 %v3945, %v5994
      %5996 = vmatprep.mubr.bf16.mxu0 %v1351
      %5997 = vmatmul.mubr.bf16.gmra.mrb[0].mxu0 %v1350
      %v5998 = vpop.f32.mrb[0].mxu0
      %v5999 = vadd.f32 %v3949, %v5998
      %v6000 = vpop.f32.mrb[0].mxu0
      %v6001 = vadd.f32 %v3951, %v6000
      %v6002 = vpop.f32.mrb[0].mxu0
      %v6003 = vadd.f32 %v3953, %v6002
      %v6004 = vpop.f32.mrb[0].mxu0
      %v6005 = vadd.f32 %v3955, %v6004
      %6006 = vmatprep.mubr.bf16.mxu0 %v1360
      %6007 = vmatmul.mubr.bf16.gmra.mrb[0].mxu0 %v1359
      %v6008 = vpop.f32.mrb[0].mxu0
      %v6009 = vadd.f32 %v3959, %v6008
      %v6010 = vpop.f32.mrb[0].mxu0
      %v6011 = vadd.f32 %v3961, %v6010
      %v6012 = vpop.f32.mrb[0].mxu0
      %v6013 = vadd.f32 %v3963, %v6012
      %v6014 = vpop.f32.mrb[0].mxu0
      %v6015 = vadd.f32 %v3965, %v6014
      %6016 = vmatprep.mubr.bf16.mxu0 %v1369
      %6017 = vmatmul.mubr.bf16.gmra.mrb[0].mxu0 %v1368
      %v6018 = vpop.f32.mrb[0].mxu0
      %v6019 = vadd.f32 %v3969, %v6018
      %v6020 = vpop.f32.mrb[0].mxu0
      %v6021 = vadd.f32 %v3971, %v6020
      %v6022 = vpop.f32.mrb[0].mxu0
      %v6023 = vadd.f32 %v3973, %v6022
      %v6024 = vpop.f32.mrb[0].mxu0
      %v6025 = vadd.f32 %v3975, %v6024
      %6026 = vmatprep.mubr.bf16.mxu0 %v1378
      %6027 = vmatmul.mubr.bf16.gmra.mrb[0].mxu0 %v1377
      %v6028 = vpop.f32.mrb[0].mxu0
      %v6029 = vadd.f32 %v3979, %v6028
      %v6030 = vpop.f32.mrb[0].mxu0
      %v6031 = vadd.f32 %v3981, %v6030
      %v6032 = vpop.f32.mrb[0].mxu0
      %v6033 = vadd.f32 %v3983, %v6032
      %v6034 = vpop.f32.mrb[0].mxu0
      %v6035 = vadd.f32 %v3985, %v6034
      %6036 = vmatprep.mubr.bf16.mxu0 %v1387
      %6037 = vmatmul.mubr.bf16.gmra.mrb[0].mxu0 %v1386
      %v6038 = vpop.f32.mrb[0].mxu0
      %v6039 = vadd.f32 %v3989, %v6038
      %v6040 = vpop.f32.mrb[0].mxu0
      %v6041 = vadd.f32 %v3991, %v6040
      %v6042 = vpop.f32.mrb[0].mxu0
      %v6043 = vadd.f32 %v3993, %v6042
      %v6044 = vpop.f32.mrb[0].mxu0
      %v6045 = vadd.f32 %v3995, %v6044
      %6046 = vmatprep.mubr.bf16.mxu0 %v1396
      %6047 = vmatmul.mubr.bf16.gmra.mrb[0].mxu0 %v1395
      %v6048 = vpop.f32.mrb[0].mxu0
      %v6049 = vadd.f32 %v3999, %v6048
      %v6050 = vpop.f32.mrb[0].mxu0
      %v6051 = vadd.f32 %v4001, %v6050
      %v6052 = vpop.f32.mrb[0].mxu0
      %v6053 = vadd.f32 %v4003, %v6052
      %v6054 = vpop.f32.mrb[0].mxu0
      %v6055 = vadd.f32 %v4005, %v6054
      %6056 = vdwg.mxu0
      %6057 = vmatprep.subr.bf16.mxu0 %v5501
      %6058 = vmatpush1.bf16.msra.mxu0 %v5500
      %6059 = vmatprep.subr.bf16.mxu0 %v5504
      %6060 = vmatpush1.bf16.msra.mxu0 %v5503
      %6061 = vmatprep.subr.bf16.mxu0 %v5507
      %6062 = vmatpush1.bf16.msra.mxu0 %v5506
      %6063 = vmatprep.subr.bf16.mxu0 %v5510
      %6064 = vmatpush1.bf16.msra.mxu0 %v5509
      %6065 = vmatprep.subr.bf16.mxu0 %v5513
      %6066 = vmatpush1.bf16.msra.mxu0 %v5512
      %6067 = vmatprep.subr.bf16.mxu0 %v5516
      %6068 = vmatpush1.bf16.msra.mxu0 %v5515
      %6069 = vmatprep.subr.bf16.mxu0 %v5519
      %6070 = vmatpush1.bf16.msra.mxu0 %v5518
      %6071 = vmatprep.subr.bf16.mxu0 %v5522
      %6072 = vmatpush1.bf16.msra.mxu0 %v5521
      %6073 = vmatprep.subr.bf16.mxu0 %v5525
      %6074 = vmatpush1.bf16.msra.mxu0 %v5524
      %6075 = vmatprep.subr.bf16.mxu0 %v5528
      %6076 = vmatpush1.bf16.msra.mxu0 %v5527
      %6077 = vmatprep.subr.bf16.mxu0 %v5531
      %6078 = vmatpush1.bf16.msra.mxu0 %v5530
      %6079 = vmatprep.subr.bf16.mxu0 %v5534
      %6080 = vmatpush1.bf16.msra.mxu0 %v5533
      %6081 = vmatprep.subr.bf16.mxu0 %v5537
      %6082 = vmatpush1.bf16.msra.mxu0 %v5536
      %6083 = vmatprep.subr.bf16.mxu0 %v5540
      %6084 = vmatpush1.bf16.msra.mxu0 %v5539
      %6085 = vmatprep.subr.bf16.mxu0 %v5543
      %6086 = vmatpush1.bf16.msra.mxu0 %v5542
      %6087 = vmatprep.subr.bf16.mxu0 %v5546
      %6088 = vmatpush1.bf16.msra.mxu0 %v5545
      %6089 = vmatprep.mubr.bf16.mxu0 %v1281
      %6090 = vmatmul.mubr.bf16.gmra.mrb[0].mxu0 %v1280
      %v6091 = vpop.f32.mrb[0].mxu0
      %v6092 = vadd.f32 %v5919, %v6091
      %v6093 = vpop.f32.mrb[0].mxu0
      %v6094 = vadd.f32 %v5921, %v6093
      %v6095 = vpop.f32.mrb[0].mxu0
      %v6096 = vadd.f32 %v5923, %v6095
      %v6097 = vpop.f32.mrb[0].mxu0
      %v6098 = vadd.f32 %v5925, %v6097
      %6099 = vmatprep.mubr.bf16.mxu0 %v1290
      %6100 = vmatmul.mubr.bf16.gmra.mrb[0].mxu0 %v1289
      %v6101 = vpop.f32.mrb[0].mxu0
      %v6102 = vadd.f32 %v5929, %v6101
      %v6103 = vpop.f32.mrb[0].mxu0
      %v6104 = vadd.f32 %v5931, %v6103
      %v6105 = vpop.f32.mrb[0].mxu0
      %v6106 = vadd.f32 %v5933, %v6105
      %v6107 = vpop.f32.mrb[0].mxu0
      %v6108 = vadd.f32 %v5935, %v6107
      %6109 = vmatprep.mubr.bf16.mxu0 %v1299
      %6110 = vmatmul.mubr.bf16.gmra.mrb[0].mxu0 %v1298
      %v6111 = vpop.f32.mrb[0].mxu0
      %v6112 = vadd.f32 %v5939, %v6111
      %v6113 = vpop.f32.mrb[0].mxu0
      %v6114 = vadd.f32 %v5941, %v6113
      %v6115 = vpop.f32.mrb[0].mxu0
      %v6116 = vadd.f32 %v5943, %v6115
      %v6117 = vpop.f32.mrb[0].mxu0
      %v6118 = vadd.f32 %v5945, %v6117
      %6119 = vmatprep.mubr.bf16.mxu0 %v1308
      %6120 = vmatmul.mubr.bf16.gmra.mrb[0].mxu0 %v1307
      %v6121 = vpop.f32.mrb[0].mxu0
      %v6122 = vadd.f32 %v5949, %v6121
      %v6123 = vpop.f32.mrb[0].mxu0
      %v6124 = vadd.f32 %v5951, %v6123
      %v6125 = vpop.f32.mrb[0].mxu0
      %v6126 = vadd.f32 %v5953, %v6125
      %v6127 = vpop.f32.mrb[0].mxu0
      %v6128 = vadd.f32 %v5955, %v6127
      %6129 = vmatprep.mubr.bf16.mxu0 %v1317
      %6130 = vmatmul.mubr.bf16.gmra.mrb[0].mxu0 %v1316
      %v6131 = vpop.f32.mrb[0].mxu0
      %v6132 = vadd.f32 %v5959, %v6131
      %v6133 = vpop.f32.mrb[0].mxu0
      %v6134 = vadd.f32 %v5961, %v6133
      %v6135 = vpop.f32.mrb[0].mxu0
      %v6136 = vadd.f32 %v5963, %v6135
      %v6137 = vpop.f32.mrb[0].mxu0
      %v6138 = vadd.f32 %v5965, %v6137
      %6139 = vmatprep.mubr.bf16.mxu0 %v1326
      %6140 = vmatmul.mubr.bf16.gmra.mrb[0].mxu0 %v1325
      %v6141 = vpop.f32.mrb[0].mxu0
      %v6142 = vadd.f32 %v5969, %v6141
      %v6143 = vpop.f32.mrb[0].mxu0
      %v6144 = vadd.f32 %v5971, %v6143
      %v6145 = vpop.f32.mrb[0].mxu0
      %v6146 = vadd.f32 %v5973, %v6145
      %v6147 = vpop.f32.mrb[0].mxu0
      %v6148 = vadd.f32 %v5975, %v6147
      %6149 = vmatprep.mubr.bf16.mxu0 %v1335
      %6150 = vmatmul.mubr.bf16.gmra.mrb[0].mxu0 %v1334
      %v6151 = vpop.f32.mrb[0].mxu0
      %v6152 = vadd.f32 %v5979, %v6151
      %v6153 = vpop.f32.mrb[0].mxu0
      %v6154 = vadd.f32 %v5981, %v6153
      %v6155 = vpop.f32.mrb[0].mxu0
      %v6156 = vadd.f32 %v5983, %v6155
      %v6157 = vpop.f32.mrb[0].mxu0
      %v6158 = vadd.f32 %v5985, %v6157
      %6159 = vmatprep.mubr.bf16.mxu0 %v1344
      %6160 = vmatmul.mubr.bf16.gmra.mrb[0].mxu0 %v1343
      %v6161 = vpop.f32.mrb[0].mxu0
      %v6162 = vadd.f32 %v5989, %v6161
      %v6163 = vpop.f32.mrb[0].mxu0
      %v6164 = vadd.f32 %v5991, %v6163
      %v6165 = vpop.f32.mrb[0].mxu0
      %v6166 = vadd.f32 %v5993, %v6165
      %v6167 = vpop.f32.mrb[0].mxu0
      %v6168 = vadd.f32 %v5995, %v6167
      %6169 = vmatprep.mubr.bf16.mxu0 %v1353
      %6170 = vmatmul.mubr.bf16.gmra.mrb[0].mxu0 %v1352
      %v6171 = vpop.f32.mrb[0].mxu0
      %v6172 = vadd.f32 %v5999, %v6171
      %v6173 = vpop.f32.mrb[0].mxu0
      %v6174 = vadd.f32 %v6001, %v6173
      %v6175 = vpop.f32.mrb[0].mxu0
      %v6176 = vadd.f32 %v6003, %v6175
      %v6177 = vpop.f32.mrb[0].mxu0
      %v6178 = vadd.f32 %v6005, %v6177
      %6179 = vmatprep.mubr.bf16.mxu0 %v1362
      %6180 = vmatmul.mubr.bf16.gmra.mrb[0].mxu0 %v1361
      %v6181 = vpop.f32.mrb[0].mxu0
      %v6182 = vadd.f32 %v6009, %v6181
      %v6183 = vpop.f32.mrb[0].mxu0
      %v6184 = vadd.f32 %v6011, %v6183
      %v6185 = vpop.f32.mrb[0].mxu0
      %v6186 = vadd.f32 %v6013, %v6185
      %v6187 = vpop.f32.mrb[0].mxu0
      %v6188 = vadd.f32 %v6015, %v6187
      %6189 = vmatprep.mubr.bf16.mxu0 %v1371
      %6190 = vmatmul.mubr.bf16.gmra.mrb[0].mxu0 %v1370
      %v6191 = vpop.f32.mrb[0].mxu0
      %v6192 = vadd.f32 %v6019, %v6191
      %v6193 = vpop.f32.mrb[0].mxu0
      %v6194 = vadd.f32 %v6021, %v6193
      %v6195 = vpop.f32.mrb[0].mxu0
      %v6196 = vadd.f32 %v6023, %v6195
      %v6197 = vpop.f32.mrb[0].mxu0
      %v6198 = vadd.f32 %v6025, %v6197
      %6199 = vmatprep.mubr.bf16.mxu0 %v1380
      %6200 = vmatmul.mubr.bf16.gmra.mrb[0].mxu0 %v1379
      %v6201 = vpop.f32.mrb[0].mxu0
      %v6202 = vadd.f32 %v6029, %v6201
      %v6203 = vpop.f32.mrb[0].mxu0
      %v6204 = vadd.f32 %v6031, %v6203
      %v6205 = vpop.f32.mrb[0].mxu0
      %v6206 = vadd.f32 %v6033, %v6205
      %v6207 = vpop.f32.mrb[0].mxu0
      %v6208 = vadd.f32 %v6035, %v6207
      %6209 = vmatprep.mubr.bf16.mxu0 %v1389
      %6210 = vmatmul.mubr.bf16.gmra.mrb[0].mxu0 %v1388
      %v6211 = vpop.f32.mrb[0].mxu0
      %v6212 = vadd.f32 %v6039, %v6211
      %v6213 = vpop.f32.mrb[0].mxu0
      %v6214 = vadd.f32 %v6041, %v6213
      %v6215 = vpop.f32.mrb[0].mxu0
      %v6216 = vadd.f32 %v6043, %v6215
      %v6217 = vpop.f32.mrb[0].mxu0
      %v6218 = vadd.f32 %v6045, %v6217
      %6219 = vmatprep.mubr.bf16.mxu0 %v1398
      %6220 = vmatmul.mubr.bf16.gmra.mrb[0].mxu0 %v1397
      %v6221 = vpop.f32.mrb[0].mxu0
      %v6222 = vadd.f32 %v6049, %v6221
      %v6223 = vpop.f32.mrb[0].mxu0
      %v6224 = vadd.f32 %v6051, %v6223
      %v6225 = vpop.f32.mrb[0].mxu0
      %v6226 = vadd.f32 %v6053, %v6225
      %v6227 = vpop.f32.mrb[0].mxu0
      %v6228 = vadd.f32 %v6055, %v6227
      %6229 = vdwg.mxu0
      %6230 = vmatprep.subr.bf16.mxu0 %v5549
      %6231 = vmatpush1.bf16.msra.mxu0 %v5548
      %6232 = vmatprep.subr.bf16.mxu0 %v5552
      %6233 = vmatpush1.bf16.msra.mxu0 %v5551
      %6234 = vmatprep.subr.bf16.mxu0 %v5555
      %6235 = vmatpush1.bf16.msra.mxu0 %v5554
      %6236 = vmatprep.subr.bf16.mxu0 %v5558
      %6237 = vmatpush1.bf16.msra.mxu0 %v5557
      %6238 = vmatprep.subr.bf16.mxu0 %v5561
      %6239 = vmatpush1.bf16.msra.mxu0 %v5560
      %6240 = vmatprep.subr.bf16.mxu0 %v5564
      %6241 = vmatpush1.bf16.msra.mxu0 %v5563
      %6242 = vmatprep.subr.bf16.mxu0 %v5567
      %6243 = vmatpush1.bf16.msra.mxu0 %v5566
      %6244 = vmatprep.subr.bf16.mxu0 %v5570
      %6245 = vmatpush1.bf16.msra.mxu0 %v5569
      %6246 = vmatprep.subr.bf16.mxu0 %v5573
      %6247 = vmatpush1.bf16.msra.mxu0 %v5572
      %6248 = vmatprep.subr.bf16.mxu0 %v5576
      %6249 = vmatpush1.bf16.msra.mxu0 %v5575
      %6250 = vmatprep.subr.bf16.mxu0 %v5579
      %6251 = vmatpush1.bf16.msra.mxu0 %v5578
      %6252 = vmatprep.subr.bf16.mxu0 %v5582
      %6253 = vmatpush1.bf16.msra.mxu0 %v5581
      %6254 = vmatprep.subr.bf16.mxu0 %v5585
      %6255 = vmatpush1.bf16.msra.mxu0 %v5584
      %6256 = vmatprep.subr.bf16.mxu0 %v5588
      %6257 = vmatpush1.bf16.msra.mxu0 %v5587
      %6258 = vmatprep.subr.bf16.mxu0 %v5591
      %6259 = vmatpush1.bf16.msra.mxu0 %v5590
      %6260 = vmatprep.subr.bf16.mxu0 %v5594
      %6261 = vmatpush1.bf16.msra.mxu0 %v5593
      %6262 = vmatprep.mubr.bf16.mxu0 %v1283
      %6263 = vmatmul.mubr.bf16.gmra.mrb[0].mxu0 %v1282
      %v6264 = vpop.f32.mrb[0].mxu0
      %v6265 = vadd.f32 %v6092, %v6264
      %v6266 = vpop.f32.mrb[0].mxu0
      %v6267 = vadd.f32 %v6094, %v6266
      %v6268 = vpop.f32.mrb[0].mxu0
      %v6269 = vadd.f32 %v6096, %v6268
      %v6270 = vpop.f32.mrb[0].mxu0
      %v6271 = vadd.f32 %v6098, %v6270
      %6272 = vmatprep.mubr.bf16.mxu0 %v1292
      %6273 = vmatmul.mubr.bf16.gmra.mrb[0].mxu0 %v1291
      %v6274 = vpop.f32.mrb[0].mxu0
      %v6275 = vadd.f32 %v6102, %v6274
      %v6276 = vpop.f32.mrb[0].mxu0
      %v6277 = vadd.f32 %v6104, %v6276
      %v6278 = vpop.f32.mrb[0].mxu0
      %v6279 = vadd.f32 %v6106, %v6278
      %v6280 = vpop.f32.mrb[0].mxu0
      %v6281 = vadd.f32 %v6108, %v6280
      %6282 = vmatprep.mubr.bf16.mxu0 %v1301
      %6283 = vmatmul.mubr.bf16.gmra.mrb[0].mxu0 %v1300
      %v6284 = vpop.f32.mrb[0].mxu0
      %v6285 = vadd.f32 %v6112, %v6284
      %v6286 = vpop.f32.mrb[0].mxu0
      %v6287 = vadd.f32 %v6114, %v6286
      %v6288 = vpop.f32.mrb[0].mxu0
      %v6289 = vadd.f32 %v6116, %v6288
      %v6290 = vpop.f32.mrb[0].mxu0
      %v6291 = vadd.f32 %v6118, %v6290
      %6292 = vmatprep.mubr.bf16.mxu0 %v1310
      %6293 = vmatmul.mubr.bf16.gmra.mrb[0].mxu0 %v1309
      %v6294 = vpop.f32.mrb[0].mxu0
      %v6295 = vadd.f32 %v6122, %v6294
      %v6296 = vpop.f32.mrb[0].mxu0
      %v6297 = vadd.f32 %v6124, %v6296
      %v6298 = vpop.f32.mrb[0].mxu0
      %v6299 = vadd.f32 %v6126, %v6298
      %v6300 = vpop.f32.mrb[0].mxu0
      %v6301 = vadd.f32 %v6128, %v6300
      %6302 = vmatprep.mubr.bf16.mxu0 %v1319
      %6303 = vmatmul.mubr.bf16.gmra.mrb[0].mxu0 %v1318
      %v6304 = vpop.f32.mrb[0].mxu0
      %v6305 = vadd.f32 %v6132, %v6304
      %v6306 = vpop.f32.mrb[0].mxu0
      %v6307 = vadd.f32 %v6134, %v6306
      %v6308 = vpop.f32.mrb[0].mxu0
      %v6309 = vadd.f32 %v6136, %v6308
      %v6310 = vpop.f32.mrb[0].mxu0
      %v6311 = vadd.f32 %v6138, %v6310
      %6312 = vmatprep.mubr.bf16.mxu0 %v1328
      %6313 = vmatmul.mubr.bf16.gmra.mrb[0].mxu0 %v1327
      %v6314 = vpop.f32.mrb[0].mxu0
      %v6315 = vadd.f32 %v6142, %v6314
      %v6316 = vpop.f32.mrb[0].mxu0
      %v6317 = vadd.f32 %v6144, %v6316
      %v6318 = vpop.f32.mrb[0].mxu0
      %v6319 = vadd.f32 %v6146, %v6318
      %v6320 = vpop.f32.mrb[0].mxu0
      %v6321 = vadd.f32 %v6148, %v6320
      %6322 = vmatprep.mubr.bf16.mxu0 %v1337
      %6323 = vmatmul.mubr.bf16.gmra.mrb[0].mxu0 %v1336
      %v6324 = vpop.f32.mrb[0].mxu0
      %v6325 = vadd.f32 %v6152, %v6324
      %v6326 = vpop.f32.mrb[0].mxu0
      %v6327 = vadd.f32 %v6154, %v6326
      %v6328 = vpop.f32.mrb[0].mxu0
      %v6329 = vadd.f32 %v6156, %v6328
      %v6330 = vpop.f32.mrb[0].mxu0
      %v6331 = vadd.f32 %v6158, %v6330
      %6332 = vmatprep.mubr.bf16.mxu0 %v1346
      %6333 = vmatmul.mubr.bf16.gmra.mrb[0].mxu0 %v1345
      %v6334 = vpop.f32.mrb[0].mxu0
      %v6335 = vadd.f32 %v6162, %v6334
      %v6336 = vpop.f32.mrb[0].mxu0
      %v6337 = vadd.f32 %v6164, %v6336
      %v6338 = vpop.f32.mrb[0].mxu0
      %v6339 = vadd.f32 %v6166, %v6338
      %v6340 = vpop.f32.mrb[0].mxu0
      %v6341 = vadd.f32 %v6168, %v6340
      %6342 = vmatprep.mubr.bf16.mxu0 %v1355
      %6343 = vmatmul.mubr.bf16.gmra.mrb[0].mxu0 %v1354
      %v6344 = vpop.f32.mrb[0].mxu0
      %v6345 = vadd.f32 %v6172, %v6344
      %v6346 = vpop.f32.mrb[0].mxu0
      %v6347 = vadd.f32 %v6174, %v6346
      %v6348 = vpop.f32.mrb[0].mxu0
      %v6349 = vadd.f32 %v6176, %v6348
      %v6350 = vpop.f32.mrb[0].mxu0
      %v6351 = vadd.f32 %v6178, %v6350
      %6352 = vmatprep.mubr.bf16.mxu0 %v1364
      %6353 = vmatmul.mubr.bf16.gmra.mrb[0].mxu0 %v1363
      %v6354 = vpop.f32.mrb[0].mxu0
      %v6355 = vadd.f32 %v6182, %v6354
      %v6356 = vpop.f32.mrb[0].mxu0
      %v6357 = vadd.f32 %v6184, %v6356
      %v6358 = vpop.f32.mrb[0].mxu0
      %v6359 = vadd.f32 %v6186, %v6358
      %v6360 = vpop.f32.mrb[0].mxu0
      %v6361 = vadd.f32 %v6188, %v6360
      %6362 = vmatprep.mubr.bf16.mxu0 %v1373
      %6363 = vmatmul.mubr.bf16.gmra.mrb[0].mxu0 %v1372
      %v6364 = vpop.f32.mrb[0].mxu0
      %v6365 = vadd.f32 %v6192, %v6364
      %v6366 = vpop.f32.mrb[0].mxu0
      %v6367 = vadd.f32 %v6194, %v6366
      %v6368 = vpop.f32.mrb[0].mxu0
      %v6369 = vadd.f32 %v6196, %v6368
      %v6370 = vpop.f32.mrb[0].mxu0
      %v6371 = vadd.f32 %v6198, %v6370
      %6372 = vmatprep.mubr.bf16.mxu0 %v1382
      %6373 = vmatmul.mubr.bf16.gmra.mrb[0].mxu0 %v1381
      %v6374 = vpop.f32.mrb[0].mxu0
      %v6375 = vadd.f32 %v6202, %v6374
      %v6376 = vpop.f32.mrb[0].mxu0
      %v6377 = vadd.f32 %v6204, %v6376
      %v6378 = vpop.f32.mrb[0].mxu0
      %v6379 = vadd.f32 %v6206, %v6378
      %v6380 = vpop.f32.mrb[0].mxu0
      %v6381 = vadd.f32 %v6208, %v6380
      %6382 = vmatprep.mubr.bf16.mxu0 %v1391
      %6383 = vmatmul.mubr.bf16.gmra.mrb[0].mxu0 %v1390
      %v6384 = vpop.f32.mrb[0].mxu0
      %v6385 = vadd.f32 %v6212, %v6384
      %v6386 = vpop.f32.mrb[0].mxu0
      %v6387 = vadd.f32 %v6214, %v6386
      %v6388 = vpop.f32.mrb[0].mxu0
      %v6389 = vadd.f32 %v6216, %v6388
      %v6390 = vpop.f32.mrb[0].mxu0
      %v6391 = vadd.f32 %v6218, %v6390
      %6392 = vmatprep.mubr.bf16.mxu0 %v1400
      %6393 = vmatmul.mubr.bf16.gmra.mrb[0].mxu0 %v1399
      %v6394 = vpop.f32.mrb[0].mxu0
      %v6395 = vadd.f32 %v6222, %v6394
      %v6396 = vpop.f32.mrb[0].mxu0
      %v6397 = vadd.f32 %v6224, %v6396
      %v6398 = vpop.f32.mrb[0].mxu0
      %v6399 = vadd.f32 %v6226, %v6398
      %v6400 = vpop.f32.mrb[0].mxu0
      %v6401 = vadd.f32 %v6228, %v6400
      %6402 = vdwg.mxu0
      %6403 = vmatprep.subr.bf16.mxu0 %v5597
      %6404 = vmatpush1.bf16.msra.mxu0 %v5596
      %6405 = vmatprep.subr.bf16.mxu0 %v5600
      %6406 = vmatpush1.bf16.msra.mxu0 %v5599
      %6407 = vmatprep.subr.bf16.mxu0 %v5603
      %6408 = vmatpush1.bf16.msra.mxu0 %v5602
      %6409 = vmatprep.subr.bf16.mxu0 %v5606
      %6410 = vmatpush1.bf16.msra.mxu0 %v5605
      %6411 = vmatprep.subr.bf16.mxu0 %v5609
      %6412 = vmatpush1.bf16.msra.mxu0 %v5608
      %6413 = vmatprep.subr.bf16.mxu0 %v5612
      %6414 = vmatpush1.bf16.msra.mxu0 %v5611
      %6415 = vmatprep.subr.bf16.mxu0 %v5615
      %6416 = vmatpush1.bf16.msra.mxu0 %v5614
      %6417 = vmatprep.subr.bf16.mxu0 %v5618
      %6418 = vmatpush1.bf16.msra.mxu0 %v5617
      %6419 = vmatprep.subr.bf16.mxu0 %v5621
      %6420 = vmatpush1.bf16.msra.mxu0 %v5620
      %6421 = vmatprep.subr.bf16.mxu0 %v5624
      %6422 = vmatpush1.bf16.msra.mxu0 %v5623
      %6423 = vmatprep.subr.bf16.mxu0 %v5627
      %6424 = vmatpush1.bf16.msra.mxu0 %v5626
      %6425 = vmatprep.subr.bf16.mxu0 %v5630
      %6426 = vmatpush1.bf16.msra.mxu0 %v5629
      %6427 = vmatprep.subr.bf16.mxu0 %v5633
      %6428 = vmatpush1.bf16.msra.mxu0 %v5632
      %6429 = vmatprep.subr.bf16.mxu0 %v5636
      %6430 = vmatpush1.bf16.msra.mxu0 %v5635
      %6431 = vmatprep.subr.bf16.mxu0 %v5639
      %6432 = vmatpush1.bf16.msra.mxu0 %v5638
      %6433 = vmatprep.subr.bf16.mxu0 %v5642
      %6434 = vmatpush1.bf16.msra.mxu0 %v5641
      %6435 = vmatprep.mubr.bf16.mxu0 %v1285
      %6436 = vmatmul.mubr.bf16.gmra.mrb[0].mxu0 %v1284
      %v6437 = vpop.f32.mrb[0].mxu0
      %v6438 = vadd.f32 %v6265, %v6437
      %v6439 = vpop.f32.mrb[0].mxu0
      %v6440 = vadd.f32 %v6267, %v6439
      %v6441 = vpop.f32.mrb[0].mxu0
      %v6442 = vadd.f32 %v6269, %v6441
      %v6443 = vpop.f32.mrb[0].mxu0
      %v6444 = vadd.f32 %v6271, %v6443
      %6445 = vmatprep.mubr.bf16.mxu0 %v1294
      %6446 = vmatmul.mubr.bf16.gmra.mrb[0].mxu0 %v1293
      %v6447 = vpop.f32.mrb[0].mxu0
      %v6448 = vadd.f32 %v6275, %v6447
      %v6449 = vpop.f32.mrb[0].mxu0
      %v6450 = vadd.f32 %v6277, %v6449
      %v6451 = vpop.f32.mrb[0].mxu0
      %v6452 = vadd.f32 %v6279, %v6451
      %v6453 = vpop.f32.mrb[0].mxu0
      %v6454 = vadd.f32 %v6281, %v6453
      %6455 = vmatprep.mubr.bf16.mxu0 %v1303
      %6456 = vmatmul.mubr.bf16.gmra.mrb[0].mxu0 %v1302
      %v6457 = vpop.f32.mrb[0].mxu0
      %v6458 = vadd.f32 %v6285, %v6457
      %v6459 = vpop.f32.mrb[0].mxu0
      %v6460 = vadd.f32 %v6287, %v6459
      %v6461 = vpop.f32.mrb[0].mxu0
      %v6462 = vadd.f32 %v6289, %v6461
      %v6463 = vpop.f32.mrb[0].mxu0
      %v6464 = vadd.f32 %v6291, %v6463
      %6465 = vmatprep.mubr.bf16.mxu0 %v1312
      %6466 = vmatmul.mubr.bf16.gmra.mrb[0].mxu0 %v1311
      %v6467 = vpop.f32.mrb[0].mxu0
      %v6468 = vadd.f32 %v6295, %v6467
      %v6469 = vpop.f32.mrb[0].mxu0
      %v6470 = vadd.f32 %v6297, %v6469
      %v6471 = vpop.f32.mrb[0].mxu0
      %v6472 = vadd.f32 %v6299, %v6471
      %v6473 = vpop.f32.mrb[0].mxu0
      %v6474 = vadd.f32 %v6301, %v6473
      %6475 = vmatprep.mubr.bf16.mxu0 %v1321
      %6476 = vmatmul.mubr.bf16.gmra.mrb[0].mxu0 %v1320
      %v6477 = vpop.f32.mrb[0].mxu0
      %v6478 = vadd.f32 %v6305, %v6477
      %v6479 = vpop.f32.mrb[0].mxu0
      %v6480 = vadd.f32 %v6307, %v6479
      %v6481 = vpop.f32.mrb[0].mxu0
      %v6482 = vadd.f32 %v6309, %v6481
      %v6483 = vpop.f32.mrb[0].mxu0
      %v6484 = vadd.f32 %v6311, %v6483
      %6485 = vmatprep.mubr.bf16.mxu0 %v1330
      %6486 = vmatmul.mubr.bf16.gmra.mrb[0].mxu0 %v1329
      %v6487 = vpop.f32.mrb[0].mxu0
      %v6488 = vadd.f32 %v6315, %v6487
      %v6489 = vpop.f32.mrb[0].mxu0
      %v6490 = vadd.f32 %v6317, %v6489
      %v6491 = vpop.f32.mrb[0].mxu0
      %v6492 = vadd.f32 %v6319, %v6491
      %v6493 = vpop.f32.mrb[0].mxu0
      %v6494 = vadd.f32 %v6321, %v6493
      %6495 = vmatprep.mubr.bf16.mxu0 %v1339
      %6496 = vmatmul.mubr.bf16.gmra.mrb[0].mxu0 %v1338
      %v6497 = vpop.f32.mrb[0].mxu0
      %v6498 = vadd.f32 %v6325, %v6497
      %v6499 = vpop.f32.mrb[0].mxu0
      %v6500 = vadd.f32 %v6327, %v6499
      %v6501 = vpop.f32.mrb[0].mxu0
      %v6502 = vadd.f32 %v6329, %v6501
      %v6503 = vpop.f32.mrb[0].mxu0
      %v6504 = vadd.f32 %v6331, %v6503
      %6505 = vmatprep.mubr.bf16.mxu0 %v1348
      %6506 = vmatmul.mubr.bf16.gmra.mrb[0].mxu0 %v1347
      %v6507 = vpop.f32.mrb[0].mxu0
      %v6508 = vadd.f32 %v6335, %v6507
      %v6509 = vpop.f32.mrb[0].mxu0
      %v6510 = vadd.f32 %v6337, %v6509
      %v6511 = vpop.f32.mrb[0].mxu0
      %v6512 = vadd.f32 %v6339, %v6511
      %v6513 = vpop.f32.mrb[0].mxu0
      %v6514 = vadd.f32 %v6341, %v6513
      %6515 = vmatprep.mubr.bf16.mxu0 %v1357
      %6516 = vmatmul.mubr.bf16.gmra.mrb[0].mxu0 %v1356
      %v6517 = vpop.f32.mrb[0].mxu0
      %v6518 = vadd.f32 %v6345, %v6517
      %v6519 = vpop.f32.mrb[0].mxu0
      %v6520 = vadd.f32 %v6347, %v6519
      %v6521 = vpop.f32.mrb[0].mxu0
      %v6522 = vadd.f32 %v6349, %v6521
      %v6523 = vpop.f32.mrb[0].mxu0
      %v6524 = vadd.f32 %v6351, %v6523
      %6525 = vmatprep.mubr.bf16.mxu0 %v1366
      %6526 = vmatmul.mubr.bf16.gmra.mrb[0].mxu0 %v1365
      %v6527 = vpop.f32.mrb[0].mxu0
      %v6528 = vadd.f32 %v6355, %v6527
      %v6529 = vpop.f32.mrb[0].mxu0
      %v6530 = vadd.f32 %v6357, %v6529
      %v6531 = vpop.f32.mrb[0].mxu0
      %v6532 = vadd.f32 %v6359, %v6531
      %v6533 = vpop.f32.mrb[0].mxu0
      %v6534 = vadd.f32 %v6361, %v6533
      %6535 = vmatprep.mubr.bf16.mxu0 %v1375
      %6536 = vmatmul.mubr.bf16.gmra.mrb[0].mxu0 %v1374
      %v6537 = vpop.f32.mrb[0].mxu0
      %v6538 = vadd.f32 %v6365, %v6537
      %v6539 = vpop.f32.mrb[0].mxu0
      %v6540 = vadd.f32 %v6367, %v6539
      %v6541 = vpop.f32.mrb[0].mxu0
      %v6542 = vadd.f32 %v6369, %v6541
      %v6543 = vpop.f32.mrb[0].mxu0
      %v6544 = vadd.f32 %v6371, %v6543
      %6545 = vmatprep.mubr.bf16.mxu0 %v1384
      %6546 = vmatmul.mubr.bf16.gmra.mrb[0].mxu0 %v1383
      %v6547 = vpop.f32.mrb[0].mxu0
      %v6548 = vadd.f32 %v6375, %v6547
      %v6549 = vpop.f32.mrb[0].mxu0
      %v6550 = vadd.f32 %v6377, %v6549
      %v6551 = vpop.f32.mrb[0].mxu0
      %v6552 = vadd.f32 %v6379, %v6551
      %v6553 = vpop.f32.mrb[0].mxu0
      %v6554 = vadd.f32 %v6381, %v6553
      %6555 = vmatprep.mubr.bf16.mxu0 %v1393
      %6556 = vmatmul.mubr.bf16.gmra.mrb[0].mxu0 %v1392
      %v6557 = vpop.f32.mrb[0].mxu0
      %v6558 = vadd.f32 %v6385, %v6557
      %v6559 = vpop.f32.mrb[0].mxu0
      %v6560 = vadd.f32 %v6387, %v6559
      %v6561 = vpop.f32.mrb[0].mxu0
      %v6562 = vadd.f32 %v6389, %v6561
      %v6563 = vpop.f32.mrb[0].mxu0
      %v6564 = vadd.f32 %v6391, %v6563
      %6565 = vmatprep.mubr.bf16.mxu0 %v1402
      %6566 = vmatmul.mubr.bf16.gmra.mrb[0].mxu0 %v1401
      %v6567 = vpop.f32.mrb[0].mxu0
      %v6568 = vadd.f32 %v6395, %v6567
      %v6569 = vpop.f32.mrb[0].mxu0
      %v6570 = vadd.f32 %v6397, %v6569
      %v6571 = vpop.f32.mrb[0].mxu0
      %v6572 = vadd.f32 %v6399, %v6571
      %v6573 = vpop.f32.mrb[0].mxu0
      %v6574 = vadd.f32 %v6401, %v6573
      %6575 = vdwg.mxu0
      %6576 = vmatprep.subr.bf16.mxu0 %v5645
      %6577 = vmatpush1.bf16.msra.mxu0 %v5644
      %6578 = vmatprep.subr.bf16.mxu0 %v5648
      %6579 = vmatpush1.bf16.msra.mxu0 %v5647
      %6580 = vmatprep.subr.bf16.mxu0 %v5651
      %6581 = vmatpush1.bf16.msra.mxu0 %v5650
      %6582 = vmatprep.subr.bf16.mxu0 %v5654
      %6583 = vmatpush1.bf16.msra.mxu0 %v5653
      %6584 = vmatprep.subr.bf16.mxu0 %v5657
      %6585 = vmatpush1.bf16.msra.mxu0 %v5656
      %6586 = vmatprep.subr.bf16.mxu0 %v5660
      %6587 = vmatpush1.bf16.msra.mxu0 %v5659
      %6588 = vmatprep.subr.bf16.mxu0 %v5663
      %6589 = vmatpush1.bf16.msra.mxu0 %v5662
      %6590 = vmatprep.subr.bf16.mxu0 %v5666
      %6591 = vmatpush1.bf16.msra.mxu0 %v5665
      %6592 = vmatprep.subr.bf16.mxu0 0
      %6593 = vmatpush1.bf16.msra.mxu0 0
      %6594 = vmatprep.subr.bf16.mxu0 0
      %6595 = vmatpush1.bf16.msra.mxu0 0
      %6596 = vmatprep.subr.bf16.mxu0 0
      %6597 = vmatpush1.bf16.msra.mxu0 0
      %6598 = vmatprep.subr.bf16.mxu0 0
      %6599 = vmatpush1.bf16.msra.mxu0 0
      %6600 = vmatprep.subr.bf16.mxu0 0
      %6601 = vmatpush1.bf16.msra.mxu0 0
      %6602 = vmatprep.subr.bf16.mxu0 0
      %6603 = vmatpush1.bf16.msra.mxu0 0
      %6604 = vmatprep.subr.bf16.mxu0 0
      %6605 = vmatpush1.bf16.msra.mxu0 0
      %6606 = vmatprep.subr.bf16.mxu0 0
      %6607 = vmatpush1.bf16.msra.mxu0 0
      %6608 = vmatprep.mubr.bf16.mxu0 0
      %6609 = vmatmul.mubr.bf16.gmra.mrb[0].mxu0 %v1286
      %v6610 = vpop.f32.mrb[0].mxu0
      %v6611 = vadd.f32 %v6438, %v6610
      %v6612 = vpop.f32.mrb[0].mxu0
      %v6613 = vadd.f32 %v6440, %v6612
      %v6614 = vpop.f32.mrb[0].mxu0
      %v6615 = vadd.f32 %v6442, %v6614
      %v6616 = vpop.f32.mrb[0].mxu0
      %v6617 = vadd.f32 %v6444, %v6616
      %6618 = vmatprep.mubr.bf16.mxu0 0
      %6619 = vmatmul.mubr.bf16.gmra.mrb[0].mxu0 %v1295
      %v6620 = vpop.f32.mrb[0].mxu0
      %v6621 = vadd.f32 %v6448, %v6620
      %v6622 = vpop.f32.mrb[0].mxu0
      %v6623 = vadd.f32 %v6450, %v6622
      %v6624 = vpop.f32.mrb[0].mxu0
      %v6625 = vadd.f32 %v6452, %v6624
      %v6626 = vpop.f32.mrb[0].mxu0
      %v6627 = vadd.f32 %v6454, %v6626
      %6628 = vmatprep.mubr.bf16.mxu0 0
      %6629 = vmatmul.mubr.bf16.gmra.mrb[0].mxu0 %v1304
      %v6630 = vpop.f32.mrb[0].mxu0
      %v6631 = vadd.f32 %v6458, %v6630
      %v6632 = vpop.f32.mrb[0].mxu0
      %v6633 = vadd.f32 %v6460, %v6632
      %v6634 = vpop.f32.mrb[0].mxu0
      %v6635 = vadd.f32 %v6462, %v6634
      %v6636 = vpop.f32.mrb[0].mxu0
      %v6637 = vadd.f32 %v6464, %v6636
      %6638 = vmatprep.mubr.bf16.mxu0 0
      %6639 = vmatmul.mubr.bf16.gmra.mrb[0].mxu0 %v1313
      %v6640 = vpop.f32.mrb[0].mxu0
      %v6641 = vadd.f32 %v6468, %v6640
      %v6642 = vpop.f32.mrb[0].mxu0
      %v6643 = vadd.f32 %v6470, %v6642
      %v6644 = vpop.f32.mrb[0].mxu0
      %v6645 = vadd.f32 %v6472, %v6644
      %v6646 = vpop.f32.mrb[0].mxu0
      %v6647 = vadd.f32 %v6474, %v6646
      %6648 = vmatprep.mubr.bf16.mxu0 0
      %6649 = vmatmul.mubr.bf16.gmra.mrb[0].mxu0 %v1322
      %v6650 = vpop.f32.mrb[0].mxu0
      %v6651 = vadd.f32 %v6478, %v6650
      %v6652 = vpop.f32.mrb[0].mxu0
      %v6653 = vadd.f32 %v6480, %v6652
      %v6654 = vpop.f32.mrb[0].mxu0
      %v6655 = vadd.f32 %v6482, %v6654
      %v6656 = vpop.f32.mrb[0].mxu0
      %v6657 = vadd.f32 %v6484, %v6656
      %6658 = vmatprep.mubr.bf16.mxu0 0
      %6659 = vmatmul.mubr.bf16.gmra.mrb[0].mxu0 %v1331
      %v6660 = vpop.f32.mrb[0].mxu0
      %v6661 = vadd.f32 %v6488, %v6660
      %v6662 = vpop.f32.mrb[0].mxu0
      %v6663 = vadd.f32 %v6490, %v6662
      %v6664 = vpop.f32.mrb[0].mxu0
      %v6665 = vadd.f32 %v6492, %v6664
      %v6666 = vpop.f32.mrb[0].mxu0
      %v6667 = vadd.f32 %v6494, %v6666
      %6668 = vmatprep.mubr.bf16.mxu0 0
      %6669 = vmatmul.mubr.bf16.gmra.mrb[0].mxu0 %v1340
      %v6670 = vpop.f32.mrb[0].mxu0
      %v6671 = vadd.f32 %v6498, %v6670
      %v6672 = vpop.f32.mrb[0].mxu0
      %v6673 = vadd.f32 %v6500, %v6672
      %v6674 = vpop.f32.mrb[0].mxu0
      %v6675 = vadd.f32 %v6502, %v6674
      %v6676 = vpop.f32.mrb[0].mxu0
      %v6677 = vadd.f32 %v6504, %v6676
      %6678 = vmatprep.mubr.bf16.mxu0 0
      %6679 = vmatmul.mubr.bf16.gmra.mrb[0].mxu0 %v1349
      %v6680 = vpop.f32.mrb[0].mxu0
      %v6681 = vadd.f32 %v6508, %v6680
      %v6682 = vpop.f32.mrb[0].mxu0
      %v6683 = vadd.f32 %v6510, %v6682
      %v6684 = vpop.f32.mrb[0].mxu0
      %v6685 = vadd.f32 %v6512, %v6684
      %v6686 = vpop.f32.mrb[0].mxu0
      %v6687 = vadd.f32 %v6514, %v6686
      %6688 = vmatprep.mubr.bf16.mxu0 0
      %6689 = vmatmul.mubr.bf16.gmra.mrb[0].mxu0 %v1358
      %v6690 = vpop.f32.mrb[0].mxu0
      %v6691 = vadd.f32 %v6518, %v6690
      %v6692 = vpop.f32.mrb[0].mxu0
      %v6693 = vadd.f32 %v6520, %v6692
      %v6694 = vpop.f32.mrb[0].mxu0
      %v6695 = vadd.f32 %v6522, %v6694
      %v6696 = vpop.f32.mrb[0].mxu0
      %v6697 = vadd.f32 %v6524, %v6696
      %6698 = vmatprep.mubr.bf16.mxu0 0
      %6699 = vmatmul.mubr.bf16.gmra.mrb[0].mxu0 %v1367
      %v6700 = vpop.f32.mrb[0].mxu0
      %v6701 = vadd.f32 %v6528, %v6700
      %v6702 = vpop.f32.mrb[0].mxu0
      %v6703 = vadd.f32 %v6530, %v6702
      %v6704 = vpop.f32.mrb[0].mxu0
      %v6705 = vadd.f32 %v6532, %v6704
      %v6706 = vpop.f32.mrb[0].mxu0
      %v6707 = vadd.f32 %v6534, %v6706
      %6708 = vmatprep.mubr.bf16.mxu0 0
      %6709 = vmatmul.mubr.bf16.gmra.mrb[0].mxu0 %v1376
      %v6710 = vpop.f32.mrb[0].mxu0
      %v6711 = vadd.f32 %v6538, %v6710
      %v6712 = vpop.f32.mrb[0].mxu0
      %v6713 = vadd.f32 %v6540, %v6712
      %v6714 = vpop.f32.mrb[0].mxu0
      %v6715 = vadd.f32 %v6542, %v6714
      %v6716 = vpop.f32.mrb[0].mxu0
      %v6717 = vadd.f32 %v6544, %v6716
      %6718 = vmatprep.mubr.bf16.mxu0 0
      %6719 = vmatmul.mubr.bf16.gmra.mrb[0].mxu0 %v1385
      %v6720 = vpop.f32.mrb[0].mxu0
      %v6721 = vadd.f32 %v6548, %v6720
      %v6722 = vpop.f32.mrb[0].mxu0
      %v6723 = vadd.f32 %v6550, %v6722
      %v6724 = vpop.f32.mrb[0].mxu0
      %v6725 = vadd.f32 %v6552, %v6724
      %v6726 = vpop.f32.mrb[0].mxu0
      %v6727 = vadd.f32 %v6554, %v6726
      %6728 = vmatprep.mubr.bf16.mxu0 0
      %6729 = vmatmul.mubr.bf16.gmra.mrb[0].mxu0 %v1394
      %v6730 = vpop.f32.mrb[0].mxu0
      %v6731 = vadd.f32 %v6558, %v6730
      %v6732 = vpop.f32.mrb[0].mxu0
      %v6733 = vadd.f32 %v6560, %v6732
      %v6734 = vpop.f32.mrb[0].mxu0
      %v6735 = vadd.f32 %v6562, %v6734
      %v6736 = vpop.f32.mrb[0].mxu0
      %v6737 = vadd.f32 %v6564, %v6736
      %6738 = vmatprep.mubr.bf16.mxu0 0
      %6739 = vmatmul.mubr.bf16.gmra.mrb[0].mxu0 %v1403
      %v6740 = vpop.f32.mrb[0].mxu0
      %v6741 = vadd.f32 %v6568, %v6740
      %v6742 = vpop.f32.mrb[0].mxu0
      %v6743 = vadd.f32 %v6570, %v6742
      %v6744 = vpop.f32.mrb[0].mxu0
      %v6745 = vadd.f32 %v6572, %v6744
      %v6746 = vpop.f32.mrb[0].mxu0
      %v6747 = vadd.f32 %v6574, %v6746
      %6748 = vdwg.mxu0
      %6749 = vmatprep.subr.bf16.mxu0 0
      %6750 = vmatpush1.bf16.msra.mxu0 %v5454
      %6751 = vmatprep.subr.bf16.mxu0 0
      %6752 = vmatpush1.bf16.msra.mxu0 %v5457
      %6753 = vmatprep.subr.bf16.mxu0 0
      %6754 = vmatpush1.bf16.msra.mxu0 %v5460
      %6755 = vmatprep.subr.bf16.mxu0 0
      %6756 = vmatpush1.bf16.msra.mxu0 %v5463
      %6757 = vmatprep.subr.bf16.mxu0 0
      %6758 = vmatpush1.bf16.msra.mxu0 %v5466
      %6759 = vmatprep.subr.bf16.mxu0 0
      %6760 = vmatpush1.bf16.msra.mxu0 %v5469
      %6761 = vmatprep.subr.bf16.mxu0 0
      %6762 = vmatpush1.bf16.msra.mxu0 %v5472
      %6763 = vmatprep.subr.bf16.mxu0 0
      %6764 = vmatpush1.bf16.msra.mxu0 %v5475
      %6765 = vmatprep.subr.bf16.mxu0 0
      %6766 = vmatpush1.bf16.msra.mxu0 %v5478
      %6767 = vmatprep.subr.bf16.mxu0 0
      %6768 = vmatpush1.bf16.msra.mxu0 %v5481
      %6769 = vmatprep.subr.bf16.mxu0 0
      %6770 = vmatpush1.bf16.msra.mxu0 %v5484
      %6771 = vmatprep.subr.bf16.mxu0 0
      %6772 = vmatpush1.bf16.msra.mxu0 %v5487
      %6773 = vmatprep.subr.bf16.mxu0 0
      %6774 = vmatpush1.bf16.msra.mxu0 %v5490
      %6775 = vmatprep.subr.bf16.mxu0 0
      %6776 = vmatpush1.bf16.msra.mxu0 %v5493
      %6777 = vmatprep.subr.bf16.mxu0 0
      %6778 = vmatpush1.bf16.msra.mxu0 %v5496
      %6779 = vmatprep.subr.bf16.mxu0 0
      %6780 = vmatpush1.bf16.msra.mxu0 %v5499
      %6781 = vmatprep.mubr.bf16.mxu0 %v1279
      %6782 = vmatmul.mubr.bf16.gmra.mrb[0].mxu0 %v1278
      %v6783 = vpop.f32.mrb[0].mxu0
      %v6784 = vadd.f32 %v4622, %v6783
      %v6785 = vpop.f32.mrb[0].mxu0
      %v6786 = vpop.f32.mrb[0].mxu0
      %v6787 = vadd.f32 %v4625, %v6786
      %v6788 = vpop.f32.mrb[0].mxu0
      %6789 = vmatprep.mubr.bf16.mxu0 %v1288
      %6790 = vmatmul.mubr.bf16.gmra.mrb[0].mxu0 %v1287
      %v6791 = vpop.f32.mrb[0].mxu0
      %v6792 = vadd.f32 %v4630, %v6791
      %v6793 = vpop.f32.mrb[0].mxu0
      %v6794 = vpop.f32.mrb[0].mxu0
      %v6795 = vadd.f32 %v4633, %v6794
      %v6796 = vpop.f32.mrb[0].mxu0
      %6797 = vmatprep.mubr.bf16.mxu0 %v1297
      %6798 = vmatmul.mubr.bf16.gmra.mrb[0].mxu0 %v1296
      %v6799 = vpop.f32.mrb[0].mxu0
      %v6800 = vadd.f32 %v4638, %v6799
      %v6801 = vpop.f32.mrb[0].mxu0
      %v6802 = vpop.f32.mrb[0].mxu0
      %v6803 = vadd.f32 %v4641, %v6802
      %v6804 = vpop.f32.mrb[0].mxu0
      %6805 = vmatprep.mubr.bf16.mxu0 %v1306
      %6806 = vmatmul.mubr.bf16.gmra.mrb[0].mxu0 %v1305
      %v6807 = vpop.f32.mrb[0].mxu0
      %v6808 = vadd.f32 %v4646, %v6807
      %v6809 = vpop.f32.mrb[0].mxu0
      %v6810 = vpop.f32.mrb[0].mxu0
      %v6811 = vadd.f32 %v4649, %v6810
      %v6812 = vpop.f32.mrb[0].mxu0
      %6813 = vmatprep.mubr.bf16.mxu0 %v1315
      %6814 = vmatmul.mubr.bf16.gmra.mrb[0].mxu0 %v1314
      %v6815 = vpop.f32.mrb[0].mxu0
      %v6816 = vadd.f32 %v4654, %v6815
      %v6817 = vpop.f32.mrb[0].mxu0
      %v6818 = vpop.f32.mrb[0].mxu0
      %v6819 = vadd.f32 %v4657, %v6818
      %v6820 = vpop.f32.mrb[0].mxu0
      %6821 = vmatprep.mubr.bf16.mxu0 %v1324
      %6822 = vmatmul.mubr.bf16.gmra.mrb[0].mxu0 %v1323
      %v6823 = vpop.f32.mrb[0].mxu0
      %v6824 = vadd.f32 %v4662, %v6823
      %v6825 = vpop.f32.mrb[0].mxu0
      %v6826 = vpop.f32.mrb[0].mxu0
      %v6827 = vadd.f32 %v4665, %v6826
      %v6828 = vpop.f32.mrb[0].mxu0
      %6829 = vmatprep.mubr.bf16.mxu0 %v1333
      %6830 = vmatmul.mubr.bf16.gmra.mrb[0].mxu0 %v1332
      %v6831 = vpop.f32.mrb[0].mxu0
      %v6832 = vadd.f32 %v4670, %v6831
      %v6833 = vpop.f32.mrb[0].mxu0
      %v6834 = vpop.f32.mrb[0].mxu0
      %v6835 = vadd.f32 %v4673, %v6834
      %v6836 = vpop.f32.mrb[0].mxu0
      %6837 = vmatprep.mubr.bf16.mxu0 %v1342
      %6838 = vmatmul.mubr.bf16.gmra.mrb[0].mxu0 %v1341
      %v6839 = vpop.f32.mrb[0].mxu0
      %v6840 = vadd.f32 %v4678, %v6839
      %v6841 = vpop.f32.mrb[0].mxu0
      %v6842 = vpop.f32.mrb[0].mxu0
      %v6843 = vadd.f32 %v4681, %v6842
      %v6844 = vpop.f32.mrb[0].mxu0
      %6845 = vmatprep.mubr.bf16.mxu0 %v1351
      %6846 = vmatmul.mubr.bf16.gmra.mrb[0].mxu0 %v1350
      %v6847 = vpop.f32.mrb[0].mxu0
      %v6848 = vadd.f32 %v4686, %v6847
      %v6849 = vpop.f32.mrb[0].mxu0
      %v6850 = vpop.f32.mrb[0].mxu0
      %v6851 = vadd.f32 %v4689, %v6850
      %v6852 = vpop.f32.mrb[0].mxu0
      %6853 = vmatprep.mubr.bf16.mxu0 %v1360
      %6854 = vmatmul.mubr.bf16.gmra.mrb[0].mxu0 %v1359
      %v6855 = vpop.f32.mrb[0].mxu0
      %v6856 = vadd.f32 %v4694, %v6855
      %v6857 = vpop.f32.mrb[0].mxu0
      %v6858 = vpop.f32.mrb[0].mxu0
      %v6859 = vadd.f32 %v4697, %v6858
      %v6860 = vpop.f32.mrb[0].mxu0
      %6861 = vmatprep.mubr.bf16.mxu0 %v1369
      %6862 = vmatmul.mubr.bf16.gmra.mrb[0].mxu0 %v1368
      %v6863 = vpop.f32.mrb[0].mxu0
      %v6864 = vadd.f32 %v4702, %v6863
      %v6865 = vpop.f32.mrb[0].mxu0
      %v6866 = vpop.f32.mrb[0].mxu0
      %v6867 = vadd.f32 %v4705, %v6866
      %v6868 = vpop.f32.mrb[0].mxu0
      %6869 = vmatprep.mubr.bf16.mxu0 %v1378
      %6870 = vmatmul.mubr.bf16.gmra.mrb[0].mxu0 %v1377
      %v6871 = vpop.f32.mrb[0].mxu0
      %v6872 = vadd.f32 %v4710, %v6871
      %v6873 = vpop.f32.mrb[0].mxu0
      %v6874 = vpop.f32.mrb[0].mxu0
      %v6875 = vadd.f32 %v4713, %v6874
      %v6876 = vpop.f32.mrb[0].mxu0
      %6877 = vmatprep.mubr.bf16.mxu0 %v1387
      %6878 = vmatmul.mubr.bf16.gmra.mrb[0].mxu0 %v1386
      %v6879 = vpop.f32.mrb[0].mxu0
      %v6880 = vadd.f32 %v4718, %v6879
      %v6881 = vpop.f32.mrb[0].mxu0
      %v6882 = vpop.f32.mrb[0].mxu0
      %v6883 = vadd.f32 %v4721, %v6882
      %v6884 = vpop.f32.mrb[0].mxu0
      %6885 = vmatprep.mubr.bf16.mxu0 %v1396
      %6886 = vmatmul.mubr.bf16.gmra.mrb[0].mxu0 %v1395
      %v6887 = vpop.f32.mrb[0].mxu0
      %v6888 = vadd.f32 %v4726, %v6887
      %v6889 = vpop.f32.mrb[0].mxu0
      %v6890 = vpop.f32.mrb[0].mxu0
      %v6891 = vadd.f32 %v4729, %v6890
      %v6892 = vpop.f32.mrb[0].mxu0
      %6893 = vdwg.mxu0
      %6894 = vmatprep.subr.bf16.mxu0 0
      %6895 = vmatpush1.bf16.msra.mxu0 %v5502
      %6896 = vmatprep.subr.bf16.mxu0 0
      %6897 = vmatpush1.bf16.msra.mxu0 %v5505
      %6898 = vmatprep.subr.bf16.mxu0 0
      %6899 = vmatpush1.bf16.msra.mxu0 %v5508
      %6900 = vmatprep.subr.bf16.mxu0 0
      %6901 = vmatpush1.bf16.msra.mxu0 %v5511
      %6902 = vmatprep.subr.bf16.mxu0 0
      %6903 = vmatpush1.bf16.msra.mxu0 %v5514
      %6904 = vmatprep.subr.bf16.mxu0 0
      %6905 = vmatpush1.bf16.msra.mxu0 %v5517
      %6906 = vmatprep.subr.bf16.mxu0 0
      %6907 = vmatpush1.bf16.msra.mxu0 %v5520
      %6908 = vmatprep.subr.bf16.mxu0 0
      %6909 = vmatpush1.bf16.msra.mxu0 %v5523
      %6910 = vmatprep.subr.bf16.mxu0 0
      %6911 = vmatpush1.bf16.msra.mxu0 %v5526
      %6912 = vmatprep.subr.bf16.mxu0 0
      %6913 = vmatpush1.bf16.msra.mxu0 %v5529
      %6914 = vmatprep.subr.bf16.mxu0 0
      %6915 = vmatpush1.bf16.msra.mxu0 %v5532
      %6916 = vmatprep.subr.bf16.mxu0 0
      %6917 = vmatpush1.bf16.msra.mxu0 %v5535
      %6918 = vmatprep.subr.bf16.mxu0 0
      %6919 = vmatpush1.bf16.msra.mxu0 %v5538
      %6920 = vmatprep.subr.bf16.mxu0 0
      %6921 = vmatpush1.bf16.msra.mxu0 %v5541
      %6922 = vmatprep.subr.bf16.mxu0 0
      %6923 = vmatpush1.bf16.msra.mxu0 %v5544
      %6924 = vmatprep.subr.bf16.mxu0 0
      %6925 = vmatpush1.bf16.msra.mxu0 %v5547
      %6926 = vmatprep.mubr.bf16.mxu0 %v1281
      %6927 = vmatmul.mubr.bf16.gmra.mrb[0].mxu0 %v1280
      %v6928 = vpop.f32.mrb[0].mxu0
      %v6929 = vadd.f32 %v6784, %v6928
      %v6930 = vpop.f32.mrb[0].mxu0
      %v6931 = vpop.f32.mrb[0].mxu0
      %v6932 = vadd.f32 %v6787, %v6931
      %v6933 = vpop.f32.mrb[0].mxu0
      %6934 = vmatprep.mubr.bf16.mxu0 %v1290
      %6935 = vmatmul.mubr.bf16.gmra.mrb[0].mxu0 %v1289
      %v6936 = vpop.f32.mrb[0].mxu0
      %v6937 = vadd.f32 %v6792, %v6936
      %v6938 = vpop.f32.mrb[0].mxu0
      %v6939 = vpop.f32.mrb[0].mxu0
      %v6940 = vadd.f32 %v6795, %v6939
      %v6941 = vpop.f32.mrb[0].mxu0
      %6942 = vmatprep.mubr.bf16.mxu0 %v1299
      %6943 = vmatmul.mubr.bf16.gmra.mrb[0].mxu0 %v1298
      %v6944 = vpop.f32.mrb[0].mxu0
      %v6945 = vadd.f32 %v6800, %v6944
      %v6946 = vpop.f32.mrb[0].mxu0
      %v6947 = vpop.f32.mrb[0].mxu0
      %v6948 = vadd.f32 %v6803, %v6947
      %v6949 = vpop.f32.mrb[0].mxu0
      %6950 = vmatprep.mubr.bf16.mxu0 %v1308
      %6951 = vmatmul.mubr.bf16.gmra.mrb[0].mxu0 %v1307
      %v6952 = vpop.f32.mrb[0].mxu0
      %v6953 = vadd.f32 %v6808, %v6952
      %v6954 = vpop.f32.mrb[0].mxu0
      %v6955 = vpop.f32.mrb[0].mxu0
      %v6956 = vadd.f32 %v6811, %v6955
      %v6957 = vpop.f32.mrb[0].mxu0
      %6958 = vmatprep.mubr.bf16.mxu0 %v1317
      %6959 = vmatmul.mubr.bf16.gmra.mrb[0].mxu0 %v1316
      %v6960 = vpop.f32.mrb[0].mxu0
      %v6961 = vadd.f32 %v6816, %v6960
      %v6962 = vpop.f32.mrb[0].mxu0
      %v6963 = vpop.f32.mrb[0].mxu0
      %v6964 = vadd.f32 %v6819, %v6963
      %v6965 = vpop.f32.mrb[0].mxu0
      %6966 = vmatprep.mubr.bf16.mxu0 %v1326
      %6967 = vmatmul.mubr.bf16.gmra.mrb[0].mxu0 %v1325
      %v6968 = vpop.f32.mrb[0].mxu0
      %v6969 = vadd.f32 %v6824, %v6968
      %v6970 = vpop.f32.mrb[0].mxu0
      %v6971 = vpop.f32.mrb[0].mxu0
      %v6972 = vadd.f32 %v6827, %v6971
      %v6973 = vpop.f32.mrb[0].mxu0
      %6974 = vmatprep.mubr.bf16.mxu0 %v1335
      %6975 = vmatmul.mubr.bf16.gmra.mrb[0].mxu0 %v1334
      %v6976 = vpop.f32.mrb[0].mxu0
      %v6977 = vadd.f32 %v6832, %v6976
      %v6978 = vpop.f32.mrb[0].mxu0
      %v6979 = vpop.f32.mrb[0].mxu0
      %v6980 = vadd.f32 %v6835, %v6979
      %v6981 = vpop.f32.mrb[0].mxu0
      %6982 = vmatprep.mubr.bf16.mxu0 %v1344
      %6983 = vmatmul.mubr.bf16.gmra.mrb[0].mxu0 %v1343
      %v6984 = vpop.f32.mrb[0].mxu0
      %v6985 = vadd.f32 %v6840, %v6984
      %v6986 = vpop.f32.mrb[0].mxu0
      %v6987 = vpop.f32.mrb[0].mxu0
      %v6988 = vadd.f32 %v6843, %v6987
      %v6989 = vpop.f32.mrb[0].mxu0
      %6990 = vmatprep.mubr.bf16.mxu0 %v1353
      %6991 = vmatmul.mubr.bf16.gmra.mrb[0].mxu0 %v1352
      %v6992 = vpop.f32.mrb[0].mxu0
      %v6993 = vadd.f32 %v6848, %v6992
      %v6994 = vpop.f32.mrb[0].mxu0
      %v6995 = vpop.f32.mrb[0].mxu0
      %v6996 = vadd.f32 %v6851, %v6995
      %v6997 = vpop.f32.mrb[0].mxu0
      %6998 = vmatprep.mubr.bf16.mxu0 %v1362
      %6999 = vmatmul.mubr.bf16.gmra.mrb[0].mxu0 %v1361
      %v7000 = vpop.f32.mrb[0].mxu0
      %v7001 = vadd.f32 %v6856, %v7000
      %v7002 = vpop.f32.mrb[0].mxu0
      %v7003 = vpop.f32.mrb[0].mxu0
      %v7004 = vadd.f32 %v6859, %v7003
      %v7005 = vpop.f32.mrb[0].mxu0
      %7006 = vmatprep.mubr.bf16.mxu0 %v1371
      %7007 = vmatmul.mubr.bf16.gmra.mrb[0].mxu0 %v1370
      %v7008 = vpop.f32.mrb[0].mxu0
      %v7009 = vadd.f32 %v6864, %v7008
      %v7010 = vpop.f32.mrb[0].mxu0
      %v7011 = vpop.f32.mrb[0].mxu0
      %v7012 = vadd.f32 %v6867, %v7011
      %v7013 = vpop.f32.mrb[0].mxu0
      %7014 = vmatprep.mubr.bf16.mxu0 %v1380
      %7015 = vmatmul.mubr.bf16.gmra.mrb[0].mxu0 %v1379
      %v7016 = vpop.f32.mrb[0].mxu0
      %v7017 = vadd.f32 %v6872, %v7016
      %v7018 = vpop.f32.mrb[0].mxu0
      %v7019 = vpop.f32.mrb[0].mxu0
      %v7020 = vadd.f32 %v6875, %v7019
      %v7021 = vpop.f32.mrb[0].mxu0
      %7022 = vmatprep.mubr.bf16.mxu0 %v1389
      %7023 = vmatmul.mubr.bf16.gmra.mrb[0].mxu0 %v1388
      %v7024 = vpop.f32.mrb[0].mxu0
      %v7025 = vadd.f32 %v6880, %v7024
      %v7026 = vpop.f32.mrb[0].mxu0
      %v7027 = vpop.f32.mrb[0].mxu0
      %v7028 = vadd.f32 %v6883, %v7027
      %v7029 = vpop.f32.mrb[0].mxu0
      %7030 = vmatprep.mubr.bf16.mxu0 %v1398
      %7031 = vmatmul.mubr.bf16.gmra.mrb[0].mxu0 %v1397
      %v7032 = vpop.f32.mrb[0].mxu0
      %v7033 = vadd.f32 %v6888, %v7032
      %v7034 = vpop.f32.mrb[0].mxu0
      %v7035 = vpop.f32.mrb[0].mxu0
      %v7036 = vadd.f32 %v6891, %v7035
      %v7037 = vpop.f32.mrb[0].mxu0
      %7038 = vdwg.mxu0
      %7039 = vmatprep.subr.bf16.mxu0 0
      %7040 = vmatpush1.bf16.msra.mxu0 %v5550
      %7041 = vmatprep.subr.bf16.mxu0 0
      %7042 = vmatpush1.bf16.msra.mxu0 %v5553
      %7043 = vmatprep.subr.bf16.mxu0 0
      %7044 = vmatpush1.bf16.msra.mxu0 %v5556
      %7045 = vmatprep.subr.bf16.mxu0 0
      %7046 = vmatpush1.bf16.msra.mxu0 %v5559
      %7047 = vmatprep.subr.bf16.mxu0 0
      %7048 = vmatpush1.bf16.msra.mxu0 %v5562
      %7049 = vmatprep.subr.bf16.mxu0 0
      %7050 = vmatpush1.bf16.msra.mxu0 %v5565
      %7051 = vmatprep.subr.bf16.mxu0 0
      %7052 = vmatpush1.bf16.msra.mxu0 %v5568
      %7053 = vmatprep.subr.bf16.mxu0 0
      %7054 = vmatpush1.bf16.msra.mxu0 %v5571
      %7055 = vmatprep.subr.bf16.mxu0 0
      %7056 = vmatpush1.bf16.msra.mxu0 %v5574
      %7057 = vmatprep.subr.bf16.mxu0 0
      %7058 = vmatpush1.bf16.msra.mxu0 %v5577
      %7059 = vmatprep.subr.bf16.mxu0 0
      %7060 = vmatpush1.bf16.msra.mxu0 %v5580
      %7061 = vmatprep.subr.bf16.mxu0 0
      %7062 = vmatpush1.bf16.msra.mxu0 %v5583
      %7063 = vmatprep.subr.bf16.mxu0 0
      %7064 = vmatpush1.bf16.msra.mxu0 %v5586
      %7065 = vmatprep.subr.bf16.mxu0 0
      %7066 = vmatpush1.bf16.msra.mxu0 %v5589
      %7067 = vmatprep.subr.bf16.mxu0 0
      %7068 = vmatpush1.bf16.msra.mxu0 %v5592
      %7069 = vmatprep.subr.bf16.mxu0 0
      %7070 = vmatpush1.bf16.msra.mxu0 %v5595
      %7071 = vmatprep.mubr.bf16.mxu0 %v1283
      %7072 = vmatmul.mubr.bf16.gmra.mrb[0].mxu0 %v1282
      %v7073 = vpop.f32.mrb[0].mxu0
      %v7074 = vadd.f32 %v6929, %v7073
      %v7075 = vpop.f32.mrb[0].mxu0
      %v7076 = vpop.f32.mrb[0].mxu0
      %v7077 = vadd.f32 %v6932, %v7076
      %v7078 = vpop.f32.mrb[0].mxu0
      %7079 = vmatprep.mubr.bf16.mxu0 %v1292
      %7080 = vmatmul.mubr.bf16.gmra.mrb[0].mxu0 %v1291
      %v7081 = vpop.f32.mrb[0].mxu0
      %v7082 = vadd.f32 %v6937, %v7081
      %v7083 = vpop.f32.mrb[0].mxu0
      %v7084 = vpop.f32.mrb[0].mxu0
      %v7085 = vadd.f32 %v6940, %v7084
      %v7086 = vpop.f32.mrb[0].mxu0
      %7087 = vmatprep.mubr.bf16.mxu0 %v1301
      %7088 = vmatmul.mubr.bf16.gmra.mrb[0].mxu0 %v1300
      %v7089 = vpop.f32.mrb[0].mxu0
      %v7090 = vadd.f32 %v6945, %v7089
      %v7091 = vpop.f32.mrb[0].mxu0
      %v7092 = vpop.f32.mrb[0].mxu0
      %v7093 = vadd.f32 %v6948, %v7092
      %v7094 = vpop.f32.mrb[0].mxu0
      %7095 = vmatprep.mubr.bf16.mxu0 %v1310
      %7096 = vmatmul.mubr.bf16.gmra.mrb[0].mxu0 %v1309
      %v7097 = vpop.f32.mrb[0].mxu0
      %v7098 = vadd.f32 %v6953, %v7097
      %v7099 = vpop.f32.mrb[0].mxu0
      %v7100 = vpop.f32.mrb[0].mxu0
      %v7101 = vadd.f32 %v6956, %v7100
      %v7102 = vpop.f32.mrb[0].mxu0
      %7103 = vmatprep.mubr.bf16.mxu0 %v1319
      %7104 = vmatmul.mubr.bf16.gmra.mrb[0].mxu0 %v1318
      %v7105 = vpop.f32.mrb[0].mxu0
      %v7106 = vadd.f32 %v6961, %v7105
      %v7107 = vpop.f32.mrb[0].mxu0
      %v7108 = vpop.f32.mrb[0].mxu0
      %v7109 = vadd.f32 %v6964, %v7108
      %v7110 = vpop.f32.mrb[0].mxu0
      %7111 = vmatprep.mubr.bf16.mxu0 %v1328
      %7112 = vmatmul.mubr.bf16.gmra.mrb[0].mxu0 %v1327
      %v7113 = vpop.f32.mrb[0].mxu0
      %v7114 = vadd.f32 %v6969, %v7113
      %v7115 = vpop.f32.mrb[0].mxu0
      %v7116 = vpop.f32.mrb[0].mxu0
      %v7117 = vadd.f32 %v6972, %v7116
      %v7118 = vpop.f32.mrb[0].mxu0
      %7119 = vmatprep.mubr.bf16.mxu0 %v1337
      %7120 = vmatmul.mubr.bf16.gmra.mrb[0].mxu0 %v1336
      %v7121 = vpop.f32.mrb[0].mxu0
      %v7122 = vadd.f32 %v6977, %v7121
      %v7123 = vpop.f32.mrb[0].mxu0
      %v7124 = vpop.f32.mrb[0].mxu0
      %v7125 = vadd.f32 %v6980, %v7124
      %v7126 = vpop.f32.mrb[0].mxu0
      %7127 = vmatprep.mubr.bf16.mxu0 %v1346
      %7128 = vmatmul.mubr.bf16.gmra.mrb[0].mxu0 %v1345
      %v7129 = vpop.f32.mrb[0].mxu0
      %v7130 = vadd.f32 %v6985, %v7129
      %v7131 = vpop.f32.mrb[0].mxu0
      %v7132 = vpop.f32.mrb[0].mxu0
      %v7133 = vadd.f32 %v6988, %v7132
      %v7134 = vpop.f32.mrb[0].mxu0
      %7135 = vmatprep.mubr.bf16.mxu0 %v1355
      %7136 = vmatmul.mubr.bf16.gmra.mrb[0].mxu0 %v1354
      %v7137 = vpop.f32.mrb[0].mxu0
      %v7138 = vadd.f32 %v6993, %v7137
      %v7139 = vpop.f32.mrb[0].mxu0
      %v7140 = vpop.f32.mrb[0].mxu0
      %v7141 = vadd.f32 %v6996, %v7140
      %v7142 = vpop.f32.mrb[0].mxu0
      %7143 = vmatprep.mubr.bf16.mxu0 %v1364
      %7144 = vmatmul.mubr.bf16.gmra.mrb[0].mxu0 %v1363
      %v7145 = vpop.f32.mrb[0].mxu0
      %v7146 = vadd.f32 %v7001, %v7145
      %v7147 = vpop.f32.mrb[0].mxu0
      %v7148 = vpop.f32.mrb[0].mxu0
      %v7149 = vadd.f32 %v7004, %v7148
      %v7150 = vpop.f32.mrb[0].mxu0
      %7151 = vmatprep.mubr.bf16.mxu0 %v1373
      %7152 = vmatmul.mubr.bf16.gmra.mrb[0].mxu0 %v1372
      %v7153 = vpop.f32.mrb[0].mxu0
      %v7154 = vadd.f32 %v7009, %v7153
      %v7155 = vpop.f32.mrb[0].mxu0
      %v7156 = vpop.f32.mrb[0].mxu0
      %v7157 = vadd.f32 %v7012, %v7156
      %v7158 = vpop.f32.mrb[0].mxu0
      %7159 = vmatprep.mubr.bf16.mxu0 %v1382
      %7160 = vmatmul.mubr.bf16.gmra.mrb[0].mxu0 %v1381
      %v7161 = vpop.f32.mrb[0].mxu0
      %v7162 = vadd.f32 %v7017, %v7161
      %v7163 = vpop.f32.mrb[0].mxu0
      %v7164 = vpop.f32.mrb[0].mxu0
      %v7165 = vadd.f32 %v7020, %v7164
      %v7166 = vpop.f32.mrb[0].mxu0
      %7167 = vmatprep.mubr.bf16.mxu0 %v1391
      %7168 = vmatmul.mubr.bf16.gmra.mrb[0].mxu0 %v1390
      %v7169 = vpop.f32.mrb[0].mxu0
      %v7170 = vadd.f32 %v7025, %v7169
      %v7171 = vpop.f32.mrb[0].mxu0
      %v7172 = vpop.f32.mrb[0].mxu0
      %v7173 = vadd.f32 %v7028, %v7172
      %v7174 = vpop.f32.mrb[0].mxu0
      %7175 = vmatprep.mubr.bf16.mxu0 %v1400
      %7176 = vmatmul.mubr.bf16.gmra.mrb[0].mxu0 %v1399
      %v7177 = vpop.f32.mrb[0].mxu0
      %v7178 = vadd.f32 %v7033, %v7177
      %v7179 = vpop.f32.mrb[0].mxu0
      %v7180 = vpop.f32.mrb[0].mxu0
      %v7181 = vadd.f32 %v7036, %v7180
      %v7182 = vpop.f32.mrb[0].mxu0
      %7183 = vdwg.mxu0
      %7184 = vmatprep.subr.bf16.mxu0 0
      %7185 = vmatpush1.bf16.msra.mxu0 %v5598
      %7186 = vmatprep.subr.bf16.mxu0 0
      %7187 = vmatpush1.bf16.msra.mxu0 %v5601
      %7188 = vmatprep.subr.bf16.mxu0 0
      %7189 = vmatpush1.bf16.msra.mxu0 %v5604
      %7190 = vmatprep.subr.bf16.mxu0 0
      %7191 = vmatpush1.bf16.msra.mxu0 %v5607
      %7192 = vmatprep.subr.bf16.mxu0 0
      %7193 = vmatpush1.bf16.msra.mxu0 %v5610
      %7194 = vmatprep.subr.bf16.mxu0 0
      %7195 = vmatpush1.bf16.msra.mxu0 %v5613
      %7196 = vmatprep.subr.bf16.mxu0 0
      %7197 = vmatpush1.bf16.msra.mxu0 %v5616
      %7198 = vmatprep.subr.bf16.mxu0 0
      %7199 = vmatpush1.bf16.msra.mxu0 %v5619
      %7200 = vmatprep.subr.bf16.mxu0 0
      %7201 = vmatpush1.bf16.msra.mxu0 %v5622
      %7202 = vmatprep.subr.bf16.mxu0 0
      %7203 = vmatpush1.bf16.msra.mxu0 %v5625
      %7204 = vmatprep.subr.bf16.mxu0 0
      %7205 = vmatpush1.bf16.msra.mxu0 %v5628
      %7206 = vmatprep.subr.bf16.mxu0 0
      %7207 = vmatpush1.bf16.msra.mxu0 %v5631
      %7208 = vmatprep.subr.bf16.mxu0 0
      %7209 = vmatpush1.bf16.msra.mxu0 %v5634
      %7210 = vmatprep.subr.bf16.mxu0 0
      %7211 = vmatpush1.bf16.msra.mxu0 %v5637
      %7212 = vmatprep.subr.bf16.mxu0 0
      %7213 = vmatpush1.bf16.msra.mxu0 %v5640
      %7214 = vmatprep.subr.bf16.mxu0 0
      %7215 = vmatpush1.bf16.msra.mxu0 %v5643
      %7216 = vmatprep.mubr.bf16.mxu0 %v1285
      %7217 = vmatmul.mubr.bf16.gmra.mrb[0].mxu0 %v1284
      %v7218 = vpop.f32.mrb[0].mxu0
      %v7219 = vadd.f32 %v7074, %v7218
      %v7220 = vpop.f32.mrb[0].mxu0
      %v7221 = vpop.f32.mrb[0].mxu0
      %v7222 = vadd.f32 %v7077, %v7221
      %v7223 = vpop.f32.mrb[0].mxu0
      %7224 = vmatprep.mubr.bf16.mxu0 %v1294
      %7225 = vmatmul.mubr.bf16.gmra.mrb[0].mxu0 %v1293
      %v7226 = vpop.f32.mrb[0].mxu0
      %v7227 = vadd.f32 %v7082, %v7226
      %v7228 = vpop.f32.mrb[0].mxu0
      %v7229 = vpop.f32.mrb[0].mxu0
      %v7230 = vadd.f32 %v7085, %v7229
      %v7231 = vpop.f32.mrb[0].mxu0
      %7232 = vmatprep.mubr.bf16.mxu0 %v1303
      %7233 = vmatmul.mubr.bf16.gmra.mrb[0].mxu0 %v1302
      %v7234 = vpop.f32.mrb[0].mxu0
      %v7235 = vadd.f32 %v7090, %v7234
      %v7236 = vpop.f32.mrb[0].mxu0
      %v7237 = vpop.f32.mrb[0].mxu0
      %v7238 = vadd.f32 %v7093, %v7237
      %v7239 = vpop.f32.mrb[0].mxu0
      %7240 = vmatprep.mubr.bf16.mxu0 %v1312
      %7241 = vmatmul.mubr.bf16.gmra.mrb[0].mxu0 %v1311
      %v7242 = vpop.f32.mrb[0].mxu0
      %v7243 = vadd.f32 %v7098, %v7242
      %v7244 = vpop.f32.mrb[0].mxu0
      %v7245 = vpop.f32.mrb[0].mxu0
      %v7246 = vadd.f32 %v7101, %v7245
      %v7247 = vpop.f32.mrb[0].mxu0
      %7248 = vmatprep.mubr.bf16.mxu0 %v1321
      %7249 = vmatmul.mubr.bf16.gmra.mrb[0].mxu0 %v1320
      %v7250 = vpop.f32.mrb[0].mxu0
      %v7251 = vadd.f32 %v7106, %v7250
      %v7252 = vpop.f32.mrb[0].mxu0
      %v7253 = vpop.f32.mrb[0].mxu0
      %v7254 = vadd.f32 %v7109, %v7253
      %v7255 = vpop.f32.mrb[0].mxu0
      %7256 = vmatprep.mubr.bf16.mxu0 %v1330
      %7257 = vmatmul.mubr.bf16.gmra.mrb[0].mxu0 %v1329
      %v7258 = vpop.f32.mrb[0].mxu0
      %v7259 = vadd.f32 %v7114, %v7258
      %v7260 = vpop.f32.mrb[0].mxu0
      %v7261 = vpop.f32.mrb[0].mxu0
      %v7262 = vadd.f32 %v7117, %v7261
      %v7263 = vpop.f32.mrb[0].mxu0
      %7264 = vmatprep.mubr.bf16.mxu0 %v1339
      %7265 = vmatmul.mubr.bf16.gmra.mrb[0].mxu0 %v1338
      %v7266 = vpop.f32.mrb[0].mxu0
      %v7267 = vadd.f32 %v7122, %v7266
      %v7268 = vpop.f32.mrb[0].mxu0
      %v7269 = vpop.f32.mrb[0].mxu0
      %v7270 = vadd.f32 %v7125, %v7269
      %v7271 = vpop.f32.mrb[0].mxu0
      %7272 = vmatprep.mubr.bf16.mxu0 %v1348
      %7273 = vmatmul.mubr.bf16.gmra.mrb[0].mxu0 %v1347
      %v7274 = vpop.f32.mrb[0].mxu0
      %v7275 = vadd.f32 %v7130, %v7274
      %v7276 = vpop.f32.mrb[0].mxu0
      %v7277 = vpop.f32.mrb[0].mxu0
      %v7278 = vadd.f32 %v7133, %v7277
      %v7279 = vpop.f32.mrb[0].mxu0
      %7280 = vmatprep.mubr.bf16.mxu0 %v1357
      %7281 = vmatmul.mubr.bf16.gmra.mrb[0].mxu0 %v1356
      %v7282 = vpop.f32.mrb[0].mxu0
      %v7283 = vadd.f32 %v7138, %v7282
      %v7284 = vpop.f32.mrb[0].mxu0
      %v7285 = vpop.f32.mrb[0].mxu0
      %v7286 = vadd.f32 %v7141, %v7285
      %v7287 = vpop.f32.mrb[0].mxu0
      %7288 = vmatprep.mubr.bf16.mxu0 %v1366
      %7289 = vmatmul.mubr.bf16.gmra.mrb[0].mxu0 %v1365
      %v7290 = vpop.f32.mrb[0].mxu0
      %v7291 = vadd.f32 %v7146, %v7290
      %v7292 = vpop.f32.mrb[0].mxu0
      %v7293 = vpop.f32.mrb[0].mxu0
      %v7294 = vadd.f32 %v7149, %v7293
      %v7295 = vpop.f32.mrb[0].mxu0
      %7296 = vmatprep.mubr.bf16.mxu0 %v1375
      %7297 = vmatmul.mubr.bf16.gmra.mrb[0].mxu0 %v1374
      %v7298 = vpop.f32.mrb[0].mxu0
      %v7299 = vadd.f32 %v7154, %v7298
      %v7300 = vpop.f32.mrb[0].mxu0
      %v7301 = vpop.f32.mrb[0].mxu0
      %v7302 = vadd.f32 %v7157, %v7301
      %v7303 = vpop.f32.mrb[0].mxu0
      %7304 = vmatprep.mubr.bf16.mxu0 %v1384
      %7305 = vmatmul.mubr.bf16.gmra.mrb[0].mxu0 %v1383
      %v7306 = vpop.f32.mrb[0].mxu0
      %v7307 = vadd.f32 %v7162, %v7306
      %v7308 = vpop.f32.mrb[0].mxu0
      %v7309 = vpop.f32.mrb[0].mxu0
      %v7310 = vadd.f32 %v7165, %v7309
      %v7311 = vpop.f32.mrb[0].mxu0
      %7312 = vmatprep.mubr.bf16.mxu0 %v1393
      %7313 = vmatmul.mubr.bf16.gmra.mrb[0].mxu0 %v1392
      %v7314 = vpop.f32.mrb[0].mxu0
      %v7315 = vadd.f32 %v7170, %v7314
      %v7316 = vpop.f32.mrb[0].mxu0
      %v7317 = vpop.f32.mrb[0].mxu0
      %v7318 = vadd.f32 %v7173, %v7317
      %v7319 = vpop.f32.mrb[0].mxu0
      %7320 = vmatprep.mubr.bf16.mxu0 %v1402
      %7321 = vmatmul.mubr.bf16.gmra.mrb[0].mxu0 %v1401
      %v7322 = vpop.f32.mrb[0].mxu0
      %v7323 = vadd.f32 %v7178, %v7322
      %v7324 = vpop.f32.mrb[0].mxu0
      %v7325 = vpop.f32.mrb[0].mxu0
      %v7326 = vadd.f32 %v7181, %v7325
      %v7327 = vpop.f32.mrb[0].mxu0
      %7328 = vdwg.mxu0
      %7329 = vmatprep.subr.bf16.mxu0 0
      %7330 = vmatpush1.bf16.msra.mxu0 %v5646
      %7331 = vmatprep.subr.bf16.mxu0 0
      %7332 = vmatpush1.bf16.msra.mxu0 %v5649
      %7333 = vmatprep.subr.bf16.mxu0 0
      %7334 = vmatpush1.bf16.msra.mxu0 %v5652
      %7335 = vmatprep.subr.bf16.mxu0 0
      %7336 = vmatpush1.bf16.msra.mxu0 %v5655
      %7337 = vmatprep.subr.bf16.mxu0 0
      %7338 = vmatpush1.bf16.msra.mxu0 %v5658
      %7339 = vmatprep.subr.bf16.mxu0 0
      %7340 = vmatpush1.bf16.msra.mxu0 %v5661
      %7341 = vmatprep.subr.bf16.mxu0 0
      %7342 = vmatpush1.bf16.msra.mxu0 %v5664
      %7343 = vmatprep.subr.bf16.mxu0 0
      %7344 = vmatpush1.bf16.msra.mxu0 %v5667
      %7345 = vmatprep.subr.bf16.mxu0 0
      %7346 = vmatpush1.bf16.msra.mxu0 0
      %7347 = vmatprep.subr.bf16.mxu0 0
      %7348 = vmatpush1.bf16.msra.mxu0 0
      %7349 = vmatprep.subr.bf16.mxu0 0
      %7350 = vmatpush1.bf16.msra.mxu0 0
      %7351 = vmatprep.subr.bf16.mxu0 0
      %7352 = vmatpush1.bf16.msra.mxu0 0
      %7353 = vmatprep.subr.bf16.mxu0 0
      %7354 = vmatpush1.bf16.msra.mxu0 0
      %7355 = vmatprep.subr.bf16.mxu0 0
      %7356 = vmatpush1.bf16.msra.mxu0 0
      %7357 = vmatprep.subr.bf16.mxu0 0
      %7358 = vmatpush1.bf16.msra.mxu0 0
      %7359 = vmatprep.subr.bf16.mxu0 0
      %7360 = vmatpush1.bf16.msra.mxu0 0
      %7361 = vmatprep.mubr.bf16.mxu0 0
      %7362 = vmatmul.mubr.bf16.gmra.mrb[0].mxu0 %v1286
      %v7363 = vpop.f32.mrb[0].mxu0
      %v7364 = vadd.f32 %v7219, %v7363
      %v7365 = vpop.f32.mrb[0].mxu0
      %v7366 = vpop.f32.mrb[0].mxu0
      %v7367 = vadd.f32 %v7222, %v7366
      %v7368 = vpop.f32.mrb[0].mxu0
      %7369 = vmatprep.mubr.bf16.mxu0 0
      %7370 = vmatmul.mubr.bf16.gmra.mrb[0].mxu0 %v1295
      %v7371 = vpop.f32.mrb[0].mxu0
      %v7372 = vadd.f32 %v7227, %v7371
      %v7373 = vpop.f32.mrb[0].mxu0
      %v7374 = vpop.f32.mrb[0].mxu0
      %v7375 = vadd.f32 %v7230, %v7374
      %v7376 = vpop.f32.mrb[0].mxu0
      %7377 = vmatprep.mubr.bf16.mxu0 0
      %7378 = vmatmul.mubr.bf16.gmra.mrb[0].mxu0 %v1304
      %v7379 = vpop.f32.mrb[0].mxu0
      %v7380 = vadd.f32 %v7235, %v7379
      %v7381 = vpop.f32.mrb[0].mxu0
      %v7382 = vpop.f32.mrb[0].mxu0
      %v7383 = vadd.f32 %v7238, %v7382
      %v7384 = vpop.f32.mrb[0].mxu0
      %7385 = vmatprep.mubr.bf16.mxu0 0
      %7386 = vmatmul.mubr.bf16.gmra.mrb[0].mxu0 %v1313
      %v7387 = vpop.f32.mrb[0].mxu0
      %v7388 = vadd.f32 %v7243, %v7387
      %v7389 = vpop.f32.mrb[0].mxu0
      %v7390 = vpop.f32.mrb[0].mxu0
      %v7391 = vadd.f32 %v7246, %v7390
      %v7392 = vpop.f32.mrb[0].mxu0
      %7393 = vmatprep.mubr.bf16.mxu0 0
      %7394 = vmatmul.mubr.bf16.gmra.mrb[0].mxu0 %v1322
      %v7395 = vpop.f32.mrb[0].mxu0
      %v7396 = vadd.f32 %v7251, %v7395
      %v7397 = vpop.f32.mrb[0].mxu0
      %v7398 = vpop.f32.mrb[0].mxu0
      %v7399 = vadd.f32 %v7254, %v7398
      %v7400 = vpop.f32.mrb[0].mxu0
      %7401 = vmatprep.mubr.bf16.mxu0 0
      %7402 = vmatmul.mubr.bf16.gmra.mrb[0].mxu0 %v1331
      %v7403 = vpop.f32.mrb[0].mxu0
      %v7404 = vadd.f32 %v7259, %v7403
      %v7405 = vpop.f32.mrb[0].mxu0
      %v7406 = vpop.f32.mrb[0].mxu0
      %v7407 = vadd.f32 %v7262, %v7406
      %v7408 = vpop.f32.mrb[0].mxu0
      %7409 = vmatprep.mubr.bf16.mxu0 0
      %7410 = vmatmul.mubr.bf16.gmra.mrb[0].mxu0 %v1340
      %v7411 = vpop.f32.mrb[0].mxu0
      %v7412 = vadd.f32 %v7267, %v7411
      %v7413 = vpop.f32.mrb[0].mxu0
      %v7414 = vpop.f32.mrb[0].mxu0
      %v7415 = vadd.f32 %v7270, %v7414
      %v7416 = vpop.f32.mrb[0].mxu0
      %7417 = vmatprep.mubr.bf16.mxu0 0
      %7418 = vmatmul.mubr.bf16.gmra.mrb[0].mxu0 %v1349
      %v7419 = vpop.f32.mrb[0].mxu0
      %v7420 = vadd.f32 %v7275, %v7419
      %v7421 = vpop.f32.mrb[0].mxu0
      %v7422 = vpop.f32.mrb[0].mxu0
      %v7423 = vadd.f32 %v7278, %v7422
      %v7424 = vpop.f32.mrb[0].mxu0
      %7425 = vmatprep.mubr.bf16.mxu0 0
      %7426 = vmatmul.mubr.bf16.gmra.mrb[0].mxu0 %v1358
      %v7427 = vpop.f32.mrb[0].mxu0
      %v7428 = vadd.f32 %v7283, %v7427
      %v7429 = vpop.f32.mrb[0].mxu0
      %v7430 = vpop.f32.mrb[0].mxu0
      %v7431 = vadd.f32 %v7286, %v7430
      %v7432 = vpop.f32.mrb[0].mxu0
      %7433 = vmatprep.mubr.bf16.mxu0 0
      %7434 = vmatmul.mubr.bf16.gmra.mrb[0].mxu0 %v1367
      %v7435 = vpop.f32.mrb[0].mxu0
      %v7436 = vadd.f32 %v7291, %v7435
      %v7437 = vpop.f32.mrb[0].mxu0
      %v7438 = vpop.f32.mrb[0].mxu0
      %v7439 = vadd.f32 %v7294, %v7438
      %v7440 = vpop.f32.mrb[0].mxu0
      %7441 = vmatprep.mubr.bf16.mxu0 0
      %7442 = vmatmul.mubr.bf16.gmra.mrb[0].mxu0 %v1376
      %v7443 = vpop.f32.mrb[0].mxu0
      %v7444 = vadd.f32 %v7299, %v7443
      %v7445 = vpop.f32.mrb[0].mxu0
      %v7446 = vpop.f32.mrb[0].mxu0
      %v7447 = vadd.f32 %v7302, %v7446
      %v7448 = vpop.f32.mrb[0].mxu0
      %7449 = vmatprep.mubr.bf16.mxu0 0
      %7450 = vmatmul.mubr.bf16.gmra.mrb[0].mxu0 %v1385
      %v7451 = vpop.f32.mrb[0].mxu0
      %v7452 = vadd.f32 %v7307, %v7451
      %v7453 = vpop.f32.mrb[0].mxu0
      %v7454 = vpop.f32.mrb[0].mxu0
      %v7455 = vadd.f32 %v7310, %v7454
      %v7456 = vpop.f32.mrb[0].mxu0
      %7457 = vmatprep.mubr.bf16.mxu0 0
      %7458 = vmatmul.mubr.bf16.gmra.mrb[0].mxu0 %v1394
      %v7459 = vpop.f32.mrb[0].mxu0
      %v7460 = vadd.f32 %v7315, %v7459
      %v7461 = vpop.f32.mrb[0].mxu0
      %v7462 = vpop.f32.mrb[0].mxu0
      %v7463 = vadd.f32 %v7318, %v7462
      %v7464 = vpop.f32.mrb[0].mxu0
      %7465 = vmatprep.mubr.bf16.mxu0 0
      %7466 = vmatmul.mubr.bf16.gmra.mrb[0].mxu0 %v1403
      %v7467 = vpop.f32.mrb[0].mxu0
      %v7468 = vadd.f32 %v7323, %v7467
      %v7469 = vpop.f32.mrb[0].mxu0
      %v7470 = vpop.f32.mrb[0].mxu0
      %v7471 = vadd.f32 %v7326, %v7470
      %v7472 = vpop.f32.mrb[0].mxu0
      %7473 = vdwg.mxu0
      %v7474 = vld [vmem:[#allocation2 + $0x90] sm:$0xff]
      %v7475 = vld [vmem:[#allocation2 + $0x98] sm:$0xff]
      %v7476 = vld [vmem:[#allocation2 + $0xa0] sm:$0xff]
      %v7477 = vld [vmem:[#allocation2 + $0xa8] sm:$0xff]
      %v7478 = vld [vmem:[#allocation2 + $0xb0] sm:$0xff]
      %v7479 = vld [vmem:[#allocation2 + $0xb8] sm:$0xff]
      %v7480 = vld [vmem:[#allocation2 + $0xc0] sm:$0xff]
      %v7481 = vld [vmem:[#allocation2 + $0xc8] sm:$0xff]
      %v7482 = vld [vmem:[#allocation2 + $0xd0] sm:$0xff]
      %v7483 = vld [vmem:[#allocation2 + $0xd8] sm:$0xff]
      %v7484 = vld [vmem:[#allocation2 + $0xe0] sm:$0xff]
      %v7485 = vld [vmem:[#allocation2 + $0xe8] sm:$0xff]
      %v7486 = vld [vmem:[#allocation2 + $0xf0] sm:$0xff]
      %v7487 = vld [vmem:[#allocation2 + $0xf8] sm:$0xff]
      %v7488 = vld [vmem:[#allocation2 + $0x100] sm:$0xff]
      %v7489 = vld [vmem:[#allocation2 + $0x108] sm:$0xff]
      %v7490 = vld [vmem:[#allocation2 + $0x110] sm:$0xff]
      %v7491 = vld [vmem:[#allocation2 + $0x118] sm:$0xff]
      %v7492 = vld [vmem:[#allocation2 + $0x120] sm:$0xff]
      %v7493 = vld [vmem:[#allocation2 + $0x128] sm:$0xff]
      %v7494 = vld [vmem:[#allocation2 + $0x130] sm:$0xff]
      %v7495 = vld [vmem:[#allocation2 + $0x138] sm:$0xff]
      %v7496 = vld [vmem:[#allocation2 + $0x140] sm:$0xff]
      %v7497 = vld [vmem:[#allocation2 + $0x148] sm:$0xff]
      %v7498 = vld [vmem:[#allocation2 + $0x150] sm:$0xff]
      %v7499 = vld [vmem:[#allocation2 + $0x158] sm:$0xff]
      %v7500 = vld [vmem:[#allocation2 + $0x160] sm:$0xff]
      %v7501 = vld [vmem:[#allocation2 + $0x168] sm:$0xff]
      %v7502 = vld [vmem:[#allocation2 + $0x170] sm:$0xff]
      %v7503 = vld [vmem:[#allocation2 + $0x178] sm:$0xff]
      %v7504 = vld [vmem:[#allocation2 + $0x180] sm:$0xff]
      %v7505 = vld [vmem:[#allocation2 + $0x188] sm:$0xff]
      %v7506 = vld [vmem:[#allocation2 + $0x190] sm:$0xff]
      %v7507 = vld [vmem:[#allocation2 + $0x198] sm:$0xff]
      %v7508 = vld [vmem:[#allocation2 + $0x1a0] sm:$0xff]
      %v7509 = vld [vmem:[#allocation2 + $0x1a8] sm:$0xff]
      %v7510 = vld [vmem:[#allocation2 + $0x1b0] sm:$0xff]
      %v7511 = vld [vmem:[#allocation2 + $0x1b8] sm:$0xff]
      %v7512 = vld [vmem:[#allocation2 + $0x1c0] sm:$0xff]
      %v7513 = vld [vmem:[#allocation2 + $0x1c8] sm:$0xff]
      %v7514 = vld [vmem:[#allocation2 + $0x1d0] sm:$0xff]
      %v7515 = vld [vmem:[#allocation2 + $0x1d8] sm:$0xff]
      %v7516 = vld [vmem:[#allocation2 + $0x1e0] sm:$0xff]
      %v7517 = vld [vmem:[#allocation2 + $0x1e8] sm:$0xff]
      %v7518 = vld [vmem:[#allocation2 + $0x1f0] sm:$0xff]
      %v7519 = vld [vmem:[#allocation2 + $0x1f8] sm:$0xff]
      %v7520 = vld [vmem:[#allocation2 + $0x200] sm:$0xff]
      %v7521 = vld [vmem:[#allocation2 + $0x208] sm:$0xff]
      %v7522 = vld [vmem:[#allocation2 + $0x210] sm:$0xff]
      %v7523 = vld [vmem:[#allocation2 + $0x218] sm:$0xff]
      %v7524 = vld [vmem:[#allocation2 + $0x220] sm:$0xff]
      %v7525 = vld [vmem:[#allocation2 + $0x228] sm:$0xff]
      %v7526 = vld [vmem:[#allocation2 + $0x230] sm:$0xff]
      %v7527 = vld [vmem:[#allocation2 + $0x238] sm:$0xff]
      %v7528 = vld [vmem:[#allocation2 + $0x240] sm:$0xff]
      %v7529 = vld [vmem:[#allocation2 + $0x248] sm:$0xff]
      %v7530 = vld [vmem:[#allocation2 + $0x250] sm:$0xff]
      %v7531 = vld [vmem:[#allocation2 + $0x258] sm:$0xff]
      %v7532 = vld [vmem:[#allocation2 + $0x260] sm:$0xff]
      %v7533 = vld [vmem:[#allocation2 + $0x268] sm:$0xff]
      %v7534 = vld [vmem:[#allocation2 + $0x270] sm:$0xff]
      %v7535 = vld [vmem:[#allocation2 + $0x278] sm:$0xff]
      %v7536 = vld [vmem:[#allocation2 + $0x280] sm:$0xff]
      %v7537 = vld [vmem:[#allocation2 + $0x288] sm:$0xff]
      %v7538 = vld [vmem:[#allocation2 + $0x290] sm:$0xff]
      %v7539 = vld [vmem:[#allocation2 + $0x298] sm:$0xff]
      %v7540 = vld [vmem:[#allocation2 + $0x2a0] sm:$0xff]
      %v7541 = vld [vmem:[#allocation2 + $0x2a8] sm:$0xff]
      %v7542 = vld [vmem:[#allocation2 + $0x2b0] sm:$0xff]
      %v7543 = vld [vmem:[#allocation2 + $0x2b8] sm:$0xff]
      %v7544 = vld [vmem:[#allocation2 + $0x2c0] sm:$0xff]
      %v7545 = vld [vmem:[#allocation2 + $0x2c8] sm:$0xff]
      %v7546 = vld [vmem:[#allocation2 + $0x2d0] sm:$0xff]
      %v7547 = vld [vmem:[#allocation2 + $0x2d8] sm:$0xff]
      %v7548 = vld [vmem:[#allocation2 + $0x2e0] sm:$0xff]
      %v7549 = vld [vmem:[#allocation2 + $0x2e8] sm:$0xff]
      %v7550 = vld [vmem:[#allocation2 + $0x2f0] sm:$0xff]
      %v7551 = vld [vmem:[#allocation2 + $0x2f8] sm:$0xff]
      %v7552 = vld [vmem:[#allocation2 + $0x300] sm:$0xff]
      %v7553 = vld [vmem:[#allocation2 + $0x308] sm:$0xff]
      %v7554 = vld [vmem:[#allocation2 + $0x310] sm:$0xff]
      %v7555 = vld [vmem:[#allocation2 + $0x318] sm:$0xff]
      %v7556 = vld [vmem:[#allocation2 + $0x320] sm:$0xff]
      %v7557 = vld [vmem:[#allocation2 + $0x328] sm:$0xff]
      %v7558 = vld [vmem:[#allocation2 + $0x330] sm:$0xff]
      %v7559 = vld [vmem:[#allocation2 + $0x338] sm:$0xff]
      %v7560 = vld [vmem:[#allocation2 + $0x340] sm:$0xff]
      %v7561 = vld [vmem:[#allocation2 + $0x348] sm:$0xff]
      %v7562 = vld [vmem:[#allocation2 + $0x350] sm:$0xff]
      %v7563 = vld [vmem:[#allocation2 + $0x358] sm:$0xff]
      %v7564 = vld [vmem:[#allocation2 + $0x360] sm:$0xff]
      %v7565 = vld [vmem:[#allocation2 + $0x368] sm:$0xff]
      %v7566 = vld [vmem:[#allocation2 + $0x370] sm:$0xff]
      %v7567 = vld [vmem:[#allocation2 + $0x378] sm:$0xff]
      %v7568 = vld [vmem:[#allocation2 + $0x380] sm:$0xff]
      %v7569 = vld [vmem:[#allocation2 + $0x388] sm:$0xff]
      %v7570 = vld [vmem:[#allocation2 + $0x390] sm:$0xff]
      %v7571 = vld [vmem:[#allocation2 + $0x398] sm:$0xff]
      %v7572 = vld [vmem:[#allocation2 + $0x3a0] sm:$0xff]
      %v7573 = vld [vmem:[#allocation2 + $0x3a8] sm:$0xff]
      %v7574 = vld [vmem:[#allocation2 + $0x3b0] sm:$0xff]
      %v7575 = vld [vmem:[#allocation2 + $0x3b8] sm:$0xff]
      %v7576 = vld [vmem:[#allocation2 + $0x3c0] sm:$0xff]
      %v7577 = vld [vmem:[#allocation2 + $0x3c8] sm:$0xff]
      %v7578 = vld [vmem:[#allocation2 + $0x3d0] sm:$0xff]
      %v7579 = vld [vmem:[#allocation2 + $0x3d8] sm:$0xff]
      %v7580 = vld [vmem:[#allocation2 + $0x3e0] sm:$0xff]
      %v7581 = vld [vmem:[#allocation2 + $0x3e8] sm:$0xff]
      %v7582 = vld [vmem:[#allocation2 + $0x3f0] sm:$0xff]
      %v7583 = vld [vmem:[#allocation2 + $0x3f8] sm:$0xff]
      %v7584 = vld [vmem:[#allocation2 + $0x400] sm:$0xff]
      %v7585 = vld [vmem:[#allocation2 + $0x408] sm:$0xff]
      %v7586 = vld [vmem:[#allocation2 + $0x410] sm:$0xff]
      %v7587 = vld [vmem:[#allocation2 + $0x418] sm:$0xff]
      %v7588 = vld [vmem:[#allocation2 + $0x420] sm:$0xff]
      %v7589 = vld [vmem:[#allocation2 + $0x428] sm:$0xff]
      %v7590 = vld [vmem:[#allocation2 + $0x430] sm:$0xff]
      %v7591 = vld [vmem:[#allocation2 + $0x438] sm:$0xff]
      %v7592 = vld [vmem:[#allocation2 + $0x440] sm:$0xff]
      %v7593 = vld [vmem:[#allocation2 + $0x448] sm:$0xff]
      %v7594 = vld [vmem:[#allocation2 + $0x450] sm:$0xff]
      %v7595 = vld [vmem:[#allocation2 + $0x458] sm:$0xff]
      %v7596 = vld [vmem:[#allocation2 + $0x460] sm:$0xff]
      %v7597 = vld [vmem:[#allocation2 + $0x468] sm:$0xff]
      %v7598 = vld [vmem:[#allocation2 + $0x470] sm:$0xff]
      %v7599 = vld [vmem:[#allocation2 + $0x478] sm:$0xff]
      %s7600 = scalar_lea.vmem %s1, 3456
      %v7601 = vld [vmem:[%s7600] sm:$0xff]
      %v7602 = vld [vmem:[%s7600 + $0x8] sm:$0xf]
      %v7603 = vld [vmem:[%s7600 + $0xc] sm:$0xff]
      %v7604 = vld [vmem:[%s7600 + $0x14] sm:$0xf]
      %v7605 = vld [vmem:[%s7600 + $0x18] sm:$0xff]
      %v7606 = vld [vmem:[%s7600 + $0x20] sm:$0xf]
      %v7607 = vld [vmem:[%s7600 + $0x24] sm:$0xff]
      %v7608 = vld [vmem:[%s7600 + $0x2c] sm:$0xf]
      %v7609 = vld [vmem:[%s7600 + $0x30] sm:$0xff]
      %v7610 = vld [vmem:[%s7600 + $0x38] sm:$0xf]
      %v7611 = vld [vmem:[%s7600 + $0x3c] sm:$0xff]
      %v7612 = vld [vmem:[%s7600 + $0x44] sm:$0xf]
      %v7613 = vld [vmem:[%s7600 + $0x48] sm:$0xff]
      %v7614 = vld [vmem:[%s7600 + $0x50] sm:$0xf]
      %v7615 = vld [vmem:[%s7600 + $0x54] sm:$0xff]
      %v7616 = vld [vmem:[%s7600 + $0x5c] sm:$0xf]
      %v7617 = vld [vmem:[%s7600 + $0x60] sm:$0xff]
      %v7618 = vld [vmem:[%s7600 + $0x68] sm:$0xf]
      %v7619 = vld [vmem:[%s7600 + $0x6c] sm:$0xff]
      %v7620 = vld [vmem:[%s7600 + $0x74] sm:$0xf]
      %v7621 = vld [vmem:[%s7600 + $0x78] sm:$0xff]
      %v7622 = vld [vmem:[%s7600 + $0x80] sm:$0xf]
      %v7623 = vld [vmem:[%s7600 + $0x84] sm:$0xff]
      %v7624 = vld [vmem:[%s7600 + $0x8c] sm:$0xf]
      %v7625 = vld [vmem:[%s7600 + $0x90] sm:$0xff]
      %v7626 = vld [vmem:[%s7600 + $0x98] sm:$0xf]
      %v7627 = vld [vmem:[%s7600 + $0x9c] sm:$0xff]
      %v7628 = vld [vmem:[%s7600 + $0xa4] sm:$0xf]
      %v7629 = vld [vmem:[%s7600 + $0xa8] sm:$0xff]
      %v7630 = vld [vmem:[%s7600 + $0xb0] sm:$0xf]
      %v7631 = vld [vmem:[%s7600 + $0xb4] sm:$0xff]
      %v7632 = vld [vmem:[%s7600 + $0xbc] sm:$0xf]
      %v7633 = vld [vmem:[%s7600 + $0xc0] sm:$0xff]
      %v7634 = vld [vmem:[%s7600 + $0xc8] sm:$0xf]
      %v7635 = vld [vmem:[%s7600 + $0xcc] sm:$0xff]
      %v7636 = vld [vmem:[%s7600 + $0xd4] sm:$0xf]
      %v7637 = vld [vmem:[%s7600 + $0xd8] sm:$0xff]
      %v7638 = vld [vmem:[%s7600 + $0xe0] sm:$0xf]
      %v7639 = vld [vmem:[%s7600 + $0xe4] sm:$0xff]
      %v7640 = vld [vmem:[%s7600 + $0xec] sm:$0xf]
      %v7641 = vld [vmem:[%s7600 + $0xf0] sm:$0xff]
      %v7642 = vld [vmem:[%s7600 + $0xf8] sm:$0xf]
      %v7643 = vld [vmem:[%s7600 + $0xfc] sm:$0xff]
      %v7644 = vld [vmem:[%s7600 + $0x104] sm:$0xf]
      %v7645 = vld [vmem:[%s7600 + $0x108] sm:$0xff]
      %v7646 = vld [vmem:[%s7600 + $0x110] sm:$0xf]
      %v7647 = vld [vmem:[%s7600 + $0x114] sm:$0xff]
      %v7648 = vld [vmem:[%s7600 + $0x11c] sm:$0xf]
      %v7649 = vld [vmem:[%s7600 + $0x120] sm:$0xff]
      %v7650 = vld [vmem:[%s7600 + $0x128] sm:$0xf]
      %v7651 = vld [vmem:[%s7600 + $0x12c] sm:$0xff]
      %v7652 = vld [vmem:[%s7600 + $0x134] sm:$0xf]
      %v7653 = vld [vmem:[%s7600 + $0x138] sm:$0xff]
      %v7654 = vld [vmem:[%s7600 + $0x140] sm:$0xf]
      %v7655 = vld [vmem:[%s7600 + $0x144] sm:$0xff]
      %v7656 = vld [vmem:[%s7600 + $0x14c] sm:$0xf]
      %v7657 = vld [vmem:[%s7600 + $0x150] sm:$0xff]
      %v7658 = vld [vmem:[%s7600 + $0x158] sm:$0xf]
      %v7659 = vld [vmem:[%s7600 + $0x15c] sm:$0xff]
      %v7660 = vld [vmem:[%s7600 + $0x164] sm:$0xf]
      %v7661 = vld [vmem:[%s7600 + $0x168] sm:$0xff]
      %v7662 = vld [vmem:[%s7600 + $0x170] sm:$0xf]
      %v7663 = vld [vmem:[%s7600 + $0x174] sm:$0xff]
      %v7664 = vld [vmem:[%s7600 + $0x17c] sm:$0xf]
      %v7665 = vld [vmem:[%s7600 + $0x180] sm:$0xff]
      %v7666 = vld [vmem:[%s7600 + $0x188] sm:$0xf]
      %v7667 = vld [vmem:[%s7600 + $0x18c] sm:$0xff]
      %v7668 = vld [vmem:[%s7600 + $0x194] sm:$0xf]
      %v7669 = vld [vmem:[%s7600 + $0x198] sm:$0xff]
      %v7670 = vld [vmem:[%s7600 + $0x1a0] sm:$0xf]
      %v7671 = vld [vmem:[%s7600 + $0x1a4] sm:$0xff]
      %v7672 = vld [vmem:[%s7600 + $0x1ac] sm:$0xf]
      %v7673 = vld [vmem:[%s7600 + $0x1b0] sm:$0xff]
      %v7674 = vld [vmem:[%s7600 + $0x1b8] sm:$0xf]
      %v7675 = vld [vmem:[%s7600 + $0x1bc] sm:$0xff]
      %v7676 = vld [vmem:[%s7600 + $0x1c4] sm:$0xf]
      %v7677 = vld [vmem:[%s7600 + $0x1c8] sm:$0xff]
      %v7678 = vld [vmem:[%s7600 + $0x1d0] sm:$0xf]
      %v7679 = vld [vmem:[%s7600 + $0x1d4] sm:$0xff]
      %v7680 = vld [vmem:[%s7600 + $0x1dc] sm:$0xf]
      %v7681 = vld [vmem:[%s7600 + $0x1e0] sm:$0xff]
      %v7682 = vld [vmem:[%s7600 + $0x1e8] sm:$0xf]
      %v7683 = vld [vmem:[%s7600 + $0x1ec] sm:$0xff]
      %v7684 = vld [vmem:[%s7600 + $0x1f4] sm:$0xf]
      %v7685 = vld [vmem:[%s7600 + $0x1f8] sm:$0xff]
      %v7686 = vld [vmem:[%s7600 + $0x200] sm:$0xf]
      %v7687 = vld [vmem:[%s7600 + $0x204] sm:$0xff]
      %v7688 = vld [vmem:[%s7600 + $0x20c] sm:$0xf]
      %v7689 = vld [vmem:[%s7600 + $0x210] sm:$0xff]
      %v7690 = vld [vmem:[%s7600 + $0x218] sm:$0xf]
      %v7691 = vld [vmem:[%s7600 + $0x21c] sm:$0xff]
      %v7692 = vld [vmem:[%s7600 + $0x224] sm:$0xf]
      %v7693 = vld [vmem:[%s7600 + $0x228] sm:$0xff]
      %v7694 = vld [vmem:[%s7600 + $0x230] sm:$0xf]
      %v7695 = vld [vmem:[%s7600 + $0x234] sm:$0xff]
      %v7696 = vld [vmem:[%s7600 + $0x23c] sm:$0xf]
      %v7697 = vld [vmem:[%s7600 + $0x240] sm:$0xff]
      %v7698 = vld [vmem:[%s7600 + $0x248] sm:$0xf]
      %v7699 = vld [vmem:[%s7600 + $0x24c] sm:$0xff]
      %v7700 = vld [vmem:[%s7600 + $0x254] sm:$0xf]
      %v7701 = vld [vmem:[%s7600 + $0x258] sm:$0xff]
      %v7702 = vld [vmem:[%s7600 + $0x260] sm:$0xf]
      %v7703 = vld [vmem:[%s7600 + $0x264] sm:$0xff]
      %v7704 = vld [vmem:[%s7600 + $0x26c] sm:$0xf]
      %v7705 = vld [vmem:[%s7600 + $0x270] sm:$0xff]
      %v7706 = vld [vmem:[%s7600 + $0x278] sm:$0xf]
      %v7707 = vld [vmem:[%s7600 + $0x27c] sm:$0xff]
      %v7708 = vld [vmem:[%s7600 + $0x284] sm:$0xf]
      %v7709 = vld [vmem:[%s7600 + $0x288] sm:$0xff]
      %v7710 = vld [vmem:[%s7600 + $0x290] sm:$0xf]
      %v7711 = vld [vmem:[%s7600 + $0x294] sm:$0xff]
      %v7712 = vld [vmem:[%s7600 + $0x29c] sm:$0xf]
      %v7713 = vld [vmem:[%s7600 + $0x2a0] sm:$0xff]
      %v7714 = vld [vmem:[%s7600 + $0x2a8] sm:$0xf]
      %v7715 = vld [vmem:[%s7600 + $0x2ac] sm:$0xff]
      %v7716 = vld [vmem:[%s7600 + $0x2b4] sm:$0xf]
      %v7717 = vld [vmem:[%s7600 + $0x2b8] sm:$0xff]
      %v7718 = vld [vmem:[%s7600 + $0x2c0] sm:$0xf]
      %v7719 = vld [vmem:[%s7600 + $0x2c4] sm:$0xff]
      %v7720 = vld [vmem:[%s7600 + $0x2cc] sm:$0xf]
      %v7721 = vld [vmem:[%s7600 + $0x2d0] sm:$0xff]
      %v7722 = vld [vmem:[%s7600 + $0x2d8] sm:$0xf]
      %v7723 = vld [vmem:[%s7600 + $0x2dc] sm:$0xff]
      %v7724 = vld [vmem:[%s7600 + $0x2e4] sm:$0xf]
      %v7725 = vld [vmem:[%s7600 + $0x2e8] sm:$0xff]
      %v7726 = vld [vmem:[%s7600 + $0x2f0] sm:$0xf]
      %v7727 = vld [vmem:[%s7600 + $0x2f4] sm:$0xff]
      %v7728 = vld [vmem:[%s7600 + $0x2fc] sm:$0xf]
      %v7729 = vld [vmem:[%s7600 + $0x300] sm:$0xff]
      %v7730 = vld [vmem:[%s7600 + $0x308] sm:$0xf]
      %v7731 = vld [vmem:[%s7600 + $0x30c] sm:$0xff]
      %v7732 = vld [vmem:[%s7600 + $0x314] sm:$0xf]
      %v7733 = vld [vmem:[%s7600 + $0x318] sm:$0xff]
      %v7734 = vld [vmem:[%s7600 + $0x320] sm:$0xf]
      %v7735 = vld [vmem:[%s7600 + $0x324] sm:$0xff]
      %v7736 = vld [vmem:[%s7600 + $0x32c] sm:$0xf]
      %v7737 = vld [vmem:[%s7600 + $0x330] sm:$0xff]
      %v7738 = vld [vmem:[%s7600 + $0x338] sm:$0xf]
      %v7739 = vld [vmem:[%s7600 + $0x33c] sm:$0xff]
      %v7740 = vld [vmem:[%s7600 + $0x344] sm:$0xf]
      %v7741 = vld [vmem:[%s7600 + $0x348] sm:$0xff]
      %v7742 = vld [vmem:[%s7600 + $0x350] sm:$0xf]
      %v7743 = vld [vmem:[%s7600 + $0x354] sm:$0xff]
      %v7744 = vld [vmem:[%s7600 + $0x35c] sm:$0xf]
      %v7745 = vld [vmem:[%s7600 + $0x360] sm:$0xff]
      %v7746 = vld [vmem:[%s7600 + $0x368] sm:$0xf]
      %v7747 = vld [vmem:[%s7600 + $0x36c] sm:$0xff]
      %v7748 = vld [vmem:[%s7600 + $0x374] sm:$0xf]
      %v7749 = vld [vmem:[%s7600 + $0x378] sm:$0xff]
      %v7750 = vld [vmem:[%s7600 + $0x380] sm:$0xf]
      %v7751 = vld [vmem:[%s7600 + $0x384] sm:$0xff]
      %v7752 = vld [vmem:[%s7600 + $0x38c] sm:$0xf]
      %v7753 = vld [vmem:[%s7600 + $0x390] sm:$0xff]
      %v7754 = vld [vmem:[%s7600 + $0x398] sm:$0xf]
      %v7755 = vld [vmem:[%s7600 + $0x39c] sm:$0xff]
      %v7756 = vld [vmem:[%s7600 + $0x3a4] sm:$0xf]
      %v7757 = vld [vmem:[%s7600 + $0x3a8] sm:$0xff]
      %v7758 = vld [vmem:[%s7600 + $0x3b0] sm:$0xf]
      %v7759 = vld [vmem:[%s7600 + $0x3b4] sm:$0xff]
      %v7760 = vld [vmem:[%s7600 + $0x3bc] sm:$0xf]
      %v7761 = vld [vmem:[%s7600 + $0x3c0] sm:$0xff]
      %v7762 = vld [vmem:[%s7600 + $0x3c8] sm:$0xf]
      %v7763 = vld [vmem:[%s7600 + $0x3cc] sm:$0xff]
      %v7764 = vld [vmem:[%s7600 + $0x3d4] sm:$0xf]
      %v7765 = vld [vmem:[%s7600 + $0x3d8] sm:$0xff]
      %v7766 = vld [vmem:[%s7600 + $0x3e0] sm:$0xf]
      %v7767 = vld [vmem:[%s7600 + $0x3e4] sm:$0xff]
      %v7768 = vld [vmem:[%s7600 + $0x3ec] sm:$0xf]
      %v7769 = vld [vmem:[%s7600 + $0x3f0] sm:$0xff]
      %v7770 = vld [vmem:[%s7600 + $0x3f8] sm:$0xf]
      %v7771 = vld [vmem:[%s7600 + $0x3fc] sm:$0xff]
      %v7772 = vld [vmem:[%s7600 + $0x404] sm:$0xf]
      %v7773 = vld [vmem:[%s7600 + $0x408] sm:$0xff]
      %v7774 = vld [vmem:[%s7600 + $0x410] sm:$0xf]
      %v7775 = vld [vmem:[%s7600 + $0x414] sm:$0xff]
      %v7776 = vld [vmem:[%s7600 + $0x41c] sm:$0xf]
      %v7777 = vld [vmem:[%s7600 + $0x420] sm:$0xff]
      %v7778 = vld [vmem:[%s7600 + $0x428] sm:$0xf]
      %v7779 = vld [vmem:[%s7600 + $0x42c] sm:$0xff]
      %v7780 = vld [vmem:[%s7600 + $0x434] sm:$0xf]
      %v7781 = vld [vmem:[%s7600 + $0x438] sm:$0xff]
      %v7782 = vld [vmem:[%s7600 + $0x440] sm:$0xf]
      %v7783 = vld [vmem:[%s7600 + $0x444] sm:$0xff]
      %v7784 = vld [vmem:[%s7600 + $0x44c] sm:$0xf]
      %v7785 = vld [vmem:[%s7600 + $0x450] sm:$0xff]
      %v7786 = vld [vmem:[%s7600 + $0x458] sm:$0xf]
      %v7787 = vld [vmem:[%s7600 + $0x45c] sm:$0xff]
      %v7788 = vld [vmem:[%s7600 + $0x464] sm:$0xf]
      %v7789 = vld [vmem:[%s7600 + $0x468] sm:$0xff]
      %v7790 = vld [vmem:[%s7600 + $0x470] sm:$0xf]
      %v7791 = vld [vmem:[%s7600 + $0x474] sm:$0xff]
      %v7792 = vld [vmem:[%s7600 + $0x47c] sm:$0xf]
      %v7793 = vld [vmem:[%s7600 + $0x480] sm:$0xff]
      %v7794 = vld [vmem:[%s7600 + $0x488] sm:$0xf]
      %v7795 = vld [vmem:[%s7600 + $0x48c] sm:$0xff]
      %v7796 = vld [vmem:[%s7600 + $0x494] sm:$0xf]
      %v7797 = vld [vmem:[%s7600 + $0x498] sm:$0xff]
      %v7798 = vld [vmem:[%s7600 + $0x4a0] sm:$0xf]
      %v7799 = vld [vmem:[%s7600 + $0x4a4] sm:$0xff]
      %v7800 = vld [vmem:[%s7600 + $0x4ac] sm:$0xf]
      %v7801 = vld [vmem:[%s7600 + $0x4b0] sm:$0xff]
      %v7802 = vld [vmem:[%s7600 + $0x4b8] sm:$0xf]
      %v7803 = vld [vmem:[%s7600 + $0x4bc] sm:$0xff]
      %v7804 = vld [vmem:[%s7600 + $0x4c4] sm:$0xf]
      %v7805 = vld [vmem:[%s7600 + $0x4c8] sm:$0xff]
      %v7806 = vld [vmem:[%s7600 + $0x4d0] sm:$0xf]
      %v7807 = vld [vmem:[%s7600 + $0x4d4] sm:$0xff]
      %v7808 = vld [vmem:[%s7600 + $0x4dc] sm:$0xf]
      %v7809 = vld [vmem:[%s7600 + $0x4e0] sm:$0xff]
      %v7810 = vld [vmem:[%s7600 + $0x4e8] sm:$0xf]
      %v7811 = vld [vmem:[%s7600 + $0x4ec] sm:$0xff]
      %v7812 = vld [vmem:[%s7600 + $0x4f4] sm:$0xf]
      %v7813 = vld [vmem:[%s7600 + $0x4f8] sm:$0xff]
      %v7814 = vld [vmem:[%s7600 + $0x500] sm:$0xf]
      %v7815 = vld [vmem:[%s7600 + $0x504] sm:$0xff]
      %v7816 = vld [vmem:[%s7600 + $0x50c] sm:$0xf]
      %v7817 = vld [vmem:[%s7600 + $0x510] sm:$0xff]
      %v7818 = vld [vmem:[%s7600 + $0x518] sm:$0xf]
      %v7819 = vld [vmem:[%s7600 + $0x51c] sm:$0xff]
      %v7820 = vld [vmem:[%s7600 + $0x524] sm:$0xf]
      %v7821 = vld [vmem:[%s7600 + $0x528] sm:$0xff]
      %v7822 = vld [vmem:[%s7600 + $0x530] sm:$0xf]
      %v7823 = vld [vmem:[%s7600 + $0x534] sm:$0xff]
      %v7824 = vld [vmem:[%s7600 + $0x53c] sm:$0xf]
      %v7825 = vld [vmem:[%s7600 + $0x540] sm:$0xff]
      %v7826 = vld [vmem:[%s7600 + $0x548] sm:$0xf]
      %v7827 = vld [vmem:[%s7600 + $0x54c] sm:$0xff]
      %v7828 = vld [vmem:[%s7600 + $0x554] sm:$0xf]
      %v7829 = vld [vmem:[%s7600 + $0x558] sm:$0xff]
      %v7830 = vld [vmem:[%s7600 + $0x560] sm:$0xf]
      %v7831 = vld [vmem:[%s7600 + $0x564] sm:$0xff]
      %v7832 = vld [vmem:[%s7600 + $0x56c] sm:$0xf]
      %v7833 = vld [vmem:[%s7600 + $0x570] sm:$0xff]
      %v7834 = vld [vmem:[%s7600 + $0x578] sm:$0xf]
      %v7835 = vld [vmem:[%s7600 + $0x57c] sm:$0xff]
      %v7836 = vld [vmem:[%s7600 + $0x584] sm:$0xf]
      %v7837 = vld [vmem:[%s7600 + $0x588] sm:$0xff]
      %v7838 = vld [vmem:[%s7600 + $0x590] sm:$0xf]
      %v7839 = vld [vmem:[%s7600 + $0x594] sm:$0xff]
      %v7840 = vld [vmem:[%s7600 + $0x59c] sm:$0xf]
      %v7841 = vld [vmem:[%s7600 + $0x5a0] sm:$0xff]
      %v7842 = vld [vmem:[%s7600 + $0x5a8] sm:$0xf]
      %v7843 = vld [vmem:[%s7600 + $0x5ac] sm:$0xff]
      %v7844 = vld [vmem:[%s7600 + $0x5b4] sm:$0xf]
      %v7845 = vld [vmem:[%s7600 + $0x5b8] sm:$0xff]
      %v7846 = vld [vmem:[%s7600 + $0x5c0] sm:$0xf]
      %v7847 = vld [vmem:[%s7600 + $0x5c4] sm:$0xff]
      %v7848 = vld [vmem:[%s7600 + $0x5cc] sm:$0xf]
      %v7849 = vld [vmem:[%s7600 + $0x5d0] sm:$0xff]
      %v7850 = vld [vmem:[%s7600 + $0x5d8] sm:$0xf]
      %v7851 = vld [vmem:[%s7600 + $0x5dc] sm:$0xff]
      %v7852 = vld [vmem:[%s7600 + $0x5e4] sm:$0xf]
      %v7853 = vld [vmem:[%s7600 + $0x5e8] sm:$0xff]
      %v7854 = vld [vmem:[%s7600 + $0x5f0] sm:$0xf]
      %v7855 = vld [vmem:[%s7600 + $0x5f4] sm:$0xff]
      %v7856 = vld [vmem:[%s7600 + $0x5fc] sm:$0xf]
      %v7857 = vld [vmem:[%s7600 + $0x600] sm:$0xff]
      %v7858 = vld [vmem:[%s7600 + $0x608] sm:$0xf]
      %v7859 = vld [vmem:[%s7600 + $0x60c] sm:$0xff]
      %v7860 = vld [vmem:[%s7600 + $0x614] sm:$0xf]
      %v7861 = vld [vmem:[%s7600 + $0x618] sm:$0xff]
      %v7862 = vld [vmem:[%s7600 + $0x620] sm:$0xf]
      %v7863 = vld [vmem:[%s7600 + $0x624] sm:$0xff]
      %v7864 = vld [vmem:[%s7600 + $0x62c] sm:$0xf]
      %v7865 = vld [vmem:[%s7600 + $0x630] sm:$0xff]
      %v7866 = vld [vmem:[%s7600 + $0x638] sm:$0xf]
      %v7867 = vld [vmem:[%s7600 + $0x63c] sm:$0xff]
      %v7868 = vld [vmem:[%s7600 + $0x644] sm:$0xf]
      %v7869 = vld [vmem:[%s7600 + $0x648] sm:$0xff]
      %v7870 = vld [vmem:[%s7600 + $0x650] sm:$0xf]
      %v7871 = vld [vmem:[%s7600 + $0x654] sm:$0xff]
      %v7872 = vld [vmem:[%s7600 + $0x65c] sm:$0xf]
      %v7873 = vld [vmem:[%s7600 + $0x660] sm:$0xff]
      %v7874 = vld [vmem:[%s7600 + $0x668] sm:$0xf]
      %v7875 = vld [vmem:[%s7600 + $0x66c] sm:$0xff]
      %v7876 = vld [vmem:[%s7600 + $0x674] sm:$0xf]
      %v7877 = vld [vmem:[%s7600 + $0x678] sm:$0xff]
      %v7878 = vld [vmem:[%s7600 + $0x680] sm:$0xf]
      %v7879 = vld [vmem:[%s7600 + $0x684] sm:$0xff]
      %v7880 = vld [vmem:[%s7600 + $0x68c] sm:$0xf]
      %v7881 = vld [vmem:[%s7600 + $0x690] sm:$0xff]
      %v7882 = vld [vmem:[%s7600 + $0x698] sm:$0xf]
      %v7883 = vld [vmem:[%s7600 + $0x69c] sm:$0xff]
      %v7884 = vld [vmem:[%s7600 + $0x6a4] sm:$0xf]
      %v7885 = vld [vmem:[%s7600 + $0x6a8] sm:$0xff]
      %v7886 = vld [vmem:[%s7600 + $0x6b0] sm:$0xf]
      %v7887 = vld [vmem:[%s7600 + $0x6b4] sm:$0xff]
      %v7888 = vld [vmem:[%s7600 + $0x6bc] sm:$0xf]
      %v8177 = vunpack.c.l.b16 %v7601
      %v8178 = vunpack.c.h.b16 %v7601
      %v8179 = vunpack.c.l.b16 %v7602
      %v8180 = vunpack.c.l.b16 %v7603
      %v8181 = vunpack.c.h.b16 %v7603
      %v8182 = vunpack.c.l.b16 %v7604
      %v8183 = vunpack.c.l.b16 %v7605
      %v8184 = vunpack.c.h.b16 %v7605
      %v8185 = vunpack.c.l.b16 %v7606
      %v8186 = vunpack.c.l.b16 %v7607
      %v8187 = vunpack.c.h.b16 %v7607
      %v8188 = vunpack.c.l.b16 %v7608
      %v8189 = vunpack.c.l.b16 %v7609
      %v8190 = vunpack.c.h.b16 %v7609
      %v8191 = vunpack.c.l.b16 %v7610
      %v8192 = vunpack.c.l.b16 %v7611
      %v8193 = vunpack.c.h.b16 %v7611
      %v8194 = vunpack.c.l.b16 %v7612
      %v8195 = vunpack.c.l.b16 %v7613
      %v8196 = vunpack.c.h.b16 %v7613
      %v8197 = vunpack.c.l.b16 %v7614
      %v8198 = vunpack.c.l.b16 %v7615
      %v8199 = vunpack.c.h.b16 %v7615
      %v8200 = vunpack.c.l.b16 %v7616
      %v8201 = vunpack.c.l.b16 %v7617
      %v8202 = vunpack.c.h.b16 %v7617
      %v8203 = vunpack.c.l.b16 %v7618
      %v8204 = vunpack.c.l.b16 %v7619
      %v8205 = vunpack.c.h.b16 %v7619
      %v8206 = vunpack.c.l.b16 %v7620
      %v8207 = vunpack.c.l.b16 %v7621
      %v8208 = vunpack.c.h.b16 %v7621
      %v8209 = vunpack.c.l.b16 %v7622
      %v8210 = vunpack.c.l.b16 %v7623
      %v8211 = vunpack.c.h.b16 %v7623
      %v8212 = vunpack.c.l.b16 %v7624
      %v8213 = vunpack.c.l.b16 %v7625
      %v8214 = vunpack.c.h.b16 %v7625
      %v8215 = vunpack.c.l.b16 %v7626
      %v8216 = vunpack.c.l.b16 %v7627
      %v8217 = vunpack.c.h.b16 %v7627
      %v8218 = vunpack.c.l.b16 %v7628
      %v8219 = vunpack.c.l.b16 %v7629
      %v8220 = vunpack.c.h.b16 %v7629
      %v8221 = vunpack.c.l.b16 %v7630
      %v8222 = vunpack.c.l.b16 %v7631
      %v8223 = vunpack.c.h.b16 %v7631
      %v8224 = vunpack.c.l.b16 %v7632
      %v8225 = vunpack.c.l.b16 %v7633
      %v8226 = vunpack.c.h.b16 %v7633
      %v8227 = vunpack.c.l.b16 %v7634
      %v8228 = vunpack.c.l.b16 %v7635
      %v8229 = vunpack.c.h.b16 %v7635
      %v8230 = vunpack.c.l.b16 %v7636
      %v8231 = vunpack.c.l.b16 %v7637
      %v8232 = vunpack.c.h.b16 %v7637
      %v8233 = vunpack.c.l.b16 %v7638
      %v8234 = vunpack.c.l.b16 %v7639
      %v8235 = vunpack.c.h.b16 %v7639
      %v8236 = vunpack.c.l.b16 %v7640
      %v8237 = vunpack.c.l.b16 %v7641
      %v8238 = vunpack.c.h.b16 %v7641
      %v8239 = vunpack.c.l.b16 %v7642
      %v8240 = vunpack.c.l.b16 %v7643
      %v8241 = vunpack.c.h.b16 %v7643
      %v8242 = vunpack.c.l.b16 %v7644
      %v8243 = vunpack.c.l.b16 %v7645
      %v8244 = vunpack.c.h.b16 %v7645
      %v8245 = vunpack.c.l.b16 %v7646
      %v8246 = vunpack.c.l.b16 %v7647
      %v8247 = vunpack.c.h.b16 %v7647
      %v8248 = vunpack.c.l.b16 %v7648
      %v8249 = vunpack.c.l.b16 %v7649
      %v8250 = vunpack.c.h.b16 %v7649
      %v8251 = vunpack.c.l.b16 %v7650
      %v8252 = vunpack.c.l.b16 %v7651
      %v8253 = vunpack.c.h.b16 %v7651
      %v8254 = vunpack.c.l.b16 %v7652
      %v8255 = vunpack.c.l.b16 %v7653
      %v8256 = vunpack.c.h.b16 %v7653
      %v8257 = vunpack.c.l.b16 %v7654
      %v8258 = vunpack.c.l.b16 %v7655
      %v8259 = vunpack.c.h.b16 %v7655
      %v8260 = vunpack.c.l.b16 %v7656
      %v8261 = vunpack.c.l.b16 %v7657
      %v8262 = vunpack.c.h.b16 %v7657
      %v8263 = vunpack.c.l.b16 %v7658
      %v8264 = vunpack.c.l.b16 %v7659
      %v8265 = vunpack.c.h.b16 %v7659
      %v8266 = vunpack.c.l.b16 %v7660
      %v8267 = vunpack.c.l.b16 %v7661
      %v8268 = vunpack.c.h.b16 %v7661
      %v8269 = vunpack.c.l.b16 %v7662
      %v8270 = vunpack.c.l.b16 %v7663
      %v8271 = vunpack.c.h.b16 %v7663
      %v8272 = vunpack.c.l.b16 %v7664
      %v8273 = vunpack.c.l.b16 %v7665
      %v8274 = vunpack.c.h.b16 %v7665
      %v8275 = vunpack.c.l.b16 %v7666
      %v8276 = vunpack.c.l.b16 %v7667
      %v8277 = vunpack.c.h.b16 %v7667
      %v8278 = vunpack.c.l.b16 %v7668
      %v8279 = vunpack.c.l.b16 %v7669
      %v8280 = vunpack.c.h.b16 %v7669
      %v8281 = vunpack.c.l.b16 %v7670
      %v8282 = vunpack.c.l.b16 %v7671
      %v8283 = vunpack.c.h.b16 %v7671
      %v8284 = vunpack.c.l.b16 %v7672
      %v8285 = vunpack.c.l.b16 %v7673
      %v8286 = vunpack.c.h.b16 %v7673
      %v8287 = vunpack.c.l.b16 %v7674
      %v8288 = vunpack.c.l.b16 %v7675
      %v8289 = vunpack.c.h.b16 %v7675
      %v8290 = vunpack.c.l.b16 %v7676
      %v8291 = vunpack.c.l.b16 %v7677
      %v8292 = vunpack.c.h.b16 %v7677
      %v8293 = vunpack.c.l.b16 %v7678
      %v8294 = vunpack.c.l.b16 %v7679
      %v8295 = vunpack.c.h.b16 %v7679
      %v8296 = vunpack.c.l.b16 %v7680
      %v8297 = vunpack.c.l.b16 %v7681
      %v8298 = vunpack.c.h.b16 %v7681
      %v8299 = vunpack.c.l.b16 %v7682
      %v8300 = vunpack.c.l.b16 %v7683
      %v8301 = vunpack.c.h.b16 %v7683
      %v8302 = vunpack.c.l.b16 %v7684
      %v8303 = vunpack.c.l.b16 %v7685
      %v8304 = vunpack.c.h.b16 %v7685
      %v8305 = vunpack.c.l.b16 %v7686
      %v8306 = vunpack.c.l.b16 %v7687
      %v8307 = vunpack.c.h.b16 %v7687
      %v8308 = vunpack.c.l.b16 %v7688
      %v8309 = vunpack.c.l.b16 %v7689
      %v8310 = vunpack.c.h.b16 %v7689
      %v8311 = vunpack.c.l.b16 %v7690
      %v8312 = vunpack.c.l.b16 %v7691
      %v8313 = vunpack.c.h.b16 %v7691
      %v8314 = vunpack.c.l.b16 %v7692
      %v8315 = vunpack.c.l.b16 %v7693
      %v8316 = vunpack.c.h.b16 %v7693
      %v8317 = vunpack.c.l.b16 %v7694
      %v8318 = vunpack.c.l.b16 %v7695
      %v8319 = vunpack.c.h.b16 %v7695
      %v8320 = vunpack.c.l.b16 %v7696
      %v8321 = vunpack.c.l.b16 %v7697
      %v8322 = vunpack.c.h.b16 %v7697
      %v8323 = vunpack.c.l.b16 %v7698
      %v8324 = vunpack.c.l.b16 %v7699
      %v8325 = vunpack.c.h.b16 %v7699
      %v8326 = vunpack.c.l.b16 %v7700
      %v8327 = vunpack.c.l.b16 %v7701
      %v8328 = vunpack.c.h.b16 %v7701
      %v8329 = vunpack.c.l.b16 %v7702
      %v8330 = vunpack.c.l.b16 %v7703
      %v8331 = vunpack.c.h.b16 %v7703
      %v8332 = vunpack.c.l.b16 %v7704
      %v8333 = vunpack.c.l.b16 %v7705
      %v8334 = vunpack.c.h.b16 %v7705
      %v8335 = vunpack.c.l.b16 %v7706
      %v8336 = vunpack.c.l.b16 %v7707
      %v8337 = vunpack.c.h.b16 %v7707
      %v8338 = vunpack.c.l.b16 %v7708
      %v8339 = vunpack.c.l.b16 %v7709
      %v8340 = vunpack.c.h.b16 %v7709
      %v8341 = vunpack.c.l.b16 %v7710
      %v8342 = vunpack.c.l.b16 %v7711
      %v8343 = vunpack.c.h.b16 %v7711
      %v8344 = vunpack.c.l.b16 %v7712
      %v8345 = vunpack.c.l.b16 %v7713
      %v8346 = vunpack.c.h.b16 %v7713
      %v8347 = vunpack.c.l.b16 %v7714
      %v8348 = vunpack.c.l.b16 %v7715
      %v8349 = vunpack.c.h.b16 %v7715
      %v8350 = vunpack.c.l.b16 %v7716
      %v8351 = vunpack.c.l.b16 %v7717
      %v8352 = vunpack.c.h.b16 %v7717
      %v8353 = vunpack.c.l.b16 %v7718
      %v8354 = vunpack.c.l.b16 %v7719
      %v8355 = vunpack.c.h.b16 %v7719
      %v8356 = vunpack.c.l.b16 %v7720
      %v8357 = vunpack.c.l.b16 %v7721
      %v8358 = vunpack.c.h.b16 %v7721
      %v8359 = vunpack.c.l.b16 %v7722
      %v8360 = vunpack.c.l.b16 %v7723
      %v8361 = vunpack.c.h.b16 %v7723
      %v8362 = vunpack.c.l.b16 %v7724
      %v8363 = vunpack.c.l.b16 %v7725
      %v8364 = vunpack.c.h.b16 %v7725
      %v8365 = vunpack.c.l.b16 %v7726
      %v8366 = vunpack.c.l.b16 %v7727
      %v8367 = vunpack.c.h.b16 %v7727
      %v8368 = vunpack.c.l.b16 %v7728
      %v8369 = vunpack.c.l.b16 %v7729
      %v8370 = vunpack.c.h.b16 %v7729
      %v8371 = vunpack.c.l.b16 %v7730
      %v8372 = vunpack.c.l.b16 %v7731
      %v8373 = vunpack.c.h.b16 %v7731
      %v8374 = vunpack.c.l.b16 %v7732
      %v8375 = vunpack.c.l.b16 %v7733
      %v8376 = vunpack.c.h.b16 %v7733
      %v8377 = vunpack.c.l.b16 %v7734
      %v8378 = vunpack.c.l.b16 %v7735
      %v8379 = vunpack.c.h.b16 %v7735
      %v8380 = vunpack.c.l.b16 %v7736
      %v8381 = vunpack.c.l.b16 %v7737
      %v8382 = vunpack.c.h.b16 %v7737
      %v8383 = vunpack.c.l.b16 %v7738
      %v8384 = vunpack.c.l.b16 %v7739
      %v8385 = vunpack.c.h.b16 %v7739
      %v8386 = vunpack.c.l.b16 %v7740
      %v8387 = vunpack.c.l.b16 %v7741
      %v8388 = vunpack.c.h.b16 %v7741
      %v8389 = vunpack.c.l.b16 %v7742
      %v8390 = vunpack.c.l.b16 %v7743
      %v8391 = vunpack.c.h.b16 %v7743
      %v8392 = vunpack.c.l.b16 %v7744
      %v8393 = vunpack.c.l.b16 %v7745
      %v8394 = vunpack.c.h.b16 %v7745
      %v8395 = vunpack.c.l.b16 %v7746
      %v8396 = vunpack.c.l.b16 %v7747
      %v8397 = vunpack.c.h.b16 %v7747
      %v8398 = vunpack.c.l.b16 %v7748
      %v8399 = vunpack.c.l.b16 %v7749
      %v8400 = vunpack.c.h.b16 %v7749
      %v8401 = vunpack.c.l.b16 %v7750
      %v8402 = vunpack.c.l.b16 %v7751
      %v8403 = vunpack.c.h.b16 %v7751
      %v8404 = vunpack.c.l.b16 %v7752
      %v8405 = vunpack.c.l.b16 %v7753
      %v8406 = vunpack.c.h.b16 %v7753
      %v8407 = vunpack.c.l.b16 %v7754
      %v8408 = vunpack.c.l.b16 %v7755
      %v8409 = vunpack.c.h.b16 %v7755
      %v8410 = vunpack.c.l.b16 %v7756
      %v8411 = vunpack.c.l.b16 %v7757
      %v8412 = vunpack.c.h.b16 %v7757
      %v8413 = vunpack.c.l.b16 %v7758
      %v8414 = vunpack.c.l.b16 %v7759
      %v8415 = vunpack.c.h.b16 %v7759
      %v8416 = vunpack.c.l.b16 %v7760
      %v8417 = vunpack.c.l.b16 %v7761
      %v8418 = vunpack.c.h.b16 %v7761
      %v8419 = vunpack.c.l.b16 %v7762
      %v8420 = vunpack.c.l.b16 %v7763
      %v8421 = vunpack.c.h.b16 %v7763
      %v8422 = vunpack.c.l.b16 %v7764
      %v8423 = vunpack.c.l.b16 %v7765
      %v8424 = vunpack.c.h.b16 %v7765
      %v8425 = vunpack.c.l.b16 %v7766
      %v8426 = vunpack.c.l.b16 %v7767
      %v8427 = vunpack.c.h.b16 %v7767
      %v8428 = vunpack.c.l.b16 %v7768
      %v8429 = vunpack.c.l.b16 %v7769
      %v8430 = vunpack.c.h.b16 %v7769
      %v8431 = vunpack.c.l.b16 %v7770
      %v8432 = vunpack.c.l.b16 %v7771
      %v8433 = vunpack.c.h.b16 %v7771
      %v8434 = vunpack.c.l.b16 %v7772
      %v8435 = vunpack.c.l.b16 %v7773
      %v8436 = vunpack.c.h.b16 %v7773
      %v8437 = vunpack.c.l.b16 %v7774
      %v8438 = vunpack.c.l.b16 %v7775
      %v8439 = vunpack.c.h.b16 %v7775
      %v8440 = vunpack.c.l.b16 %v7776
      %v8441 = vunpack.c.l.b16 %v7777
      %v8442 = vunpack.c.h.b16 %v7777
      %v8443 = vunpack.c.l.b16 %v7778
      %v8444 = vunpack.c.l.b16 %v7779
      %v8445 = vunpack.c.h.b16 %v7779
      %v8446 = vunpack.c.l.b16 %v7780
      %v8447 = vunpack.c.l.b16 %v7781
      %v8448 = vunpack.c.h.b16 %v7781
      %v8449 = vunpack.c.l.b16 %v7782
      %v8450 = vunpack.c.l.b16 %v7783
      %v8451 = vunpack.c.h.b16 %v7783
      %v8452 = vunpack.c.l.b16 %v7784
      %v8453 = vunpack.c.l.b16 %v7785
      %v8454 = vunpack.c.h.b16 %v7785
      %v8455 = vunpack.c.l.b16 %v7786
      %v8456 = vunpack.c.l.b16 %v7787
      %v8457 = vunpack.c.h.b16 %v7787
      %v8458 = vunpack.c.l.b16 %v7788
      %v8459 = vunpack.c.l.b16 %v7789
      %v8460 = vunpack.c.h.b16 %v7789
      %v8461 = vunpack.c.l.b16 %v7790
      %v8462 = vunpack.c.l.b16 %v7791
      %v8463 = vunpack.c.h.b16 %v7791
      %v8464 = vunpack.c.l.b16 %v7792
      %v8465 = vunpack.c.l.b16 %v7793
      %v8466 = vunpack.c.h.b16 %v7793
      %v8467 = vunpack.c.l.b16 %v7794
      %v8468 = vunpack.c.l.b16 %v7795
      %v8469 = vunpack.c.h.b16 %v7795
      %v8470 = vunpack.c.l.b16 %v7796
      %v8471 = vunpack.c.l.b16 %v7797
      %v8472 = vunpack.c.h.b16 %v7797
      %v8473 = vunpack.c.l.b16 %v7798
      %v8474 = vunpack.c.l.b16 %v7799
      %v8475 = vunpack.c.h.b16 %v7799
      %v8476 = vunpack.c.l.b16 %v7800
      %v8477 = vunpack.c.l.b16 %v7801
      %v8478 = vunpack.c.h.b16 %v7801
      %v8479 = vunpack.c.l.b16 %v7802
      %v8480 = vunpack.c.l.b16 %v7803
      %v8481 = vunpack.c.h.b16 %v7803
      %v8482 = vunpack.c.l.b16 %v7804
      %v8483 = vunpack.c.l.b16 %v7805
      %v8484 = vunpack.c.h.b16 %v7805
      %v8485 = vunpack.c.l.b16 %v7806
      %v8486 = vunpack.c.l.b16 %v7807
      %v8487 = vunpack.c.h.b16 %v7807
      %v8488 = vunpack.c.l.b16 %v7808
      %v8489 = vunpack.c.l.b16 %v7809
      %v8490 = vunpack.c.h.b16 %v7809
      %v8491 = vunpack.c.l.b16 %v7810
      %v8492 = vunpack.c.l.b16 %v7811
      %v8493 = vunpack.c.h.b16 %v7811
      %v8494 = vunpack.c.l.b16 %v7812
      %v8495 = vunpack.c.l.b16 %v7813
      %v8496 = vunpack.c.h.b16 %v7813
      %v8497 = vunpack.c.l.b16 %v7814
      %v8498 = vunpack.c.l.b16 %v7815
      %v8499 = vunpack.c.h.b16 %v7815
      %v8500 = vunpack.c.l.b16 %v7816
      %v8501 = vunpack.c.l.b16 %v7817
      %v8502 = vunpack.c.h.b16 %v7817
      %v8503 = vunpack.c.l.b16 %v7818
      %v8504 = vunpack.c.l.b16 %v7819
      %v8505 = vunpack.c.h.b16 %v7819
      %v8506 = vunpack.c.l.b16 %v7820
      %v8507 = vunpack.c.l.b16 %v7821
      %v8508 = vunpack.c.h.b16 %v7821
      %v8509 = vunpack.c.l.b16 %v7822
      %v8510 = vunpack.c.l.b16 %v7823
      %v8511 = vunpack.c.h.b16 %v7823
      %v8512 = vunpack.c.l.b16 %v7824
      %v8513 = vunpack.c.l.b16 %v7825
      %v8514 = vunpack.c.h.b16 %v7825
      %v8515 = vunpack.c.l.b16 %v7826
      %v8516 = vunpack.c.l.b16 %v7827
      %v8517 = vunpack.c.h.b16 %v7827
      %v8518 = vunpack.c.l.b16 %v7828
      %v8519 = vunpack.c.l.b16 %v7829
      %v8520 = vunpack.c.h.b16 %v7829
      %v8521 = vunpack.c.l.b16 %v7830
      %v8522 = vunpack.c.l.b16 %v7831
      %v8523 = vunpack.c.h.b16 %v7831
      %v8524 = vunpack.c.l.b16 %v7832
      %v8525 = vunpack.c.l.b16 %v7833
      %v8526 = vunpack.c.h.b16 %v7833
      %v8527 = vunpack.c.l.b16 %v7834
      %v8528 = vunpack.c.l.b16 %v7835
      %v8529 = vunpack.c.h.b16 %v7835
      %v8530 = vunpack.c.l.b16 %v7836
      %v8531 = vunpack.c.l.b16 %v7837
      %v8532 = vunpack.c.h.b16 %v7837
      %v8533 = vunpack.c.l.b16 %v7838
      %v8534 = vunpack.c.l.b16 %v7839
      %v8535 = vunpack.c.h.b16 %v7839
      %v8536 = vunpack.c.l.b16 %v7840
      %v8537 = vunpack.c.l.b16 %v7841
      %v8538 = vunpack.c.h.b16 %v7841
      %v8539 = vunpack.c.l.b16 %v7842
      %v8540 = vunpack.c.l.b16 %v7843
      %v8541 = vunpack.c.h.b16 %v7843
      %v8542 = vunpack.c.l.b16 %v7844
      %v8543 = vunpack.c.l.b16 %v7845
      %v8544 = vunpack.c.h.b16 %v7845
      %v8545 = vunpack.c.l.b16 %v7846
      %v8546 = vunpack.c.l.b16 %v7847
      %v8547 = vunpack.c.h.b16 %v7847
      %v8548 = vunpack.c.l.b16 %v7848
      %v8549 = vunpack.c.l.b16 %v7849
      %v8550 = vunpack.c.h.b16 %v7849
      %v8551 = vunpack.c.l.b16 %v7850
      %v8552 = vunpack.c.l.b16 %v7851
      %v8553 = vunpack.c.h.b16 %v7851
      %v8554 = vunpack.c.l.b16 %v7852
      %v8555 = vunpack.c.l.b16 %v7853
      %v8556 = vunpack.c.h.b16 %v7853
      %v8557 = vunpack.c.l.b16 %v7854
      %v8558 = vunpack.c.l.b16 %v7855
      %v8559 = vunpack.c.h.b16 %v7855
      %v8560 = vunpack.c.l.b16 %v7856
      %v8561 = vunpack.c.l.b16 %v7857
      %v8562 = vunpack.c.h.b16 %v7857
      %v8563 = vunpack.c.l.b16 %v7858
      %v8564 = vunpack.c.l.b16 %v7859
      %v8565 = vunpack.c.h.b16 %v7859
      %v8566 = vunpack.c.l.b16 %v7860
      %v8567 = vunpack.c.l.b16 %v7861
      %v8568 = vunpack.c.h.b16 %v7861
      %v8569 = vunpack.c.l.b16 %v7862
      %v8570 = vunpack.c.l.b16 %v7863
      %v8571 = vunpack.c.h.b16 %v7863
      %v8572 = vunpack.c.l.b16 %v7864
      %v8573 = vunpack.c.l.b16 %v7865
      %v8574 = vunpack.c.h.b16 %v7865
      %v8575 = vunpack.c.l.b16 %v7866
      %v8576 = vunpack.c.l.b16 %v7867
      %v8577 = vunpack.c.h.b16 %v7867
      %v8578 = vunpack.c.l.b16 %v7868
      %v8579 = vunpack.c.l.b16 %v7869
      %v8580 = vunpack.c.h.b16 %v7869
      %v8581 = vunpack.c.l.b16 %v7870
      %v8582 = vunpack.c.l.b16 %v7871
      %v8583 = vunpack.c.h.b16 %v7871
      %v8584 = vunpack.c.l.b16 %v7872
      %v8585 = vunpack.c.l.b16 %v7873
      %v8586 = vunpack.c.h.b16 %v7873
      %v8587 = vunpack.c.l.b16 %v7874
      %v8588 = vunpack.c.l.b16 %v7875
      %v8589 = vunpack.c.h.b16 %v7875
      %v8590 = vunpack.c.l.b16 %v7876
      %v8591 = vunpack.c.l.b16 %v7877
      %v8592 = vunpack.c.h.b16 %v7877
      %v8593 = vunpack.c.l.b16 %v7878
      %v8594 = vunpack.c.l.b16 %v7879
      %v8595 = vunpack.c.h.b16 %v7879
      %v8596 = vunpack.c.l.b16 %v7880
      %v8597 = vunpack.c.l.b16 %v7881
      %v8598 = vunpack.c.h.b16 %v7881
      %v8599 = vunpack.c.l.b16 %v7882
      %v8600 = vunpack.c.l.b16 %v7883
      %v8601 = vunpack.c.h.b16 %v7883
      %v8602 = vunpack.c.l.b16 %v7884
      %v8603 = vunpack.c.l.b16 %v7885
      %v8604 = vunpack.c.h.b16 %v7885
      %v8605 = vunpack.c.l.b16 %v7886
      %v8606 = vunpack.c.l.b16 %v7887
      %v8607 = vunpack.c.h.b16 %v7887
      %v8608 = vunpack.c.l.b16 %v7888
      %v8609 = vpack.c.b16 %v8180, %v8177
      %v8610 = vpack.c.b16 %v8181, %v8178
      %v8611 = vpack.c.b16 %v8182, %v8179
      %v8612 = vpack.c.b16 %v8186, %v8183
      %v8613 = vpack.c.b16 %v8187, %v8184
      %v8614 = vpack.c.b16 %v8188, %v8185
      %v8615 = vpack.c.b16 %v8192, %v8189
      %v8616 = vpack.c.b16 %v8193, %v8190
      %v8617 = vpack.c.b16 %v8194, %v8191
      %v8618 = vpack.c.b16 %v8198, %v8195
      %v8619 = vpack.c.b16 %v8199, %v8196
      %v8620 = vpack.c.b16 %v8200, %v8197
      %v8621 = vpack.c.b16 %v8204, %v8201
      %v8622 = vpack.c.b16 %v8205, %v8202
      %v8623 = vpack.c.b16 %v8206, %v8203
      %v8624 = vpack.c.b16 %v8210, %v8207
      %v8625 = vpack.c.b16 %v8211, %v8208
      %v8626 = vpack.c.b16 %v8212, %v8209
      %v8627 = vpack.c.b16 %v8216, %v8213
      %v8628 = vpack.c.b16 %v8217, %v8214
      %v8629 = vpack.c.b16 %v8218, %v8215
      %v8630 = vpack.c.b16 %v8222, %v8219
      %v8631 = vpack.c.b16 %v8223, %v8220
      %v8632 = vpack.c.b16 %v8224, %v8221
      %v8633 = vpack.c.b16 %v8228, %v8225
      %v8634 = vpack.c.b16 %v8229, %v8226
      %v8635 = vpack.c.b16 %v8230, %v8227
      %v8636 = vpack.c.b16 %v8234, %v8231
      %v8637 = vpack.c.b16 %v8235, %v8232
      %v8638 = vpack.c.b16 %v8236, %v8233
      %v8639 = vpack.c.b16 %v8240, %v8237
      %v8640 = vpack.c.b16 %v8241, %v8238
      %v8641 = vpack.c.b16 %v8242, %v8239
      %v8642 = vpack.c.b16 %v8246, %v8243
      %v8643 = vpack.c.b16 %v8247, %v8244
      %v8644 = vpack.c.b16 %v8248, %v8245
      %v8645 = vpack.c.b16 %v8252, %v8249
      %v8646 = vpack.c.b16 %v8253, %v8250
      %v8647 = vpack.c.b16 %v8254, %v8251
      %v8648 = vpack.c.b16 %v8258, %v8255
      %v8649 = vpack.c.b16 %v8259, %v8256
      %v8650 = vpack.c.b16 %v8260, %v8257
      %v8651 = vpack.c.b16 %v8264, %v8261
      %v8652 = vpack.c.b16 %v8265, %v8262
      %v8653 = vpack.c.b16 %v8266, %v8263
      %v8654 = vpack.c.b16 %v8270, %v8267
      %v8655 = vpack.c.b16 %v8271, %v8268
      %v8656 = vpack.c.b16 %v8272, %v8269
      %v8657 = vpack.c.b16 %v8276, %v8273
      %v8658 = vpack.c.b16 %v8277, %v8274
      %v8659 = vpack.c.b16 %v8278, %v8275
      %v8660 = vpack.c.b16 %v8282, %v8279
      %v8661 = vpack.c.b16 %v8283, %v8280
      %v8662 = vpack.c.b16 %v8284, %v8281
      %v8663 = vpack.c.b16 %v8288, %v8285
      %v8664 = vpack.c.b16 %v8289, %v8286
      %v8665 = vpack.c.b16 %v8290, %v8287
      %v8666 = vpack.c.b16 %v8294, %v8291
      %v8667 = vpack.c.b16 %v8295, %v8292
      %v8668 = vpack.c.b16 %v8296, %v8293
      %v8669 = vpack.c.b16 %v8300, %v8297
      %v8670 = vpack.c.b16 %v8301, %v8298
      %v8671 = vpack.c.b16 %v8302, %v8299
      %v8672 = vpack.c.b16 %v8306, %v8303
      %v8673 = vpack.c.b16 %v8307, %v8304
      %v8674 = vpack.c.b16 %v8308, %v8305
      %v8675 = vpack.c.b16 %v8312, %v8309
      %v8676 = vpack.c.b16 %v8313, %v8310
      %v8677 = vpack.c.b16 %v8314, %v8311
      %v8678 = vpack.c.b16 %v8318, %v8315
      %v8679 = vpack.c.b16 %v8319, %v8316
      %v8680 = vpack.c.b16 %v8320, %v8317
      %v8681 = vpack.c.b16 %v8324, %v8321
      %v8682 = vpack.c.b16 %v8325, %v8322
      %v8683 = vpack.c.b16 %v8326, %v8323
      %v8684 = vpack.c.b16 %v8330, %v8327
      %v8685 = vpack.c.b16 %v8331, %v8328
      %v8686 = vpack.c.b16 %v8332, %v8329
      %v8687 = vpack.c.b16 %v8336, %v8333
      %v8688 = vpack.c.b16 %v8337, %v8334
      %v8689 = vpack.c.b16 %v8338, %v8335
      %v8690 = vpack.c.b16 %v8342, %v8339
      %v8691 = vpack.c.b16 %v8343, %v8340
      %v8692 = vpack.c.b16 %v8344, %v8341
      %v8693 = vpack.c.b16 %v8348, %v8345
      %v8694 = vpack.c.b16 %v8349, %v8346
      %v8695 = vpack.c.b16 %v8350, %v8347
      %v8696 = vpack.c.b16 %v8354, %v8351
      %v8697 = vpack.c.b16 %v8355, %v8352
      %v8698 = vpack.c.b16 %v8356, %v8353
      %v8699 = vpack.c.b16 %v8360, %v8357
      %v8700 = vpack.c.b16 %v8361, %v8358
      %v8701 = vpack.c.b16 %v8362, %v8359
      %v8702 = vpack.c.b16 %v8366, %v8363
      %v8703 = vpack.c.b16 %v8367, %v8364
      %v8704 = vpack.c.b16 %v8368, %v8365
      %v8705 = vpack.c.b16 %v8372, %v8369
      %v8706 = vpack.c.b16 %v8373, %v8370
      %v8707 = vpack.c.b16 %v8374, %v8371
      %v8708 = vpack.c.b16 %v8378, %v8375
      %v8709 = vpack.c.b16 %v8379, %v8376
      %v8710 = vpack.c.b16 %v8380, %v8377
      %v8711 = vpack.c.b16 %v8384, %v8381
      %v8712 = vpack.c.b16 %v8385, %v8382
      %v8713 = vpack.c.b16 %v8386, %v8383
      %v8714 = vpack.c.b16 %v8390, %v8387
      %v8715 = vpack.c.b16 %v8391, %v8388
      %v8716 = vpack.c.b16 %v8392, %v8389
      %v8717 = vpack.c.b16 %v8396, %v8393
      %v8718 = vpack.c.b16 %v8397, %v8394
      %v8719 = vpack.c.b16 %v8398, %v8395
      %v8720 = vpack.c.b16 %v8402, %v8399
      %v8721 = vpack.c.b16 %v8403, %v8400
      %v8722 = vpack.c.b16 %v8404, %v8401
      %v8723 = vpack.c.b16 %v8408, %v8405
      %v8724 = vpack.c.b16 %v8409, %v8406
      %v8725 = vpack.c.b16 %v8410, %v8407
      %v8726 = vpack.c.b16 %v8414, %v8411
      %v8727 = vpack.c.b16 %v8415, %v8412
      %v8728 = vpack.c.b16 %v8416, %v8413
      %v8729 = vpack.c.b16 %v8420, %v8417
      %v8730 = vpack.c.b16 %v8421, %v8418
      %v8731 = vpack.c.b16 %v8422, %v8419
      %v8732 = vpack.c.b16 %v8426, %v8423
      %v8733 = vpack.c.b16 %v8427, %v8424
      %v8734 = vpack.c.b16 %v8428, %v8425
      %v8735 = vpack.c.b16 %v8432, %v8429
      %v8736 = vpack.c.b16 %v8433, %v8430
      %v8737 = vpack.c.b16 %v8434, %v8431
      %v8738 = vpack.c.b16 %v8438, %v8435
      %v8739 = vpack.c.b16 %v8439, %v8436
      %v8740 = vpack.c.b16 %v8440, %v8437
      %v8741 = vpack.c.b16 %v8444, %v8441
      %v8742 = vpack.c.b16 %v8445, %v8442
      %v8743 = vpack.c.b16 %v8446, %v8443
      %v8744 = vpack.c.b16 %v8450, %v8447
      %v8745 = vpack.c.b16 %v8451, %v8448
      %v8746 = vpack.c.b16 %v8452, %v8449
      %v8747 = vpack.c.b16 %v8456, %v8453
      %v8748 = vpack.c.b16 %v8457, %v8454
      %v8749 = vpack.c.b16 %v8458, %v8455
      %v8750 = vpack.c.b16 %v8462, %v8459
      %v8751 = vpack.c.b16 %v8463, %v8460
      %v8752 = vpack.c.b16 %v8464, %v8461
      %v8753 = vpack.c.b16 %v8468, %v8465
      %v8754 = vpack.c.b16 %v8469, %v8466
      %v8755 = vpack.c.b16 %v8470, %v8467
      %v8756 = vpack.c.b16 %v8474, %v8471
      %v8757 = vpack.c.b16 %v8475, %v8472
      %v8758 = vpack.c.b16 %v8476, %v8473
      %v8759 = vpack.c.b16 %v8480, %v8477
      %v8760 = vpack.c.b16 %v8481, %v8478
      %v8761 = vpack.c.b16 %v8482, %v8479
      %v8762 = vpack.c.b16 %v8486, %v8483
      %v8763 = vpack.c.b16 %v8487, %v8484
      %v8764 = vpack.c.b16 %v8488, %v8485
      %v8765 = vpack.c.b16 %v8492, %v8489
      %v8766 = vpack.c.b16 %v8493, %v8490
      %v8767 = vpack.c.b16 %v8494, %v8491
      %v8768 = vpack.c.b16 %v8498, %v8495
      %v8769 = vpack.c.b16 %v8499, %v8496
      %v8770 = vpack.c.b16 %v8500, %v8497
      %v8771 = vpack.c.b16 %v8504, %v8501
      %v8772 = vpack.c.b16 %v8505, %v8502
      %v8773 = vpack.c.b16 %v8506, %v8503
      %v8774 = vpack.c.b16 %v8510, %v8507
      %v8775 = vpack.c.b16 %v8511, %v8508
      %v8776 = vpack.c.b16 %v8512, %v8509
      %v8777 = vpack.c.b16 %v8516, %v8513
      %v8778 = vpack.c.b16 %v8517, %v8514
      %v8779 = vpack.c.b16 %v8518, %v8515
      %v8780 = vpack.c.b16 %v8522, %v8519
      %v8781 = vpack.c.b16 %v8523, %v8520
      %v8782 = vpack.c.b16 %v8524, %v8521
      %v8783 = vpack.c.b16 %v8528, %v8525
      %v8784 = vpack.c.b16 %v8529, %v8526
      %v8785 = vpack.c.b16 %v8530, %v8527
      %v8786 = vpack.c.b16 %v8534, %v8531
      %v8787 = vpack.c.b16 %v8535, %v8532
      %v8788 = vpack.c.b16 %v8536, %v8533
      %v8789 = vpack.c.b16 %v8540, %v8537
      %v8790 = vpack.c.b16 %v8541, %v8538
      %v8791 = vpack.c.b16 %v8542, %v8539
      %v8792 = vpack.c.b16 %v8546, %v8543
      %v8793 = vpack.c.b16 %v8547, %v8544
      %v8794 = vpack.c.b16 %v8548, %v8545
      %v8795 = vpack.c.b16 %v8552, %v8549
      %v8796 = vpack.c.b16 %v8553, %v8550
      %v8797 = vpack.c.b16 %v8554, %v8551
      %v8798 = vpack.c.b16 %v8558, %v8555
      %v8799 = vpack.c.b16 %v8559, %v8556
      %v8800 = vpack.c.b16 %v8560, %v8557
      %v8801 = vpack.c.b16 %v8564, %v8561
      %v8802 = vpack.c.b16 %v8565, %v8562
      %v8803 = vpack.c.b16 %v8566, %v8563
      %v8804 = vpack.c.b16 %v8570, %v8567
      %v8805 = vpack.c.b16 %v8571, %v8568
      %v8806 = vpack.c.b16 %v8572, %v8569
      %v8807 = vpack.c.b16 %v8576, %v8573
      %v8808 = vpack.c.b16 %v8577, %v8574
      %v8809 = vpack.c.b16 %v8578, %v8575
      %v8810 = vpack.c.b16 %v8582, %v8579
      %v8811 = vpack.c.b16 %v8583, %v8580
      %v8812 = vpack.c.b16 %v8584, %v8581
      %v8813 = vpack.c.b16 %v8588, %v8585
      %v8814 = vpack.c.b16 %v8589, %v8586
      %v8815 = vpack.c.b16 %v8590, %v8587
      %v8816 = vpack.c.b16 %v8594, %v8591
      %v8817 = vpack.c.b16 %v8595, %v8592
      %v8818 = vpack.c.b16 %v8596, %v8593
      %v8819 = vpack.c.b16 %v8600, %v8597
      %v8820 = vpack.c.b16 %v8601, %v8598
      %v8821 = vpack.c.b16 %v8602, %v8599
      %v8822 = vpack.c.b16 %v8606, %v8603
      %v8823 = vpack.c.b16 %v8607, %v8604
      %v8824 = vpack.c.b16 %v8608, %v8605
      %9041 = vmatprep.subr.bf16.mxu0 %v8610
      %9042 = vmatpush1.bf16.msra.mxu0 %v8609
      %9043 = vmatprep.subr.bf16.mxu0 %v8613
      %9044 = vmatpush1.bf16.msra.mxu0 %v8612
      %9045 = vmatprep.subr.bf16.mxu0 %v8616
      %9046 = vmatpush1.bf16.msra.mxu0 %v8615
      %9047 = vmatprep.subr.bf16.mxu0 %v8619
      %9048 = vmatpush1.bf16.msra.mxu0 %v8618
      %9049 = vmatprep.subr.bf16.mxu0 %v8622
      %9050 = vmatpush1.bf16.msra.mxu0 %v8621
      %9051 = vmatprep.subr.bf16.mxu0 %v8625
      %9052 = vmatpush1.bf16.msra.mxu0 %v8624
      %9053 = vmatprep.subr.bf16.mxu0 %v8628
      %9054 = vmatpush1.bf16.msra.mxu0 %v8627
      %9055 = vmatprep.subr.bf16.mxu0 %v8631
      %9056 = vmatpush1.bf16.msra.mxu0 %v8630
      %9057 = vmatprep.subr.bf16.mxu0 %v8634
      %9058 = vmatpush1.bf16.msra.mxu0 %v8633
      %9059 = vmatprep.subr.bf16.mxu0 %v8637
      %9060 = vmatpush1.bf16.msra.mxu0 %v8636
      %9061 = vmatprep.subr.bf16.mxu0 %v8640
      %9062 = vmatpush1.bf16.msra.mxu0 %v8639
      %9063 = vmatprep.subr.bf16.mxu0 %v8643
      %9064 = vmatpush1.bf16.msra.mxu0 %v8642
      %9065 = vmatprep.subr.bf16.mxu0 %v8646
      %9066 = vmatpush1.bf16.msra.mxu0 %v8645
      %9067 = vmatprep.subr.bf16.mxu0 %v8649
      %9068 = vmatpush1.bf16.msra.mxu0 %v8648
      %9069 = vmatprep.subr.bf16.mxu0 %v8652
      %9070 = vmatpush1.bf16.msra.mxu0 %v8651
      %9071 = vmatprep.subr.bf16.mxu0 %v8655
      %9072 = vmatpush1.bf16.msra.mxu0 %v8654
      %9073 = vmatprep.mubr.bf16.mxu0 %v7475
      %9074 = vmatmul.mubr.bf16.gmra.mrb[0].mxu0 %v7474
      %v9075 = vpop.f32.mrb[0].mxu0
      %v9076 = vadd.f32 0.0, %v9075
      %v9077 = vpop.f32.mrb[0].mxu0
      %v9078 = vadd.f32 0.0, %v9077
      %v9079 = vpop.f32.mrb[0].mxu0
      %v9080 = vadd.f32 0.0, %v9079
      %v9081 = vpop.f32.mrb[0].mxu0
      %v9082 = vadd.f32 0.0, %v9081
      %9083 = vmatprep.mubr.bf16.mxu0 %v7484
      %9084 = vmatmul.mubr.bf16.gmra.mrb[0].mxu0 %v7483
      %v9085 = vpop.f32.mrb[0].mxu0
      %v9086 = vadd.f32 0.0, %v9085
      %v9087 = vpop.f32.mrb[0].mxu0
      %v9088 = vadd.f32 0.0, %v9087
      %v9089 = vpop.f32.mrb[0].mxu0
      %v9090 = vadd.f32 0.0, %v9089
      %v9091 = vpop.f32.mrb[0].mxu0
      %v9092 = vadd.f32 0.0, %v9091
      %9093 = vmatprep.mubr.bf16.mxu0 %v7493
      %9094 = vmatmul.mubr.bf16.gmra.mrb[0].mxu0 %v7492
      %v9095 = vpop.f32.mrb[0].mxu0
      %v9096 = vadd.f32 0.0, %v9095
      %v9097 = vpop.f32.mrb[0].mxu0
      %v9098 = vadd.f32 0.0, %v9097
      %v9099 = vpop.f32.mrb[0].mxu0
      %v9100 = vadd.f32 0.0, %v9099
      %v9101 = vpop.f32.mrb[0].mxu0
      %v9102 = vadd.f32 0.0, %v9101
      %9103 = vmatprep.mubr.bf16.mxu0 %v7502
      %9104 = vmatmul.mubr.bf16.gmra.mrb[0].mxu0 %v7501
      %v9105 = vpop.f32.mrb[0].mxu0
      %v9106 = vadd.f32 0.0, %v9105
      %v9107 = vpop.f32.mrb[0].mxu0
      %v9108 = vadd.f32 0.0, %v9107
      %v9109 = vpop.f32.mrb[0].mxu0
      %v9110 = vadd.f32 0.0, %v9109
      %v9111 = vpop.f32.mrb[0].mxu0
      %v9112 = vadd.f32 0.0, %v9111
      %9113 = vmatprep.mubr.bf16.mxu0 %v7511
      %9114 = vmatmul.mubr.bf16.gmra.mrb[0].mxu0 %v7510
      %v9115 = vpop.f32.mrb[0].mxu0
      %v9116 = vadd.f32 0.0, %v9115
      %v9117 = vpop.f32.mrb[0].mxu0
      %v9118 = vadd.f32 0.0, %v9117
      %v9119 = vpop.f32.mrb[0].mxu0
      %v9120 = vadd.f32 0.0, %v9119
      %v9121 = vpop.f32.mrb[0].mxu0
      %v9122 = vadd.f32 0.0, %v9121
      %9123 = vmatprep.mubr.bf16.mxu0 %v7520
      %9124 = vmatmul.mubr.bf16.gmra.mrb[0].mxu0 %v7519
      %v9125 = vpop.f32.mrb[0].mxu0
      %v9126 = vadd.f32 0.0, %v9125
      %v9127 = vpop.f32.mrb[0].mxu0
      %v9128 = vadd.f32 0.0, %v9127
      %v9129 = vpop.f32.mrb[0].mxu0
      %v9130 = vadd.f32 0.0, %v9129
      %v9131 = vpop.f32.mrb[0].mxu0
      %v9132 = vadd.f32 0.0, %v9131
      %9133 = vmatprep.mubr.bf16.mxu0 %v7529
      %9134 = vmatmul.mubr.bf16.gmra.mrb[0].mxu0 %v7528
      %v9135 = vpop.f32.mrb[0].mxu0
      %v9136 = vadd.f32 0.0, %v9135
      %v9137 = vpop.f32.mrb[0].mxu0
      %v9138 = vadd.f32 0.0, %v9137
      %v9139 = vpop.f32.mrb[0].mxu0
      %v9140 = vadd.f32 0.0, %v9139
      %v9141 = vpop.f32.mrb[0].mxu0
      %v9142 = vadd.f32 0.0, %v9141
      %9143 = vmatprep.mubr.bf16.mxu0 %v7538
      %9144 = vmatmul.mubr.bf16.gmra.mrb[0].mxu0 %v7537
      %v9145 = vpop.f32.mrb[0].mxu0
      %v9146 = vadd.f32 0.0, %v9145
      %v9147 = vpop.f32.mrb[0].mxu0
      %v9148 = vadd.f32 0.0, %v9147
      %v9149 = vpop.f32.mrb[0].mxu0
      %v9150 = vadd.f32 0.0, %v9149
      %v9151 = vpop.f32.mrb[0].mxu0
      %v9152 = vadd.f32 0.0, %v9151
      %9153 = vmatprep.mubr.bf16.mxu0 %v7547
      %9154 = vmatmul.mubr.bf16.gmra.mrb[0].mxu0 %v7546
      %v9155 = vpop.f32.mrb[0].mxu0
      %v9156 = vadd.f32 0.0, %v9155
      %v9157 = vpop.f32.mrb[0].mxu0
      %v9158 = vadd.f32 0.0, %v9157
      %v9159 = vpop.f32.mrb[0].mxu0
      %v9160 = vadd.f32 0.0, %v9159
      %v9161 = vpop.f32.mrb[0].mxu0
      %v9162 = vadd.f32 0.0, %v9161
      %9163 = vmatprep.mubr.bf16.mxu0 %v7556
      %9164 = vmatmul.mubr.bf16.gmra.mrb[0].mxu0 %v7555
      %v9165 = vpop.f32.mrb[0].mxu0
      %v9166 = vadd.f32 0.0, %v9165
      %v9167 = vpop.f32.mrb[0].mxu0
      %v9168 = vadd.f32 0.0, %v9167
      %v9169 = vpop.f32.mrb[0].mxu0
      %v9170 = vadd.f32 0.0, %v9169
      %v9171 = vpop.f32.mrb[0].mxu0
      %v9172 = vadd.f32 0.0, %v9171
      %9173 = vmatprep.mubr.bf16.mxu0 %v7565
      %9174 = vmatmul.mubr.bf16.gmra.mrb[0].mxu0 %v7564
      %v9175 = vpop.f32.mrb[0].mxu0
      %v9176 = vadd.f32 0.0, %v9175
      %v9177 = vpop.f32.mrb[0].mxu0
      %v9178 = vadd.f32 0.0, %v9177
      %v9179 = vpop.f32.mrb[0].mxu0
      %v9180 = vadd.f32 0.0, %v9179
      %v9181 = vpop.f32.mrb[0].mxu0
      %v9182 = vadd.f32 0.0, %v9181
      %9183 = vmatprep.mubr.bf16.mxu0 %v7574
      %9184 = vmatmul.mubr.bf16.gmra.mrb[0].mxu0 %v7573
      %v9185 = vpop.f32.mrb[0].mxu0
      %v9186 = vadd.f32 0.0, %v9185
      %v9187 = vpop.f32.mrb[0].mxu0
      %v9188 = vadd.f32 0.0, %v9187
      %v9189 = vpop.f32.mrb[0].mxu0
      %v9190 = vadd.f32 0.0, %v9189
      %v9191 = vpop.f32.mrb[0].mxu0
      %v9192 = vadd.f32 0.0, %v9191
      %9193 = vmatprep.mubr.bf16.mxu0 %v7583
      %9194 = vmatmul.mubr.bf16.gmra.mrb[0].mxu0 %v7582
      %v9195 = vpop.f32.mrb[0].mxu0
      %v9196 = vadd.f32 0.0, %v9195
      %v9197 = vpop.f32.mrb[0].mxu0
      %v9198 = vadd.f32 0.0, %v9197
      %v9199 = vpop.f32.mrb[0].mxu0
      %v9200 = vadd.f32 0.0, %v9199
      %v9201 = vpop.f32.mrb[0].mxu0
      %v9202 = vadd.f32 0.0, %v9201
      %9203 = vmatprep.mubr.bf16.mxu0 %v7592
      %9204 = vmatmul.mubr.bf16.gmra.mrb[0].mxu0 %v7591
      %v9205 = vpop.f32.mrb[0].mxu0
      %v9206 = vadd.f32 0.0, %v9205
      %v9207 = vpop.f32.mrb[0].mxu0
      %v9208 = vadd.f32 0.0, %v9207
      %v9209 = vpop.f32.mrb[0].mxu0
      %v9210 = vadd.f32 0.0, %v9209
      %v9211 = vpop.f32.mrb[0].mxu0
      %v9212 = vadd.f32 0.0, %v9211
      %9213 = vdwg.mxu0
      %9214 = vmatprep.subr.bf16.mxu0 %v8658
      %9215 = vmatpush1.bf16.msra.mxu0 %v8657
      %9216 = vmatprep.subr.bf16.mxu0 %v8661
      %9217 = vmatpush1.bf16.msra.mxu0 %v8660
      %9218 = vmatprep.subr.bf16.mxu0 %v8664
      %9219 = vmatpush1.bf16.msra.mxu0 %v8663
      %9220 = vmatprep.subr.bf16.mxu0 %v8667
      %9221 = vmatpush1.bf16.msra.mxu0 %v8666
      %9222 = vmatprep.subr.bf16.mxu0 %v8670
      %9223 = vmatpush1.bf16.msra.mxu0 %v8669
      %9224 = vmatprep.subr.bf16.mxu0 %v8673
      %9225 = vmatpush1.bf16.msra.mxu0 %v8672
      %9226 = vmatprep.subr.bf16.mxu0 %v8676
      %9227 = vmatpush1.bf16.msra.mxu0 %v8675
      %9228 = vmatprep.subr.bf16.mxu0 %v8679
      %9229 = vmatpush1.bf16.msra.mxu0 %v8678
      %9230 = vmatprep.subr.bf16.mxu0 %v8682
      %9231 = vmatpush1.bf16.msra.mxu0 %v8681
      %9232 = vmatprep.subr.bf16.mxu0 %v8685
      %9233 = vmatpush1.bf16.msra.mxu0 %v8684
      %9234 = vmatprep.subr.bf16.mxu0 %v8688
      %9235 = vmatpush1.bf16.msra.mxu0 %v8687
      %9236 = vmatprep.subr.bf16.mxu0 %v8691
      %9237 = vmatpush1.bf16.msra.mxu0 %v8690
      %9238 = vmatprep.subr.bf16.mxu0 %v8694
      %9239 = vmatpush1.bf16.msra.mxu0 %v8693
      %9240 = vmatprep.subr.bf16.mxu0 %v8697
      %9241 = vmatpush1.bf16.msra.mxu0 %v8696
      %9242 = vmatprep.subr.bf16.mxu0 %v8700
      %9243 = vmatpush1.bf16.msra.mxu0 %v8699
      %9244 = vmatprep.subr.bf16.mxu0 %v8703
      %9245 = vmatpush1.bf16.msra.mxu0 %v8702
      %9246 = vmatprep.mubr.bf16.mxu0 %v7477
      %9247 = vmatmul.mubr.bf16.gmra.mrb[0].mxu0 %v7476
      %v9248 = vpop.f32.mrb[0].mxu0
      %v9249 = vadd.f32 %v9076, %v9248
      %v9250 = vpop.f32.mrb[0].mxu0
      %v9251 = vadd.f32 %v9078, %v9250
      %v9252 = vpop.f32.mrb[0].mxu0
      %v9253 = vadd.f32 %v9080, %v9252
      %v9254 = vpop.f32.mrb[0].mxu0
      %v9255 = vadd.f32 %v9082, %v9254
      %9256 = vmatprep.mubr.bf16.mxu0 %v7486
      %9257 = vmatmul.mubr.bf16.gmra.mrb[0].mxu0 %v7485
      %v9258 = vpop.f32.mrb[0].mxu0
      %v9259 = vadd.f32 %v9086, %v9258
      %v9260 = vpop.f32.mrb[0].mxu0
      %v9261 = vadd.f32 %v9088, %v9260
      %v9262 = vpop.f32.mrb[0].mxu0
      %v9263 = vadd.f32 %v9090, %v9262
      %v9264 = vpop.f32.mrb[0].mxu0
      %v9265 = vadd.f32 %v9092, %v9264
      %9266 = vmatprep.mubr.bf16.mxu0 %v7495
      %9267 = vmatmul.mubr.bf16.gmra.mrb[0].mxu0 %v7494
      %v9268 = vpop.f32.mrb[0].mxu0
      %v9269 = vadd.f32 %v9096, %v9268
      %v9270 = vpop.f32.mrb[0].mxu0
      %v9271 = vadd.f32 %v9098, %v9270
      %v9272 = vpop.f32.mrb[0].mxu0
      %v9273 = vadd.f32 %v9100, %v9272
      %v9274 = vpop.f32.mrb[0].mxu0
      %v9275 = vadd.f32 %v9102, %v9274
      %9276 = vmatprep.mubr.bf16.mxu0 %v7504
      %9277 = vmatmul.mubr.bf16.gmra.mrb[0].mxu0 %v7503
      %v9278 = vpop.f32.mrb[0].mxu0
      %v9279 = vadd.f32 %v9106, %v9278
      %v9280 = vpop.f32.mrb[0].mxu0
      %v9281 = vadd.f32 %v9108, %v9280
      %v9282 = vpop.f32.mrb[0].mxu0
      %v9283 = vadd.f32 %v9110, %v9282
      %v9284 = vpop.f32.mrb[0].mxu0
      %v9285 = vadd.f32 %v9112, %v9284
      %9286 = vmatprep.mubr.bf16.mxu0 %v7513
      %9287 = vmatmul.mubr.bf16.gmra.mrb[0].mxu0 %v7512
      %v9288 = vpop.f32.mrb[0].mxu0
      %v9289 = vadd.f32 %v9116, %v9288
      %v9290 = vpop.f32.mrb[0].mxu0
      %v9291 = vadd.f32 %v9118, %v9290
      %v9292 = vpop.f32.mrb[0].mxu0
      %v9293 = vadd.f32 %v9120, %v9292
      %v9294 = vpop.f32.mrb[0].mxu0
      %v9295 = vadd.f32 %v9122, %v9294
      %9296 = vmatprep.mubr.bf16.mxu0 %v7522
      %9297 = vmatmul.mubr.bf16.gmra.mrb[0].mxu0 %v7521
      %v9298 = vpop.f32.mrb[0].mxu0
      %v9299 = vadd.f32 %v9126, %v9298
      %v9300 = vpop.f32.mrb[0].mxu0
      %v9301 = vadd.f32 %v9128, %v9300
      %v9302 = vpop.f32.mrb[0].mxu0
      %v9303 = vadd.f32 %v9130, %v9302
      %v9304 = vpop.f32.mrb[0].mxu0
      %v9305 = vadd.f32 %v9132, %v9304
      %9306 = vmatprep.mubr.bf16.mxu0 %v7531
      %9307 = vmatmul.mubr.bf16.gmra.mrb[0].mxu0 %v7530
      %v9308 = vpop.f32.mrb[0].mxu0
      %v9309 = vadd.f32 %v9136, %v9308
      %v9310 = vpop.f32.mrb[0].mxu0
      %v9311 = vadd.f32 %v9138, %v9310
      %v9312 = vpop.f32.mrb[0].mxu0
      %v9313 = vadd.f32 %v9140, %v9312
      %v9314 = vpop.f32.mrb[0].mxu0
      %v9315 = vadd.f32 %v9142, %v9314
      %9316 = vmatprep.mubr.bf16.mxu0 %v7540
      %9317 = vmatmul.mubr.bf16.gmra.mrb[0].mxu0 %v7539
      %v9318 = vpop.f32.mrb[0].mxu0
      %v9319 = vadd.f32 %v9146, %v9318
      %v9320 = vpop.f32.mrb[0].mxu0
      %v9321 = vadd.f32 %v9148, %v9320
      %v9322 = vpop.f32.mrb[0].mxu0
      %v9323 = vadd.f32 %v9150, %v9322
      %v9324 = vpop.f32.mrb[0].mxu0
      %v9325 = vadd.f32 %v9152, %v9324
      %9326 = vmatprep.mubr.bf16.mxu0 %v7549
      %9327 = vmatmul.mubr.bf16.gmra.mrb[0].mxu0 %v7548
      %v9328 = vpop.f32.mrb[0].mxu0
      %v9329 = vadd.f32 %v9156, %v9328
      %v9330 = vpop.f32.mrb[0].mxu0
      %v9331 = vadd.f32 %v9158, %v9330
      %v9332 = vpop.f32.mrb[0].mxu0
      %v9333 = vadd.f32 %v9160, %v9332
      %v9334 = vpop.f32.mrb[0].mxu0
      %v9335 = vadd.f32 %v9162, %v9334
      %9336 = vmatprep.mubr.bf16.mxu0 %v7558
      %9337 = vmatmul.mubr.bf16.gmra.mrb[0].mxu0 %v7557
      %v9338 = vpop.f32.mrb[0].mxu0
      %v9339 = vadd.f32 %v9166, %v9338
      %v9340 = vpop.f32.mrb[0].mxu0
      %v9341 = vadd.f32 %v9168, %v9340
      %v9342 = vpop.f32.mrb[0].mxu0
      %v9343 = vadd.f32 %v9170, %v9342
      %v9344 = vpop.f32.mrb[0].mxu0
      %v9345 = vadd.f32 %v9172, %v9344
      %9346 = vmatprep.mubr.bf16.mxu0 %v7567
      %9347 = vmatmul.mubr.bf16.gmra.mrb[0].mxu0 %v7566
      %v9348 = vpop.f32.mrb[0].mxu0
      %v9349 = vadd.f32 %v9176, %v9348
      %v9350 = vpop.f32.mrb[0].mxu0
      %v9351 = vadd.f32 %v9178, %v9350
      %v9352 = vpop.f32.mrb[0].mxu0
      %v9353 = vadd.f32 %v9180, %v9352
      %v9354 = vpop.f32.mrb[0].mxu0
      %v9355 = vadd.f32 %v9182, %v9354
      %9356 = vmatprep.mubr.bf16.mxu0 %v7576
      %9357 = vmatmul.mubr.bf16.gmra.mrb[0].mxu0 %v7575
      %v9358 = vpop.f32.mrb[0].mxu0
      %v9359 = vadd.f32 %v9186, %v9358
      %v9360 = vpop.f32.mrb[0].mxu0
      %v9361 = vadd.f32 %v9188, %v9360
      %v9362 = vpop.f32.mrb[0].mxu0
      %v9363 = vadd.f32 %v9190, %v9362
      %v9364 = vpop.f32.mrb[0].mxu0
      %v9365 = vadd.f32 %v9192, %v9364
      %9366 = vmatprep.mubr.bf16.mxu0 %v7585
      %9367 = vmatmul.mubr.bf16.gmra.mrb[0].mxu0 %v7584
      %v9368 = vpop.f32.mrb[0].mxu0
      %v9369 = vadd.f32 %v9196, %v9368
      %v9370 = vpop.f32.mrb[0].mxu0
      %v9371 = vadd.f32 %v9198, %v9370
      %v9372 = vpop.f32.mrb[0].mxu0
      %v9373 = vadd.f32 %v9200, %v9372
      %v9374 = vpop.f32.mrb[0].mxu0
      %v9375 = vadd.f32 %v9202, %v9374
      %9376 = vmatprep.mubr.bf16.mxu0 %v7594
      %9377 = vmatmul.mubr.bf16.gmra.mrb[0].mxu0 %v7593
      %v9378 = vpop.f32.mrb[0].mxu0
      %v9379 = vadd.f32 %v9206, %v9378
      %v9380 = vpop.f32.mrb[0].mxu0
      %v9381 = vadd.f32 %v9208, %v9380
      %v9382 = vpop.f32.mrb[0].mxu0
      %v9383 = vadd.f32 %v9210, %v9382
      %v9384 = vpop.f32.mrb[0].mxu0
      %v9385 = vadd.f32 %v9212, %v9384
      %9386 = vdwg.mxu0
      %9387 = vmatprep.subr.bf16.mxu0 %v8706
      %9388 = vmatpush1.bf16.msra.mxu0 %v8705
      %9389 = vmatprep.subr.bf16.mxu0 %v8709
      %9390 = vmatpush1.bf16.msra.mxu0 %v8708
      %9391 = vmatprep.subr.bf16.mxu0 %v8712
      %9392 = vmatpush1.bf16.msra.mxu0 %v8711
      %9393 = vmatprep.subr.bf16.mxu0 %v8715
      %9394 = vmatpush1.bf16.msra.mxu0 %v8714
      %9395 = vmatprep.subr.bf16.mxu0 %v8718
      %9396 = vmatpush1.bf16.msra.mxu0 %v8717
      %9397 = vmatprep.subr.bf16.mxu0 %v8721
      %9398 = vmatpush1.bf16.msra.mxu0 %v8720
      %9399 = vmatprep.subr.bf16.mxu0 %v8724
      %9400 = vmatpush1.bf16.msra.mxu0 %v8723
      %9401 = vmatprep.subr.bf16.mxu0 %v8727
      %9402 = vmatpush1.bf16.msra.mxu0 %v8726
      %9403 = vmatprep.subr.bf16.mxu0 %v8730
      %9404 = vmatpush1.bf16.msra.mxu0 %v8729
      %9405 = vmatprep.subr.bf16.mxu0 %v8733
      %9406 = vmatpush1.bf16.msra.mxu0 %v8732
      %9407 = vmatprep.subr.bf16.mxu0 %v8736
      %9408 = vmatpush1.bf16.msra.mxu0 %v8735
      %9409 = vmatprep.subr.bf16.mxu0 %v8739
      %9410 = vmatpush1.bf16.msra.mxu0 %v8738
      %9411 = vmatprep.subr.bf16.mxu0 %v8742
      %9412 = vmatpush1.bf16.msra.mxu0 %v8741
      %9413 = vmatprep.subr.bf16.mxu0 %v8745
      %9414 = vmatpush1.bf16.msra.mxu0 %v8744
      %9415 = vmatprep.subr.bf16.mxu0 %v8748
      %9416 = vmatpush1.bf16.msra.mxu0 %v8747
      %9417 = vmatprep.subr.bf16.mxu0 %v8751
      %9418 = vmatpush1.bf16.msra.mxu0 %v8750
      %9419 = vmatprep.mubr.bf16.mxu0 %v7479
      %9420 = vmatmul.mubr.bf16.gmra.mrb[0].mxu0 %v7478
      %v9421 = vpop.f32.mrb[0].mxu0
      %v9422 = vadd.f32 %v9249, %v9421
      %v9423 = vpop.f32.mrb[0].mxu0
      %v9424 = vadd.f32 %v9251, %v9423
      %v9425 = vpop.f32.mrb[0].mxu0
      %v9426 = vadd.f32 %v9253, %v9425
      %v9427 = vpop.f32.mrb[0].mxu0
      %v9428 = vadd.f32 %v9255, %v9427
      %9429 = vmatprep.mubr.bf16.mxu0 %v7488
      %9430 = vmatmul.mubr.bf16.gmra.mrb[0].mxu0 %v7487
      %v9431 = vpop.f32.mrb[0].mxu0
      %v9432 = vadd.f32 %v9259, %v9431
      %v9433 = vpop.f32.mrb[0].mxu0
      %v9434 = vadd.f32 %v9261, %v9433
      %v9435 = vpop.f32.mrb[0].mxu0
      %v9436 = vadd.f32 %v9263, %v9435
      %v9437 = vpop.f32.mrb[0].mxu0
      %v9438 = vadd.f32 %v9265, %v9437
      %9439 = vmatprep.mubr.bf16.mxu0 %v7497
      %9440 = vmatmul.mubr.bf16.gmra.mrb[0].mxu0 %v7496
      %v9441 = vpop.f32.mrb[0].mxu0
      %v9442 = vadd.f32 %v9269, %v9441
      %v9443 = vpop.f32.mrb[0].mxu0
      %v9444 = vadd.f32 %v9271, %v9443
      %v9445 = vpop.f32.mrb[0].mxu0
      %v9446 = vadd.f32 %v9273, %v9445
      %v9447 = vpop.f32.mrb[0].mxu0
      %v9448 = vadd.f32 %v9275, %v9447
      %9449 = vmatprep.mubr.bf16.mxu0 %v7506
      %9450 = vmatmul.mubr.bf16.gmra.mrb[0].mxu0 %v7505
      %v9451 = vpop.f32.mrb[0].mxu0
      %v9452 = vadd.f32 %v9279, %v9451
      %v9453 = vpop.f32.mrb[0].mxu0
      %v9454 = vadd.f32 %v9281, %v9453
      %v9455 = vpop.f32.mrb[0].mxu0
      %v9456 = vadd.f32 %v9283, %v9455
      %v9457 = vpop.f32.mrb[0].mxu0
      %v9458 = vadd.f32 %v9285, %v9457
      %9459 = vmatprep.mubr.bf16.mxu0 %v7515
      %9460 = vmatmul.mubr.bf16.gmra.mrb[0].mxu0 %v7514
      %v9461 = vpop.f32.mrb[0].mxu0
      %v9462 = vadd.f32 %v9289, %v9461
      %v9463 = vpop.f32.mrb[0].mxu0
      %v9464 = vadd.f32 %v9291, %v9463
      %v9465 = vpop.f32.mrb[0].mxu0
      %v9466 = vadd.f32 %v9293, %v9465
      %v9467 = vpop.f32.mrb[0].mxu0
      %v9468 = vadd.f32 %v9295, %v9467
      %9469 = vmatprep.mubr.bf16.mxu0 %v7524
      %9470 = vmatmul.mubr.bf16.gmra.mrb[0].mxu0 %v7523
      %v9471 = vpop.f32.mrb[0].mxu0
      %v9472 = vadd.f32 %v9299, %v9471
      %v9473 = vpop.f32.mrb[0].mxu0
      %v9474 = vadd.f32 %v9301, %v9473
      %v9475 = vpop.f32.mrb[0].mxu0
      %v9476 = vadd.f32 %v9303, %v9475
      %v9477 = vpop.f32.mrb[0].mxu0
      %v9478 = vadd.f32 %v9305, %v9477
      %9479 = vmatprep.mubr.bf16.mxu0 %v7533
      %9480 = vmatmul.mubr.bf16.gmra.mrb[0].mxu0 %v7532
      %v9481 = vpop.f32.mrb[0].mxu0
      %v9482 = vadd.f32 %v9309, %v9481
      %v9483 = vpop.f32.mrb[0].mxu0
      %v9484 = vadd.f32 %v9311, %v9483
      %v9485 = vpop.f32.mrb[0].mxu0
      %v9486 = vadd.f32 %v9313, %v9485
      %v9487 = vpop.f32.mrb[0].mxu0
      %v9488 = vadd.f32 %v9315, %v9487
      %9489 = vmatprep.mubr.bf16.mxu0 %v7542
      %9490 = vmatmul.mubr.bf16.gmra.mrb[0].mxu0 %v7541
      %v9491 = vpop.f32.mrb[0].mxu0
      %v9492 = vadd.f32 %v9319, %v9491
      %v9493 = vpop.f32.mrb[0].mxu0
      %v9494 = vadd.f32 %v9321, %v9493
      %v9495 = vpop.f32.mrb[0].mxu0
      %v9496 = vadd.f32 %v9323, %v9495
      %v9497 = vpop.f32.mrb[0].mxu0
      %v9498 = vadd.f32 %v9325, %v9497
      %9499 = vmatprep.mubr.bf16.mxu0 %v7551
      %9500 = vmatmul.mubr.bf16.gmra.mrb[0].mxu0 %v7550
      %v9501 = vpop.f32.mrb[0].mxu0
      %v9502 = vadd.f32 %v9329, %v9501
      %v9503 = vpop.f32.mrb[0].mxu0
      %v9504 = vadd.f32 %v9331, %v9503
      %v9505 = vpop.f32.mrb[0].mxu0
      %v9506 = vadd.f32 %v9333, %v9505
      %v9507 = vpop.f32.mrb[0].mxu0
      %v9508 = vadd.f32 %v9335, %v9507
      %9509 = vmatprep.mubr.bf16.mxu0 %v7560
      %9510 = vmatmul.mubr.bf16.gmra.mrb[0].mxu0 %v7559
      %v9511 = vpop.f32.mrb[0].mxu0
      %v9512 = vadd.f32 %v9339, %v9511
      %v9513 = vpop.f32.mrb[0].mxu0
      %v9514 = vadd.f32 %v9341, %v9513
      %v9515 = vpop.f32.mrb[0].mxu0
      %v9516 = vadd.f32 %v9343, %v9515
      %v9517 = vpop.f32.mrb[0].mxu0
      %v9518 = vadd.f32 %v9345, %v9517
      %9519 = vmatprep.mubr.bf16.mxu0 %v7569
      %9520 = vmatmul.mubr.bf16.gmra.mrb[0].mxu0 %v7568
      %v9521 = vpop.f32.mrb[0].mxu0
      %v9522 = vadd.f32 %v9349, %v9521
      %v9523 = vpop.f32.mrb[0].mxu0
      %v9524 = vadd.f32 %v9351, %v9523
      %v9525 = vpop.f32.mrb[0].mxu0
      %v9526 = vadd.f32 %v9353, %v9525
      %v9527 = vpop.f32.mrb[0].mxu0
      %v9528 = vadd.f32 %v9355, %v9527
      %9529 = vmatprep.mubr.bf16.mxu0 %v7578
      %9530 = vmatmul.mubr.bf16.gmra.mrb[0].mxu0 %v7577
      %v9531 = vpop.f32.mrb[0].mxu0
      %v9532 = vadd.f32 %v9359, %v9531
      %v9533 = vpop.f32.mrb[0].mxu0
      %v9534 = vadd.f32 %v9361, %v9533
      %v9535 = vpop.f32.mrb[0].mxu0
      %v9536 = vadd.f32 %v9363, %v9535
      %v9537 = vpop.f32.mrb[0].mxu0
      %v9538 = vadd.f32 %v9365, %v9537
      %9539 = vmatprep.mubr.bf16.mxu0 %v7587
      %9540 = vmatmul.mubr.bf16.gmra.mrb[0].mxu0 %v7586
      %v9541 = vpop.f32.mrb[0].mxu0
      %v9542 = vadd.f32 %v9369, %v9541
      %v9543 = vpop.f32.mrb[0].mxu0
      %v9544 = vadd.f32 %v9371, %v9543
      %v9545 = vpop.f32.mrb[0].mxu0
      %v9546 = vadd.f32 %v9373, %v9545
      %v9547 = vpop.f32.mrb[0].mxu0
      %v9548 = vadd.f32 %v9375, %v9547
      %9549 = vmatprep.mubr.bf16.mxu0 %v7596
      %9550 = vmatmul.mubr.bf16.gmra.mrb[0].mxu0 %v7595
      %v9551 = vpop.f32.mrb[0].mxu0
      %v9552 = vadd.f32 %v9379, %v9551
      %v9553 = vpop.f32.mrb[0].mxu0
      %v9554 = vadd.f32 %v9381, %v9553
      %v9555 = vpop.f32.mrb[0].mxu0
      %v9556 = vadd.f32 %v9383, %v9555
      %v9557 = vpop.f32.mrb[0].mxu0
      %v9558 = vadd.f32 %v9385, %v9557
      %9559 = vdwg.mxu0
      %9560 = vmatprep.subr.bf16.mxu0 %v8754
      %9561 = vmatpush1.bf16.msra.mxu0 %v8753
      %9562 = vmatprep.subr.bf16.mxu0 %v8757
      %9563 = vmatpush1.bf16.msra.mxu0 %v8756
      %9564 = vmatprep.subr.bf16.mxu0 %v8760
      %9565 = vmatpush1.bf16.msra.mxu0 %v8759
      %9566 = vmatprep.subr.bf16.mxu0 %v8763
      %9567 = vmatpush1.bf16.msra.mxu0 %v8762
      %9568 = vmatprep.subr.bf16.mxu0 %v8766
      %9569 = vmatpush1.bf16.msra.mxu0 %v8765
      %9570 = vmatprep.subr.bf16.mxu0 %v8769
      %9571 = vmatpush1.bf16.msra.mxu0 %v8768
      %9572 = vmatprep.subr.bf16.mxu0 %v8772
      %9573 = vmatpush1.bf16.msra.mxu0 %v8771
      %9574 = vmatprep.subr.bf16.mxu0 %v8775
      %9575 = vmatpush1.bf16.msra.mxu0 %v8774
      %9576 = vmatprep.subr.bf16.mxu0 %v8778
      %9577 = vmatpush1.bf16.msra.mxu0 %v8777
      %9578 = vmatprep.subr.bf16.mxu0 %v8781
      %9579 = vmatpush1.bf16.msra.mxu0 %v8780
      %9580 = vmatprep.subr.bf16.mxu0 %v8784
      %9581 = vmatpush1.bf16.msra.mxu0 %v8783
      %9582 = vmatprep.subr.bf16.mxu0 %v8787
      %9583 = vmatpush1.bf16.msra.mxu0 %v8786
      %9584 = vmatprep.subr.bf16.mxu0 %v8790
      %9585 = vmatpush1.bf16.msra.mxu0 %v8789
      %9586 = vmatprep.subr.bf16.mxu0 %v8793
      %9587 = vmatpush1.bf16.msra.mxu0 %v8792
      %9588 = vmatprep.subr.bf16.mxu0 %v8796
      %9589 = vmatpush1.bf16.msra.mxu0 %v8795
      %9590 = vmatprep.subr.bf16.mxu0 %v8799
      %9591 = vmatpush1.bf16.msra.mxu0 %v8798
      %9592 = vmatprep.mubr.bf16.mxu0 %v7481
      %9593 = vmatmul.mubr.bf16.gmra.mrb[0].mxu0 %v7480
      %v9594 = vpop.f32.mrb[0].mxu0
      %v9595 = vadd.f32 %v9422, %v9594
      %v9596 = vpop.f32.mrb[0].mxu0
      %v9597 = vadd.f32 %v9424, %v9596
      %v9598 = vpop.f32.mrb[0].mxu0
      %v9599 = vadd.f32 %v9426, %v9598
      %v9600 = vpop.f32.mrb[0].mxu0
      %v9601 = vadd.f32 %v9428, %v9600
      %9602 = vmatprep.mubr.bf16.mxu0 %v7490
      %9603 = vmatmul.mubr.bf16.gmra.mrb[0].mxu0 %v7489
      %v9604 = vpop.f32.mrb[0].mxu0
      %v9605 = vadd.f32 %v9432, %v9604
      %v9606 = vpop.f32.mrb[0].mxu0
      %v9607 = vadd.f32 %v9434, %v9606
      %v9608 = vpop.f32.mrb[0].mxu0
      %v9609 = vadd.f32 %v9436, %v9608
      %v9610 = vpop.f32.mrb[0].mxu0
      %v9611 = vadd.f32 %v9438, %v9610
      %9612 = vmatprep.mubr.bf16.mxu0 %v7499
      %9613 = vmatmul.mubr.bf16.gmra.mrb[0].mxu0 %v7498
      %v9614 = vpop.f32.mrb[0].mxu0
      %v9615 = vadd.f32 %v9442, %v9614
      %v9616 = vpop.f32.mrb[0].mxu0
      %v9617 = vadd.f32 %v9444, %v9616
      %v9618 = vpop.f32.mrb[0].mxu0
      %v9619 = vadd.f32 %v9446, %v9618
      %v9620 = vpop.f32.mrb[0].mxu0
      %v9621 = vadd.f32 %v9448, %v9620
      %9622 = vmatprep.mubr.bf16.mxu0 %v7508
      %9623 = vmatmul.mubr.bf16.gmra.mrb[0].mxu0 %v7507
      %v9624 = vpop.f32.mrb[0].mxu0
      %v9625 = vadd.f32 %v9452, %v9624
      %v9626 = vpop.f32.mrb[0].mxu0
      %v9627 = vadd.f32 %v9454, %v9626
      %v9628 = vpop.f32.mrb[0].mxu0
      %v9629 = vadd.f32 %v9456, %v9628
      %v9630 = vpop.f32.mrb[0].mxu0
      %v9631 = vadd.f32 %v9458, %v9630
      %9632 = vmatprep.mubr.bf16.mxu0 %v7517
      %9633 = vmatmul.mubr.bf16.gmra.mrb[0].mxu0 %v7516
      %v9634 = vpop.f32.mrb[0].mxu0
      %v9635 = vadd.f32 %v9462, %v9634
      %v9636 = vpop.f32.mrb[0].mxu0
      %v9637 = vadd.f32 %v9464, %v9636
      %v9638 = vpop.f32.mrb[0].mxu0
      %v9639 = vadd.f32 %v9466, %v9638
      %v9640 = vpop.f32.mrb[0].mxu0
      %v9641 = vadd.f32 %v9468, %v9640
      %9642 = vmatprep.mubr.bf16.mxu0 %v7526
      %9643 = vmatmul.mubr.bf16.gmra.mrb[0].mxu0 %v7525
      %v9644 = vpop.f32.mrb[0].mxu0
      %v9645 = vadd.f32 %v9472, %v9644
      %v9646 = vpop.f32.mrb[0].mxu0
      %v9647 = vadd.f32 %v9474, %v9646
      %v9648 = vpop.f32.mrb[0].mxu0
      %v9649 = vadd.f32 %v9476, %v9648
      %v9650 = vpop.f32.mrb[0].mxu0
      %v9651 = vadd.f32 %v9478, %v9650
      %9652 = vmatprep.mubr.bf16.mxu0 %v7535
      %9653 = vmatmul.mubr.bf16.gmra.mrb[0].mxu0 %v7534
      %v9654 = vpop.f32.mrb[0].mxu0
      %v9655 = vadd.f32 %v9482, %v9654
      %v9656 = vpop.f32.mrb[0].mxu0
      %v9657 = vadd.f32 %v9484, %v9656
      %v9658 = vpop.f32.mrb[0].mxu0
      %v9659 = vadd.f32 %v9486, %v9658
      %v9660 = vpop.f32.mrb[0].mxu0
      %v9661 = vadd.f32 %v9488, %v9660
      %9662 = vmatprep.mubr.bf16.mxu0 %v7544
      %9663 = vmatmul.mubr.bf16.gmra.mrb[0].mxu0 %v7543
      %v9664 = vpop.f32.mrb[0].mxu0
      %v9665 = vadd.f32 %v9492, %v9664
      %v9666 = vpop.f32.mrb[0].mxu0
      %v9667 = vadd.f32 %v9494, %v9666
      %v9668 = vpop.f32.mrb[0].mxu0
      %v9669 = vadd.f32 %v9496, %v9668
      %v9670 = vpop.f32.mrb[0].mxu0
      %v9671 = vadd.f32 %v9498, %v9670
      %9672 = vmatprep.mubr.bf16.mxu0 %v7553
      %9673 = vmatmul.mubr.bf16.gmra.mrb[0].mxu0 %v7552
      %v9674 = vpop.f32.mrb[0].mxu0
      %v9675 = vadd.f32 %v9502, %v9674
      %v9676 = vpop.f32.mrb[0].mxu0
      %v9677 = vadd.f32 %v9504, %v9676
      %v9678 = vpop.f32.mrb[0].mxu0
      %v9679 = vadd.f32 %v9506, %v9678
      %v9680 = vpop.f32.mrb[0].mxu0
      %v9681 = vadd.f32 %v9508, %v9680
      %9682 = vmatprep.mubr.bf16.mxu0 %v7562
      %9683 = vmatmul.mubr.bf16.gmra.mrb[0].mxu0 %v7561
      %v9684 = vpop.f32.mrb[0].mxu0
      %v9685 = vadd.f32 %v9512, %v9684
      %v9686 = vpop.f32.mrb[0].mxu0
      %v9687 = vadd.f32 %v9514, %v9686
      %v9688 = vpop.f32.mrb[0].mxu0
      %v9689 = vadd.f32 %v9516, %v9688
      %v9690 = vpop.f32.mrb[0].mxu0
      %v9691 = vadd.f32 %v9518, %v9690
      %9692 = vmatprep.mubr.bf16.mxu0 %v7571
      %9693 = vmatmul.mubr.bf16.gmra.mrb[0].mxu0 %v7570
      %v9694 = vpop.f32.mrb[0].mxu0
      %v9695 = vadd.f32 %v9522, %v9694
      %v9696 = vpop.f32.mrb[0].mxu0
      %v9697 = vadd.f32 %v9524, %v9696
      %v9698 = vpop.f32.mrb[0].mxu0
      %v9699 = vadd.f32 %v9526, %v9698
      %v9700 = vpop.f32.mrb[0].mxu0
      %v9701 = vadd.f32 %v9528, %v9700
      %9702 = vmatprep.mubr.bf16.mxu0 %v7580
      %9703 = vmatmul.mubr.bf16.gmra.mrb[0].mxu0 %v7579
      %v9704 = vpop.f32.mrb[0].mxu0
      %v9705 = vadd.f32 %v9532, %v9704
      %v9706 = vpop.f32.mrb[0].mxu0
      %v9707 = vadd.f32 %v9534, %v9706
      %v9708 = vpop.f32.mrb[0].mxu0
      %v9709 = vadd.f32 %v9536, %v9708
      %v9710 = vpop.f32.mrb[0].mxu0
      %v9711 = vadd.f32 %v9538, %v9710
      %9712 = vmatprep.mubr.bf16.mxu0 %v7589
      %9713 = vmatmul.mubr.bf16.gmra.mrb[0].mxu0 %v7588
      %v9714 = vpop.f32.mrb[0].mxu0
      %v9715 = vadd.f32 %v9542, %v9714
      %v9716 = vpop.f32.mrb[0].mxu0
      %v9717 = vadd.f32 %v9544, %v9716
      %v9718 = vpop.f32.mrb[0].mxu0
      %v9719 = vadd.f32 %v9546, %v9718
      %v9720 = vpop.f32.mrb[0].mxu0
      %v9721 = vadd.f32 %v9548, %v9720
      %9722 = vmatprep.mubr.bf16.mxu0 %v7598
      %9723 = vmatmul.mubr.bf16.gmra.mrb[0].mxu0 %v7597
      %v9724 = vpop.f32.mrb[0].mxu0
      %v9725 = vadd.f32 %v9552, %v9724
      %v9726 = vpop.f32.mrb[0].mxu0
      %v9727 = vadd.f32 %v9554, %v9726
      %v9728 = vpop.f32.mrb[0].mxu0
      %v9729 = vadd.f32 %v9556, %v9728
      %v9730 = vpop.f32.mrb[0].mxu0
      %v9731 = vadd.f32 %v9558, %v9730
      %9732 = vdwg.mxu0
      %9733 = vmatprep.subr.bf16.mxu0 %v8802
      %9734 = vmatpush1.bf16.msra.mxu0 %v8801
      %9735 = vmatprep.subr.bf16.mxu0 %v8805
      %9736 = vmatpush1.bf16.msra.mxu0 %v8804
      %9737 = vmatprep.subr.bf16.mxu0 %v8808
      %9738 = vmatpush1.bf16.msra.mxu0 %v8807
      %9739 = vmatprep.subr.bf16.mxu0 %v8811
      %9740 = vmatpush1.bf16.msra.mxu0 %v8810
      %9741 = vmatprep.subr.bf16.mxu0 %v8814
      %9742 = vmatpush1.bf16.msra.mxu0 %v8813
      %9743 = vmatprep.subr.bf16.mxu0 %v8817
      %9744 = vmatpush1.bf16.msra.mxu0 %v8816
      %9745 = vmatprep.subr.bf16.mxu0 %v8820
      %9746 = vmatpush1.bf16.msra.mxu0 %v8819
      %9747 = vmatprep.subr.bf16.mxu0 %v8823
      %9748 = vmatpush1.bf16.msra.mxu0 %v8822
      %9749 = vmatprep.subr.bf16.mxu0 0
      %9750 = vmatpush1.bf16.msra.mxu0 0
      %9751 = vmatprep.subr.bf16.mxu0 0
      %9752 = vmatpush1.bf16.msra.mxu0 0
      %9753 = vmatprep.subr.bf16.mxu0 0
      %9754 = vmatpush1.bf16.msra.mxu0 0
      %9755 = vmatprep.subr.bf16.mxu0 0
      %9756 = vmatpush1.bf16.msra.mxu0 0
      %9757 = vmatprep.subr.bf16.mxu0 0
      %9758 = vmatpush1.bf16.msra.mxu0 0
      %9759 = vmatprep.subr.bf16.mxu0 0
      %9760 = vmatpush1.bf16.msra.mxu0 0
      %9761 = vmatprep.subr.bf16.mxu0 0
      %9762 = vmatpush1.bf16.msra.mxu0 0
      %9763 = vmatprep.subr.bf16.mxu0 0
      %9764 = vmatpush1.bf16.msra.mxu0 0
      %9765 = vmatprep.mubr.bf16.mxu0 0
      %9766 = vmatmul.mubr.bf16.gmra.mrb[0].mxu0 %v7482
      %v9767 = vpop.f32.mrb[0].mxu0
      %v9768 = vadd.f32 %v9595, %v9767
      %v9769 = vpop.f32.mrb[0].mxu0
      %v9770 = vadd.f32 %v9597, %v9769
      %v9771 = vpop.f32.mrb[0].mxu0
      %v9772 = vadd.f32 %v9599, %v9771
      %v9773 = vpop.f32.mrb[0].mxu0
      %v9774 = vadd.f32 %v9601, %v9773
      %9775 = vmatprep.mubr.bf16.mxu0 0
      %9776 = vmatmul.mubr.bf16.gmra.mrb[0].mxu0 %v7491
      %v9777 = vpop.f32.mrb[0].mxu0
      %v9778 = vadd.f32 %v9605, %v9777
      %v9779 = vpop.f32.mrb[0].mxu0
      %v9780 = vadd.f32 %v9607, %v9779
      %v9781 = vpop.f32.mrb[0].mxu0
      %v9782 = vadd.f32 %v9609, %v9781
      %v9783 = vpop.f32.mrb[0].mxu0
      %v9784 = vadd.f32 %v9611, %v9783
      %9785 = vmatprep.mubr.bf16.mxu0 0
      %9786 = vmatmul.mubr.bf16.gmra.mrb[0].mxu0 %v7500
      %v9787 = vpop.f32.mrb[0].mxu0
      %v9788 = vadd.f32 %v9615, %v9787
      %v9789 = vpop.f32.mrb[0].mxu0
      %v9790 = vadd.f32 %v9617, %v9789
      %v9791 = vpop.f32.mrb[0].mxu0
      %v9792 = vadd.f32 %v9619, %v9791
      %v9793 = vpop.f32.mrb[0].mxu0
      %v9794 = vadd.f32 %v9621, %v9793
      %9795 = vmatprep.mubr.bf16.mxu0 0
      %9796 = vmatmul.mubr.bf16.gmra.mrb[0].mxu0 %v7509
      %v9797 = vpop.f32.mrb[0].mxu0
      %v9798 = vadd.f32 %v9625, %v9797
      %v9799 = vpop.f32.mrb[0].mxu0
      %v9800 = vadd.f32 %v9627, %v9799
      %v9801 = vpop.f32.mrb[0].mxu0
      %v9802 = vadd.f32 %v9629, %v9801
      %v9803 = vpop.f32.mrb[0].mxu0
      %v9804 = vadd.f32 %v9631, %v9803
      %9805 = vmatprep.mubr.bf16.mxu0 0
      %9806 = vmatmul.mubr.bf16.gmra.mrb[0].mxu0 %v7518
      %v9807 = vpop.f32.mrb[0].mxu0
      %v9808 = vadd.f32 %v9635, %v9807
      %v9809 = vpop.f32.mrb[0].mxu0
      %v9810 = vadd.f32 %v9637, %v9809
      %v9811 = vpop.f32.mrb[0].mxu0
      %v9812 = vadd.f32 %v9639, %v9811
      %v9813 = vpop.f32.mrb[0].mxu0
      %v9814 = vadd.f32 %v9641, %v9813
      %9815 = vmatprep.mubr.bf16.mxu0 0
      %9816 = vmatmul.mubr.bf16.gmra.mrb[0].mxu0 %v7527
      %v9817 = vpop.f32.mrb[0].mxu0
      %v9818 = vadd.f32 %v9645, %v9817
      %v9819 = vpop.f32.mrb[0].mxu0
      %v9820 = vadd.f32 %v9647, %v9819
      %v9821 = vpop.f32.mrb[0].mxu0
      %v9822 = vadd.f32 %v9649, %v9821
      %v9823 = vpop.f32.mrb[0].mxu0
      %v9824 = vadd.f32 %v9651, %v9823
      %9825 = vmatprep.mubr.bf16.mxu0 0
      %9826 = vmatmul.mubr.bf16.gmra.mrb[0].mxu0 %v7536
      %v9827 = vpop.f32.mrb[0].mxu0
      %v9828 = vadd.f32 %v9655, %v9827
      %v9829 = vpop.f32.mrb[0].mxu0
      %v9830 = vadd.f32 %v9657, %v9829
      %v9831 = vpop.f32.mrb[0].mxu0
      %v9832 = vadd.f32 %v9659, %v9831
      %v9833 = vpop.f32.mrb[0].mxu0
      %v9834 = vadd.f32 %v9661, %v9833
      %9835 = vmatprep.mubr.bf16.mxu0 0
      %9836 = vmatmul.mubr.bf16.gmra.mrb[0].mxu0 %v7545
      %v9837 = vpop.f32.mrb[0].mxu0
      %v9838 = vadd.f32 %v9665, %v9837
      %v9839 = vpop.f32.mrb[0].mxu0
      %v9840 = vadd.f32 %v9667, %v9839
      %v9841 = vpop.f32.mrb[0].mxu0
      %v9842 = vadd.f32 %v9669, %v9841
      %v9843 = vpop.f32.mrb[0].mxu0
      %v9844 = vadd.f32 %v9671, %v9843
      %9845 = vmatprep.mubr.bf16.mxu0 0
      %9846 = vmatmul.mubr.bf16.gmra.mrb[0].mxu0 %v7554
      %v9847 = vpop.f32.mrb[0].mxu0
      %v9848 = vadd.f32 %v9675, %v9847
      %v9849 = vpop.f32.mrb[0].mxu0
      %v9850 = vadd.f32 %v9677, %v9849
      %v9851 = vpop.f32.mrb[0].mxu0
      %v9852 = vadd.f32 %v9679, %v9851
      %v9853 = vpop.f32.mrb[0].mxu0
      %v9854 = vadd.f32 %v9681, %v9853
      %9855 = vmatprep.mubr.bf16.mxu0 0
      %9856 = vmatmul.mubr.bf16.gmra.mrb[0].mxu0 %v7563
      %v9857 = vpop.f32.mrb[0].mxu0
      %v9858 = vadd.f32 %v9685, %v9857
      %v9859 = vpop.f32.mrb[0].mxu0
      %v9860 = vadd.f32 %v9687, %v9859
      %v9861 = vpop.f32.mrb[0].mxu0
      %v9862 = vadd.f32 %v9689, %v9861
      %v9863 = vpop.f32.mrb[0].mxu0
      %v9864 = vadd.f32 %v9691, %v9863
      %9865 = vmatprep.mubr.bf16.mxu0 0
      %9866 = vmatmul.mubr.bf16.gmra.mrb[0].mxu0 %v7572
      %v9867 = vpop.f32.mrb[0].mxu0
      %v9868 = vadd.f32 %v9695, %v9867
      %v9869 = vpop.f32.mrb[0].mxu0
      %v9870 = vadd.f32 %v9697, %v9869
      %v9871 = vpop.f32.mrb[0].mxu0
      %v9872 = vadd.f32 %v9699, %v9871
      %v9873 = vpop.f32.mrb[0].mxu0
      %v9874 = vadd.f32 %v9701, %v9873
      %9875 = vmatprep.mubr.bf16.mxu0 0
      %9876 = vmatmul.mubr.bf16.gmra.mrb[0].mxu0 %v7581
      %v9877 = vpop.f32.mrb[0].mxu0
      %v9878 = vadd.f32 %v9705, %v9877
      %v9879 = vpop.f32.mrb[0].mxu0
      %v9880 = vadd.f32 %v9707, %v9879
      %v9881 = vpop.f32.mrb[0].mxu0
      %v9882 = vadd.f32 %v9709, %v9881
      %v9883 = vpop.f32.mrb[0].mxu0
      %v9884 = vadd.f32 %v9711, %v9883
      %9885 = vmatprep.mubr.bf16.mxu0 0
      %9886 = vmatmul.mubr.bf16.gmra.mrb[0].mxu0 %v7590
      %v9887 = vpop.f32.mrb[0].mxu0
      %v9888 = vadd.f32 %v9715, %v9887
      %v9889 = vpop.f32.mrb[0].mxu0
      %v9890 = vadd.f32 %v9717, %v9889
      %v9891 = vpop.f32.mrb[0].mxu0
      %v9892 = vadd.f32 %v9719, %v9891
      %v9893 = vpop.f32.mrb[0].mxu0
      %v9894 = vadd.f32 %v9721, %v9893
      %9895 = vmatprep.mubr.bf16.mxu0 0
      %9896 = vmatmul.mubr.bf16.gmra.mrb[0].mxu0 %v7599
      %v9897 = vpop.f32.mrb[0].mxu0
      %v9898 = vadd.f32 %v9725, %v9897
      %v9899 = vpop.f32.mrb[0].mxu0
      %v9900 = vadd.f32 %v9727, %v9899
      %v9901 = vpop.f32.mrb[0].mxu0
      %v9902 = vadd.f32 %v9729, %v9901
      %v9903 = vpop.f32.mrb[0].mxu0
      %v9904 = vadd.f32 %v9731, %v9903
      %9905 = vdwg.mxu0
      %9906 = vmatprep.subr.bf16.mxu0 0
      %9907 = vmatpush1.bf16.msra.mxu0 %v8611
      %9908 = vmatprep.subr.bf16.mxu0 0
      %9909 = vmatpush1.bf16.msra.mxu0 %v8614
      %9910 = vmatprep.subr.bf16.mxu0 0
      %9911 = vmatpush1.bf16.msra.mxu0 %v8617
      %9912 = vmatprep.subr.bf16.mxu0 0
      %9913 = vmatpush1.bf16.msra.mxu0 %v8620
      %9914 = vmatprep.subr.bf16.mxu0 0
      %9915 = vmatpush1.bf16.msra.mxu0 %v8623
      %9916 = vmatprep.subr.bf16.mxu0 0
      %9917 = vmatpush1.bf16.msra.mxu0 %v8626
      %9918 = vmatprep.subr.bf16.mxu0 0
      %9919 = vmatpush1.bf16.msra.mxu0 %v8629
      %9920 = vmatprep.subr.bf16.mxu0 0
      %9921 = vmatpush1.bf16.msra.mxu0 %v8632
      %9922 = vmatprep.subr.bf16.mxu0 0
      %9923 = vmatpush1.bf16.msra.mxu0 %v8635
      %9924 = vmatprep.subr.bf16.mxu0 0
      %9925 = vmatpush1.bf16.msra.mxu0 %v8638
      %9926 = vmatprep.subr.bf16.mxu0 0
      %9927 = vmatpush1.bf16.msra.mxu0 %v8641
      %9928 = vmatprep.subr.bf16.mxu0 0
      %9929 = vmatpush1.bf16.msra.mxu0 %v8644
      %9930 = vmatprep.subr.bf16.mxu0 0
      %9931 = vmatpush1.bf16.msra.mxu0 %v8647
      %9932 = vmatprep.subr.bf16.mxu0 0
      %9933 = vmatpush1.bf16.msra.mxu0 %v8650
      %9934 = vmatprep.subr.bf16.mxu0 0
      %9935 = vmatpush1.bf16.msra.mxu0 %v8653
      %9936 = vmatprep.subr.bf16.mxu0 0
      %9937 = vmatpush1.bf16.msra.mxu0 %v8656
      %9938 = vmatprep.mubr.bf16.mxu0 %v7475
      %9939 = vmatmul.mubr.bf16.gmra.mrb[0].mxu0 %v7474
      %v9940 = vpop.f32.mrb[0].mxu0
      %v9941 = vadd.f32 0.0, %v9940
      %v9942 = vpop.f32.mrb[0].mxu0
      %v9943 = vpop.f32.mrb[0].mxu0
      %v9944 = vadd.f32 0.0, %v9943
      %v9945 = vpop.f32.mrb[0].mxu0
      %9946 = vmatprep.mubr.bf16.mxu0 %v7484
      %9947 = vmatmul.mubr.bf16.gmra.mrb[0].mxu0 %v7483
      %v9948 = vpop.f32.mrb[0].mxu0
      %v9949 = vadd.f32 0.0, %v9948
      %v9950 = vpop.f32.mrb[0].mxu0
      %v9951 = vpop.f32.mrb[0].mxu0
      %v9952 = vadd.f32 0.0, %v9951
      %v9953 = vpop.f32.mrb[0].mxu0
      %9954 = vmatprep.mubr.bf16.mxu0 %v7493
      %9955 = vmatmul.mubr.bf16.gmra.mrb[0].mxu0 %v7492
      %v9956 = vpop.f32.mrb[0].mxu0
      %v9957 = vadd.f32 0.0, %v9956
      %v9958 = vpop.f32.mrb[0].mxu0
      %v9959 = vpop.f32.mrb[0].mxu0
      %v9960 = vadd.f32 0.0, %v9959
      %v9961 = vpop.f32.mrb[0].mxu0
      %9962 = vmatprep.mubr.bf16.mxu0 %v7502
      %9963 = vmatmul.mubr.bf16.gmra.mrb[0].mxu0 %v7501
      %v9964 = vpop.f32.mrb[0].mxu0
      %v9965 = vadd.f32 0.0, %v9964
      %v9966 = vpop.f32.mrb[0].mxu0
      %v9967 = vpop.f32.mrb[0].mxu0
      %v9968 = vadd.f32 0.0, %v9967
      %v9969 = vpop.f32.mrb[0].mxu0
      %9970 = vmatprep.mubr.bf16.mxu0 %v7511
      %9971 = vmatmul.mubr.bf16.gmra.mrb[0].mxu0 %v7510
      %v9972 = vpop.f32.mrb[0].mxu0
      %v9973 = vadd.f32 0.0, %v9972
      %v9974 = vpop.f32.mrb[0].mxu0
      %v9975 = vpop.f32.mrb[0].mxu0
      %v9976 = vadd.f32 0.0, %v9975
      %v9977 = vpop.f32.mrb[0].mxu0
      %9978 = vmatprep.mubr.bf16.mxu0 %v7520
      %9979 = vmatmul.mubr.bf16.gmra.mrb[0].mxu0 %v7519
      %v9980 = vpop.f32.mrb[0].mxu0
      %v9981 = vadd.f32 0.0, %v9980
      %v9982 = vpop.f32.mrb[0].mxu0
      %v9983 = vpop.f32.mrb[0].mxu0
      %v9984 = vadd.f32 0.0, %v9983
      %v9985 = vpop.f32.mrb[0].mxu0
      %9986 = vmatprep.mubr.bf16.mxu0 %v7529
      %9987 = vmatmul.mubr.bf16.gmra.mrb[0].mxu0 %v7528
      %v9988 = vpop.f32.mrb[0].mxu0
      %v9989 = vadd.f32 0.0, %v9988
      %v9990 = vpop.f32.mrb[0].mxu0
      %v9991 = vpop.f32.mrb[0].mxu0
      %v9992 = vadd.f32 0.0, %v9991
      %v9993 = vpop.f32.mrb[0].mxu0
      %9994 = vmatprep.mubr.bf16.mxu0 %v7538
      %9995 = vmatmul.mubr.bf16.gmra.mrb[0].mxu0 %v7537
      %v9996 = vpop.f32.mrb[0].mxu0
      %v9997 = vadd.f32 0.0, %v9996
      %v9998 = vpop.f32.mrb[0].mxu0
      %v9999 = vpop.f32.mrb[0].mxu0
      %v10000 = vadd.f32 0.0, %v9999
      %v10001 = vpop.f32.mrb[0].mxu0
      %10002 = vmatprep.mubr.bf16.mxu0 %v7547
      %10003 = vmatmul.mubr.bf16.gmra.mrb[0].mxu0 %v7546
      %v10004 = vpop.f32.mrb[0].mxu0
      %v10005 = vadd.f32 0.0, %v10004
      %v10006 = vpop.f32.mrb[0].mxu0
      %v10007 = vpop.f32.mrb[0].mxu0
      %v10008 = vadd.f32 0.0, %v10007
      %v10009 = vpop.f32.mrb[0].mxu0
      %10010 = vmatprep.mubr.bf16.mxu0 %v7556
      %10011 = vmatmul.mubr.bf16.gmra.mrb[0].mxu0 %v7555
      %v10012 = vpop.f32.mrb[0].mxu0
      %v10013 = vadd.f32 0.0, %v10012
      %v10014 = vpop.f32.mrb[0].mxu0
      %v10015 = vpop.f32.mrb[0].mxu0
      %v10016 = vadd.f32 0.0, %v10015
      %v10017 = vpop.f32.mrb[0].mxu0
      %10018 = vmatprep.mubr.bf16.mxu0 %v7565
      %10019 = vmatmul.mubr.bf16.gmra.mrb[0].mxu0 %v7564
      %v10020 = vpop.f32.mrb[0].mxu0
      %v10021 = vadd.f32 0.0, %v10020
      %v10022 = vpop.f32.mrb[0].mxu0
      %v10023 = vpop.f32.mrb[0].mxu0
      %v10024 = vadd.f32 0.0, %v10023
      %v10025 = vpop.f32.mrb[0].mxu0
      %10026 = vmatprep.mubr.bf16.mxu0 %v7574
      %10027 = vmatmul.mubr.bf16.gmra.mrb[0].mxu0 %v7573
      %v10028 = vpop.f32.mrb[0].mxu0
      %v10029 = vadd.f32 0.0, %v10028
      %v10030 = vpop.f32.mrb[0].mxu0
      %v10031 = vpop.f32.mrb[0].mxu0
      %v10032 = vadd.f32 0.0, %v10031
      %v10033 = vpop.f32.mrb[0].mxu0
      %10034 = vmatprep.mubr.bf16.mxu0 %v7583
      %10035 = vmatmul.mubr.bf16.gmra.mrb[0].mxu0 %v7582
      %v10036 = vpop.f32.mrb[0].mxu0
      %v10037 = vadd.f32 0.0, %v10036
      %v10038 = vpop.f32.mrb[0].mxu0
      %v10039 = vpop.f32.mrb[0].mxu0
      %v10040 = vadd.f32 0.0, %v10039
      %v10041 = vpop.f32.mrb[0].mxu0
      %10042 = vmatprep.mubr.bf16.mxu0 %v7592
      %10043 = vmatmul.mubr.bf16.gmra.mrb[0].mxu0 %v7591
      %v10044 = vpop.f32.mrb[0].mxu0
      %v10045 = vadd.f32 0.0, %v10044
      %v10046 = vpop.f32.mrb[0].mxu0
      %v10047 = vpop.f32.mrb[0].mxu0
      %v10048 = vadd.f32 0.0, %v10047
      %v10049 = vpop.f32.mrb[0].mxu0
      %10050 = vdwg.mxu0
      %10051 = vmatprep.subr.bf16.mxu0 0
      %10052 = vmatpush1.bf16.msra.mxu0 %v8659
      %10053 = vmatprep.subr.bf16.mxu0 0
      %10054 = vmatpush1.bf16.msra.mxu0 %v8662
      %10055 = vmatprep.subr.bf16.mxu0 0
      %10056 = vmatpush1.bf16.msra.mxu0 %v8665
      %10057 = vmatprep.subr.bf16.mxu0 0
      %10058 = vmatpush1.bf16.msra.mxu0 %v8668
      %10059 = vmatprep.subr.bf16.mxu0 0
      %10060 = vmatpush1.bf16.msra.mxu0 %v8671
      %10061 = vmatprep.subr.bf16.mxu0 0
      %10062 = vmatpush1.bf16.msra.mxu0 %v8674
      %10063 = vmatprep.subr.bf16.mxu0 0
      %10064 = vmatpush1.bf16.msra.mxu0 %v8677
      %10065 = vmatprep.subr.bf16.mxu0 0
      %10066 = vmatpush1.bf16.msra.mxu0 %v8680
      %10067 = vmatprep.subr.bf16.mxu0 0
      %10068 = vmatpush1.bf16.msra.mxu0 %v8683
      %10069 = vmatprep.subr.bf16.mxu0 0
      %10070 = vmatpush1.bf16.msra.mxu0 %v8686
      %10071 = vmatprep.subr.bf16.mxu0 0
      %10072 = vmatpush1.bf16.msra.mxu0 %v8689
      %10073 = vmatprep.subr.bf16.mxu0 0
      %10074 = vmatpush1.bf16.msra.mxu0 %v8692
      %10075 = vmatprep.subr.bf16.mxu0 0
      %10076 = vmatpush1.bf16.msra.mxu0 %v8695
      %10077 = vmatprep.subr.bf16.mxu0 0
      %10078 = vmatpush1.bf16.msra.mxu0 %v8698
      %10079 = vmatprep.subr.bf16.mxu0 0
      %10080 = vmatpush1.bf16.msra.mxu0 %v8701
      %10081 = vmatprep.subr.bf16.mxu0 0
      %10082 = vmatpush1.bf16.msra.mxu0 %v8704
      %10083 = vmatprep.mubr.bf16.mxu0 %v7477
      %10084 = vmatmul.mubr.bf16.gmra.mrb[0].mxu0 %v7476
      %v10085 = vpop.f32.mrb[0].mxu0
      %v10086 = vadd.f32 %v9941, %v10085
      %v10087 = vpop.f32.mrb[0].mxu0
      %v10088 = vpop.f32.mrb[0].mxu0
      %v10089 = vadd.f32 %v9944, %v10088
      %v10090 = vpop.f32.mrb[0].mxu0
      %10091 = vmatprep.mubr.bf16.mxu0 %v7486
      %10092 = vmatmul.mubr.bf16.gmra.mrb[0].mxu0 %v7485
      %v10093 = vpop.f32.mrb[0].mxu0
      %v10094 = vadd.f32 %v9949, %v10093
      %v10095 = vpop.f32.mrb[0].mxu0
      %v10096 = vpop.f32.mrb[0].mxu0
      %v10097 = vadd.f32 %v9952, %v10096
      %v10098 = vpop.f32.mrb[0].mxu0
      %10099 = vmatprep.mubr.bf16.mxu0 %v7495
      %10100 = vmatmul.mubr.bf16.gmra.mrb[0].mxu0 %v7494
      %v10101 = vpop.f32.mrb[0].mxu0
      %v10102 = vadd.f32 %v9957, %v10101
      %v10103 = vpop.f32.mrb[0].mxu0
      %v10104 = vpop.f32.mrb[0].mxu0
      %v10105 = vadd.f32 %v9960, %v10104
      %v10106 = vpop.f32.mrb[0].mxu0
      %10107 = vmatprep.mubr.bf16.mxu0 %v7504
      %10108 = vmatmul.mubr.bf16.gmra.mrb[0].mxu0 %v7503
      %v10109 = vpop.f32.mrb[0].mxu0
      %v10110 = vadd.f32 %v9965, %v10109
      %v10111 = vpop.f32.mrb[0].mxu0
      %v10112 = vpop.f32.mrb[0].mxu0
      %v10113 = vadd.f32 %v9968, %v10112
      %v10114 = vpop.f32.mrb[0].mxu0
      %10115 = vmatprep.mubr.bf16.mxu0 %v7513
      %10116 = vmatmul.mubr.bf16.gmra.mrb[0].mxu0 %v7512
      %v10117 = vpop.f32.mrb[0].mxu0
      %v10118 = vadd.f32 %v9973, %v10117
      %v10119 = vpop.f32.mrb[0].mxu0
      %v10120 = vpop.f32.mrb[0].mxu0
      %v10121 = vadd.f32 %v9976, %v10120
      %v10122 = vpop.f32.mrb[0].mxu0
      %10123 = vmatprep.mubr.bf16.mxu0 %v7522
      %10124 = vmatmul.mubr.bf16.gmra.mrb[0].mxu0 %v7521
      %v10125 = vpop.f32.mrb[0].mxu0
      %v10126 = vadd.f32 %v9981, %v10125
      %v10127 = vpop.f32.mrb[0].mxu0
      %v10128 = vpop.f32.mrb[0].mxu0
      %v10129 = vadd.f32 %v9984, %v10128
      %v10130 = vpop.f32.mrb[0].mxu0
      %10131 = vmatprep.mubr.bf16.mxu0 %v7531
      %10132 = vmatmul.mubr.bf16.gmra.mrb[0].mxu0 %v7530
      %v10133 = vpop.f32.mrb[0].mxu0
      %v10134 = vadd.f32 %v9989, %v10133
      %v10135 = vpop.f32.mrb[0].mxu0
      %v10136 = vpop.f32.mrb[0].mxu0
      %v10137 = vadd.f32 %v9992, %v10136
      %v10138 = vpop.f32.mrb[0].mxu0
      %10139 = vmatprep.mubr.bf16.mxu0 %v7540
      %10140 = vmatmul.mubr.bf16.gmra.mrb[0].mxu0 %v7539
      %v10141 = vpop.f32.mrb[0].mxu0
      %v10142 = vadd.f32 %v9997, %v10141
      %v10143 = vpop.f32.mrb[0].mxu0
      %v10144 = vpop.f32.mrb[0].mxu0
      %v10145 = vadd.f32 %v10000, %v10144
      %v10146 = vpop.f32.mrb[0].mxu0
      %10147 = vmatprep.mubr.bf16.mxu0 %v7549
      %10148 = vmatmul.mubr.bf16.gmra.mrb[0].mxu0 %v7548
      %v10149 = vpop.f32.mrb[0].mxu0
      %v10150 = vadd.f32 %v10005, %v10149
      %v10151 = vpop.f32.mrb[0].mxu0
      %v10152 = vpop.f32.mrb[0].mxu0
      %v10153 = vadd.f32 %v10008, %v10152
      %v10154 = vpop.f32.mrb[0].mxu0
      %10155 = vmatprep.mubr.bf16.mxu0 %v7558
      %10156 = vmatmul.mubr.bf16.gmra.mrb[0].mxu0 %v7557
      %v10157 = vpop.f32.mrb[0].mxu0
      %v10158 = vadd.f32 %v10013, %v10157
      %v10159 = vpop.f32.mrb[0].mxu0
      %v10160 = vpop.f32.mrb[0].mxu0
      %v10161 = vadd.f32 %v10016, %v10160
      %v10162 = vpop.f32.mrb[0].mxu0
      %10163 = vmatprep.mubr.bf16.mxu0 %v7567
      %10164 = vmatmul.mubr.bf16.gmra.mrb[0].mxu0 %v7566
      %v10165 = vpop.f32.mrb[0].mxu0
      %v10166 = vadd.f32 %v10021, %v10165
      %v10167 = vpop.f32.mrb[0].mxu0
      %v10168 = vpop.f32.mrb[0].mxu0
      %v10169 = vadd.f32 %v10024, %v10168
      %v10170 = vpop.f32.mrb[0].mxu0
      %10171 = vmatprep.mubr.bf16.mxu0 %v7576
      %10172 = vmatmul.mubr.bf16.gmra.mrb[0].mxu0 %v7575
      %v10173 = vpop.f32.mrb[0].mxu0
      %v10174 = vadd.f32 %v10029, %v10173
      %v10175 = vpop.f32.mrb[0].mxu0
      %v10176 = vpop.f32.mrb[0].mxu0
      %v10177 = vadd.f32 %v10032, %v10176
      %v10178 = vpop.f32.mrb[0].mxu0
      %10179 = vmatprep.mubr.bf16.mxu0 %v7585
      %10180 = vmatmul.mubr.bf16.gmra.mrb[0].mxu0 %v7584
      %v10181 = vpop.f32.mrb[0].mxu0
      %v10182 = vadd.f32 %v10037, %v10181
      %v10183 = vpop.f32.mrb[0].mxu0
      %v10184 = vpop.f32.mrb[0].mxu0
      %v10185 = vadd.f32 %v10040, %v10184
      %v10186 = vpop.f32.mrb[0].mxu0
      %10187 = vmatprep.mubr.bf16.mxu0 %v7594
      %10188 = vmatmul.mubr.bf16.gmra.mrb[0].mxu0 %v7593
      %v10189 = vpop.f32.mrb[0].mxu0
      %v10190 = vadd.f32 %v10045, %v10189
      %v10191 = vpop.f32.mrb[0].mxu0
      %v10192 = vpop.f32.mrb[0].mxu0
      %v10193 = vadd.f32 %v10048, %v10192
      %v10194 = vpop.f32.mrb[0].mxu0
      %10195 = vdwg.mxu0
      %10196 = vmatprep.subr.bf16.mxu0 0
      %10197 = vmatpush1.bf16.msra.mxu0 %v8707
      %10198 = vmatprep.subr.bf16.mxu0 0
      %10199 = vmatpush1.bf16.msra.mxu0 %v8710
      %10200 = vmatprep.subr.bf16.mxu0 0
      %10201 = vmatpush1.bf16.msra.mxu0 %v8713
      %10202 = vmatprep.subr.bf16.mxu0 0
      %10203 = vmatpush1.bf16.msra.mxu0 %v8716
      %10204 = vmatprep.subr.bf16.mxu0 0
      %10205 = vmatpush1.bf16.msra.mxu0 %v8719
      %10206 = vmatprep.subr.bf16.mxu0 0
      %10207 = vmatpush1.bf16.msra.mxu0 %v8722
      %10208 = vmatprep.subr.bf16.mxu0 0
      %10209 = vmatpush1.bf16.msra.mxu0 %v8725
      %10210 = vmatprep.subr.bf16.mxu0 0
      %10211 = vmatpush1.bf16.msra.mxu0 %v8728
      %10212 = vmatprep.subr.bf16.mxu0 0
      %10213 = vmatpush1.bf16.msra.mxu0 %v8731
      %10214 = vmatprep.subr.bf16.mxu0 0
      %10215 = vmatpush1.bf16.msra.mxu0 %v8734
      %10216 = vmatprep.subr.bf16.mxu0 0
      %10217 = vmatpush1.bf16.msra.mxu0 %v8737
      %10218 = vmatprep.subr.bf16.mxu0 0
      %10219 = vmatpush1.bf16.msra.mxu0 %v8740
      %10220 = vmatprep.subr.bf16.mxu0 0
      %10221 = vmatpush1.bf16.msra.mxu0 %v8743
      %10222 = vmatprep.subr.bf16.mxu0 0
      %10223 = vmatpush1.bf16.msra.mxu0 %v8746
      %10224 = vmatprep.subr.bf16.mxu0 0
      %10225 = vmatpush1.bf16.msra.mxu0 %v8749
      %10226 = vmatprep.subr.bf16.mxu0 0
      %10227 = vmatpush1.bf16.msra.mxu0 %v8752
      %10228 = vmatprep.mubr.bf16.mxu0 %v7479
      %10229 = vmatmul.mubr.bf16.gmra.mrb[0].mxu0 %v7478
      %v10230 = vpop.f32.mrb[0].mxu0
      %v10231 = vadd.f32 %v10086, %v10230
      %v10232 = vpop.f32.mrb[0].mxu0
      %v10233 = vpop.f32.mrb[0].mxu0
      %v10234 = vadd.f32 %v10089, %v10233
      %v10235 = vpop.f32.mrb[0].mxu0
      %10236 = vmatprep.mubr.bf16.mxu0 %v7488
      %10237 = vmatmul.mubr.bf16.gmra.mrb[0].mxu0 %v7487
      %v10238 = vpop.f32.mrb[0].mxu0
      %v10239 = vadd.f32 %v10094, %v10238
      %v10240 = vpop.f32.mrb[0].mxu0
      %v10241 = vpop.f32.mrb[0].mxu0
      %v10242 = vadd.f32 %v10097, %v10241
      %v10243 = vpop.f32.mrb[0].mxu0
      %10244 = vmatprep.mubr.bf16.mxu0 %v7497
      %10245 = vmatmul.mubr.bf16.gmra.mrb[0].mxu0 %v7496
      %v10246 = vpop.f32.mrb[0].mxu0
      %v10247 = vadd.f32 %v10102, %v10246
      %v10248 = vpop.f32.mrb[0].mxu0
      %v10249 = vpop.f32.mrb[0].mxu0
      %v10250 = vadd.f32 %v10105, %v10249
      %v10251 = vpop.f32.mrb[0].mxu0
      %10252 = vmatprep.mubr.bf16.mxu0 %v7506
      %10253 = vmatmul.mubr.bf16.gmra.mrb[0].mxu0 %v7505
      %v10254 = vpop.f32.mrb[0].mxu0
      %v10255 = vadd.f32 %v10110, %v10254
      %v10256 = vpop.f32.mrb[0].mxu0
      %v10257 = vpop.f32.mrb[0].mxu0
      %v10258 = vadd.f32 %v10113, %v10257
      %v10259 = vpop.f32.mrb[0].mxu0
      %10260 = vmatprep.mubr.bf16.mxu0 %v7515
      %10261 = vmatmul.mubr.bf16.gmra.mrb[0].mxu0 %v7514
      %v10262 = vpop.f32.mrb[0].mxu0
      %v10263 = vadd.f32 %v10118, %v10262
      %v10264 = vpop.f32.mrb[0].mxu0
      %v10265 = vpop.f32.mrb[0].mxu0
      %v10266 = vadd.f32 %v10121, %v10265
      %v10267 = vpop.f32.mrb[0].mxu0
      %10268 = vmatprep.mubr.bf16.mxu0 %v7524
      %10269 = vmatmul.mubr.bf16.gmra.mrb[0].mxu0 %v7523
      %v10270 = vpop.f32.mrb[0].mxu0
      %v10271 = vadd.f32 %v10126, %v10270
      %v10272 = vpop.f32.mrb[0].mxu0
      %v10273 = vpop.f32.mrb[0].mxu0
      %v10274 = vadd.f32 %v10129, %v10273
      %v10275 = vpop.f32.mrb[0].mxu0
      %10276 = vmatprep.mubr.bf16.mxu0 %v7533
      %10277 = vmatmul.mubr.bf16.gmra.mrb[0].mxu0 %v7532
      %v10278 = vpop.f32.mrb[0].mxu0
      %v10279 = vadd.f32 %v10134, %v10278
      %v10280 = vpop.f32.mrb[0].mxu0
      %v10281 = vpop.f32.mrb[0].mxu0
      %v10282 = vadd.f32 %v10137, %v10281
      %v10283 = vpop.f32.mrb[0].mxu0
      %10284 = vmatprep.mubr.bf16.mxu0 %v7542
      %10285 = vmatmul.mubr.bf16.gmra.mrb[0].mxu0 %v7541
      %v10286 = vpop.f32.mrb[0].mxu0
      %v10287 = vadd.f32 %v10142, %v10286
      %v10288 = vpop.f32.mrb[0].mxu0
      %v10289 = vpop.f32.mrb[0].mxu0
      %v10290 = vadd.f32 %v10145, %v10289
      %v10291 = vpop.f32.mrb[0].mxu0
      %10292 = vmatprep.mubr.bf16.mxu0 %v7551
      %10293 = vmatmul.mubr.bf16.gmra.mrb[0].mxu0 %v7550
      %v10294 = vpop.f32.mrb[0].mxu0
      %v10295 = vadd.f32 %v10150, %v10294
      %v10296 = vpop.f32.mrb[0].mxu0
      %v10297 = vpop.f32.mrb[0].mxu0
      %v10298 = vadd.f32 %v10153, %v10297
      %v10299 = vpop.f32.mrb[0].mxu0
      %10300 = vmatprep.mubr.bf16.mxu0 %v7560
      %10301 = vmatmul.mubr.bf16.gmra.mrb[0].mxu0 %v7559
      %v10302 = vpop.f32.mrb[0].mxu0
      %v10303 = vadd.f32 %v10158, %v10302
      %v10304 = vpop.f32.mrb[0].mxu0
      %v10305 = vpop.f32.mrb[0].mxu0
      %v10306 = vadd.f32 %v10161, %v10305
      %v10307 = vpop.f32.mrb[0].mxu0
      %10308 = vmatprep.mubr.bf16.mxu0 %v7569
      %10309 = vmatmul.mubr.bf16.gmra.mrb[0].mxu0 %v7568
      %v10310 = vpop.f32.mrb[0].mxu0
      %v10311 = vadd.f32 %v10166, %v10310
      %v10312 = vpop.f32.mrb[0].mxu0
      %v10313 = vpop.f32.mrb[0].mxu0
      %v10314 = vadd.f32 %v10169, %v10313
      %v10315 = vpop.f32.mrb[0].mxu0
      %10316 = vmatprep.mubr.bf16.mxu0 %v7578
      %10317 = vmatmul.mubr.bf16.gmra.mrb[0].mxu0 %v7577
      %v10318 = vpop.f32.mrb[0].mxu0
      %v10319 = vadd.f32 %v10174, %v10318
      %v10320 = vpop.f32.mrb[0].mxu0
      %v10321 = vpop.f32.mrb[0].mxu0
      %v10322 = vadd.f32 %v10177, %v10321
      %v10323 = vpop.f32.mrb[0].mxu0
      %10324 = vmatprep.mubr.bf16.mxu0 %v7587
      %10325 = vmatmul.mubr.bf16.gmra.mrb[0].mxu0 %v7586
      %v10326 = vpop.f32.mrb[0].mxu0
      %v10327 = vadd.f32 %v10182, %v10326
      %v10328 = vpop.f32.mrb[0].mxu0
      %v10329 = vpop.f32.mrb[0].mxu0
      %v10330 = vadd.f32 %v10185, %v10329
      %v10331 = vpop.f32.mrb[0].mxu0
      %10332 = vmatprep.mubr.bf16.mxu0 %v7596
      %10333 = vmatmul.mubr.bf16.gmra.mrb[0].mxu0 %v7595
      %v10334 = vpop.f32.mrb[0].mxu0
      %v10335 = vadd.f32 %v10190, %v10334
      %v10336 = vpop.f32.mrb[0].mxu0
      %v10337 = vpop.f32.mrb[0].mxu0
      %v10338 = vadd.f32 %v10193, %v10337
      %v10339 = vpop.f32.mrb[0].mxu0
      %10340 = vdwg.mxu0
      %10341 = vmatprep.subr.bf16.mxu0 0
      %10342 = vmatpush1.bf16.msra.mxu0 %v8755
      %10343 = vmatprep.subr.bf16.mxu0 0
      %10344 = vmatpush1.bf16.msra.mxu0 %v8758
      %10345 = vmatprep.subr.bf16.mxu0 0
      %10346 = vmatpush1.bf16.msra.mxu0 %v8761
      %10347 = vmatprep.subr.bf16.mxu0 0
      %10348 = vmatpush1.bf16.msra.mxu0 %v8764
      %10349 = vmatprep.subr.bf16.mxu0 0
      %10350 = vmatpush1.bf16.msra.mxu0 %v8767
      %10351 = vmatprep.subr.bf16.mxu0 0
      %10352 = vmatpush1.bf16.msra.mxu0 %v8770
      %10353 = vmatprep.subr.bf16.mxu0 0
      %10354 = vmatpush1.bf16.msra.mxu0 %v8773
      %10355 = vmatprep.subr.bf16.mxu0 0
      %10356 = vmatpush1.bf16.msra.mxu0 %v8776
      %10357 = vmatprep.subr.bf16.mxu0 0
      %10358 = vmatpush1.bf16.msra.mxu0 %v8779
      %10359 = vmatprep.subr.bf16.mxu0 0
      %10360 = vmatpush1.bf16.msra.mxu0 %v8782
      %10361 = vmatprep.subr.bf16.mxu0 0
      %10362 = vmatpush1.bf16.msra.mxu0 %v8785
      %10363 = vmatprep.subr.bf16.mxu0 0
      %10364 = vmatpush1.bf16.msra.mxu0 %v8788
      %10365 = vmatprep.subr.bf16.mxu0 0
      %10366 = vmatpush1.bf16.msra.mxu0 %v8791
      %10367 = vmatprep.subr.bf16.mxu0 0
      %10368 = vmatpush1.bf16.msra.mxu0 %v8794
      %10369 = vmatprep.subr.bf16.mxu0 0
      %10370 = vmatpush1.bf16.msra.mxu0 %v8797
      %10371 = vmatprep.subr.bf16.mxu0 0
      %10372 = vmatpush1.bf16.msra.mxu0 %v8800
      %10373 = vmatprep.mubr.bf16.mxu0 %v7481
      %10374 = vmatmul.mubr.bf16.gmra.mrb[0].mxu0 %v7480
      %v10375 = vpop.f32.mrb[0].mxu0
      %v10376 = vadd.f32 %v10231, %v10375
      %v10377 = vpop.f32.mrb[0].mxu0
      %v10378 = vpop.f32.mrb[0].mxu0
      %v10379 = vadd.f32 %v10234, %v10378
      %v10380 = vpop.f32.mrb[0].mxu0
      %10381 = vmatprep.mubr.bf16.mxu0 %v7490
      %10382 = vmatmul.mubr.bf16.gmra.mrb[0].mxu0 %v7489
      %v10383 = vpop.f32.mrb[0].mxu0
      %v10384 = vadd.f32 %v10239, %v10383
      %v10385 = vpop.f32.mrb[0].mxu0
      %v10386 = vpop.f32.mrb[0].mxu0
      %v10387 = vadd.f32 %v10242, %v10386
      %v10388 = vpop.f32.mrb[0].mxu0
      %10389 = vmatprep.mubr.bf16.mxu0 %v7499
      %10390 = vmatmul.mubr.bf16.gmra.mrb[0].mxu0 %v7498
      %v10391 = vpop.f32.mrb[0].mxu0
      %v10392 = vadd.f32 %v10247, %v10391
      %v10393 = vpop.f32.mrb[0].mxu0
      %v10394 = vpop.f32.mrb[0].mxu0
      %v10395 = vadd.f32 %v10250, %v10394
      %v10396 = vpop.f32.mrb[0].mxu0
      %10397 = vmatprep.mubr.bf16.mxu0 %v7508
      %10398 = vmatmul.mubr.bf16.gmra.mrb[0].mxu0 %v7507
      %v10399 = vpop.f32.mrb[0].mxu0
      %v10400 = vadd.f32 %v10255, %v10399
      %v10401 = vpop.f32.mrb[0].mxu0
      %v10402 = vpop.f32.mrb[0].mxu0
      %v10403 = vadd.f32 %v10258, %v10402
      %v10404 = vpop.f32.mrb[0].mxu0
      %10405 = vmatprep.mubr.bf16.mxu0 %v7517
      %10406 = vmatmul.mubr.bf16.gmra.mrb[0].mxu0 %v7516
      %v10407 = vpop.f32.mrb[0].mxu0
      %v10408 = vadd.f32 %v10263, %v10407
      %v10409 = vpop.f32.mrb[0].mxu0
      %v10410 = vpop.f32.mrb[0].mxu0
      %v10411 = vadd.f32 %v10266, %v10410
      %v10412 = vpop.f32.mrb[0].mxu0
      %10413 = vmatprep.mubr.bf16.mxu0 %v7526
      %10414 = vmatmul.mubr.bf16.gmra.mrb[0].mxu0 %v7525
      %v10415 = vpop.f32.mrb[0].mxu0
      %v10416 = vadd.f32 %v10271, %v10415
      %v10417 = vpop.f32.mrb[0].mxu0
      %v10418 = vpop.f32.mrb[0].mxu0
      %v10419 = vadd.f32 %v10274, %v10418
      %v10420 = vpop.f32.mrb[0].mxu0
      %10421 = vmatprep.mubr.bf16.mxu0 %v7535
      %10422 = vmatmul.mubr.bf16.gmra.mrb[0].mxu0 %v7534
      %v10423 = vpop.f32.mrb[0].mxu0
      %v10424 = vadd.f32 %v10279, %v10423
      %v10425 = vpop.f32.mrb[0].mxu0
      %v10426 = vpop.f32.mrb[0].mxu0
      %v10427 = vadd.f32 %v10282, %v10426
      %v10428 = vpop.f32.mrb[0].mxu0
      %10429 = vmatprep.mubr.bf16.mxu0 %v7544
      %10430 = vmatmul.mubr.bf16.gmra.mrb[0].mxu0 %v7543
      %v10431 = vpop.f32.mrb[0].mxu0
      %v10432 = vadd.f32 %v10287, %v10431
      %v10433 = vpop.f32.mrb[0].mxu0
      %v10434 = vpop.f32.mrb[0].mxu0
      %v10435 = vadd.f32 %v10290, %v10434
      %v10436 = vpop.f32.mrb[0].mxu0
      %10437 = vmatprep.mubr.bf16.mxu0 %v7553
      %10438 = vmatmul.mubr.bf16.gmra.mrb[0].mxu0 %v7552
      %v10439 = vpop.f32.mrb[0].mxu0
      %v10440 = vadd.f32 %v10295, %v10439
      %v10441 = vpop.f32.mrb[0].mxu0
      %v10442 = vpop.f32.mrb[0].mxu0
      %v10443 = vadd.f32 %v10298, %v10442
      %v10444 = vpop.f32.mrb[0].mxu0
      %10445 = vmatprep.mubr.bf16.mxu0 %v7562
      %10446 = vmatmul.mubr.bf16.gmra.mrb[0].mxu0 %v7561
      %v10447 = vpop.f32.mrb[0].mxu0
      %v10448 = vadd.f32 %v10303, %v10447
      %v10449 = vpop.f32.mrb[0].mxu0
      %v10450 = vpop.f32.mrb[0].mxu0
      %v10451 = vadd.f32 %v10306, %v10450
      %v10452 = vpop.f32.mrb[0].mxu0
      %10453 = vmatprep.mubr.bf16.mxu0 %v7571
      %10454 = vmatmul.mubr.bf16.gmra.mrb[0].mxu0 %v7570
      %v10455 = vpop.f32.mrb[0].mxu0
      %v10456 = vadd.f32 %v10311, %v10455
      %v10457 = vpop.f32.mrb[0].mxu0
      %v10458 = vpop.f32.mrb[0].mxu0
      %v10459 = vadd.f32 %v10314, %v10458
      %v10460 = vpop.f32.mrb[0].mxu0
      %10461 = vmatprep.mubr.bf16.mxu0 %v7580
      %10462 = vmatmul.mubr.bf16.gmra.mrb[0].mxu0 %v7579
      %v10463 = vpop.f32.mrb[0].mxu0
      %v10464 = vadd.f32 %v10319, %v10463
      %v10465 = vpop.f32.mrb[0].mxu0
      %v10466 = vpop.f32.mrb[0].mxu0
      %v10467 = vadd.f32 %v10322, %v10466
      %v10468 = vpop.f32.mrb[0].mxu0
      %10469 = vmatprep.mubr.bf16.mxu0 %v7589
      %10470 = vmatmul.mubr.bf16.gmra.mrb[0].mxu0 %v7588
      %v10471 = vpop.f32.mrb[0].mxu0
      %v10472 = vadd.f32 %v10327, %v10471
      %v10473 = vpop.f32.mrb[0].mxu0
      %v10474 = vpop.f32.mrb[0].mxu0
      %v10475 = vadd.f32 %v10330, %v10474
      %v10476 = vpop.f32.mrb[0].mxu0
      %10477 = vmatprep.mubr.bf16.mxu0 %v7598
      %10478 = vmatmul.mubr.bf16.gmra.mrb[0].mxu0 %v7597
      %v10479 = vpop.f32.mrb[0].mxu0
      %v10480 = vadd.f32 %v10335, %v10479
      %v10481 = vpop.f32.mrb[0].mxu0
      %v10482 = vpop.f32.mrb[0].mxu0
      %v10483 = vadd.f32 %v10338, %v10482
      %v10484 = vpop.f32.mrb[0].mxu0
      %10485 = vdwg.mxu0
      %10486 = vmatprep.subr.bf16.mxu0 0
      %10487 = vmatpush1.bf16.msra.mxu0 %v8803
      %10488 = vmatprep.subr.bf16.mxu0 0
      %10489 = vmatpush1.bf16.msra.mxu0 %v8806
      %10490 = vmatprep.subr.bf16.mxu0 0
      %10491 = vmatpush1.bf16.msra.mxu0 %v8809
      %10492 = vmatprep.subr.bf16.mxu0 0
      %10493 = vmatpush1.bf16.msra.mxu0 %v8812
      %10494 = vmatprep.subr.bf16.mxu0 0
      %10495 = vmatpush1.bf16.msra.mxu0 %v8815
      %10496 = vmatprep.subr.bf16.mxu0 0
      %10497 = vmatpush1.bf16.msra.mxu0 %v8818
      %10498 = vmatprep.subr.bf16.mxu0 0
      %10499 = vmatpush1.bf16.msra.mxu0 %v8821
      %10500 = vmatprep.subr.bf16.mxu0 0
      %10501 = vmatpush1.bf16.msra.mxu0 %v8824
      %10502 = vmatprep.subr.bf16.mxu0 0
      %10503 = vmatpush1.bf16.msra.mxu0 0
      %10504 = vmatprep.subr.bf16.mxu0 0
      %10505 = vmatpush1.bf16.msra.mxu0 0
      %10506 = vmatprep.subr.bf16.mxu0 0
      %10507 = vmatpush1.bf16.msra.mxu0 0
      %10508 = vmatprep.subr.bf16.mxu0 0
      %10509 = vmatpush1.bf16.msra.mxu0 0
      %10510 = vmatprep.subr.bf16.mxu0 0
      %10511 = vmatpush1.bf16.msra.mxu0 0
      %10512 = vmatprep.subr.bf16.mxu0 0
      %10513 = vmatpush1.bf16.msra.mxu0 0
      %10514 = vmatprep.subr.bf16.mxu0 0
      %10515 = vmatpush1.bf16.msra.mxu0 0
      %10516 = vmatprep.subr.bf16.mxu0 0
      %10517 = vmatpush1.bf16.msra.mxu0 0
      %10518 = vmatprep.mubr.bf16.mxu0 0
      %10519 = vmatmul.mubr.bf16.gmra.mrb[0].mxu0 %v7482
      %v10520 = vpop.f32.mrb[0].mxu0
      %v10521 = vadd.f32 %v10376, %v10520
      %v10522 = vpop.f32.mrb[0].mxu0
      %v10523 = vpop.f32.mrb[0].mxu0
      %v10524 = vadd.f32 %v10379, %v10523
      %v10525 = vpop.f32.mrb[0].mxu0
      %10526 = vmatprep.mubr.bf16.mxu0 0
      %10527 = vmatmul.mubr.bf16.gmra.mrb[0].mxu0 %v7491
      %v10528 = vpop.f32.mrb[0].mxu0
      %v10529 = vadd.f32 %v10384, %v10528
      %v10530 = vpop.f32.mrb[0].mxu0
      %v10531 = vpop.f32.mrb[0].mxu0
      %v10532 = vadd.f32 %v10387, %v10531
      %v10533 = vpop.f32.mrb[0].mxu0
      %10534 = vmatprep.mubr.bf16.mxu0 0
      %10535 = vmatmul.mubr.bf16.gmra.mrb[0].mxu0 %v7500
      %v10536 = vpop.f32.mrb[0].mxu0
      %v10537 = vadd.f32 %v10392, %v10536
      %v10538 = vpop.f32.mrb[0].mxu0
      %v10539 = vpop.f32.mrb[0].mxu0
      %v10540 = vadd.f32 %v10395, %v10539
      %v10541 = vpop.f32.mrb[0].mxu0
      %10542 = vmatprep.mubr.bf16.mxu0 0
      %10543 = vmatmul.mubr.bf16.gmra.mrb[0].mxu0 %v7509
      %v10544 = vpop.f32.mrb[0].mxu0
      %v10545 = vadd.f32 %v10400, %v10544
      %v10546 = vpop.f32.mrb[0].mxu0
      %v10547 = vpop.f32.mrb[0].mxu0
      %v10548 = vadd.f32 %v10403, %v10547
      %v10549 = vpop.f32.mrb[0].mxu0
      %10550 = vmatprep.mubr.bf16.mxu0 0
      %10551 = vmatmul.mubr.bf16.gmra.mrb[0].mxu0 %v7518
      %v10552 = vpop.f32.mrb[0].mxu0
      %v10553 = vadd.f32 %v10408, %v10552
      %v10554 = vpop.f32.mrb[0].mxu0
      %v10555 = vpop.f32.mrb[0].mxu0
      %v10556 = vadd.f32 %v10411, %v10555
      %v10557 = vpop.f32.mrb[0].mxu0
      %10558 = vmatprep.mubr.bf16.mxu0 0
      %10559 = vmatmul.mubr.bf16.gmra.mrb[0].mxu0 %v7527
      %v10560 = vpop.f32.mrb[0].mxu0
      %v10561 = vadd.f32 %v10416, %v10560
      %v10562 = vpop.f32.mrb[0].mxu0
      %v10563 = vpop.f32.mrb[0].mxu0
      %v10564 = vadd.f32 %v10419, %v10563
      %v10565 = vpop.f32.mrb[0].mxu0
      %10566 = vmatprep.mubr.bf16.mxu0 0
      %10567 = vmatmul.mubr.bf16.gmra.mrb[0].mxu0 %v7536
      %v10568 = vpop.f32.mrb[0].mxu0
      %v10569 = vadd.f32 %v10424, %v10568
      %v10570 = vpop.f32.mrb[0].mxu0
      %v10571 = vpop.f32.mrb[0].mxu0
      %v10572 = vadd.f32 %v10427, %v10571
      %v10573 = vpop.f32.mrb[0].mxu0
      %10574 = vmatprep.mubr.bf16.mxu0 0
      %10575 = vmatmul.mubr.bf16.gmra.mrb[0].mxu0 %v7545
      %v10576 = vpop.f32.mrb[0].mxu0
      %v10577 = vadd.f32 %v10432, %v10576
      %v10578 = vpop.f32.mrb[0].mxu0
      %v10579 = vpop.f32.mrb[0].mxu0
      %v10580 = vadd.f32 %v10435, %v10579
      %v10581 = vpop.f32.mrb[0].mxu0
      %10582 = vmatprep.mubr.bf16.mxu0 0
      %10583 = vmatmul.mubr.bf16.gmra.mrb[0].mxu0 %v7554
      %v10584 = vpop.f32.mrb[0].mxu0
      %v10585 = vadd.f32 %v10440, %v10584
      %v10586 = vpop.f32.mrb[0].mxu0
      %v10587 = vpop.f32.mrb[0].mxu0
      %v10588 = vadd.f32 %v10443, %v10587
      %v10589 = vpop.f32.mrb[0].mxu0
      %10590 = vmatprep.mubr.bf16.mxu0 0
      %10591 = vmatmul.mubr.bf16.gmra.mrb[0].mxu0 %v7563
      %v10592 = vpop.f32.mrb[0].mxu0
      %v10593 = vadd.f32 %v10448, %v10592
      %v10594 = vpop.f32.mrb[0].mxu0
      %v10595 = vpop.f32.mrb[0].mxu0
      %v10596 = vadd.f32 %v10451, %v10595
      %v10597 = vpop.f32.mrb[0].mxu0
      %10598 = vmatprep.mubr.bf16.mxu0 0
      %10599 = vmatmul.mubr.bf16.gmra.mrb[0].mxu0 %v7572
      %v10600 = vpop.f32.mrb[0].mxu0
      %v10601 = vadd.f32 %v10456, %v10600
      %v10602 = vpop.f32.mrb[0].mxu0
      %v10603 = vpop.f32.mrb[0].mxu0
      %v10604 = vadd.f32 %v10459, %v10603
      %v10605 = vpop.f32.mrb[0].mxu0
      %10606 = vmatprep.mubr.bf16.mxu0 0
      %10607 = vmatmul.mubr.bf16.gmra.mrb[0].mxu0 %v7581
      %v10608 = vpop.f32.mrb[0].mxu0
      %v10609 = vadd.f32 %v10464, %v10608
      %v10610 = vpop.f32.mrb[0].mxu0
      %v10611 = vpop.f32.mrb[0].mxu0
      %v10612 = vadd.f32 %v10467, %v10611
      %v10613 = vpop.f32.mrb[0].mxu0
      %10614 = vmatprep.mubr.bf16.mxu0 0
      %10615 = vmatmul.mubr.bf16.gmra.mrb[0].mxu0 %v7590
      %v10616 = vpop.f32.mrb[0].mxu0
      %v10617 = vadd.f32 %v10472, %v10616
      %v10618 = vpop.f32.mrb[0].mxu0
      %v10619 = vpop.f32.mrb[0].mxu0
      %v10620 = vadd.f32 %v10475, %v10619
      %v10621 = vpop.f32.mrb[0].mxu0
      %10622 = vmatprep.mubr.bf16.mxu0 0
      %10623 = vmatmul.mubr.bf16.gmra.mrb[0].mxu0 %v7599
      %v10624 = vpop.f32.mrb[0].mxu0
      %v10625 = vadd.f32 %v10480, %v10624
      %v10626 = vpop.f32.mrb[0].mxu0
      %v10627 = vpop.f32.mrb[0].mxu0
      %v10628 = vadd.f32 %v10483, %v10627
      %v10629 = vpop.f32.mrb[0].mxu0
      %10630 = vdwg.mxu0
      %v10631 = vadd.f32 %v6611, %v9768
      %v10632 = vadd.f32 %v6613, %v9770
      %v10633 = vadd.f32 %v7364, %v10521
      %v10634 = vadd.f32 %v6615, %v9772
      %v10635 = vadd.f32 %v6617, %v9774
      %v10636 = vadd.f32 %v7367, %v10524
      %v10637 = vadd.f32 %v6621, %v9778
      %v10638 = vadd.f32 %v6623, %v9780
      %v10639 = vadd.f32 %v7372, %v10529
      %v10640 = vadd.f32 %v6625, %v9782
      %v10641 = vadd.f32 %v6627, %v9784
      %v10642 = vadd.f32 %v7375, %v10532
      %v10643 = vadd.f32 %v6631, %v9788
      %v10644 = vadd.f32 %v6633, %v9790
      %v10645 = vadd.f32 %v7380, %v10537
      %v10646 = vadd.f32 %v6635, %v9792
      %v10647 = vadd.f32 %v6637, %v9794
      %v10648 = vadd.f32 %v7383, %v10540
      %v10649 = vadd.f32 %v6641, %v9798
      %v10650 = vadd.f32 %v6643, %v9800
      %v10651 = vadd.f32 %v7388, %v10545
      %v10652 = vadd.f32 %v6645, %v9802
      %v10653 = vadd.f32 %v6647, %v9804
      %v10654 = vadd.f32 %v7391, %v10548
      %v10655 = vadd.f32 %v6651, %v9808
      %v10656 = vadd.f32 %v6653, %v9810
      %v10657 = vadd.f32 %v7396, %v10553
      %v10658 = vadd.f32 %v6655, %v9812
      %v10659 = vadd.f32 %v6657, %v9814
      %v10660 = vadd.f32 %v7399, %v10556
      %v10661 = vadd.f32 %v6661, %v9818
      %v10662 = vadd.f32 %v6663, %v9820
      %v10663 = vadd.f32 %v7404, %v10561
      %v10664 = vadd.f32 %v6665, %v9822
      %v10665 = vadd.f32 %v6667, %v9824
      %v10666 = vadd.f32 %v7407, %v10564
      %v10667 = vadd.f32 %v6671, %v9828
      %v10668 = vadd.f32 %v6673, %v9830
      %v10669 = vadd.f32 %v7412, %v10569
      %v10670 = vadd.f32 %v6675, %v9832
      %v10671 = vadd.f32 %v6677, %v9834
      %v10672 = vadd.f32 %v7415, %v10572
      %v10673 = vadd.f32 %v6681, %v9838
      %v10674 = vadd.f32 %v6683, %v9840
      %v10675 = vadd.f32 %v7420, %v10577
      %v10676 = vadd.f32 %v6685, %v9842
      %v10677 = vadd.f32 %v6687, %v9844
      %v10678 = vadd.f32 %v7423, %v10580
      %v10679 = vadd.f32 %v6691, %v9848
      %v10680 = vadd.f32 %v6693, %v9850
      %v10681 = vadd.f32 %v7428, %v10585
      %v10682 = vadd.f32 %v6695, %v9852
      %v10683 = vadd.f32 %v6697, %v9854
      %v10684 = vadd.f32 %v7431, %v10588
      %v10685 = vadd.f32 %v6701, %v9858
      %v10686 = vadd.f32 %v6703, %v9860
      %v10687 = vadd.f32 %v7436, %v10593
      %v10688 = vadd.f32 %v6705, %v9862
      %v10689 = vadd.f32 %v6707, %v9864
      %v10690 = vadd.f32 %v7439, %v10596
      %v10691 = vadd.f32 %v6711, %v9868
      %v10692 = vadd.f32 %v6713, %v9870
      %v10693 = vadd.f32 %v7444, %v10601
      %v10694 = vadd.f32 %v6715, %v9872
      %v10695 = vadd.f32 %v6717, %v9874
      %v10696 = vadd.f32 %v7447, %v10604
      %v10697 = vadd.f32 %v6721, %v9878
      %v10698 = vadd.f32 %v6723, %v9880
      %v10699 = vadd.f32 %v7452, %v10609
      %v10700 = vadd.f32 %v6725, %v9882
      %v10701 = vadd.f32 %v6727, %v9884
      %v10702 = vadd.f32 %v7455, %v10612
      %v10703 = vadd.f32 %v6731, %v9888
      %v10704 = vadd.f32 %v6733, %v9890
      %v10705 = vadd.f32 %v7460, %v10617
      %v10706 = vadd.f32 %v6735, %v9892
      %v10707 = vadd.f32 %v6737, %v9894
      %v10708 = vadd.f32 %v7463, %v10620
      %v10709 = vadd.f32 %v6741, %v9898
      %v10710 = vadd.f32 %v6743, %v9900
      %v10711 = vadd.f32 %v7468, %v10625
      %v10712 = vadd.f32 %v6745, %v9902
      %v10713 = vadd.f32 %v6747, %v9904
      %v10714 = vadd.f32 %v7471, %v10628
      %10715 = vst [vmem:[%s143] sm:$0xff] %v10631
      %10716 = vst [vmem:[%s143 + $0x8] sm:$0xff] %v10632
      %vm10717 = vcmask 64512
      %10718 = vst.msk [vmem:[%s143 + $0x10] sm:$0xff] %vm10717, %v10633
      %10719 = vst [vmem:[%s143 + $0x18] sm:$0x3f] %v10634
      %10720 = vst [vmem:[%s143 + $0x20] sm:$0x3f] %v10635
      %vm10721 = vcmask 62464
      %10722 = vst.msk [vmem:[%s143 + $0x28] sm:$0x3f] %vm10721, %v10636
      %10723 = vst [vmem:[%s143 + $0x30] sm:$0xff] %v10637
      %10724 = vst [vmem:[%s143 + $0x38] sm:$0xff] %v10638
      %10725 = vst.msk [vmem:[%s143 + $0x40] sm:$0xff] %vm10717, %v10639
      %10726 = vst [vmem:[%s143 + $0x48] sm:$0x3f] %v10640
      %10727 = vst [vmem:[%s143 + $0x50] sm:$0x3f] %v10641
      %10728 = vst.msk [vmem:[%s143 + $0x58] sm:$0x3f] %vm10721, %v10642
      %10729 = vst [vmem:[%s143 + $0x60] sm:$0xff] %v10643
      %10730 = vst [vmem:[%s143 + $0x68] sm:$0xff] %v10644
      %10731 = vst.msk [vmem:[%s143 + $0x70] sm:$0xff] %vm10717, %v10645
      %10732 = vst [vmem:[%s143 + $0x78] sm:$0x3f] %v10646
      %10733 = vst [vmem:[%s143 + $0x80] sm:$0x3f] %v10647
      %10734 = vst.msk [vmem:[%s143 + $0x88] sm:$0x3f] %vm10721, %v10648
      %10735 = vst [vmem:[%s143 + $0x90] sm:$0xff] %v10649
      %10736 = vst [vmem:[%s143 + $0x98] sm:$0xff] %v10650
      %10737 = vst.msk [vmem:[%s143 + $0xa0] sm:$0xff] %vm10717, %v10651
      %10738 = vst [vmem:[%s143 + $0xa8] sm:$0x3f] %v10652
      %10739 = vst [vmem:[%s143 + $0xb0] sm:$0x3f] %v10653
      %10740 = vst.msk [vmem:[%s143 + $0xb8] sm:$0x3f] %vm10721, %v10654
      %10741 = vst [vmem:[%s143 + $0xc0] sm:$0xff] %v10655
      %10742 = vst [vmem:[%s143 + $0xc8] sm:$0xff] %v10656
      %10743 = vst.msk [vmem:[%s143 + $0xd0] sm:$0xff] %vm10717, %v10657
      %10744 = vst [vmem:[%s143 + $0xd8] sm:$0x3f] %v10658
      %10745 = vst [vmem:[%s143 + $0xe0] sm:$0x3f] %v10659
      %10746 = vst.msk [vmem:[%s143 + $0xe8] sm:$0x3f] %vm10721, %v10660
      %10747 = vst [vmem:[%s143 + $0xf0] sm:$0xff] %v10661
      %10748 = vst [vmem:[%s143 + $0xf8] sm:$0xff] %v10662
      %10749 = vst.msk [vmem:[%s143 + $0x100] sm:$0xff] %vm10717, %v10663
      %10750 = vst [vmem:[%s143 + $0x108] sm:$0x3f] %v10664
      %10751 = vst [vmem:[%s143 + $0x110] sm:$0x3f] %v10665
      %10752 = vst.msk [vmem:[%s143 + $0x118] sm:$0x3f] %vm10721, %v10666
      %10753 = vst [vmem:[%s143 + $0x120] sm:$0xff] %v10667
      %10754 = vst [vmem:[%s143 + $0x128] sm:$0xff] %v10668
      %10755 = vst.msk [vmem:[%s143 + $0x130] sm:$0xff] %vm10717, %v10669
      %10756 = vst [vmem:[%s143 + $0x138] sm:$0x3f] %v10670
      %10757 = vst [vmem:[%s143 + $0x140] sm:$0x3f] %v10671
      %10758 = vst.msk [vmem:[%s143 + $0x148] sm:$0x3f] %vm10721, %v10672
      %10759 = vst [vmem:[%s143 + $0x150] sm:$0xff] %v10673
      %10760 = vst [vmem:[%s143 + $0x158] sm:$0xff] %v10674
      %10761 = vst.msk [vmem:[%s143 + $0x160] sm:$0xff] %vm10717, %v10675
      %10762 = vst [vmem:[%s143 + $0x168] sm:$0x3f] %v10676
      %10763 = vst [vmem:[%s143 + $0x170] sm:$0x3f] %v10677
      %10764 = vst.msk [vmem:[%s143 + $0x178] sm:$0x3f] %vm10721, %v10678
      %10765 = vst [vmem:[%s143 + $0x180] sm:$0xff] %v10679
      %10766 = vst [vmem:[%s143 + $0x188] sm:$0xff] %v10680
      %10767 = vst.msk [vmem:[%s143 + $0x190] sm:$0xff] %vm10717, %v10681
      %10768 = vst [vmem:[%s143 + $0x198] sm:$0x3f] %v10682
      %10769 = vst [vmem:[%s143 + $0x1a0] sm:$0x3f] %v10683
      %10770 = vst.msk [vmem:[%s143 + $0x1a8] sm:$0x3f] %vm10721, %v10684
      %10771 = vst [vmem:[%s143 + $0x1b0] sm:$0xff] %v10685
      %10772 = vst [vmem:[%s143 + $0x1b8] sm:$0xff] %v10686
      %10773 = vst.msk [vmem:[%s143 + $0x1c0] sm:$0xff] %vm10717, %v10687
      %10774 = vst [vmem:[%s143 + $0x1c8] sm:$0x3f] %v10688
      %10775 = vst [vmem:[%s143 + $0x1d0] sm:$0x3f] %v10689
      %10776 = vst.msk [vmem:[%s143 + $0x1d8] sm:$0x3f] %vm10721, %v10690
      %10777 = vst [vmem:[%s143 + $0x1e0] sm:$0xff] %v10691
      %10778 = vst [vmem:[%s143 + $0x1e8] sm:$0xff] %v10692
      %10779 = vst.msk [vmem:[%s143 + $0x1f0] sm:$0xff] %vm10717, %v10693
      %10780 = vst [vmem:[%s143 + $0x1f8] sm:$0x3f] %v10694
      %10781 = vst [vmem:[%s143 + $0x200] sm:$0x3f] %v10695
      %10782 = vst.msk [vmem:[%s143 + $0x208] sm:$0x3f] %vm10721, %v10696
      %10783 = vst [vmem:[%s143 + $0x210] sm:$0xff] %v10697
      %10784 = vst [vmem:[%s143 + $0x218] sm:$0xff] %v10698
      %10785 = vst.msk [vmem:[%s143 + $0x220] sm:$0xff] %vm10717, %v10699
      %10786 = vst [vmem:[%s143 + $0x228] sm:$0x3f] %v10700
      %10787 = vst [vmem:[%s143 + $0x230] sm:$0x3f] %v10701
      %10788 = vst.msk [vmem:[%s143 + $0x238] sm:$0x3f] %vm10721, %v10702
      %10789 = vst [vmem:[%s143 + $0x240] sm:$0xff] %v10703
      %10790 = vst [vmem:[%s143 + $0x248] sm:$0xff] %v10704
      %10791 = vst.msk [vmem:[%s143 + $0x250] sm:$0xff] %vm10717, %v10705
      %10792 = vst [vmem:[%s143 + $0x258] sm:$0x3f] %v10706
      %10793 = vst [vmem:[%s143 + $0x260] sm:$0x3f] %v10707
      %10794 = vst.msk [vmem:[%s143 + $0x268] sm:$0x3f] %vm10721, %v10708
      %10795 = vst [vmem:[%s143 + $0x270] sm:$0xff] %v10709
      %10796 = vst [vmem:[%s143 + $0x278] sm:$0xff] %v10710
      %10797 = vst.msk [vmem:[%s143 + $0x280] sm:$0xff] %vm10717, %v10711
      %10798 = vst [vmem:[%s143 + $0x288] sm:$0x3f] %v10712
      %10799 = vst [vmem:[%s143 + $0x290] sm:$0x3f] %v10713
      %10800 = vst.msk [vmem:[%s143 + $0x298] sm:$0x3f] %vm10721, %v10714
      %p10801 = scmp.lt.s32.totalorder %s13, 7
      %s10802 = scalar_select %p10801, %s13, 7
      %s10803 = smul.addr %s10802, 84
      %s10804 = smul.addr %s10803, 8
      %s10805 = scalar_lea.vmem %s2, %s10804
      // Predicated region
      $region29: #{relu_group_conv3x3.1} parent=27 // pred_check
        %p10806 = pneg %p78
      $region30: #{relu_group_conv3x3.1} parent=27 // pred_check_branch
        %10808 = sbr.rel (%p10806) target = $region32
      $region31: #{relu_group_conv3x3.1} parent=27 // pred_region
        _
      $region32: #{relu_group_conv3x3.1} parent=27 // pred_fallthru
        _
    $region28: #{relu_group_conv3x3.1} parent=5 // pred_fallthru
      _
    %p10809 = scmp.le.s32.totalorder 2, %s8
    // Predicated region
    $region33: #{relu_group_conv3x3.1} parent=5 // pred_check
      %p10810 = pneg %p10809
    $region34: #{relu_group_conv3x3.1} parent=5 // pred_check_branch
      %10812 = sbr.rel (%p10810) target = $region36
    $region35: #{relu_group_conv3x3.1} parent=5 // pred_region
      %s10813 = ssub.s32 %s8, 2
      // Predicated region
      $region37: #{relu_group_conv3x3.1} parent=35 // pred_check
        %p10814 = pneg %p84
      $region38: #{relu_group_conv3x3.1} parent=35 // pred_check_branch
        %10816 = sbr.rel (%p10814) target = $region40
      $region39: #{relu_group_conv3x3.1} parent=35 // pred_region
        %p10817 = scmp.lt.s32.totalorder %s14, 7
        %s10818 = scalar_select %p10817, %s14, 7
        %s10819 = smul.addr %s10818, 84
        %s10820 = smul.addr %s10819, 8
        %s10821 = scalar_lea.vmem %s2, %s10820
      $region40: #{relu_group_conv3x3.1} parent=35 // pred_fallthru
        _
    $region36: #{relu_group_conv3x3.1} parent=5 // pred_fallthru
      _
  $region6: #{relu_group_conv3x3.1} parent=0 // loop_footer
    %s12 = sadd.s32 1, %s8
  $region7: #{relu_group_conv3x3.1} parent=0 // loop_footer_branch
    %7 = sbr.rel target = $region3
  $region8: #{relu_group_conv3x3.1} parent=0 // loop_exit
    _

</llo_original>
